<compile_context>
chip_gen: v5e
topology: v5e:2x2
jax: 0.10.0
libtpu: 0.0.40
codegen_flags: <defaults>
</compile_context>

<pallas_src>
import functools

import numpy as np

import jax
import jax.numpy as jnp
from jax.experimental import pallas as pl
from jax.experimental.pallas import tpu as pltpu


_VMEM_LIMIT = 32 * 1024 * 1024     # fits v5e / v6e / v7x scoped-VMEM budgets
_SUB = 16                          # bf16 sublane tile; batch tiles are multiples


# ----------------------------------------------------------------------------
# Fused Critic kernel for one batch tile of `bt` images.
#   x_ref  : (H/4, bt, 4*W*C)   bf16  H-space-to-depth'd input, lanes = (r,w,c)
#   m1_ref : (8*W*C,    OW1*32) bf16  conv1 block-Toeplitz weight
#   m2_ref : (4*OW1*32, OW2*64) bf16  conv2   "
#   m3_ref : (3*OW2*64, OW3*64) bf16  conv3   "
#   fw1_ref: (OH3*OW3*64, 512)  bf16  fc1 (rows permuted to our flatten order)
#   fw2_ref: (1, 512)           f32   fc2
#   b*_ref : f32 biases (conv biases tiled over OW)
#   o_ref  : (bt, 1)            f32
# ----------------------------------------------------------------------------
def _critic_kernel(x_ref, m1_ref, b1_ref, m2_ref, b2_ref, m3_ref, b3_ref,
                   fw1_ref, fb1_ref, fw2_ref, fb2_ref, o_ref,
                   *, bt, oh1, oh2, oh3):
    # conv1 (8x8, stride 4): H-stride handled by the wrapper's space-to-depth
    # (output row oh needs s2d rows {oh, oh+1}); W-stride lives inside m1.
    # One matmul with M = oh1*bt rows; the reshape is layout-preserving
    # because bt is a multiple of the bf16 sublane tile (16).
    lhs = jnp.concatenate([x_ref[pl.ds(0, oh1)], x_ref[pl.ds(1, oh1)]], axis=-1)
    lhs = lhs.reshape(oh1 * bt, lhs.shape[-1])
    y = jnp.dot(lhs, m1_ref[...], preferred_element_type=jnp.float32)
    y = jnp.maximum(y + b1_ref[...], 0.0).astype(jnp.bfloat16)   # (oh1*bt, OW1*32)

    def row_groups(a, n_out, taps, step):
        # H-direction im2col: output row group o needs input row groups
        # {step*o + k, k < taps}; each group is bt rows = whole sublane tiles,
        # so slices and concats are tile-aligned vreg copies.
        groups = [jnp.concatenate(
            [a[(step * o + k) * bt:(step * o + k + 1) * bt, :]
             for k in range(taps)], axis=-1) for o in range(n_out)]
        return jnp.concatenate(groups, axis=0) if n_out > 1 else groups[0]

    # conv2 (4x4, stride 2)
    lhs = row_groups(y, oh2, 4, 2)                       # (oh2*bt, 4*OW1*32)
    y = jnp.dot(lhs, m2_ref[...], preferred_element_type=jnp.float32)
    y = jnp.maximum(y + b2_ref[...], 0.0).astype(jnp.bfloat16)   # (oh2*bt, OW2*64)

    # conv3 (3x3, stride 1)
    lhs = row_groups(y, oh3, 3, 1)                       # (oh3*bt, 3*OW2*64)
    y = jnp.dot(lhs, m3_ref[...], preferred_element_type=jnp.float32)
    y = jnp.maximum(y + b3_ref[...], 0.0).astype(jnp.bfloat16)   # (oh3*bt, OW3*64)

    # flatten ((h, w, c) order; fc1 rows were permuted to match) + value head
    flat = row_groups(y, 1, oh3, 1)                      # (bt, OH3*OW3*64)
    h = jnp.dot(flat, fw1_ref[...], preferred_element_type=jnp.float32)
    h = jnp.maximum(h + fb1_ref[...], 0.0)
    # TODO(synk): nn.Dropout(0.5) is identity here (eval mode); training-mode
    # random masking is not implemented.
    v = jnp.sum(h * fw2_ref[...], axis=-1, keepdims=True) + fb2_ref[...]
    o_ref[...] = v.astype(o_ref.dtype)


# ----------------------------------------------------------------------------
# One-time parameter layout preparation (outside the forward pass).
# ----------------------------------------------------------------------------
def _toeplitz_conv_weight(w_oihw, iw, stride):
    """(OC, C, KH, KW) conv weight -> (KH*IW*C, OW*OC) block-Toeplitz matrix.

    Row index kh*IW*C + w*C + c matches the kernel's lane-concat of KH
    full-width input rows; column index ow*OC + oc.  The W-direction taps and
    stride live entirely inside this matrix, so each conv layer is one matmul.
    """
    w = np.asarray(w_oihw, dtype=np.float32)
    oc, c, kh, kw = w.shape
    ow = (iw - kw) // stride + 1
    m = np.zeros((kh * iw * c, ow * oc), np.float32)
    for k in range(kh):
        for o in range(ow):
            for q in range(kw):
                r0 = k * iw * c + (stride * o + q) * c
                m[r0:r0 + c, o * oc:(o + 1) * oc] = w[:, :, k, q].T
    return jnp.asarray(m, dtype=jnp.bfloat16)


def _conv_dims(h, w):
    oh1, ow1 = (h - 8) // 4 + 1, (w - 8) // 4 + 1
    oh2, ow2 = (oh1 - 4) // 2 + 1, (ow1 - 4) // 2 + 1
    oh3, ow3 = oh2 - 2, ow2 - 2
    return (oh1, ow1), (oh2, ow2), (oh3, ow3)


def prepare_params(params, obs_shape):
    c, h, w = obs_shape
    (oh1, ow1), (oh2, ow2), (oh3, ow3) = _conv_dims(h, w)
    nh = params["fc1_w"].shape[1]
    # fc1 rows: PyTorch NCHW-flatten order (c, h, w) -> our (h, w, c) order.
    fc1 = (np.asarray(params["fc1_w"], np.float32)
           .reshape(64, oh3, ow3, nh).transpose(1, 2, 0, 3)
           .reshape(oh3 * ow3 * 64, nh))
    return {
        "m1": _toeplitz_conv_weight(params["conv1_w"], w, 4),
        "b1": jnp.tile(params["conv1_b"], ow1).reshape(1, -1).astype(jnp.float32),
        "m2": _toeplitz_conv_weight(params["conv2_w"], ow1, 2),
        "b2": jnp.tile(params["conv2_b"], ow2).reshape(1, -1).astype(jnp.float32),
        "m3": _toeplitz_conv_weight(params["conv3_w"], ow2, 1),
        "b3": jnp.tile(params["conv3_b"], ow3).reshape(1, -1).astype(jnp.float32),
        "fc1_w": jnp.asarray(fc1, jnp.bfloat16),
        "fc1_b": params["fc1_b"].reshape(1, -1).astype(jnp.float32),
        "fc2_w": params["fc2_w"].reshape(1, -1).astype(jnp.float32),
        "fc2_b": params["fc2_b"].reshape(1, 1).astype(jnp.float32),
    }


# ----------------------------------------------------------------------------
# Critic forward
# ----------------------------------------------------------------------------
def critic_forward(prepped, x_nchw, *, max_bt=32):
    """x: (N, C, H, W) float32 (PyTorch convention) -> (N, 1) float32."""
    n, c, h, w = x_nchw.shape
    (oh1, _), (oh2, _), (oh3, _) = _conv_dims(h, w)

    # Batch tile: a multiple of the bf16 sublane tile (16) so every in-kernel
    # row-group slice / reshape is tile-aligned; capped at 32 so the VMEM
    # working set stays a few MB even on v7x (64 MiB VMEM) and large batches
    # give a multi-step grid for v7x's two TensorCores.
    bt = min(max_bt, -(-n // _SUB) * _SUB)
    n_pad = -(-n // bt) * bt
    hp = -(-h // 4) * 4

    xb = x_nchw.astype(jnp.bfloat16)
    if n_pad != n or hp != h:
        xb = jnp.pad(xb, ((0, n_pad - n), (0, 0), (0, hp - h), (0, 0)))
    # Fold NCHW -> "(w, c) in lanes" and conv1's H-direction space-to-depth
    # (factor 4) into one XLA transpose: (N, C, H, W) -> (H/4, N, 4*W*C).
    xs = (xb.reshape(n_pad, c, hp // 4, 4, w)
             .transpose(2, 0, 3, 4, 1)
             .reshape(hp // 4, n_pad, 4 * w * c))

    k1, n1 = prepped["m1"].shape
    k2, n2 = prepped["m2"].shape
    k3, n3 = prepped["m3"].shape
    kf, nf = prepped["fc1_w"].shape

    flops = 2 * n_pad * (oh1 * k1 * n1 + oh2 * k2 * n2 + oh3 * k3 * n3
                         + kf * nf + nf)
    bytes_accessed = (xs.size * 2 + 2 * (prepped["m1"].size + prepped["m2"].size
                      + prepped["m3"].size + prepped["fc1_w"].size) + n_pad * 4)

    kernel = functools.partial(_critic_kernel, bt=bt, oh1=oh1, oh2=oh2, oh3=oh3)
    out = pl.pallas_call(
        kernel,
        out_shape=jax.ShapeDtypeStruct((n_pad, 1), jnp.float32),
        grid=(n_pad // bt,),
        in_specs=[
            pl.BlockSpec((hp // 4, bt, 4 * w * c), lambda i: (0, i, 0)),
            pl.BlockSpec((k1, n1), lambda i: (0, 0)),
            pl.BlockSpec((1, n1), lambda i: (0, 0)),
            pl.BlockSpec((k2, n2), lambda i: (0, 0)),
            pl.BlockSpec((1, n2), lambda i: (0, 0)),
            pl.BlockSpec((k3, n3), lambda i: (0, 0)),
            pl.BlockSpec((1, n3), lambda i: (0, 0)),
            pl.BlockSpec((kf, nf), lambda i: (0, 0)),
            pl.BlockSpec((1, nf), lambda i: (0, 0)),
            pl.BlockSpec((1, nf), lambda i: (0, 0)),
            pl.BlockSpec((1, 1), lambda i: (0, 0)),
        ],
        out_specs=pl.BlockSpec((bt, 1), lambda i: (i, 0)),
        compiler_params=pltpu.CompilerParams(
            dimension_semantics=("parallel",),
            vmem_limit_bytes=_VMEM_LIMIT),
        cost_estimate=pl.CostEstimate(flops=flops, transcendentals=0,
                                      bytes_accessed=bytes_accessed),
    )(xs, prepped["m1"], prepped["b1"], prepped["m2"], prepped["b2"],
      prepped["m3"], prepped["b3"], prepped["fc1_w"], prepped["fc1_b"],
      prepped["fc2_w"], prepped["fc2_b"])
    return out[:n]


# Pure-JAX reference (f32, NCHW, original PyTorch-layout params).
def critic_reference(params, x):
    def conv(x, w, b, stride):
        y = jax.lax.conv_general_dilated(
            x, w, window_strides=(stride, stride), padding="VALID",
            dimension_numbers=("NCHW", "OIHW", "NCHW"))
        return jax.nn.relu(y + b[None, :, None, None])

    x = conv(x, params["conv1_w"], params["conv1_b"], 4)
    x = conv(x, params["conv2_w"], params["conv2_b"], 2)
    x = conv(x, params["conv3_w"], params["conv3_b"], 1)
    x = x.reshape(x.shape[0], -1)
    x = jax.nn.relu(x @ params["fc1_w"] + params["fc1_b"])
    return x @ params["fc2_w"] + params["fc2_b"]


def init_params(key, obs_shape):
    c, h, w = obs_shape
    ks = jax.random.split(key, 10)

    def u(k, shape, fan_in):
        bound = 1.0 / jnp.sqrt(fan_in)
        return jax.random.uniform(k, shape, jnp.float32, -bound, bound)

    (_, _), (_, _), (oh3, ow3) = _conv_dims(h, w)
    conv_out = 64 * oh3 * ow3

    return {
        "conv1_w": u(ks[0], (32, c, 8, 8), c * 64),
        "conv1_b": u(ks[1], (32,), c * 64),
        "conv2_w": u(ks[2], (64, 32, 4, 4), 32 * 16),
        "conv2_b": u(ks[3], (64,), 32 * 16),
        "conv3_w": u(ks[4], (64, 64, 3, 3), 64 * 9),
        "conv3_b": u(ks[5], (64,), 64 * 9),
        # Linear weights stored as (in, out) for direct matmul.
        "fc1_w": u(ks[6], (conv_out, 512), conv_out),
        "fc1_b": u(ks[7], (512,), conv_out),
        "fc2_w": u(ks[8], (512, 1), 512),
        "fc2_b": u(ks[9], (1,), 512),
    }


if __name__ == "__main__":
    # Small obs consistent with the 8/4 -> 4/2 -> 3/1 conv stack that still
    # exercises a non-trivial flatten: 44x44 -> 10x10 -> 4x4 -> 2x2.
    obs_shape = (4, 44, 44)
    batch = 2

    key = jax.random.PRNGKey(0)
    pkey, xkey = jax.random.split(key)
    params = init_params(pkey, obs_shape)
    prepped = prepare_params(params, obs_shape)      # one-time layout prep
    x = jax.random.normal(xkey, (batch,) + obs_shape, dtype=jnp.float32)

    fwd = jax.jit(critic_forward)
    out = jax.block_until_ready(fwd(prepped, x))
    ref = jax.block_until_ready(critic_reference(params, x))

    assert out.shape == (batch, 1), out.shape
    # bf16 operands with f32 accumulation vs. the f32 reference: loosened tol.
    assert jnp.allclose(out, ref, rtol=5e-2, atol=5e-2), (out, ref)
    print("KERNEL_OK")
</pallas_src>

<mosaic_0001>
module attributes {stable_mosaic.version = 11 : i64} {
  func.func @_critic_kernel(%arg0: i32, %arg1: memref<11x16x704xbf16, #tpu.memory_space<vmem>>, %arg2: memref<1408x320xbf16, #tpu.memory_space<vmem>>, %arg3: memref<1x320xf32, #tpu.memory_space<vmem>>, %arg4: memref<1280x256xbf16, #tpu.memory_space<vmem>>, %arg5: memref<1x256xf32, #tpu.memory_space<vmem>>, %arg6: memref<768x128xbf16, #tpu.memory_space<vmem>>, %arg7: memref<1x128xf32, #tpu.memory_space<vmem>>, %arg8: memref<256x512xbf16, #tpu.memory_space<vmem>>, %arg9: memref<1x512xf32, #tpu.memory_space<vmem>>, %arg10: memref<1x512xf32, #tpu.memory_space<vmem>>, %arg11: memref<1x1xf32, #tpu.memory_space<vmem>>, %arg12: memref<16x1xf32, #tpu.memory_space<vmem>>) attributes {dimension_semantics = [#tpu.dimension_semantics<parallel>], iteration_bounds = array<i64: 1>, scalar_prefetch = 0 : i64, scratch_operands = 0 : i64, tpu.core_type = #tpu.core_type<tc>, window_params = [{transform_indices = @transform_0, window_bounds = array<i64: 11, 16, 704>}, {pipeline_mode = #tpu.pipeline_mode<synchronous>, transform_indices = @transform_1, window_bounds = array<i64: 1408, 320>}, {pipeline_mode = #tpu.pipeline_mode<synchronous>, transform_indices = @transform_2, window_bounds = array<i64: 1, 320>}, {pipeline_mode = #tpu.pipeline_mode<synchronous>, transform_indices = @transform_3, window_bounds = array<i64: 1280, 256>}, {pipeline_mode = #tpu.pipeline_mode<synchronous>, transform_indices = @transform_4, window_bounds = array<i64: 1, 256>}, {pipeline_mode = #tpu.pipeline_mode<synchronous>, transform_indices = @transform_5, window_bounds = array<i64: 768, 128>}, {pipeline_mode = #tpu.pipeline_mode<synchronous>, transform_indices = @transform_6, window_bounds = array<i64: 1, 128>}, {pipeline_mode = #tpu.pipeline_mode<synchronous>, transform_indices = @transform_7, window_bounds = array<i64: 256, 512>}, {pipeline_mode = #tpu.pipeline_mode<synchronous>, transform_indices = @transform_8, window_bounds = array<i64: 1, 512>}, {pipeline_mode = #tpu.pipeline_mode<synchronous>, transform_indices = @transform_9, window_bounds = array<i64: 1, 512>}, {pipeline_mode = #tpu.pipeline_mode<synchronous>, transform_indices = @transform_10, window_bounds = array<i64: 1, 1>}, {transform_indices = @transform_11, window_bounds = array<i64: 16, 1>}]} {
    %c0 = arith.constant 0 : index
    %c0_0 = arith.constant 0 : index
    %c0_1 = arith.constant 0 : index
    %0 = vector.load %arg1[%c0, %c0_0, %c0_1] : memref<11x16x704xbf16, #tpu.memory_space<vmem>>, vector<10x16x704xbf16>
    %c1 = arith.constant 1 : index
    %c0_2 = arith.constant 0 : index
    %c0_3 = arith.constant 0 : index
    %1 = vector.load %arg1[%c1, %c0_2, %c0_3] : memref<11x16x704xbf16, #tpu.memory_space<vmem>>, vector<10x16x704xbf16>
    %2 = tpu.concatenate %0, %1 in 2 : vector<10x16x704xbf16>, vector<10x16x704xbf16> -> vector<10x16x1408xbf16>
    %3 = vector.shape_cast %2 : vector<10x16x1408xbf16> to vector<160x1408xbf16>
    %c0_4 = arith.constant 0 : index
    %c0_5 = arith.constant 0 : index
    %4 = vector.load %arg2[%c0_4, %c0_5] : memref<1408x320xbf16, #tpu.memory_space<vmem>>, vector<1408x320xbf16>
    %cst = arith.constant dense<0.000000e+00> : vector<160x320xf32>
    %5 = tpu.matmul %3, %4, %cst {dimension_numbers = #tpu.dot_dimension_numbers<[1], [0], [0], [1], [0, 0, 1, 1], [], []>} : vector<160x1408xbf16>, vector<1408x320xbf16>, vector<160x320xf32> -> vector<160x320xf32>
    %c0_6 = arith.constant 0 : index
    %c0_7 = arith.constant 0 : index
    %6 = vector.load %arg3[%c0_6, %c0_7] : memref<1x320xf32, #tpu.memory_space<vmem>>, vector<1x320xf32>
    %7 = vector.broadcast %6 : vector<1x320xf32> to vector<160x320xf32>
    %8 = arith.addf %5, %7 : vector<160x320xf32>
    %cst_8 = arith.constant 0.000000e+00 : f32
    %9 = vector.broadcast %cst_8 : f32 to vector<160x320xf32>
    %10 = arith.maximumf %8, %9 : vector<160x320xf32>
    %11 = arith.truncf %10 : vector<160x320xf32> to vector<160x320xbf16>
    %12 = vector.extract_strided_slice %11 {offsets = [0, 0], sizes = [16, 320], strides = [1, 1]} : vector<160x320xbf16> to vector<16x320xbf16>
    %13 = vector.extract_strided_slice %11 {offsets = [16, 0], sizes = [16, 320], strides = [1, 1]} : vector<160x320xbf16> to vector<16x320xbf16>
    %14 = vector.extract_strided_slice %11 {offsets = [32, 0], sizes = [16, 320], strides = [1, 1]} : vector<160x320xbf16> to vector<16x320xbf16>
    %15 = vector.extract_strided_slice %11 {offsets = [48, 0], sizes = [16, 320], strides = [1, 1]} : vector<160x320xbf16> to vector<16x320xbf16>
    %16 = tpu.concatenate %12, %13, %14, %15 in 1 : vector<16x320xbf16>, vector<16x320xbf16>, vector<16x320xbf16>, vector<16x320xbf16> -> vector<16x1280xbf16>
    %17 = vector.extract_strided_slice %11 {offsets = [32, 0], sizes = [16, 320], strides = [1, 1]} : vector<160x320xbf16> to vector<16x320xbf16>
    %18 = vector.extract_strided_slice %11 {offsets = [48, 0], sizes = [16, 320], strides = [1, 1]} : vector<160x320xbf16> to vector<16x320xbf16>
    %19 = vector.extract_strided_slice %11 {offsets = [64, 0], sizes = [16, 320], strides = [1, 1]} : vector<160x320xbf16> to vector<16x320xbf16>
    %20 = vector.extract_strided_slice %11 {offsets = [80, 0], sizes = [16, 320], strides = [1, 1]} : vector<160x320xbf16> to vector<16x320xbf16>
    %21 = tpu.concatenate %17, %18, %19, %20 in 1 : vector<16x320xbf16>, vector<16x320xbf16>, vector<16x320xbf16>, vector<16x320xbf16> -> vector<16x1280xbf16>
    %22 = vector.extract_strided_slice %11 {offsets = [64, 0], sizes = [16, 320], strides = [1, 1]} : vector<160x320xbf16> to vector<16x320xbf16>
    %23 = vector.extract_strided_slice %11 {offsets = [80, 0], sizes = [16, 320], strides = [1, 1]} : vector<160x320xbf16> to vector<16x320xbf16>
    %24 = vector.extract_strided_slice %11 {offsets = [96, 0], sizes = [16, 320], strides = [1, 1]} : vector<160x320xbf16> to vector<16x320xbf16>
    %25 = vector.extract_strided_slice %11 {offsets = [112, 0], sizes = [16, 320], strides = [1, 1]} : vector<160x320xbf16> to vector<16x320xbf16>
    %26 = tpu.concatenate %22, %23, %24, %25 in 1 : vector<16x320xbf16>, vector<16x320xbf16>, vector<16x320xbf16>, vector<16x320xbf16> -> vector<16x1280xbf16>
    %27 = vector.extract_strided_slice %11 {offsets = [96, 0], sizes = [16, 320], strides = [1, 1]} : vector<160x320xbf16> to vector<16x320xbf16>
    %28 = vector.extract_strided_slice %11 {offsets = [112, 0], sizes = [16, 320], strides = [1, 1]} : vector<160x320xbf16> to vector<16x320xbf16>
    %29 = vector.extract_strided_slice %11 {offsets = [128, 0], sizes = [16, 320], strides = [1, 1]} : vector<160x320xbf16> to vector<16x320xbf16>
    %30 = vector.extract_strided_slice %11 {offsets = [144, 0], sizes = [16, 320], strides = [1, 1]} : vector<160x320xbf16> to vector<16x320xbf16>
    %31 = tpu.concatenate %27, %28, %29, %30 in 1 : vector<16x320xbf16>, vector<16x320xbf16>, vector<16x320xbf16>, vector<16x320xbf16> -> vector<16x1280xbf16>
    %32 = tpu.concatenate %16, %21, %26, %31 in 0 : vector<16x1280xbf16>, vector<16x1280xbf16>, vector<16x1280xbf16>, vector<16x1280xbf16> -> vector<64x1280xbf16>
    %c0_9 = arith.constant 0 : index
    %c0_10 = arith.constant 0 : index
    %33 = vector.load %arg4[%c0_9, %c0_10] : memref<1280x256xbf16, #tpu.memory_space<vmem>>, vector<1280x256xbf16>
    %cst_11 = arith.constant dense<0.000000e+00> : vector<64x256xf32>
    %34 = tpu.matmul %32, %33, %cst_11 {dimension_numbers = #tpu.dot_dimension_numbers<[1], [0], [0], [1], [0, 0, 1, 1], [], []>} : vector<64x1280xbf16>, vector<1280x256xbf16>, vector<64x256xf32> -> vector<64x256xf32>
    %c0_12 = arith.constant 0 : index
    %c0_13 = arith.constant 0 : index
    %35 = vector.load %arg5[%c0_12, %c0_13] : memref<1x256xf32, #tpu.memory_space<vmem>>, vector<1x256xf32>
    %36 = vector.broadcast %35 : vector<1x256xf32> to vector<64x256xf32>
    %37 = arith.addf %34, %36 : vector<64x256xf32>
    %cst_14 = arith.constant 0.000000e+00 : f32
    %38 = vector.broadcast %cst_14 : f32 to vector<64x256xf32>
    %39 = arith.maximumf %37, %38 : vector<64x256xf32>
    %40 = arith.truncf %39 : vector<64x256xf32> to vector<64x256xbf16>
    %41 = vector.extract_strided_slice %40 {offsets = [0, 0], sizes = [16, 256], strides = [1, 1]} : vector<64x256xbf16> to vector<16x256xbf16>
    %42 = vector.extract_strided_slice %40 {offsets = [16, 0], sizes = [16, 256], strides = [1, 1]} : vector<64x256xbf16> to vector<16x256xbf16>
    %43 = vector.extract_strided_slice %40 {offsets = [32, 0], sizes = [16, 256], strides = [1, 1]} : vector<64x256xbf16> to vector<16x256xbf16>
    %44 = tpu.concatenate %41, %42, %43 in 1 : vector<16x256xbf16>, vector<16x256xbf16>, vector<16x256xbf16> -> vector<16x768xbf16>
    %45 = vector.extract_strided_slice %40 {offsets = [16, 0], sizes = [16, 256], strides = [1, 1]} : vector<64x256xbf16> to vector<16x256xbf16>
    %46 = vector.extract_strided_slice %40 {offsets = [32, 0], sizes = [16, 256], strides = [1, 1]} : vector<64x256xbf16> to vector<16x256xbf16>
    %47 = vector.extract_strided_slice %40 {offsets = [48, 0], sizes = [16, 256], strides = [1, 1]} : vector<64x256xbf16> to vector<16x256xbf16>
    %48 = tpu.concatenate %45, %46, %47 in 1 : vector<16x256xbf16>, vector<16x256xbf16>, vector<16x256xbf16> -> vector<16x768xbf16>
    %49 = tpu.concatenate %44, %48 in 0 : vector<16x768xbf16>, vector<16x768xbf16> -> vector<32x768xbf16>
    %c0_15 = arith.constant 0 : index
    %c0_16 = arith.constant 0 : index
    %50 = vector.load %arg6[%c0_15, %c0_16] : memref<768x128xbf16, #tpu.memory_space<vmem>>, vector<768x128xbf16>
    %cst_17 = arith.constant dense<0.000000e+00> : vector<32x128xf32>
    %51 = tpu.matmul %49, %50, %cst_17 {dimension_numbers = #tpu.dot_dimension_numbers<[1], [0], [0], [1], [0, 0, 1, 1], [], []>} : vector<32x768xbf16>, vector<768x128xbf16>, vector<32x128xf32> -> vector<32x128xf32>
    %c0_18 = arith.constant 0 : index
    %c0_19 = arith.constant 0 : index
    %52 = vector.load %arg7[%c0_18, %c0_19] : memref<1x128xf32, #tpu.memory_space<vmem>>, vector<1x128xf32>
    %53 = vector.broadcast %52 : vector<1x128xf32> to vector<32x128xf32>
    %54 = arith.addf %51, %53 : vector<32x128xf32>
    %cst_20 = arith.constant 0.000000e+00 : f32
    %55 = vector.broadcast %cst_20 : f32 to vector<32x128xf32>
    %56 = arith.maximumf %54, %55 : vector<32x128xf32>
    %57 = arith.truncf %56 : vector<32x128xf32> to vector<32x128xbf16>
    %58 = vector.extract_strided_slice %57 {offsets = [0, 0], sizes = [16, 128], strides = [1, 1]} : vector<32x128xbf16> to vector<16x128xbf16>
    %59 = vector.extract_strided_slice %57 {offsets = [16, 0], sizes = [16, 128], strides = [1, 1]} : vector<32x128xbf16> to vector<16x128xbf16>
    %60 = tpu.concatenate %58, %59 in 1 : vector<16x128xbf16>, vector<16x128xbf16> -> vector<16x256xbf16>
    %c0_21 = arith.constant 0 : index
    %c0_22 = arith.constant 0 : index
    %61 = vector.load %arg8[%c0_21, %c0_22] : memref<256x512xbf16, #tpu.memory_space<vmem>>, vector<256x512xbf16>
    %cst_23 = arith.constant dense<0.000000e+00> : vector<16x512xf32>
    %62 = tpu.matmul %60, %61, %cst_23 {dimension_numbers = #tpu.dot_dimension_numbers<[1], [0], [0], [1], [0, 0, 1, 1], [], []>} : vector<16x256xbf16>, vector<256x512xbf16>, vector<16x512xf32> -> vector<16x512xf32>
    %c0_24 = arith.constant 0 : index
    %c0_25 = arith.constant 0 : index
    %63 = vector.load %arg9[%c0_24, %c0_25] : memref<1x512xf32, #tpu.memory_space<vmem>>, vector<1x512xf32>
    %64 = vector.broadcast %63 : vector<1x512xf32> to vector<16x512xf32>
    %65 = arith.addf %62, %64 : vector<16x512xf32>
    %cst_26 = arith.constant 0.000000e+00 : f32
    %66 = vector.broadcast %cst_26 : f32 to vector<16x512xf32>
    %67 = arith.maximumf %65, %66 : vector<16x512xf32>
    %c0_27 = arith.constant 0 : index
    %c0_28 = arith.constant 0 : index
    %68 = vector.load %arg10[%c0_27, %c0_28] : memref<1x512xf32, #tpu.memory_space<vmem>>, vector<1x512xf32>
    %69 = vector.broadcast %68 : vector<1x512xf32> to vector<16x512xf32>
    %70 = arith.mulf %67, %69 : vector<16x512xf32>
    %cst_29 = arith.constant dense<0.000000e+00> : vector<16xf32>
    %71 = vector.multi_reduction <add>, %70, %cst_29 [1] : vector<16x512xf32> to vector<16xf32>
    %72 = vector.shape_cast %71 : vector<16xf32> to vector<16x1xf32>
    %c0_30 = arith.constant 0 : index
    %c0_31 = arith.constant 0 : index
    %73 = vector.load %arg11[%c0_30, %c0_31] : memref<1x1xf32, #tpu.memory_space<vmem>>, vector<1x1xf32>
    %74 = vector.broadcast %73 : vector<1x1xf32> to vector<16x1xf32>
    %75 = arith.addf %72, %74 : vector<16x1xf32>
    %c0_32 = arith.constant 0 : index
    %c0_33 = arith.constant 0 : index
    %76 = vector.load %arg12[%c0_32, %c0_33] : memref<16x1xf32, #tpu.memory_space<vmem>>, vector<16x1xf32>
    tpu.vector_store %arg12[%c0_32, %c0_33], %75 {strides = array<i32>} : memref<16x1xf32, #tpu.memory_space<vmem>>, vector<16x1xf32>,
    return
  }
  func.func @transform_0(%arg0: i32) -> (i32, i32, i32) {
    %c0_i32 = arith.constant 0 : i32
    %c0_i32_0 = arith.constant 0 : i32
    %c0_i32_1 = arith.constant 0 : i32
    return %c0_i32, %arg0, %c0_i32_0 : i32, i32, i32
  }
  func.func @transform_1(%arg0: i32) -> (i32, i32) {
    %c0_i32 = arith.constant 0 : i32
    %c0_i32_0 = arith.constant 0 : i32
    %c0_i32_1 = arith.constant 0 : i32
    return %c0_i32, %c0_i32_0 : i32, i32
  }
  func.func @transform_2(%arg0: i32) -> (i32, i32) {
    %c0_i32 = arith.constant 0 : i32
    %c0_i32_0 = arith.constant 0 : i32
    %c0_i32_1 = arith.constant 0 : i32
    return %c0_i32, %c0_i32_0 : i32, i32
  }
  func.func @transform_3(%arg0: i32) -> (i32, i32) {
    %c0_i32 = arith.constant 0 : i32
    %c0_i32_0 = arith.constant 0 : i32
    %c0_i32_1 = arith.constant 0 : i32
    return %c0_i32, %c0_i32_0 : i32, i32
  }
  func.func @transform_4(%arg0: i32) -> (i32, i32) {
    %c0_i32 = arith.constant 0 : i32
    %c0_i32_0 = arith.constant 0 : i32
    %c0_i32_1 = arith.constant 0 : i32
    return %c0_i32, %c0_i32_0 : i32, i32
  }
  func.func @transform_5(%arg0: i32) -> (i32, i32) {
    %c0_i32 = arith.constant 0 : i32
    %c0_i32_0 = arith.constant 0 : i32
    %c0_i32_1 = arith.constant 0 : i32
    return %c0_i32, %c0_i32_0 : i32, i32
  }
  func.func @transform_6(%arg0: i32) -> (i32, i32) {
    %c0_i32 = arith.constant 0 : i32
    %c0_i32_0 = arith.constant 0 : i32
    %c0_i32_1 = arith.constant 0 : i32
    return %c0_i32, %c0_i32_0 : i32, i32
  }
  func.func @transform_7(%arg0: i32) -> (i32, i32) {
    %c0_i32 = arith.constant 0 : i32
    %c0_i32_0 = arith.constant 0 : i32
    %c0_i32_1 = arith.constant 0 : i32
    return %c0_i32, %c0_i32_0 : i32, i32
  }
  func.func @transform_8(%arg0: i32) -> (i32, i32) {
    %c0_i32 = arith.constant 0 : i32
    %c0_i32_0 = arith.constant 0 : i32
    %c0_i32_1 = arith.constant 0 : i32
    return %c0_i32, %c0_i32_0 : i32, i32
  }
  func.func @transform_9(%arg0: i32) -> (i32, i32) {
    %c0_i32 = arith.constant 0 : i32
    %c0_i32_0 = arith.constant 0 : i32
    %c0_i32_1 = arith.constant 0 : i32
    return %c0_i32, %c0_i32_0 : i32, i32
  }
  func.func @transform_10(%arg0: i32) -> (i32, i32) {
    %c0_i32 = arith.constant 0 : i32
    %c0_i32_0 = arith.constant 0 : i32
    %c0_i32_1 = arith.constant 0 : i32
    return %c0_i32, %c0_i32_0 : i32, i32
  }
  func.func @transform_11(%arg0: i32) -> (i32, i32) {
    %c0_i32 = arith.constant 0 : i32
    %c0_i32_0 = arith.constant 0 : i32
    return %arg0, %c0_i32 : i32, i32
  }
}

</mosaic_0001>

<llo_original>
// kernel: critic_forward.1
$region0: #{critic_forward.1}
  #allocation0 [shape = 'u32[]', space=smem, size = 0x4, offset = 0x4, fixed_abs, tag = 'smem constant byte address 0x4 - core index']
  #allocation1 [shape = 'u32[72,128]{1,0:T(1,128)}', space=vmem, size = 0x9000, scoped, tag = 'internal scratch']
  #allocation2 [shape = 'f32[1,1]{1,0:T(1,128)S(1)}', space=vmem, size = 0x200, scoped, tag = 'scoped memory for critic_forward.1']
  %s0 = inlined_call_operand.vmem [shape: bf16[11,16,704], index: 0, kind: input, shape index: {}]
  %s1 = inlined_call_operand.vmem [shape: bf16[1408,320], index: 1, kind: input, shape index: {}]
  %s2 = inlined_call_operand.vmem [shape: f32[1,320], index: 2, kind: input, shape index: {}]
  %s3 = inlined_call_operand.vmem [shape: bf16[1280,256], index: 3, kind: input, shape index: {}]
  %s4 = inlined_call_operand.vmem [shape: f32[1,256], index: 4, kind: input, shape index: {}]
  %s5 = inlined_call_operand.vmem [shape: bf16[768,128], index: 5, kind: input, shape index: {}]
  %s6 = inlined_call_operand.vmem [shape: f32[1,128], index: 6, kind: input, shape index: {}]
  %s7 = inlined_call_operand.vmem [shape: bf16[256,512], index: 7, kind: input, shape index: {}]
  %s8 = inlined_call_operand.vmem [shape: f32[1,512], index: 8, kind: input, shape index: {}]
  %s9 = inlined_call_operand.vmem [shape: f32[1,512], index: 9, kind: input, shape index: {}]
  %s10 = inlined_call_operand.<no memory space> [shape: f32[1,1], index: 10, kind: input, shape index: {}]
  %s11 = inlined_call_operand.vmem [shape: f32[16,1], index: 11, kind: output, shape index: {}]
  %s12 = sld [smem:[#allocation0]]
  $region54: #{critic_forward.1} parent=0
    _
  %s14 = ssub.s32 1, %s12
  %s15 = scalar_select 0, %s14, %s12
  %v16 = vstv %s10
  %17 = vst [vmem:[#allocation2] sm:$0x1] %v16
  // Predicated region
  $region2: #{critic_forward.1} parent=0 // pred_check
    _
  $region3: #{critic_forward.1} parent=0 // pred_check_branch
    %19 = sbr.rel (0) target = $region5
  $region4: #{critic_forward.1} parent=0 // pred_region
    _
  $region5: #{critic_forward.1} parent=0 // pred_fallthru
    _
  // Predicated region
  $region6: #{critic_forward.1} parent=0 // pred_check
    _
  $region7: #{critic_forward.1} parent=0 // pred_check_branch
    %21 = sbr.rel (0) target = $region9
  $region8: #{critic_forward.1} parent=0 // pred_region
    _
  $region9: #{critic_forward.1} parent=0 // pred_fallthru
    _
  // Predicated region
  $region10: #{critic_forward.1} parent=0 // pred_check
    _
  $region11: #{critic_forward.1} parent=0 // pred_check_branch
    %23 = sbr.rel (0) target = $region13
  $region12: #{critic_forward.1} parent=0 // pred_region
    _
  $region13: #{critic_forward.1} parent=0 // pred_fallthru
    _
  // Predicated region
  $region14: #{critic_forward.1} parent=0 // pred_check
    _
  $region15: #{critic_forward.1} parent=0 // pred_check_branch
    %25 = sbr.rel (0) target = $region17
  $region16: #{critic_forward.1} parent=0 // pred_region
    _
  $region17: #{critic_forward.1} parent=0 // pred_fallthru
    _
  // Predicated region
  $region18: #{critic_forward.1} parent=0 // pred_check
    _
  $region19: #{critic_forward.1} parent=0 // pred_check_branch
    %27 = sbr.rel (0) target = $region21
  $region20: #{critic_forward.1} parent=0 // pred_region
    _
  $region21: #{critic_forward.1} parent=0 // pred_fallthru
    _
  // Predicated region
  $region22: #{critic_forward.1} parent=0 // pred_check
    _
  $region23: #{critic_forward.1} parent=0 // pred_check_branch
    %29 = sbr.rel (0) target = $region25
  $region24: #{critic_forward.1} parent=0 // pred_region
    _
  $region25: #{critic_forward.1} parent=0 // pred_fallthru
    _
  // Predicated region
  $region26: #{critic_forward.1} parent=0 // pred_check
    _
  $region27: #{critic_forward.1} parent=0 // pred_check_branch
    %31 = sbr.rel (0) target = $region29
  $region28: #{critic_forward.1} parent=0 // pred_region
    _
  $region29: #{critic_forward.1} parent=0 // pred_fallthru
    _
  // Predicated region
  $region30: #{critic_forward.1} parent=0 // pred_check
    _
  $region31: #{critic_forward.1} parent=0 // pred_check_branch
    %33 = sbr.rel (0) target = $region33
  $region32: #{critic_forward.1} parent=0 // pred_region
    _
  $region33: #{critic_forward.1} parent=0 // pred_fallthru
    _
  // Predicated region
  $region34: #{critic_forward.1} parent=0 // pred_check
    _
  $region35: #{critic_forward.1} parent=0 // pred_check_branch
    %35 = sbr.rel (0) target = $region37
  $region36: #{critic_forward.1} parent=0 // pred_region
    _
  $region37: #{critic_forward.1} parent=0 // pred_fallthru
    _
  // Predicated region
  $region38: #{critic_forward.1} parent=0 // pred_check
    _
  $region39: #{critic_forward.1} parent=0 // pred_check_branch
    %37 = sbr.rel (0) target = $region41
  $region40: #{critic_forward.1} parent=0 // pred_region
    _
  $region41: #{critic_forward.1} parent=0 // pred_fallthru
    _
  // Predicated region
  $region42: #{critic_forward.1} parent=0 // pred_check
    _
  $region43: #{critic_forward.1} parent=0 // pred_check_branch
    %39 = sbr.rel (0) target = $region45
  $region44: #{critic_forward.1} parent=0 // pred_region
    _
  $region45: #{critic_forward.1} parent=0 // pred_fallthru
    _
  %v40 = vld [vmem:[%s0] sm:$0xff]
  %v41 = vld [vmem:[%s0 + $0x8] sm:$0xff]
  %v42 = vld [vmem:[%s0 + $0x10] sm:$0xff]
  %v43 = vld [vmem:[%s0 + $0x18] sm:$0xff]
  %v44 = vld [vmem:[%s0 + $0x20] sm:$0xff]
  %v45 = vld [vmem:[%s0 + $0x28] sm:$0xff]
  %v46 = vld [vmem:[%s0 + $0x30] sm:$0xff]
  %v47 = vld [vmem:[%s0 + $0x38] sm:$0xff]
  %v48 = vld [vmem:[%s0 + $0x40] sm:$0xff]
  %v49 = vld [vmem:[%s0 + $0x48] sm:$0xff]
  %v50 = vld [vmem:[%s0 + $0x50] sm:$0xff]
  %v51 = vld [vmem:[%s0 + $0x58] sm:$0xff]
  %v52 = vld [vmem:[%s0 + $0x60] sm:$0xff]
  %v53 = vld [vmem:[%s0 + $0x68] sm:$0xff]
  %v54 = vld [vmem:[%s0 + $0x70] sm:$0xff]
  %v55 = vld [vmem:[%s0 + $0x78] sm:$0xff]
  %v56 = vld [vmem:[%s0 + $0x80] sm:$0xff]
  %v57 = vld [vmem:[%s0 + $0x88] sm:$0xff]
  %v58 = vld [vmem:[%s0 + $0x90] sm:$0xff]
  %v59 = vld [vmem:[%s0 + $0x98] sm:$0xff]
  %v60 = vld [vmem:[%s0 + $0xa0] sm:$0xff]
  %v61 = vld [vmem:[%s0 + $0xa8] sm:$0xff]
  %v62 = vld [vmem:[%s0 + $0xb0] sm:$0xff]
  %v63 = vld [vmem:[%s0 + $0xb8] sm:$0xff]
  %v64 = vld [vmem:[%s0 + $0xc0] sm:$0xff]
  %v65 = vld [vmem:[%s0 + $0xc8] sm:$0xff]
  %v66 = vld [vmem:[%s0 + $0xd0] sm:$0xff]
  %v67 = vld [vmem:[%s0 + $0xd8] sm:$0xff]
  %v68 = vld [vmem:[%s0 + $0xe0] sm:$0xff]
  %v69 = vld [vmem:[%s0 + $0xe8] sm:$0xff]
  %v70 = vld [vmem:[%s0 + $0xf0] sm:$0xff]
  %v71 = vld [vmem:[%s0 + $0xf8] sm:$0xff]
  %v72 = vld [vmem:[%s0 + $0x100] sm:$0xff]
  %v73 = vld [vmem:[%s0 + $0x108] sm:$0xff]
  %v74 = vld [vmem:[%s0 + $0x110] sm:$0xff]
  %v75 = vld [vmem:[%s0 + $0x118] sm:$0xff]
  %v76 = vld [vmem:[%s0 + $0x120] sm:$0xff]
  %v77 = vld [vmem:[%s0 + $0x128] sm:$0xff]
  %v78 = vld [vmem:[%s0 + $0x130] sm:$0xff]
  %v79 = vld [vmem:[%s0 + $0x138] sm:$0xff]
  %v80 = vld [vmem:[%s0 + $0x140] sm:$0xff]
  %v81 = vld [vmem:[%s0 + $0x148] sm:$0xff]
  %v82 = vld [vmem:[%s0 + $0x150] sm:$0xff]
  %v83 = vld [vmem:[%s0 + $0x158] sm:$0xff]
  %v84 = vld [vmem:[%s0 + $0x160] sm:$0xff]
  %v85 = vld [vmem:[%s0 + $0x168] sm:$0xff]
  %v86 = vld [vmem:[%s0 + $0x170] sm:$0xff]
  %v87 = vld [vmem:[%s0 + $0x178] sm:$0xff]
  %v88 = vld [vmem:[%s0 + $0x180] sm:$0xff]
  %v89 = vld [vmem:[%s0 + $0x188] sm:$0xff]
  %v90 = vld [vmem:[%s0 + $0x190] sm:$0xff]
  %v91 = vld [vmem:[%s0 + $0x198] sm:$0xff]
  %v92 = vld [vmem:[%s0 + $0x1a0] sm:$0xff]
  %v93 = vld [vmem:[%s0 + $0x1a8] sm:$0xff]
  %v94 = vld [vmem:[%s0 + $0x1b0] sm:$0xff]
  %v95 = vld [vmem:[%s0 + $0x1b8] sm:$0xff]
  %v96 = vld [vmem:[%s0 + $0x1c0] sm:$0xff]
  %v97 = vld [vmem:[%s0 + $0x1c8] sm:$0xff]
  %v98 = vld [vmem:[%s0 + $0x1d0] sm:$0xff]
  %v99 = vld [vmem:[%s0 + $0x1d8] sm:$0xff]
  %s100 = scalar_lea.vmem %s0, 48
  %v101 = vld [vmem:[%s100] sm:$0xff]
  %v102 = vld [vmem:[%s100 + $0x8] sm:$0xff]
  %v103 = vld [vmem:[%s100 + $0x10] sm:$0xff]
  %v104 = vld [vmem:[%s100 + $0x18] sm:$0xff]
  %v105 = vld [vmem:[%s100 + $0x20] sm:$0xff]
  %v106 = vld [vmem:[%s100 + $0x28] sm:$0xff]
  %v107 = vld [vmem:[%s100 + $0x30] sm:$0xff]
  %v108 = vld [vmem:[%s100 + $0x38] sm:$0xff]
  %v109 = vld [vmem:[%s100 + $0x40] sm:$0xff]
  %v110 = vld [vmem:[%s100 + $0x48] sm:$0xff]
  %v111 = vld [vmem:[%s100 + $0x50] sm:$0xff]
  %v112 = vld [vmem:[%s100 + $0x58] sm:$0xff]
  %v113 = vld [vmem:[%s100 + $0x60] sm:$0xff]
  %v114 = vld [vmem:[%s100 + $0x68] sm:$0xff]
  %v115 = vld [vmem:[%s100 + $0x70] sm:$0xff]
  %v116 = vld [vmem:[%s100 + $0x78] sm:$0xff]
  %v117 = vld [vmem:[%s100 + $0x80] sm:$0xff]
  %v118 = vld [vmem:[%s100 + $0x88] sm:$0xff]
  %v119 = vld [vmem:[%s100 + $0x90] sm:$0xff]
  %v120 = vld [vmem:[%s100 + $0x98] sm:$0xff]
  %v121 = vld [vmem:[%s100 + $0xa0] sm:$0xff]
  %v122 = vld [vmem:[%s100 + $0xa8] sm:$0xff]
  %v123 = vld [vmem:[%s100 + $0xb0] sm:$0xff]
  %v124 = vld [vmem:[%s100 + $0xb8] sm:$0xff]
  %v125 = vld [vmem:[%s100 + $0xc0] sm:$0xff]
  %v126 = vld [vmem:[%s100 + $0xc8] sm:$0xff]
  %v127 = vld [vmem:[%s100 + $0xd0] sm:$0xff]
  %v128 = vld [vmem:[%s100 + $0xd8] sm:$0xff]
  %v129 = vld [vmem:[%s100 + $0xe0] sm:$0xff]
  %v130 = vld [vmem:[%s100 + $0xe8] sm:$0xff]
  %v131 = vld [vmem:[%s100 + $0xf0] sm:$0xff]
  %v132 = vld [vmem:[%s100 + $0xf8] sm:$0xff]
  %v133 = vld [vmem:[%s100 + $0x100] sm:$0xff]
  %v134 = vld [vmem:[%s100 + $0x108] sm:$0xff]
  %v135 = vld [vmem:[%s100 + $0x110] sm:$0xff]
  %v136 = vld [vmem:[%s100 + $0x118] sm:$0xff]
  %v137 = vld [vmem:[%s100 + $0x120] sm:$0xff]
  %v138 = vld [vmem:[%s100 + $0x128] sm:$0xff]
  %v139 = vld [vmem:[%s100 + $0x130] sm:$0xff]
  %v140 = vld [vmem:[%s100 + $0x138] sm:$0xff]
  %v141 = vld [vmem:[%s100 + $0x140] sm:$0xff]
  %v142 = vld [vmem:[%s100 + $0x148] sm:$0xff]
  %v143 = vld [vmem:[%s100 + $0x150] sm:$0xff]
  %v144 = vld [vmem:[%s100 + $0x158] sm:$0xff]
  %v145 = vld [vmem:[%s100 + $0x160] sm:$0xff]
  %v146 = vld [vmem:[%s100 + $0x168] sm:$0xff]
  %v147 = vld [vmem:[%s100 + $0x170] sm:$0xff]
  %v148 = vld [vmem:[%s100 + $0x178] sm:$0xff]
  %v149 = vld [vmem:[%s100 + $0x180] sm:$0xff]
  %v150 = vld [vmem:[%s100 + $0x188] sm:$0xff]
  %v151 = vld [vmem:[%s100 + $0x190] sm:$0xff]
  %v152 = vld [vmem:[%s100 + $0x198] sm:$0xff]
  %v153 = vld [vmem:[%s100 + $0x1a0] sm:$0xff]
  %v154 = vld [vmem:[%s100 + $0x1a8] sm:$0xff]
  %v155 = vld [vmem:[%s100 + $0x1b0] sm:$0xff]
  %v156 = vld [vmem:[%s100 + $0x1b8] sm:$0xff]
  %v157 = vld [vmem:[%s100 + $0x1c0] sm:$0xff]
  %v158 = vld [vmem:[%s100 + $0x1c8] sm:$0xff]
  %v159 = vld [vmem:[%s100 + $0x1d0] sm:$0xff]
  %v160 = vld [vmem:[%s100 + $0x1d8] sm:$0xff]
  %v221 = vunpack.c.l.b16 %v40
  %v222 = vunpack.c.h.b16 %v40
  %v223 = vunpack.c.l.b16 %v41
  %v224 = vunpack.c.h.b16 %v41
  %v225 = vunpack.c.l.b16 %v42
  %v226 = vunpack.c.h.b16 %v42
  %v227 = vunpack.c.l.b16 %v43
  %v228 = vunpack.c.h.b16 %v43
  %v229 = vunpack.c.l.b16 %v44
  %v230 = vunpack.c.h.b16 %v44
  %v231 = vunpack.c.l.b16 %v45
  %v232 = vunpack.c.h.b16 %v45
  %v233 = vunpack.c.l.b16 %v46
  %v234 = vunpack.c.h.b16 %v46
  %v235 = vunpack.c.l.b16 %v47
  %v236 = vunpack.c.h.b16 %v47
  %v237 = vunpack.c.l.b16 %v48
  %v238 = vunpack.c.h.b16 %v48
  %v239 = vunpack.c.l.b16 %v49
  %v240 = vunpack.c.h.b16 %v49
  %v241 = vunpack.c.l.b16 %v50
  %v242 = vunpack.c.h.b16 %v50
  %v243 = vunpack.c.l.b16 %v51
  %v244 = vunpack.c.h.b16 %v51
  %v245 = vunpack.c.l.b16 %v52
  %v246 = vunpack.c.h.b16 %v52
  %v247 = vunpack.c.l.b16 %v53
  %v248 = vunpack.c.h.b16 %v53
  %v249 = vunpack.c.l.b16 %v54
  %v250 = vunpack.c.h.b16 %v54
  %v251 = vunpack.c.l.b16 %v55
  %v252 = vunpack.c.h.b16 %v55
  %v253 = vunpack.c.l.b16 %v56
  %v254 = vunpack.c.h.b16 %v56
  %v255 = vunpack.c.l.b16 %v57
  %v256 = vunpack.c.h.b16 %v57
  %v257 = vunpack.c.l.b16 %v58
  %v258 = vunpack.c.h.b16 %v58
  %v259 = vunpack.c.l.b16 %v59
  %v260 = vunpack.c.h.b16 %v59
  %v261 = vunpack.c.l.b16 %v60
  %v262 = vunpack.c.h.b16 %v60
  %v263 = vunpack.c.l.b16 %v61
  %v264 = vunpack.c.h.b16 %v61
  %v265 = vunpack.c.l.b16 %v62
  %v266 = vunpack.c.h.b16 %v62
  %v267 = vunpack.c.l.b16 %v63
  %v268 = vunpack.c.h.b16 %v63
  %v269 = vunpack.c.l.b16 %v64
  %v270 = vunpack.c.h.b16 %v64
  %v271 = vunpack.c.l.b16 %v65
  %v272 = vunpack.c.h.b16 %v65
  %v273 = vunpack.c.l.b16 %v66
  %v274 = vunpack.c.h.b16 %v66
  %v275 = vunpack.c.l.b16 %v67
  %v276 = vunpack.c.h.b16 %v67
  %v277 = vunpack.c.l.b16 %v68
  %v278 = vunpack.c.h.b16 %v68
  %v279 = vunpack.c.l.b16 %v69
  %v280 = vunpack.c.h.b16 %v69
  %v281 = vunpack.c.l.b16 %v70
  %v282 = vunpack.c.h.b16 %v70
  %v283 = vunpack.c.l.b16 %v71
  %v284 = vunpack.c.h.b16 %v71
  %v285 = vunpack.c.l.b16 %v72
  %v286 = vunpack.c.h.b16 %v72
  %v287 = vunpack.c.l.b16 %v73
  %v288 = vunpack.c.h.b16 %v73
  %v289 = vunpack.c.l.b16 %v74
  %v290 = vunpack.c.h.b16 %v74
  %v291 = vunpack.c.l.b16 %v75
  %v292 = vunpack.c.h.b16 %v75
  %v293 = vunpack.c.l.b16 %v76
  %v294 = vunpack.c.h.b16 %v76
  %v295 = vunpack.c.l.b16 %v77
  %v296 = vunpack.c.h.b16 %v77
  %v297 = vunpack.c.l.b16 %v78
  %v298 = vunpack.c.h.b16 %v78
  %v299 = vunpack.c.l.b16 %v79
  %v300 = vunpack.c.h.b16 %v79
  %v301 = vunpack.c.l.b16 %v80
  %v302 = vunpack.c.h.b16 %v80
  %v303 = vunpack.c.l.b16 %v81
  %v304 = vunpack.c.h.b16 %v81
  %v305 = vunpack.c.l.b16 %v82
  %v306 = vunpack.c.h.b16 %v82
  %v307 = vunpack.c.l.b16 %v83
  %v308 = vunpack.c.h.b16 %v83
  %v309 = vunpack.c.l.b16 %v84
  %v310 = vunpack.c.h.b16 %v84
  %v311 = vunpack.c.l.b16 %v85
  %v312 = vunpack.c.h.b16 %v85
  %v313 = vunpack.c.l.b16 %v86
  %v314 = vunpack.c.h.b16 %v86
  %v315 = vunpack.c.l.b16 %v87
  %v316 = vunpack.c.h.b16 %v87
  %v317 = vunpack.c.l.b16 %v88
  %v318 = vunpack.c.h.b16 %v88
  %v319 = vunpack.c.l.b16 %v89
  %v320 = vunpack.c.h.b16 %v89
  %v321 = vunpack.c.l.b16 %v90
  %v322 = vunpack.c.h.b16 %v90
  %v323 = vunpack.c.l.b16 %v91
  %v324 = vunpack.c.h.b16 %v91
  %v325 = vunpack.c.l.b16 %v92
  %v326 = vunpack.c.h.b16 %v92
  %v327 = vunpack.c.l.b16 %v93
  %v328 = vunpack.c.h.b16 %v93
  %v329 = vunpack.c.l.b16 %v94
  %v330 = vunpack.c.h.b16 %v94
  %v331 = vunpack.c.l.b16 %v95
  %v332 = vunpack.c.h.b16 %v95
  %v333 = vunpack.c.l.b16 %v96
  %v334 = vunpack.c.h.b16 %v96
  %v335 = vunpack.c.l.b16 %v97
  %v336 = vunpack.c.h.b16 %v97
  %v337 = vunpack.c.l.b16 %v98
  %v338 = vunpack.c.h.b16 %v98
  %v339 = vunpack.c.l.b16 %v99
  %v340 = vunpack.c.h.b16 %v99
  %v341 = vpack.c.b16 %v227, %v221
  %v342 = vpack.c.b16 %v228, %v222
  %v343 = vpack.c.b16 %v229, %v223
  %v344 = vpack.c.b16 %v230, %v224
  %v345 = vpack.c.b16 %v231, %v225
  %v346 = vpack.c.b16 %v232, %v226
  %v347 = vpack.c.b16 %v239, %v233
  %v348 = vpack.c.b16 %v240, %v234
  %v349 = vpack.c.b16 %v241, %v235
  %v350 = vpack.c.b16 %v242, %v236
  %v351 = vpack.c.b16 %v243, %v237
  %v352 = vpack.c.b16 %v244, %v238
  %v353 = vpack.c.b16 %v251, %v245
  %v354 = vpack.c.b16 %v252, %v246
  %v355 = vpack.c.b16 %v253, %v247
  %v356 = vpack.c.b16 %v254, %v248
  %v357 = vpack.c.b16 %v255, %v249
  %v358 = vpack.c.b16 %v256, %v250
  %v359 = vpack.c.b16 %v263, %v257
  %v360 = vpack.c.b16 %v264, %v258
  %v361 = vpack.c.b16 %v265, %v259
  %v362 = vpack.c.b16 %v266, %v260
  %v363 = vpack.c.b16 %v267, %v261
  %v364 = vpack.c.b16 %v268, %v262
  %v365 = vpack.c.b16 %v275, %v269
  %v366 = vpack.c.b16 %v276, %v270
  %v367 = vpack.c.b16 %v277, %v271
  %v368 = vpack.c.b16 %v278, %v272
  %v369 = vpack.c.b16 %v279, %v273
  %v370 = vpack.c.b16 %v280, %v274
  %v371 = vpack.c.b16 %v287, %v281
  %v372 = vpack.c.b16 %v288, %v282
  %v373 = vpack.c.b16 %v289, %v283
  %v374 = vpack.c.b16 %v290, %v284
  %v375 = vpack.c.b16 %v291, %v285
  %v376 = vpack.c.b16 %v292, %v286
  %v377 = vpack.c.b16 %v299, %v293
  %v378 = vpack.c.b16 %v300, %v294
  %v379 = vpack.c.b16 %v301, %v295
  %v380 = vpack.c.b16 %v302, %v296
  %v381 = vpack.c.b16 %v303, %v297
  %v382 = vpack.c.b16 %v304, %v298
  %v383 = vpack.c.b16 %v311, %v305
  %v384 = vpack.c.b16 %v312, %v306
  %v385 = vpack.c.b16 %v313, %v307
  %v386 = vpack.c.b16 %v314, %v308
  %v387 = vpack.c.b16 %v315, %v309
  %v388 = vpack.c.b16 %v316, %v310
  %v389 = vpack.c.b16 %v323, %v317
  %v390 = vpack.c.b16 %v324, %v318
  %v391 = vpack.c.b16 %v325, %v319
  %v392 = vpack.c.b16 %v326, %v320
  %v393 = vpack.c.b16 %v327, %v321
  %v394 = vpack.c.b16 %v328, %v322
  %v395 = vpack.c.b16 %v335, %v329
  %v396 = vpack.c.b16 %v336, %v330
  %v397 = vpack.c.b16 %v337, %v331
  %v398 = vpack.c.b16 %v338, %v332
  %v399 = vpack.c.b16 %v339, %v333
  %v400 = vpack.c.b16 %v340, %v334
  %v511 = vunpack.c.l.b16 %v101
  %v512 = vunpack.c.h.b16 %v101
  %v513 = vunpack.c.l.b16 %v102
  %v514 = vunpack.c.h.b16 %v102
  %v515 = vunpack.c.l.b16 %v103
  %v516 = vunpack.c.h.b16 %v103
  %v517 = vunpack.c.l.b16 %v104
  %v518 = vunpack.c.h.b16 %v104
  %v519 = vunpack.c.l.b16 %v105
  %v520 = vunpack.c.h.b16 %v105
  %v521 = vunpack.c.l.b16 %v106
  %v522 = vunpack.c.h.b16 %v106
  %v523 = vunpack.c.l.b16 %v107
  %v524 = vunpack.c.h.b16 %v107
  %v525 = vunpack.c.l.b16 %v108
  %v526 = vunpack.c.h.b16 %v108
  %v527 = vunpack.c.l.b16 %v109
  %v528 = vunpack.c.h.b16 %v109
  %v529 = vunpack.c.l.b16 %v110
  %v530 = vunpack.c.h.b16 %v110
  %v531 = vunpack.c.l.b16 %v111
  %v532 = vunpack.c.h.b16 %v111
  %v533 = vunpack.c.l.b16 %v112
  %v534 = vunpack.c.h.b16 %v112
  %v535 = vunpack.c.l.b16 %v113
  %v536 = vunpack.c.h.b16 %v113
  %v537 = vunpack.c.l.b16 %v114
  %v538 = vunpack.c.h.b16 %v114
  %v539 = vunpack.c.l.b16 %v115
  %v540 = vunpack.c.h.b16 %v115
  %v541 = vunpack.c.l.b16 %v116
  %v542 = vunpack.c.h.b16 %v116
  %v543 = vunpack.c.l.b16 %v117
  %v544 = vunpack.c.h.b16 %v117
  %v545 = vunpack.c.l.b16 %v118
  %v546 = vunpack.c.h.b16 %v118
  %v547 = vunpack.c.l.b16 %v119
  %v548 = vunpack.c.h.b16 %v119
  %v549 = vunpack.c.l.b16 %v120
  %v550 = vunpack.c.h.b16 %v120
  %v551 = vunpack.c.l.b16 %v121
  %v552 = vunpack.c.h.b16 %v121
  %v553 = vunpack.c.l.b16 %v122
  %v554 = vunpack.c.h.b16 %v122
  %v555 = vunpack.c.l.b16 %v123
  %v556 = vunpack.c.h.b16 %v123
  %v557 = vunpack.c.l.b16 %v124
  %v558 = vunpack.c.h.b16 %v124
  %v559 = vunpack.c.l.b16 %v125
  %v560 = vunpack.c.h.b16 %v125
  %v561 = vunpack.c.l.b16 %v126
  %v562 = vunpack.c.h.b16 %v126
  %v563 = vunpack.c.l.b16 %v127
  %v564 = vunpack.c.h.b16 %v127
  %v565 = vunpack.c.l.b16 %v128
  %v566 = vunpack.c.h.b16 %v128
  %v567 = vunpack.c.l.b16 %v129
  %v568 = vunpack.c.h.b16 %v129
  %v569 = vunpack.c.l.b16 %v130
  %v570 = vunpack.c.h.b16 %v130
  %v571 = vunpack.c.l.b16 %v131
  %v572 = vunpack.c.h.b16 %v131
  %v573 = vunpack.c.l.b16 %v132
  %v574 = vunpack.c.h.b16 %v132
  %v575 = vunpack.c.l.b16 %v133
  %v576 = vunpack.c.h.b16 %v133
  %v577 = vunpack.c.l.b16 %v134
  %v578 = vunpack.c.h.b16 %v134
  %v579 = vunpack.c.l.b16 %v135
  %v580 = vunpack.c.h.b16 %v135
  %v581 = vunpack.c.l.b16 %v136
  %v582 = vunpack.c.h.b16 %v136
  %v583 = vunpack.c.l.b16 %v137
  %v584 = vunpack.c.h.b16 %v137
  %v585 = vunpack.c.l.b16 %v138
  %v586 = vunpack.c.h.b16 %v138
  %v587 = vunpack.c.l.b16 %v139
  %v588 = vunpack.c.h.b16 %v139
  %v589 = vunpack.c.l.b16 %v140
  %v590 = vunpack.c.h.b16 %v140
  %v591 = vunpack.c.l.b16 %v141
  %v592 = vunpack.c.h.b16 %v141
  %v593 = vunpack.c.l.b16 %v142
  %v594 = vunpack.c.h.b16 %v142
  %v595 = vunpack.c.l.b16 %v143
  %v596 = vunpack.c.h.b16 %v143
  %v597 = vunpack.c.l.b16 %v144
  %v598 = vunpack.c.h.b16 %v144
  %v599 = vunpack.c.l.b16 %v145
  %v600 = vunpack.c.h.b16 %v145
  %v601 = vunpack.c.l.b16 %v146
  %v602 = vunpack.c.h.b16 %v146
  %v603 = vunpack.c.l.b16 %v147
  %v604 = vunpack.c.h.b16 %v147
  %v605 = vunpack.c.l.b16 %v148
  %v606 = vunpack.c.h.b16 %v148
  %v607 = vunpack.c.l.b16 %v149
  %v608 = vunpack.c.h.b16 %v149
  %v609 = vunpack.c.l.b16 %v150
  %v610 = vunpack.c.h.b16 %v150
  %v611 = vunpack.c.l.b16 %v151
  %v612 = vunpack.c.h.b16 %v151
  %v613 = vunpack.c.l.b16 %v152
  %v614 = vunpack.c.h.b16 %v152
  %v615 = vunpack.c.l.b16 %v153
  %v616 = vunpack.c.h.b16 %v153
  %v617 = vunpack.c.l.b16 %v154
  %v618 = vunpack.c.h.b16 %v154
  %v619 = vunpack.c.l.b16 %v155
  %v620 = vunpack.c.h.b16 %v155
  %v621 = vunpack.c.l.b16 %v156
  %v622 = vunpack.c.h.b16 %v156
  %v623 = vunpack.c.l.b16 %v157
  %v624 = vunpack.c.h.b16 %v157
  %v625 = vunpack.c.l.b16 %v158
  %v626 = vunpack.c.h.b16 %v158
  %v627 = vunpack.c.l.b16 %v159
  %v628 = vunpack.c.h.b16 %v159
  %v629 = vunpack.c.l.b16 %v160
  %v630 = vunpack.c.h.b16 %v160
  %v631 = vpack.c.b16 %v517, %v511
  %v632 = vpack.c.b16 %v518, %v512
  %v633 = vpack.c.b16 %v519, %v513
  %v634 = vpack.c.b16 %v520, %v514
  %v635 = vpack.c.b16 %v521, %v515
  %v636 = vpack.c.b16 %v522, %v516
  %v637 = vpack.c.b16 %v529, %v523
  %v638 = vpack.c.b16 %v530, %v524
  %v639 = vpack.c.b16 %v531, %v525
  %v640 = vpack.c.b16 %v532, %v526
  %v641 = vpack.c.b16 %v533, %v527
  %v642 = vpack.c.b16 %v534, %v528
  %v643 = vpack.c.b16 %v541, %v535
  %v644 = vpack.c.b16 %v542, %v536
  %v645 = vpack.c.b16 %v543, %v537
  %v646 = vpack.c.b16 %v544, %v538
  %v647 = vpack.c.b16 %v545, %v539
  %v648 = vpack.c.b16 %v546, %v540
  %v649 = vpack.c.b16 %v553, %v547
  %v650 = vpack.c.b16 %v554, %v548
  %v651 = vpack.c.b16 %v555, %v549
  %v652 = vpack.c.b16 %v556, %v550
  %v653 = vpack.c.b16 %v557, %v551
  %v654 = vpack.c.b16 %v558, %v552
  %v655 = vpack.c.b16 %v565, %v559
  %v656 = vpack.c.b16 %v566, %v560
  %v657 = vpack.c.b16 %v567, %v561
  %v658 = vpack.c.b16 %v568, %v562
  %v659 = vpack.c.b16 %v569, %v563
  %v660 = vpack.c.b16 %v570, %v564
  %v661 = vpack.c.b16 %v577, %v571
  %v662 = vpack.c.b16 %v578, %v572
  %v663 = vpack.c.b16 %v579, %v573
  %v664 = vpack.c.b16 %v580, %v574
  %v665 = vpack.c.b16 %v581, %v575
  %v666 = vpack.c.b16 %v582, %v576
  %v667 = vpack.c.b16 %v589, %v583
  %v668 = vpack.c.b16 %v590, %v584
  %v669 = vpack.c.b16 %v591, %v585
  %v670 = vpack.c.b16 %v592, %v586
  %v671 = vpack.c.b16 %v593, %v587
  %v672 = vpack.c.b16 %v594, %v588
  %v673 = vpack.c.b16 %v601, %v595
  %v674 = vpack.c.b16 %v602, %v596
  %v675 = vpack.c.b16 %v603, %v597
  %v676 = vpack.c.b16 %v604, %v598
  %v677 = vpack.c.b16 %v605, %v599
  %v678 = vpack.c.b16 %v606, %v600
  %v679 = vpack.c.b16 %v613, %v607
  %v680 = vpack.c.b16 %v614, %v608
  %v681 = vpack.c.b16 %v615, %v609
  %v682 = vpack.c.b16 %v616, %v610
  %v683 = vpack.c.b16 %v617, %v611
  %v684 = vpack.c.b16 %v618, %v612
  %v685 = vpack.c.b16 %v625, %v619
  %v686 = vpack.c.b16 %v626, %v620
  %v687 = vpack.c.b16 %v627, %v621
  %v688 = vpack.c.b16 %v628, %v622
  %v689 = vpack.c.b16 %v629, %v623
  %v690 = vpack.c.b16 %v630, %v624
  %691 = vrot.lane.b32.xlu0 %v631, 64
  %v692 = vpop.permute.xlu0 %691
  %693 = vrot.lane.b32.xlu0 %v632, 64
  %v694 = vpop.permute.xlu0 %693
  %695 = vrot.lane.b32.xlu0 %v633, 64
  %v696 = vpop.permute.xlu0 %695
  %697 = vrot.lane.b32.xlu0 %v634, 64
  %v698 = vpop.permute.xlu0 %697
  %699 = vrot.lane.b32.xlu0 %v635, 64
  %v700 = vpop.permute.xlu0 %699
  %701 = vrot.lane.b32.xlu0 %v636, 64
  %v702 = vpop.permute.xlu0 %701
  %703 = vrot.lane.b32.xlu0 %v637, 64
  %v704 = vpop.permute.xlu0 %703
  %705 = vrot.lane.b32.xlu0 %v638, 64
  %v706 = vpop.permute.xlu0 %705
  %707 = vrot.lane.b32.xlu0 %v639, 64
  %v708 = vpop.permute.xlu0 %707
  %709 = vrot.lane.b32.xlu0 %v640, 64
  %v710 = vpop.permute.xlu0 %709
  %711 = vrot.lane.b32.xlu0 %v641, 64
  %v712 = vpop.permute.xlu0 %711
  %713 = vrot.lane.b32.xlu0 %v642, 64
  %v714 = vpop.permute.xlu0 %713
  %715 = vrot.lane.b32.xlu0 %v643, 64
  %v716 = vpop.permute.xlu0 %715
  %717 = vrot.lane.b32.xlu0 %v644, 64
  %v718 = vpop.permute.xlu0 %717
  %719 = vrot.lane.b32.xlu0 %v645, 64
  %v720 = vpop.permute.xlu0 %719
  %721 = vrot.lane.b32.xlu0 %v646, 64
  %v722 = vpop.permute.xlu0 %721
  %723 = vrot.lane.b32.xlu0 %v647, 64
  %v724 = vpop.permute.xlu0 %723
  %725 = vrot.lane.b32.xlu0 %v648, 64
  %v726 = vpop.permute.xlu0 %725
  %727 = vrot.lane.b32.xlu0 %v649, 64
  %v728 = vpop.permute.xlu0 %727
  %729 = vrot.lane.b32.xlu0 %v650, 64
  %v730 = vpop.permute.xlu0 %729
  %731 = vrot.lane.b32.xlu0 %v651, 64
  %v732 = vpop.permute.xlu0 %731
  %733 = vrot.lane.b32.xlu0 %v652, 64
  %v734 = vpop.permute.xlu0 %733
  %735 = vrot.lane.b32.xlu0 %v653, 64
  %v736 = vpop.permute.xlu0 %735
  %737 = vrot.lane.b32.xlu0 %v654, 64
  %v738 = vpop.permute.xlu0 %737
  %739 = vrot.lane.b32.xlu0 %v655, 64
  %v740 = vpop.permute.xlu0 %739
  %741 = vrot.lane.b32.xlu0 %v656, 64
  %v742 = vpop.permute.xlu0 %741
  %743 = vrot.lane.b32.xlu0 %v657, 64
  %v744 = vpop.permute.xlu0 %743
  %745 = vrot.lane.b32.xlu0 %v658, 64
  %v746 = vpop.permute.xlu0 %745
  %747 = vrot.lane.b32.xlu0 %v659, 64
  %v748 = vpop.permute.xlu0 %747
  %749 = vrot.lane.b32.xlu0 %v660, 64
  %v750 = vpop.permute.xlu0 %749
  %751 = vrot.lane.b32.xlu0 %v661, 64
  %v752 = vpop.permute.xlu0 %751
  %753 = vrot.lane.b32.xlu0 %v662, 64
  %v754 = vpop.permute.xlu0 %753
  %755 = vrot.lane.b32.xlu0 %v663, 64
  %v756 = vpop.permute.xlu0 %755
  %757 = vrot.lane.b32.xlu0 %v664, 64
  %v758 = vpop.permute.xlu0 %757
  %759 = vrot.lane.b32.xlu0 %v665, 64
  %v760 = vpop.permute.xlu0 %759
  %761 = vrot.lane.b32.xlu0 %v666, 64
  %v762 = vpop.permute.xlu0 %761
  %763 = vrot.lane.b32.xlu0 %v667, 64
  %v764 = vpop.permute.xlu0 %763
  %765 = vrot.lane.b32.xlu0 %v668, 64
  %v766 = vpop.permute.xlu0 %765
  %767 = vrot.lane.b32.xlu0 %v669, 64
  %v768 = vpop.permute.xlu0 %767
  %769 = vrot.lane.b32.xlu0 %v670, 64
  %v770 = vpop.permute.xlu0 %769
  %771 = vrot.lane.b32.xlu0 %v671, 64
  %v772 = vpop.permute.xlu0 %771
  %773 = vrot.lane.b32.xlu0 %v672, 64
  %v774 = vpop.permute.xlu0 %773
  %775 = vrot.lane.b32.xlu0 %v673, 64
  %v776 = vpop.permute.xlu0 %775
  %777 = vrot.lane.b32.xlu0 %v674, 64
  %v778 = vpop.permute.xlu0 %777
  %779 = vrot.lane.b32.xlu0 %v675, 64
  %v780 = vpop.permute.xlu0 %779
  %781 = vrot.lane.b32.xlu0 %v676, 64
  %v782 = vpop.permute.xlu0 %781
  %783 = vrot.lane.b32.xlu0 %v677, 64
  %v784 = vpop.permute.xlu0 %783
  %785 = vrot.lane.b32.xlu0 %v678, 64
  %v786 = vpop.permute.xlu0 %785
  %787 = vrot.lane.b32.xlu0 %v679, 64
  %v788 = vpop.permute.xlu0 %787
  %789 = vrot.lane.b32.xlu0 %v680, 64
  %v790 = vpop.permute.xlu0 %789
  %791 = vrot.lane.b32.xlu0 %v681, 64
  %v792 = vpop.permute.xlu0 %791
  %793 = vrot.lane.b32.xlu0 %v682, 64
  %v794 = vpop.permute.xlu0 %793
  %795 = vrot.lane.b32.xlu0 %v683, 64
  %v796 = vpop.permute.xlu0 %795
  %797 = vrot.lane.b32.xlu0 %v684, 64
  %v798 = vpop.permute.xlu0 %797
  %799 = vrot.lane.b32.xlu0 %v685, 64
  %v800 = vpop.permute.xlu0 %799
  %801 = vrot.lane.b32.xlu0 %v686, 64
  %v802 = vpop.permute.xlu0 %801
  %803 = vrot.lane.b32.xlu0 %v687, 64
  %v804 = vpop.permute.xlu0 %803
  %805 = vrot.lane.b32.xlu0 %v688, 64
  %v806 = vpop.permute.xlu0 %805
  %807 = vrot.lane.b32.xlu0 %v689, 64
  %v808 = vpop.permute.xlu0 %807
  %809 = vrot.lane.b32.xlu0 %v690, 64
  %v810 = vpop.permute.xlu0 %809
  %vm811 = vcmask 523264
  %v812 = vsel %vm811, %v692, %v694
  %v813 = vsel %vm811, %v694, %v696
  %v814 = vsel %vm811, %v696, %v698
  %v815 = vsel %vm811, %v698, %v700
  %v816 = vsel %vm811, %v700, %v702
  %v817 = vsel %vm811, %v704, %v706
  %v818 = vsel %vm811, %v706, %v708
  %v819 = vsel %vm811, %v708, %v710
  %v820 = vsel %vm811, %v710, %v712
  %v821 = vsel %vm811, %v712, %v714
  %v822 = vsel %vm811, %v716, %v718
  %v823 = vsel %vm811, %v718, %v720
  %v824 = vsel %vm811, %v720, %v722
  %v825 = vsel %vm811, %v722, %v724
  %v826 = vsel %vm811, %v724, %v726
  %v827 = vsel %vm811, %v728, %v730
  %v828 = vsel %vm811, %v730, %v732
  %v829 = vsel %vm811, %v732, %v734
  %v830 = vsel %vm811, %v734, %v736
  %v831 = vsel %vm811, %v736, %v738
  %v832 = vsel %vm811, %v740, %v742
  %v833 = vsel %vm811, %v742, %v744
  %v834 = vsel %vm811, %v744, %v746
  %v835 = vsel %vm811, %v746, %v748
  %v836 = vsel %vm811, %v748, %v750
  %v837 = vsel %vm811, %v752, %v754
  %v838 = vsel %vm811, %v754, %v756
  %v839 = vsel %vm811, %v756, %v758
  %v840 = vsel %vm811, %v758, %v760
  %v841 = vsel %vm811, %v760, %v762
  %v842 = vsel %vm811, %v764, %v766
  %v843 = vsel %vm811, %v766, %v768
  %v844 = vsel %vm811, %v768, %v770
  %v845 = vsel %vm811, %v770, %v772
  %v846 = vsel %vm811, %v772, %v774
  %v847 = vsel %vm811, %v776, %v778
  %v848 = vsel %vm811, %v778, %v780
  %v849 = vsel %vm811, %v780, %v782
  %v850 = vsel %vm811, %v782, %v784
  %v851 = vsel %vm811, %v784, %v786
  %v852 = vsel %vm811, %v788, %v790
  %v853 = vsel %vm811, %v790, %v792
  %v854 = vsel %vm811, %v792, %v794
  %v855 = vsel %vm811, %v794, %v796
  %v856 = vsel %vm811, %v796, %v798
  %v857 = vsel %vm811, %v800, %v802
  %v858 = vsel %vm811, %v802, %v804
  %v859 = vsel %vm811, %v804, %v806
  %v860 = vsel %vm811, %v806, %v808
  %v861 = vsel %vm811, %v808, %v810
  %vm912 = vcmask 523264
  %v915 = vsel %vm912, %v346, %v692
  %v919 = vsel %vm912, %v352, %v704
  %v923 = vsel %vm912, %v358, %v716
  %v927 = vsel %vm912, %v364, %v728
  %v931 = vsel %vm912, %v370, %v740
  %v935 = vsel %vm912, %v376, %v752
  %v939 = vsel %vm912, %v382, %v764
  %v943 = vsel %vm912, %v388, %v776
  %v947 = vsel %vm912, %v394, %v788
  %v951 = vsel %vm912, %v400, %v800
  %v953 = vld [vmem:[%s1] sm:$0xff]
  %v954 = vld [vmem:[%s1 + $0x8] sm:$0xf]
  %v955 = vld [vmem:[%s1 + $0xc] sm:$0xff]
  %v956 = vld [vmem:[%s1 + $0x14] sm:$0xf]
  %v957 = vld [vmem:[%s1 + $0x18] sm:$0xff]
  %v958 = vld [vmem:[%s1 + $0x20] sm:$0xf]
  %v959 = vld [vmem:[%s1 + $0x24] sm:$0xff]
  %v960 = vld [vmem:[%s1 + $0x2c] sm:$0xf]
  %v961 = vld [vmem:[%s1 + $0x30] sm:$0xff]
  %v962 = vld [vmem:[%s1 + $0x38] sm:$0xf]
  %v963 = vld [vmem:[%s1 + $0x3c] sm:$0xff]
  %v964 = vld [vmem:[%s1 + $0x44] sm:$0xf]
  %v965 = vld [vmem:[%s1 + $0x48] sm:$0xff]
  %v966 = vld [vmem:[%s1 + $0x50] sm:$0xf]
  %v967 = vld [vmem:[%s1 + $0x54] sm:$0xff]
  %v968 = vld [vmem:[%s1 + $0x5c] sm:$0xf]
  %v969 = vld [vmem:[%s1 + $0x60] sm:$0xff]
  %v970 = vld [vmem:[%s1 + $0x68] sm:$0xf]
  %v971 = vld [vmem:[%s1 + $0x6c] sm:$0xff]
  %v972 = vld [vmem:[%s1 + $0x74] sm:$0xf]
  %v973 = vld [vmem:[%s1 + $0x78] sm:$0xff]
  %v974 = vld [vmem:[%s1 + $0x80] sm:$0xf]
  %v975 = vld [vmem:[%s1 + $0x84] sm:$0xff]
  %v976 = vld [vmem:[%s1 + $0x8c] sm:$0xf]
  %v977 = vld [vmem:[%s1 + $0x90] sm:$0xff]
  %v978 = vld [vmem:[%s1 + $0x98] sm:$0xf]
  %v979 = vld [vmem:[%s1 + $0x9c] sm:$0xff]
  %v980 = vld [vmem:[%s1 + $0xa4] sm:$0xf]
  %v981 = vld [vmem:[%s1 + $0xa8] sm:$0xff]
  %v982 = vld [vmem:[%s1 + $0xb0] sm:$0xf]
  %v983 = vld [vmem:[%s1 + $0xb4] sm:$0xff]
  %v984 = vld [vmem:[%s1 + $0xbc] sm:$0xf]
  %v985 = vld [vmem:[%s1 + $0xc0] sm:$0xff]
  %v986 = vld [vmem:[%s1 + $0xc8] sm:$0xf]
  %v987 = vld [vmem:[%s1 + $0xcc] sm:$0xff]
  %v988 = vld [vmem:[%s1 + $0xd4] sm:$0xf]
  %v989 = vld [vmem:[%s1 + $0xd8] sm:$0xff]
  %v990 = vld [vmem:[%s1 + $0xe0] sm:$0xf]
  %v991 = vld [vmem:[%s1 + $0xe4] sm:$0xff]
  %v992 = vld [vmem:[%s1 + $0xec] sm:$0xf]
  %v993 = vld [vmem:[%s1 + $0xf0] sm:$0xff]
  %v994 = vld [vmem:[%s1 + $0xf8] sm:$0xf]
  %v995 = vld [vmem:[%s1 + $0xfc] sm:$0xff]
  %v996 = vld [vmem:[%s1 + $0x104] sm:$0xf]
  %v997 = vld [vmem:[%s1 + $0x108] sm:$0xff]
  %v998 = vld [vmem:[%s1 + $0x110] sm:$0xf]
  %v999 = vld [vmem:[%s1 + $0x114] sm:$0xff]
  %v1000 = vld [vmem:[%s1 + $0x11c] sm:$0xf]
  %v1001 = vld [vmem:[%s1 + $0x120] sm:$0xff]
  %v1002 = vld [vmem:[%s1 + $0x128] sm:$0xf]
  %v1003 = vld [vmem:[%s1 + $0x12c] sm:$0xff]
  %v1004 = vld [vmem:[%s1 + $0x134] sm:$0xf]
  %v1005 = vld [vmem:[%s1 + $0x138] sm:$0xff]
  %v1006 = vld [vmem:[%s1 + $0x140] sm:$0xf]
  %v1007 = vld [vmem:[%s1 + $0x144] sm:$0xff]
  %v1008 = vld [vmem:[%s1 + $0x14c] sm:$0xf]
  %v1009 = vld [vmem:[%s1 + $0x150] sm:$0xff]
  %v1010 = vld [vmem:[%s1 + $0x158] sm:$0xf]
  %v1011 = vld [vmem:[%s1 + $0x15c] sm:$0xff]
  %v1012 = vld [vmem:[%s1 + $0x164] sm:$0xf]
  %v1013 = vld [vmem:[%s1 + $0x168] sm:$0xff]
  %v1014 = vld [vmem:[%s1 + $0x170] sm:$0xf]
  %v1015 = vld [vmem:[%s1 + $0x174] sm:$0xff]
  %v1016 = vld [vmem:[%s1 + $0x17c] sm:$0xf]
  %v1017 = vld [vmem:[%s1 + $0x180] sm:$0xff]
  %v1018 = vld [vmem:[%s1 + $0x188] sm:$0xf]
  %v1019 = vld [vmem:[%s1 + $0x18c] sm:$0xff]
  %v1020 = vld [vmem:[%s1 + $0x194] sm:$0xf]
  %v1021 = vld [vmem:[%s1 + $0x198] sm:$0xff]
  %v1022 = vld [vmem:[%s1 + $0x1a0] sm:$0xf]
  %v1023 = vld [vmem:[%s1 + $0x1a4] sm:$0xff]
  %v1024 = vld [vmem:[%s1 + $0x1ac] sm:$0xf]
  %v1025 = vld [vmem:[%s1 + $0x1b0] sm:$0xff]
  %v1026 = vld [vmem:[%s1 + $0x1b8] sm:$0xf]
  %v1027 = vld [vmem:[%s1 + $0x1bc] sm:$0xff]
  %v1028 = vld [vmem:[%s1 + $0x1c4] sm:$0xf]
  %v1029 = vld [vmem:[%s1 + $0x1c8] sm:$0xff]
  %v1030 = vld [vmem:[%s1 + $0x1d0] sm:$0xf]
  %v1031 = vld [vmem:[%s1 + $0x1d4] sm:$0xff]
  %v1032 = vld [vmem:[%s1 + $0x1dc] sm:$0xf]
  %v1033 = vld [vmem:[%s1 + $0x1e0] sm:$0xff]
  %v1034 = vld [vmem:[%s1 + $0x1e8] sm:$0xf]
  %v1035 = vld [vmem:[%s1 + $0x1ec] sm:$0xff]
  %v1036 = vld [vmem:[%s1 + $0x1f4] sm:$0xf]
  %v1037 = vld [vmem:[%s1 + $0x1f8] sm:$0xff]
  %v1038 = vld [vmem:[%s1 + $0x200] sm:$0xf]
  %v1039 = vld [vmem:[%s1 + $0x204] sm:$0xff]
  %v1040 = vld [vmem:[%s1 + $0x20c] sm:$0xf]
  %v1041 = vld [vmem:[%s1 + $0x210] sm:$0xff]
  %v1042 = vld [vmem:[%s1 + $0x218] sm:$0xf]
  %v1043 = vld [vmem:[%s1 + $0x21c] sm:$0xff]
  %v1044 = vld [vmem:[%s1 + $0x224] sm:$0xf]
  %v1045 = vld [vmem:[%s1 + $0x228] sm:$0xff]
  %v1046 = vld [vmem:[%s1 + $0x230] sm:$0xf]
  %v1047 = vld [vmem:[%s1 + $0x234] sm:$0xff]
  %v1048 = vld [vmem:[%s1 + $0x23c] sm:$0xf]
  %v1049 = vld [vmem:[%s1 + $0x240] sm:$0xff]
  %v1050 = vld [vmem:[%s1 + $0x248] sm:$0xf]
  %v1051 = vld [vmem:[%s1 + $0x24c] sm:$0xff]
  %v1052 = vld [vmem:[%s1 + $0x254] sm:$0xf]
  %v1053 = vld [vmem:[%s1 + $0x258] sm:$0xff]
  %v1054 = vld [vmem:[%s1 + $0x260] sm:$0xf]
  %v1055 = vld [vmem:[%s1 + $0x264] sm:$0xff]
  %v1056 = vld [vmem:[%s1 + $0x26c] sm:$0xf]
  %v1057 = vld [vmem:[%s1 + $0x270] sm:$0xff]
  %v1058 = vld [vmem:[%s1 + $0x278] sm:$0xf]
  %v1059 = vld [vmem:[%s1 + $0x27c] sm:$0xff]
  %v1060 = vld [vmem:[%s1 + $0x284] sm:$0xf]
  %v1061 = vld [vmem:[%s1 + $0x288] sm:$0xff]
  %v1062 = vld [vmem:[%s1 + $0x290] sm:$0xf]
  %v1063 = vld [vmem:[%s1 + $0x294] sm:$0xff]
  %v1064 = vld [vmem:[%s1 + $0x29c] sm:$0xf]
  %v1065 = vld [vmem:[%s1 + $0x2a0] sm:$0xff]
  %v1066 = vld [vmem:[%s1 + $0x2a8] sm:$0xf]
  %v1067 = vld [vmem:[%s1 + $0x2ac] sm:$0xff]
  %v1068 = vld [vmem:[%s1 + $0x2b4] sm:$0xf]
  %v1069 = vld [vmem:[%s1 + $0x2b8] sm:$0xff]
  %v1070 = vld [vmem:[%s1 + $0x2c0] sm:$0xf]
  %v1071 = vld [vmem:[%s1 + $0x2c4] sm:$0xff]
  %v1072 = vld [vmem:[%s1 + $0x2cc] sm:$0xf]
  %v1073 = vld [vmem:[%s1 + $0x2d0] sm:$0xff]
  %v1074 = vld [vmem:[%s1 + $0x2d8] sm:$0xf]
  %v1075 = vld [vmem:[%s1 + $0x2dc] sm:$0xff]
  %v1076 = vld [vmem:[%s1 + $0x2e4] sm:$0xf]
  %v1077 = vld [vmem:[%s1 + $0x2e8] sm:$0xff]
  %v1078 = vld [vmem:[%s1 + $0x2f0] sm:$0xf]
  %v1079 = vld [vmem:[%s1 + $0x2f4] sm:$0xff]
  %v1080 = vld [vmem:[%s1 + $0x2fc] sm:$0xf]
  %v1081 = vld [vmem:[%s1 + $0x300] sm:$0xff]
  %v1082 = vld [vmem:[%s1 + $0x308] sm:$0xf]
  %v1083 = vld [vmem:[%s1 + $0x30c] sm:$0xff]
  %v1084 = vld [vmem:[%s1 + $0x314] sm:$0xf]
  %v1085 = vld [vmem:[%s1 + $0x318] sm:$0xff]
  %v1086 = vld [vmem:[%s1 + $0x320] sm:$0xf]
  %v1087 = vld [vmem:[%s1 + $0x324] sm:$0xff]
  %v1088 = vld [vmem:[%s1 + $0x32c] sm:$0xf]
  %v1089 = vld [vmem:[%s1 + $0x330] sm:$0xff]
  %v1090 = vld [vmem:[%s1 + $0x338] sm:$0xf]
  %v1091 = vld [vmem:[%s1 + $0x33c] sm:$0xff]
  %v1092 = vld [vmem:[%s1 + $0x344] sm:$0xf]
  %v1093 = vld [vmem:[%s1 + $0x348] sm:$0xff]
  %v1094 = vld [vmem:[%s1 + $0x350] sm:$0xf]
  %v1095 = vld [vmem:[%s1 + $0x354] sm:$0xff]
  %v1096 = vld [vmem:[%s1 + $0x35c] sm:$0xf]
  %v1097 = vld [vmem:[%s1 + $0x360] sm:$0xff]
  %v1098 = vld [vmem:[%s1 + $0x368] sm:$0xf]
  %v1099 = vld [vmem:[%s1 + $0x36c] sm:$0xff]
  %v1100 = vld [vmem:[%s1 + $0x374] sm:$0xf]
  %v1101 = vld [vmem:[%s1 + $0x378] sm:$0xff]
  %v1102 = vld [vmem:[%s1 + $0x380] sm:$0xf]
  %v1103 = vld [vmem:[%s1 + $0x384] sm:$0xff]
  %v1104 = vld [vmem:[%s1 + $0x38c] sm:$0xf]
  %v1105 = vld [vmem:[%s1 + $0x390] sm:$0xff]
  %v1106 = vld [vmem:[%s1 + $0x398] sm:$0xf]
  %v1107 = vld [vmem:[%s1 + $0x39c] sm:$0xff]
  %v1108 = vld [vmem:[%s1 + $0x3a4] sm:$0xf]
  %v1109 = vld [vmem:[%s1 + $0x3a8] sm:$0xff]
  %v1110 = vld [vmem:[%s1 + $0x3b0] sm:$0xf]
  %v1111 = vld [vmem:[%s1 + $0x3b4] sm:$0xff]
  %v1112 = vld [vmem:[%s1 + $0x3bc] sm:$0xf]
  %v1113 = vld [vmem:[%s1 + $0x3c0] sm:$0xff]
  %v1114 = vld [vmem:[%s1 + $0x3c8] sm:$0xf]
  %v1115 = vld [vmem:[%s1 + $0x3cc] sm:$0xff]
  %v1116 = vld [vmem:[%s1 + $0x3d4] sm:$0xf]
  %v1117 = vld [vmem:[%s1 + $0x3d8] sm:$0xff]
  %v1118 = vld [vmem:[%s1 + $0x3e0] sm:$0xf]
  %v1119 = vld [vmem:[%s1 + $0x3e4] sm:$0xff]
  %v1120 = vld [vmem:[%s1 + $0x3ec] sm:$0xf]
  %v1121 = vld [vmem:[%s1 + $0x3f0] sm:$0xff]
  %v1122 = vld [vmem:[%s1 + $0x3f8] sm:$0xf]
  %v1123 = vld [vmem:[%s1 + $0x3fc] sm:$0xff]
  %v1124 = vld [vmem:[%s1 + $0x404] sm:$0xf]
  %v1125 = vld [vmem:[%s1 + $0x408] sm:$0xff]
  %v1126 = vld [vmem:[%s1 + $0x410] sm:$0xf]
  %v1127 = vld [vmem:[%s1 + $0x414] sm:$0xff]
  %v1128 = vld [vmem:[%s1 + $0x41c] sm:$0xf]
  %v1129 = vld [vmem:[%s1 + $0x420] sm:$0xff]
  %v1130 = vld [vmem:[%s1 + $0x428] sm:$0xf]
  %v1131 = vld [vmem:[%s1 + $0x42c] sm:$0xff]
  %v1132 = vld [vmem:[%s1 + $0x434] sm:$0xf]
  %v1133 = vld [vmem:[%s1 + $0x438] sm:$0xff]
  %v1134 = vld [vmem:[%s1 + $0x440] sm:$0xf]
  %v1135 = vld [vmem:[%s1 + $0x444] sm:$0xff]
  %v1136 = vld [vmem:[%s1 + $0x44c] sm:$0xf]
  %v1137 = vld [vmem:[%s1 + $0x450] sm:$0xff]
  %v1138 = vld [vmem:[%s1 + $0x458] sm:$0xf]
  %v1139 = vld [vmem:[%s1 + $0x45c] sm:$0xff]
  %v1140 = vld [vmem:[%s1 + $0x464] sm:$0xf]
  %v1141 = vld [vmem:[%s1 + $0x468] sm:$0xff]
  %v1142 = vld [vmem:[%s1 + $0x470] sm:$0xf]
  %v1143 = vld [vmem:[%s1 + $0x474] sm:$0xff]
  %v1144 = vld [vmem:[%s1 + $0x47c] sm:$0xf]
  %v1145 = vld [vmem:[%s1 + $0x480] sm:$0xff]
  %v1146 = vld [vmem:[%s1 + $0x488] sm:$0xf]
  %v1147 = vld [vmem:[%s1 + $0x48c] sm:$0xff]
  %v1148 = vld [vmem:[%s1 + $0x494] sm:$0xf]
  %v1149 = vld [vmem:[%s1 + $0x498] sm:$0xff]
  %v1150 = vld [vmem:[%s1 + $0x4a0] sm:$0xf]
  %v1151 = vld [vmem:[%s1 + $0x4a4] sm:$0xff]
  %v1152 = vld [vmem:[%s1 + $0x4ac] sm:$0xf]
  %v1153 = vld [vmem:[%s1 + $0x4b0] sm:$0xff]
  %v1154 = vld [vmem:[%s1 + $0x4b8] sm:$0xf]
  %v1155 = vld [vmem:[%s1 + $0x4bc] sm:$0xff]
  %v1156 = vld [vmem:[%s1 + $0x4c4] sm:$0xf]
  %v1157 = vld [vmem:[%s1 + $0x4c8] sm:$0xff]
  %v1158 = vld [vmem:[%s1 + $0x4d0] sm:$0xf]
  %v1159 = vld [vmem:[%s1 + $0x4d4] sm:$0xff]
  %v1160 = vld [vmem:[%s1 + $0x4dc] sm:$0xf]
  %v1161 = vld [vmem:[%s1 + $0x4e0] sm:$0xff]
  %v1162 = vld [vmem:[%s1 + $0x4e8] sm:$0xf]
  %v1163 = vld [vmem:[%s1 + $0x4ec] sm:$0xff]
  %v1164 = vld [vmem:[%s1 + $0x4f4] sm:$0xf]
  %v1165 = vld [vmem:[%s1 + $0x4f8] sm:$0xff]
  %v1166 = vld [vmem:[%s1 + $0x500] sm:$0xf]
  %v1167 = vld [vmem:[%s1 + $0x504] sm:$0xff]
  %v1168 = vld [vmem:[%s1 + $0x50c] sm:$0xf]
  %v1169 = vld [vmem:[%s1 + $0x510] sm:$0xff]
  %v1170 = vld [vmem:[%s1 + $0x518] sm:$0xf]
  %v1171 = vld [vmem:[%s1 + $0x51c] sm:$0xff]
  %v1172 = vld [vmem:[%s1 + $0x524] sm:$0xf]
  %v1173 = vld [vmem:[%s1 + $0x528] sm:$0xff]
  %v1174 = vld [vmem:[%s1 + $0x530] sm:$0xf]
  %v1175 = vld [vmem:[%s1 + $0x534] sm:$0xff]
  %v1176 = vld [vmem:[%s1 + $0x53c] sm:$0xf]
  %v1177 = vld [vmem:[%s1 + $0x540] sm:$0xff]
  %v1178 = vld [vmem:[%s1 + $0x548] sm:$0xf]
  %v1179 = vld [vmem:[%s1 + $0x54c] sm:$0xff]
  %v1180 = vld [vmem:[%s1 + $0x554] sm:$0xf]
  %v1181 = vld [vmem:[%s1 + $0x558] sm:$0xff]
  %v1182 = vld [vmem:[%s1 + $0x560] sm:$0xf]
  %v1183 = vld [vmem:[%s1 + $0x564] sm:$0xff]
  %v1184 = vld [vmem:[%s1 + $0x56c] sm:$0xf]
  %v1185 = vld [vmem:[%s1 + $0x570] sm:$0xff]
  %v1186 = vld [vmem:[%s1 + $0x578] sm:$0xf]
  %v1187 = vld [vmem:[%s1 + $0x57c] sm:$0xff]
  %v1188 = vld [vmem:[%s1 + $0x584] sm:$0xf]
  %v1189 = vld [vmem:[%s1 + $0x588] sm:$0xff]
  %v1190 = vld [vmem:[%s1 + $0x590] sm:$0xf]
  %v1191 = vld [vmem:[%s1 + $0x594] sm:$0xff]
  %v1192 = vld [vmem:[%s1 + $0x59c] sm:$0xf]
  %v1193 = vld [vmem:[%s1 + $0x5a0] sm:$0xff]
  %v1194 = vld [vmem:[%s1 + $0x5a8] sm:$0xf]
  %v1195 = vld [vmem:[%s1 + $0x5ac] sm:$0xff]
  %v1196 = vld [vmem:[%s1 + $0x5b4] sm:$0xf]
  %v1197 = vld [vmem:[%s1 + $0x5b8] sm:$0xff]
  %v1198 = vld [vmem:[%s1 + $0x5c0] sm:$0xf]
  %v1199 = vld [vmem:[%s1 + $0x5c4] sm:$0xff]
  %v1200 = vld [vmem:[%s1 + $0x5cc] sm:$0xf]
  %v1201 = vld [vmem:[%s1 + $0x5d0] sm:$0xff]
  %v1202 = vld [vmem:[%s1 + $0x5d8] sm:$0xf]
  %v1203 = vld [vmem:[%s1 + $0x5dc] sm:$0xff]
  %v1204 = vld [vmem:[%s1 + $0x5e4] sm:$0xf]
  %v1205 = vld [vmem:[%s1 + $0x5e8] sm:$0xff]
  %v1206 = vld [vmem:[%s1 + $0x5f0] sm:$0xf]
  %v1207 = vld [vmem:[%s1 + $0x5f4] sm:$0xff]
  %v1208 = vld [vmem:[%s1 + $0x5fc] sm:$0xf]
  %v1209 = vld [vmem:[%s1 + $0x600] sm:$0xff]
  %v1210 = vld [vmem:[%s1 + $0x608] sm:$0xf]
  %v1211 = vld [vmem:[%s1 + $0x60c] sm:$0xff]
  %v1212 = vld [vmem:[%s1 + $0x614] sm:$0xf]
  %v1213 = vld [vmem:[%s1 + $0x618] sm:$0xff]
  %v1214 = vld [vmem:[%s1 + $0x620] sm:$0xf]
  %v1215 = vld [vmem:[%s1 + $0x624] sm:$0xff]
  %v1216 = vld [vmem:[%s1 + $0x62c] sm:$0xf]
  %v1217 = vld [vmem:[%s1 + $0x630] sm:$0xff]
  %v1218 = vld [vmem:[%s1 + $0x638] sm:$0xf]
  %v1219 = vld [vmem:[%s1 + $0x63c] sm:$0xff]
  %v1220 = vld [vmem:[%s1 + $0x644] sm:$0xf]
  %v1221 = vld [vmem:[%s1 + $0x648] sm:$0xff]
  %v1222 = vld [vmem:[%s1 + $0x650] sm:$0xf]
  %v1223 = vld [vmem:[%s1 + $0x654] sm:$0xff]
  %v1224 = vld [vmem:[%s1 + $0x65c] sm:$0xf]
  %v1225 = vld [vmem:[%s1 + $0x660] sm:$0xff]
  %v1226 = vld [vmem:[%s1 + $0x668] sm:$0xf]
  %v1227 = vld [vmem:[%s1 + $0x66c] sm:$0xff]
  %v1228 = vld [vmem:[%s1 + $0x674] sm:$0xf]
  %v1229 = vld [vmem:[%s1 + $0x678] sm:$0xff]
  %v1230 = vld [vmem:[%s1 + $0x680] sm:$0xf]
  %v1231 = vld [vmem:[%s1 + $0x684] sm:$0xff]
  %v1232 = vld [vmem:[%s1 + $0x68c] sm:$0xf]
  %v1233 = vld [vmem:[%s1 + $0x690] sm:$0xff]
  %v1234 = vld [vmem:[%s1 + $0x698] sm:$0xf]
  %v1235 = vld [vmem:[%s1 + $0x69c] sm:$0xff]
  %v1236 = vld [vmem:[%s1 + $0x6a4] sm:$0xf]
  %v1237 = vld [vmem:[%s1 + $0x6a8] sm:$0xff]
  %v1238 = vld [vmem:[%s1 + $0x6b0] sm:$0xf]
  %v1239 = vld [vmem:[%s1 + $0x6b4] sm:$0xff]
  %v1240 = vld [vmem:[%s1 + $0x6bc] sm:$0xf]
  %v1241 = vld [vmem:[%s1 + $0x6c0] sm:$0xff]
  %v1242 = vld [vmem:[%s1 + $0x6c8] sm:$0xf]
  %v1243 = vld [vmem:[%s1 + $0x6cc] sm:$0xff]
  %v1244 = vld [vmem:[%s1 + $0x6d4] sm:$0xf]
  %v1245 = vld [vmem:[%s1 + $0x6d8] sm:$0xff]
  %v1246 = vld [vmem:[%s1 + $0x6e0] sm:$0xf]
  %v1247 = vld [vmem:[%s1 + $0x6e4] sm:$0xff]
  %v1248 = vld [vmem:[%s1 + $0x6ec] sm:$0xf]
  %v1249 = vld [vmem:[%s1 + $0x6f0] sm:$0xff]
  %v1250 = vld [vmem:[%s1 + $0x6f8] sm:$0xf]
  %v1251 = vld [vmem:[%s1 + $0x6fc] sm:$0xff]
  %v1252 = vld [vmem:[%s1 + $0x704] sm:$0xf]
  %v1253 = vld [vmem:[%s1 + $0x708] sm:$0xff]
  %v1254 = vld [vmem:[%s1 + $0x710] sm:$0xf]
  %v1255 = vld [vmem:[%s1 + $0x714] sm:$0xff]
  %v1256 = vld [vmem:[%s1 + $0x71c] sm:$0xf]
  %v1257 = vld [vmem:[%s1 + $0x720] sm:$0xff]
  %v1258 = vld [vmem:[%s1 + $0x728] sm:$0xf]
  %v1259 = vld [vmem:[%s1 + $0x72c] sm:$0xff]
  %v1260 = vld [vmem:[%s1 + $0x734] sm:$0xf]
  %v1261 = vld [vmem:[%s1 + $0x738] sm:$0xff]
  %v1262 = vld [vmem:[%s1 + $0x740] sm:$0xf]
  %v1263 = vld [vmem:[%s1 + $0x744] sm:$0xff]
  %v1264 = vld [vmem:[%s1 + $0x74c] sm:$0xf]
  %v1265 = vld [vmem:[%s1 + $0x750] sm:$0xff]
  %v1266 = vld [vmem:[%s1 + $0x758] sm:$0xf]
  %v1267 = vld [vmem:[%s1 + $0x75c] sm:$0xff]
  %v1268 = vld [vmem:[%s1 + $0x764] sm:$0xf]
  %v1269 = vld [vmem:[%s1 + $0x768] sm:$0xff]
  %v1270 = vld [vmem:[%s1 + $0x770] sm:$0xf]
  %v1271 = vld [vmem:[%s1 + $0x774] sm:$0xff]
  %v1272 = vld [vmem:[%s1 + $0x77c] sm:$0xf]
  %v1273 = vld [vmem:[%s1 + $0x780] sm:$0xff]
  %v1274 = vld [vmem:[%s1 + $0x788] sm:$0xf]
  %v1275 = vld [vmem:[%s1 + $0x78c] sm:$0xff]
  %v1276 = vld [vmem:[%s1 + $0x794] sm:$0xf]
  %v1277 = vld [vmem:[%s1 + $0x798] sm:$0xff]
  %v1278 = vld [vmem:[%s1 + $0x7a0] sm:$0xf]
  %v1279 = vld [vmem:[%s1 + $0x7a4] sm:$0xff]
  %v1280 = vld [vmem:[%s1 + $0x7ac] sm:$0xf]
  %v1281 = vld [vmem:[%s1 + $0x7b0] sm:$0xff]
  %v1282 = vld [vmem:[%s1 + $0x7b8] sm:$0xf]
  %v1283 = vld [vmem:[%s1 + $0x7bc] sm:$0xff]
  %v1284 = vld [vmem:[%s1 + $0x7c4] sm:$0xf]
  %v1285 = vld [vmem:[%s1 + $0x7c8] sm:$0xff]
  %v1286 = vld [vmem:[%s1 + $0x7d0] sm:$0xf]
  %v1287 = vld [vmem:[%s1 + $0x7d4] sm:$0xff]
  %v1288 = vld [vmem:[%s1 + $0x7dc] sm:$0xf]
  %v1289 = vld [vmem:[%s1 + $0x7e0] sm:$0xff]
  %v1290 = vld [vmem:[%s1 + $0x7e8] sm:$0xf]
  %v1291 = vld [vmem:[%s1 + $0x7ec] sm:$0xff]
  %v1292 = vld [vmem:[%s1 + $0x7f4] sm:$0xf]
  %v1293 = vld [vmem:[%s1 + $0x7f8] sm:$0xff]
  %v1294 = vld [vmem:[%s1 + $0x800] sm:$0xf]
  %v1295 = vld [vmem:[%s1 + $0x804] sm:$0xff]
  %v1296 = vld [vmem:[%s1 + $0x80c] sm:$0xf]
  %v1297 = vld [vmem:[%s1 + $0x810] sm:$0xff]
  %v1298 = vld [vmem:[%s1 + $0x818] sm:$0xf]
  %v1299 = vld [vmem:[%s1 + $0x81c] sm:$0xff]
  %v1300 = vld [vmem:[%s1 + $0x824] sm:$0xf]
  %v1301 = vld [vmem:[%s1 + $0x828] sm:$0xff]
  %v1302 = vld [vmem:[%s1 + $0x830] sm:$0xf]
  %v1303 = vld [vmem:[%s1 + $0x834] sm:$0xff]
  %v1304 = vld [vmem:[%s1 + $0x83c] sm:$0xf]
  %v1305 = vld [vmem:[%s2] sm:$0x7]
  %v1307 = vperm.slane %v1305, 0
  %v1308 = vperm.slane %v1305, 1
  %v1309 = vperm.slane %v1305, 2
  %v1665 = vunpack.c.l.b16 %v953
  %v1666 = vunpack.c.h.b16 %v953
  %v1667 = vunpack.c.l.b16 %v954
  %v1668 = vunpack.c.l.b16 %v955
  %v1669 = vunpack.c.h.b16 %v955
  %v1670 = vunpack.c.l.b16 %v956
  %v1671 = vunpack.c.l.b16 %v957
  %v1672 = vunpack.c.h.b16 %v957
  %v1673 = vunpack.c.l.b16 %v958
  %v1674 = vunpack.c.l.b16 %v959
  %v1675 = vunpack.c.h.b16 %v959
  %v1676 = vunpack.c.l.b16 %v960
  %v1677 = vunpack.c.l.b16 %v961
  %v1678 = vunpack.c.h.b16 %v961
  %v1679 = vunpack.c.l.b16 %v962
  %v1680 = vunpack.c.l.b16 %v963
  %v1681 = vunpack.c.h.b16 %v963
  %v1682 = vunpack.c.l.b16 %v964
  %v1683 = vunpack.c.l.b16 %v965
  %v1684 = vunpack.c.h.b16 %v965
  %v1685 = vunpack.c.l.b16 %v966
  %v1686 = vunpack.c.l.b16 %v967
  %v1687 = vunpack.c.h.b16 %v967
  %v1688 = vunpack.c.l.b16 %v968
  %v1689 = vunpack.c.l.b16 %v969
  %v1690 = vunpack.c.h.b16 %v969
  %v1691 = vunpack.c.l.b16 %v970
  %v1692 = vunpack.c.l.b16 %v971
  %v1693 = vunpack.c.h.b16 %v971
  %v1694 = vunpack.c.l.b16 %v972
  %v1695 = vunpack.c.l.b16 %v973
  %v1696 = vunpack.c.h.b16 %v973
  %v1697 = vunpack.c.l.b16 %v974
  %v1698 = vunpack.c.l.b16 %v975
  %v1699 = vunpack.c.h.b16 %v975
  %v1700 = vunpack.c.l.b16 %v976
  %v1701 = vunpack.c.l.b16 %v977
  %v1702 = vunpack.c.h.b16 %v977
  %v1703 = vunpack.c.l.b16 %v978
  %v1704 = vunpack.c.l.b16 %v979
  %v1705 = vunpack.c.h.b16 %v979
  %v1706 = vunpack.c.l.b16 %v980
  %v1707 = vunpack.c.l.b16 %v981
  %v1708 = vunpack.c.h.b16 %v981
  %v1709 = vunpack.c.l.b16 %v982
  %v1710 = vunpack.c.l.b16 %v983
  %v1711 = vunpack.c.h.b16 %v983
  %v1712 = vunpack.c.l.b16 %v984
  %v1713 = vunpack.c.l.b16 %v985
  %v1714 = vunpack.c.h.b16 %v985
  %v1715 = vunpack.c.l.b16 %v986
  %v1716 = vunpack.c.l.b16 %v987
  %v1717 = vunpack.c.h.b16 %v987
  %v1718 = vunpack.c.l.b16 %v988
  %v1719 = vunpack.c.l.b16 %v989
  %v1720 = vunpack.c.h.b16 %v989
  %v1721 = vunpack.c.l.b16 %v990
  %v1722 = vunpack.c.l.b16 %v991
  %v1723 = vunpack.c.h.b16 %v991
  %v1724 = vunpack.c.l.b16 %v992
  %v1725 = vunpack.c.l.b16 %v993
  %v1726 = vunpack.c.h.b16 %v993
  %v1727 = vunpack.c.l.b16 %v994
  %v1728 = vunpack.c.l.b16 %v995
  %v1729 = vunpack.c.h.b16 %v995
  %v1730 = vunpack.c.l.b16 %v996
  %v1731 = vunpack.c.l.b16 %v997
  %v1732 = vunpack.c.h.b16 %v997
  %v1733 = vunpack.c.l.b16 %v998
  %v1734 = vunpack.c.l.b16 %v999
  %v1735 = vunpack.c.h.b16 %v999
  %v1736 = vunpack.c.l.b16 %v1000
  %v1737 = vunpack.c.l.b16 %v1001
  %v1738 = vunpack.c.h.b16 %v1001
  %v1739 = vunpack.c.l.b16 %v1002
  %v1740 = vunpack.c.l.b16 %v1003
  %v1741 = vunpack.c.h.b16 %v1003
  %v1742 = vunpack.c.l.b16 %v1004
  %v1743 = vunpack.c.l.b16 %v1005
  %v1744 = vunpack.c.h.b16 %v1005
  %v1745 = vunpack.c.l.b16 %v1006
  %v1746 = vunpack.c.l.b16 %v1007
  %v1747 = vunpack.c.h.b16 %v1007
  %v1748 = vunpack.c.l.b16 %v1008
  %v1749 = vunpack.c.l.b16 %v1009
  %v1750 = vunpack.c.h.b16 %v1009
  %v1751 = vunpack.c.l.b16 %v1010
  %v1752 = vunpack.c.l.b16 %v1011
  %v1753 = vunpack.c.h.b16 %v1011
  %v1754 = vunpack.c.l.b16 %v1012
  %v1755 = vunpack.c.l.b16 %v1013
  %v1756 = vunpack.c.h.b16 %v1013
  %v1757 = vunpack.c.l.b16 %v1014
  %v1758 = vunpack.c.l.b16 %v1015
  %v1759 = vunpack.c.h.b16 %v1015
  %v1760 = vunpack.c.l.b16 %v1016
  %v1761 = vunpack.c.l.b16 %v1017
  %v1762 = vunpack.c.h.b16 %v1017
  %v1763 = vunpack.c.l.b16 %v1018
  %v1764 = vunpack.c.l.b16 %v1019
  %v1765 = vunpack.c.h.b16 %v1019
  %v1766 = vunpack.c.l.b16 %v1020
  %v1767 = vunpack.c.l.b16 %v1021
  %v1768 = vunpack.c.h.b16 %v1021
  %v1769 = vunpack.c.l.b16 %v1022
  %v1770 = vunpack.c.l.b16 %v1023
  %v1771 = vunpack.c.h.b16 %v1023
  %v1772 = vunpack.c.l.b16 %v1024
  %v1773 = vunpack.c.l.b16 %v1025
  %v1774 = vunpack.c.h.b16 %v1025
  %v1775 = vunpack.c.l.b16 %v1026
  %v1776 = vunpack.c.l.b16 %v1027
  %v1777 = vunpack.c.h.b16 %v1027
  %v1778 = vunpack.c.l.b16 %v1028
  %v1779 = vunpack.c.l.b16 %v1029
  %v1780 = vunpack.c.h.b16 %v1029
  %v1781 = vunpack.c.l.b16 %v1030
  %v1782 = vunpack.c.l.b16 %v1031
  %v1783 = vunpack.c.h.b16 %v1031
  %v1784 = vunpack.c.l.b16 %v1032
  %v1785 = vunpack.c.l.b16 %v1033
  %v1786 = vunpack.c.h.b16 %v1033
  %v1787 = vunpack.c.l.b16 %v1034
  %v1788 = vunpack.c.l.b16 %v1035
  %v1789 = vunpack.c.h.b16 %v1035
  %v1790 = vunpack.c.l.b16 %v1036
  %v1791 = vunpack.c.l.b16 %v1037
  %v1792 = vunpack.c.h.b16 %v1037
  %v1793 = vunpack.c.l.b16 %v1038
  %v1794 = vunpack.c.l.b16 %v1039
  %v1795 = vunpack.c.h.b16 %v1039
  %v1796 = vunpack.c.l.b16 %v1040
  %v1797 = vunpack.c.l.b16 %v1041
  %v1798 = vunpack.c.h.b16 %v1041
  %v1799 = vunpack.c.l.b16 %v1042
  %v1800 = vunpack.c.l.b16 %v1043
  %v1801 = vunpack.c.h.b16 %v1043
  %v1802 = vunpack.c.l.b16 %v1044
  %v1803 = vunpack.c.l.b16 %v1045
  %v1804 = vunpack.c.h.b16 %v1045
  %v1805 = vunpack.c.l.b16 %v1046
  %v1806 = vunpack.c.l.b16 %v1047
  %v1807 = vunpack.c.h.b16 %v1047
  %v1808 = vunpack.c.l.b16 %v1048
  %v1809 = vunpack.c.l.b16 %v1049
  %v1810 = vunpack.c.h.b16 %v1049
  %v1811 = vunpack.c.l.b16 %v1050
  %v1812 = vunpack.c.l.b16 %v1051
  %v1813 = vunpack.c.h.b16 %v1051
  %v1814 = vunpack.c.l.b16 %v1052
  %v1815 = vunpack.c.l.b16 %v1053
  %v1816 = vunpack.c.h.b16 %v1053
  %v1817 = vunpack.c.l.b16 %v1054
  %v1818 = vunpack.c.l.b16 %v1055
  %v1819 = vunpack.c.h.b16 %v1055
  %v1820 = vunpack.c.l.b16 %v1056
  %v1821 = vunpack.c.l.b16 %v1057
  %v1822 = vunpack.c.h.b16 %v1057
  %v1823 = vunpack.c.l.b16 %v1058
  %v1824 = vunpack.c.l.b16 %v1059
  %v1825 = vunpack.c.h.b16 %v1059
  %v1826 = vunpack.c.l.b16 %v1060
  %v1827 = vunpack.c.l.b16 %v1061
  %v1828 = vunpack.c.h.b16 %v1061
  %v1829 = vunpack.c.l.b16 %v1062
  %v1830 = vunpack.c.l.b16 %v1063
  %v1831 = vunpack.c.h.b16 %v1063
  %v1832 = vunpack.c.l.b16 %v1064
  %v1833 = vunpack.c.l.b16 %v1065
  %v1834 = vunpack.c.h.b16 %v1065
  %v1835 = vunpack.c.l.b16 %v1066
  %v1836 = vunpack.c.l.b16 %v1067
  %v1837 = vunpack.c.h.b16 %v1067
  %v1838 = vunpack.c.l.b16 %v1068
  %v1839 = vunpack.c.l.b16 %v1069
  %v1840 = vunpack.c.h.b16 %v1069
  %v1841 = vunpack.c.l.b16 %v1070
  %v1842 = vunpack.c.l.b16 %v1071
  %v1843 = vunpack.c.h.b16 %v1071
  %v1844 = vunpack.c.l.b16 %v1072
  %v1845 = vunpack.c.l.b16 %v1073
  %v1846 = vunpack.c.h.b16 %v1073
  %v1847 = vunpack.c.l.b16 %v1074
  %v1848 = vunpack.c.l.b16 %v1075
  %v1849 = vunpack.c.h.b16 %v1075
  %v1850 = vunpack.c.l.b16 %v1076
  %v1851 = vunpack.c.l.b16 %v1077
  %v1852 = vunpack.c.h.b16 %v1077
  %v1853 = vunpack.c.l.b16 %v1078
  %v1854 = vunpack.c.l.b16 %v1079
  %v1855 = vunpack.c.h.b16 %v1079
  %v1856 = vunpack.c.l.b16 %v1080
  %v1857 = vunpack.c.l.b16 %v1081
  %v1858 = vunpack.c.h.b16 %v1081
  %v1859 = vunpack.c.l.b16 %v1082
  %v1860 = vunpack.c.l.b16 %v1083
  %v1861 = vunpack.c.h.b16 %v1083
  %v1862 = vunpack.c.l.b16 %v1084
  %v1863 = vunpack.c.l.b16 %v1085
  %v1864 = vunpack.c.h.b16 %v1085
  %v1865 = vunpack.c.l.b16 %v1086
  %v1866 = vunpack.c.l.b16 %v1087
  %v1867 = vunpack.c.h.b16 %v1087
  %v1868 = vunpack.c.l.b16 %v1088
  %v1869 = vunpack.c.l.b16 %v1089
  %v1870 = vunpack.c.h.b16 %v1089
  %v1871 = vunpack.c.l.b16 %v1090
  %v1872 = vunpack.c.l.b16 %v1091
  %v1873 = vunpack.c.h.b16 %v1091
  %v1874 = vunpack.c.l.b16 %v1092
  %v1875 = vunpack.c.l.b16 %v1093
  %v1876 = vunpack.c.h.b16 %v1093
  %v1877 = vunpack.c.l.b16 %v1094
  %v1878 = vunpack.c.l.b16 %v1095
  %v1879 = vunpack.c.h.b16 %v1095
  %v1880 = vunpack.c.l.b16 %v1096
  %v1881 = vunpack.c.l.b16 %v1097
  %v1882 = vunpack.c.h.b16 %v1097
  %v1883 = vunpack.c.l.b16 %v1098
  %v1884 = vunpack.c.l.b16 %v1099
  %v1885 = vunpack.c.h.b16 %v1099
  %v1886 = vunpack.c.l.b16 %v1100
  %v1887 = vunpack.c.l.b16 %v1101
  %v1888 = vunpack.c.h.b16 %v1101
  %v1889 = vunpack.c.l.b16 %v1102
  %v1890 = vunpack.c.l.b16 %v1103
  %v1891 = vunpack.c.h.b16 %v1103
  %v1892 = vunpack.c.l.b16 %v1104
  %v1893 = vunpack.c.l.b16 %v1105
  %v1894 = vunpack.c.h.b16 %v1105
  %v1895 = vunpack.c.l.b16 %v1106
  %v1896 = vunpack.c.l.b16 %v1107
  %v1897 = vunpack.c.h.b16 %v1107
  %v1898 = vunpack.c.l.b16 %v1108
  %v1899 = vunpack.c.l.b16 %v1109
  %v1900 = vunpack.c.h.b16 %v1109
  %v1901 = vunpack.c.l.b16 %v1110
  %v1902 = vunpack.c.l.b16 %v1111
  %v1903 = vunpack.c.h.b16 %v1111
  %v1904 = vunpack.c.l.b16 %v1112
  %v1905 = vunpack.c.l.b16 %v1113
  %v1906 = vunpack.c.h.b16 %v1113
  %v1907 = vunpack.c.l.b16 %v1114
  %v1908 = vunpack.c.l.b16 %v1115
  %v1909 = vunpack.c.h.b16 %v1115
  %v1910 = vunpack.c.l.b16 %v1116
  %v1911 = vunpack.c.l.b16 %v1117
  %v1912 = vunpack.c.h.b16 %v1117
  %v1913 = vunpack.c.l.b16 %v1118
  %v1914 = vunpack.c.l.b16 %v1119
  %v1915 = vunpack.c.h.b16 %v1119
  %v1916 = vunpack.c.l.b16 %v1120
  %v1917 = vunpack.c.l.b16 %v1121
  %v1918 = vunpack.c.h.b16 %v1121
  %v1919 = vunpack.c.l.b16 %v1122
  %v1920 = vunpack.c.l.b16 %v1123
  %v1921 = vunpack.c.h.b16 %v1123
  %v1922 = vunpack.c.l.b16 %v1124
  %v1923 = vunpack.c.l.b16 %v1125
  %v1924 = vunpack.c.h.b16 %v1125
  %v1925 = vunpack.c.l.b16 %v1126
  %v1926 = vunpack.c.l.b16 %v1127
  %v1927 = vunpack.c.h.b16 %v1127
  %v1928 = vunpack.c.l.b16 %v1128
  %v1929 = vunpack.c.l.b16 %v1129
  %v1930 = vunpack.c.h.b16 %v1129
  %v1931 = vunpack.c.l.b16 %v1130
  %v1932 = vunpack.c.l.b16 %v1131
  %v1933 = vunpack.c.h.b16 %v1131
  %v1934 = vunpack.c.l.b16 %v1132
  %v1935 = vunpack.c.l.b16 %v1133
  %v1936 = vunpack.c.h.b16 %v1133
  %v1937 = vunpack.c.l.b16 %v1134
  %v1938 = vunpack.c.l.b16 %v1135
  %v1939 = vunpack.c.h.b16 %v1135
  %v1940 = vunpack.c.l.b16 %v1136
  %v1941 = vunpack.c.l.b16 %v1137
  %v1942 = vunpack.c.h.b16 %v1137
  %v1943 = vunpack.c.l.b16 %v1138
  %v1944 = vunpack.c.l.b16 %v1139
  %v1945 = vunpack.c.h.b16 %v1139
  %v1946 = vunpack.c.l.b16 %v1140
  %v1947 = vunpack.c.l.b16 %v1141
  %v1948 = vunpack.c.h.b16 %v1141
  %v1949 = vunpack.c.l.b16 %v1142
  %v1950 = vunpack.c.l.b16 %v1143
  %v1951 = vunpack.c.h.b16 %v1143
  %v1952 = vunpack.c.l.b16 %v1144
  %v1953 = vunpack.c.l.b16 %v1145
  %v1954 = vunpack.c.h.b16 %v1145
  %v1955 = vunpack.c.l.b16 %v1146
  %v1956 = vunpack.c.l.b16 %v1147
  %v1957 = vunpack.c.h.b16 %v1147
  %v1958 = vunpack.c.l.b16 %v1148
  %v1959 = vunpack.c.l.b16 %v1149
  %v1960 = vunpack.c.h.b16 %v1149
  %v1961 = vunpack.c.l.b16 %v1150
  %v1962 = vunpack.c.l.b16 %v1151
  %v1963 = vunpack.c.h.b16 %v1151
  %v1964 = vunpack.c.l.b16 %v1152
  %v1965 = vunpack.c.l.b16 %v1153
  %v1966 = vunpack.c.h.b16 %v1153
  %v1967 = vunpack.c.l.b16 %v1154
  %v1968 = vunpack.c.l.b16 %v1155
  %v1969 = vunpack.c.h.b16 %v1155
  %v1970 = vunpack.c.l.b16 %v1156
  %v1971 = vunpack.c.l.b16 %v1157
  %v1972 = vunpack.c.h.b16 %v1157
  %v1973 = vunpack.c.l.b16 %v1158
  %v1974 = vunpack.c.l.b16 %v1159
  %v1975 = vunpack.c.h.b16 %v1159
  %v1976 = vunpack.c.l.b16 %v1160
  %v1977 = vunpack.c.l.b16 %v1161
  %v1978 = vunpack.c.h.b16 %v1161
  %v1979 = vunpack.c.l.b16 %v1162
  %v1980 = vunpack.c.l.b16 %v1163
  %v1981 = vunpack.c.h.b16 %v1163
  %v1982 = vunpack.c.l.b16 %v1164
  %v1983 = vunpack.c.l.b16 %v1165
  %v1984 = vunpack.c.h.b16 %v1165
  %v1985 = vunpack.c.l.b16 %v1166
  %v1986 = vunpack.c.l.b16 %v1167
  %v1987 = vunpack.c.h.b16 %v1167
  %v1988 = vunpack.c.l.b16 %v1168
  %v1989 = vunpack.c.l.b16 %v1169
  %v1990 = vunpack.c.h.b16 %v1169
  %v1991 = vunpack.c.l.b16 %v1170
  %v1992 = vunpack.c.l.b16 %v1171
  %v1993 = vunpack.c.h.b16 %v1171
  %v1994 = vunpack.c.l.b16 %v1172
  %v1995 = vunpack.c.l.b16 %v1173
  %v1996 = vunpack.c.h.b16 %v1173
  %v1997 = vunpack.c.l.b16 %v1174
  %v1998 = vunpack.c.l.b16 %v1175
  %v1999 = vunpack.c.h.b16 %v1175
  %v2000 = vunpack.c.l.b16 %v1176
  %v2001 = vunpack.c.l.b16 %v1177
  %v2002 = vunpack.c.h.b16 %v1177
  %v2003 = vunpack.c.l.b16 %v1178
  %v2004 = vunpack.c.l.b16 %v1179
  %v2005 = vunpack.c.h.b16 %v1179
  %v2006 = vunpack.c.l.b16 %v1180
  %v2007 = vunpack.c.l.b16 %v1181
  %v2008 = vunpack.c.h.b16 %v1181
  %v2009 = vunpack.c.l.b16 %v1182
  %v2010 = vunpack.c.l.b16 %v1183
  %v2011 = vunpack.c.h.b16 %v1183
  %v2012 = vunpack.c.l.b16 %v1184
  %v2013 = vunpack.c.l.b16 %v1185
  %v2014 = vunpack.c.h.b16 %v1185
  %v2015 = vunpack.c.l.b16 %v1186
  %v2016 = vunpack.c.l.b16 %v1187
  %v2017 = vunpack.c.h.b16 %v1187
  %v2018 = vunpack.c.l.b16 %v1188
  %v2019 = vunpack.c.l.b16 %v1189
  %v2020 = vunpack.c.h.b16 %v1189
  %v2021 = vunpack.c.l.b16 %v1190
  %v2022 = vunpack.c.l.b16 %v1191
  %v2023 = vunpack.c.h.b16 %v1191
  %v2024 = vunpack.c.l.b16 %v1192
  %v2025 = vunpack.c.l.b16 %v1193
  %v2026 = vunpack.c.h.b16 %v1193
  %v2027 = vunpack.c.l.b16 %v1194
  %v2028 = vunpack.c.l.b16 %v1195
  %v2029 = vunpack.c.h.b16 %v1195
  %v2030 = vunpack.c.l.b16 %v1196
  %v2031 = vunpack.c.l.b16 %v1197
  %v2032 = vunpack.c.h.b16 %v1197
  %v2033 = vunpack.c.l.b16 %v1198
  %v2034 = vunpack.c.l.b16 %v1199
  %v2035 = vunpack.c.h.b16 %v1199
  %v2036 = vunpack.c.l.b16 %v1200
  %v2037 = vunpack.c.l.b16 %v1201
  %v2038 = vunpack.c.h.b16 %v1201
  %v2039 = vunpack.c.l.b16 %v1202
  %v2040 = vunpack.c.l.b16 %v1203
  %v2041 = vunpack.c.h.b16 %v1203
  %v2042 = vunpack.c.l.b16 %v1204
  %v2043 = vunpack.c.l.b16 %v1205
  %v2044 = vunpack.c.h.b16 %v1205
  %v2045 = vunpack.c.l.b16 %v1206
  %v2046 = vunpack.c.l.b16 %v1207
  %v2047 = vunpack.c.h.b16 %v1207
  %v2048 = vunpack.c.l.b16 %v1208
  %v2049 = vunpack.c.l.b16 %v1209
  %v2050 = vunpack.c.h.b16 %v1209
  %v2051 = vunpack.c.l.b16 %v1210
  %v2052 = vunpack.c.l.b16 %v1211
  %v2053 = vunpack.c.h.b16 %v1211
  %v2054 = vunpack.c.l.b16 %v1212
  %v2055 = vunpack.c.l.b16 %v1213
  %v2056 = vunpack.c.h.b16 %v1213
  %v2057 = vunpack.c.l.b16 %v1214
  %v2058 = vunpack.c.l.b16 %v1215
  %v2059 = vunpack.c.h.b16 %v1215
  %v2060 = vunpack.c.l.b16 %v1216
  %v2061 = vunpack.c.l.b16 %v1217
  %v2062 = vunpack.c.h.b16 %v1217
  %v2063 = vunpack.c.l.b16 %v1218
  %v2064 = vunpack.c.l.b16 %v1219
  %v2065 = vunpack.c.h.b16 %v1219
  %v2066 = vunpack.c.l.b16 %v1220
  %v2067 = vunpack.c.l.b16 %v1221
  %v2068 = vunpack.c.h.b16 %v1221
  %v2069 = vunpack.c.l.b16 %v1222
  %v2070 = vunpack.c.l.b16 %v1223
  %v2071 = vunpack.c.h.b16 %v1223
  %v2072 = vunpack.c.l.b16 %v1224
  %v2073 = vunpack.c.l.b16 %v1225
  %v2074 = vunpack.c.h.b16 %v1225
  %v2075 = vunpack.c.l.b16 %v1226
  %v2076 = vunpack.c.l.b16 %v1227
  %v2077 = vunpack.c.h.b16 %v1227
  %v2078 = vunpack.c.l.b16 %v1228
  %v2079 = vunpack.c.l.b16 %v1229
  %v2080 = vunpack.c.h.b16 %v1229
  %v2081 = vunpack.c.l.b16 %v1230
  %v2082 = vunpack.c.l.b16 %v1231
  %v2083 = vunpack.c.h.b16 %v1231
  %v2084 = vunpack.c.l.b16 %v1232
  %v2085 = vunpack.c.l.b16 %v1233
  %v2086 = vunpack.c.h.b16 %v1233
  %v2087 = vunpack.c.l.b16 %v1234
  %v2088 = vunpack.c.l.b16 %v1235
  %v2089 = vunpack.c.h.b16 %v1235
  %v2090 = vunpack.c.l.b16 %v1236
  %v2091 = vunpack.c.l.b16 %v1237
  %v2092 = vunpack.c.h.b16 %v1237
  %v2093 = vunpack.c.l.b16 %v1238
  %v2094 = vunpack.c.l.b16 %v1239
  %v2095 = vunpack.c.h.b16 %v1239
  %v2096 = vunpack.c.l.b16 %v1240
  %v2097 = vunpack.c.l.b16 %v1241
  %v2098 = vunpack.c.h.b16 %v1241
  %v2099 = vunpack.c.l.b16 %v1242
  %v2100 = vunpack.c.l.b16 %v1243
  %v2101 = vunpack.c.h.b16 %v1243
  %v2102 = vunpack.c.l.b16 %v1244
  %v2103 = vunpack.c.l.b16 %v1245
  %v2104 = vunpack.c.h.b16 %v1245
  %v2105 = vunpack.c.l.b16 %v1246
  %v2106 = vunpack.c.l.b16 %v1247
  %v2107 = vunpack.c.h.b16 %v1247
  %v2108 = vunpack.c.l.b16 %v1248
  %v2109 = vunpack.c.l.b16 %v1249
  %v2110 = vunpack.c.h.b16 %v1249
  %v2111 = vunpack.c.l.b16 %v1250
  %v2112 = vunpack.c.l.b16 %v1251
  %v2113 = vunpack.c.h.b16 %v1251
  %v2114 = vunpack.c.l.b16 %v1252
  %v2115 = vunpack.c.l.b16 %v1253
  %v2116 = vunpack.c.h.b16 %v1253
  %v2117 = vunpack.c.l.b16 %v1254
  %v2118 = vunpack.c.l.b16 %v1255
  %v2119 = vunpack.c.h.b16 %v1255
  %v2120 = vunpack.c.l.b16 %v1256
  %v2121 = vunpack.c.l.b16 %v1257
  %v2122 = vunpack.c.h.b16 %v1257
  %v2123 = vunpack.c.l.b16 %v1258
  %v2124 = vunpack.c.l.b16 %v1259
  %v2125 = vunpack.c.h.b16 %v1259
  %v2126 = vunpack.c.l.b16 %v1260
  %v2127 = vunpack.c.l.b16 %v1261
  %v2128 = vunpack.c.h.b16 %v1261
  %v2129 = vunpack.c.l.b16 %v1262
  %v2130 = vunpack.c.l.b16 %v1263
  %v2131 = vunpack.c.h.b16 %v1263
  %v2132 = vunpack.c.l.b16 %v1264
  %v2133 = vunpack.c.l.b16 %v1265
  %v2134 = vunpack.c.h.b16 %v1265
  %v2135 = vunpack.c.l.b16 %v1266
  %v2136 = vunpack.c.l.b16 %v1267
  %v2137 = vunpack.c.h.b16 %v1267
  %v2138 = vunpack.c.l.b16 %v1268
  %v2139 = vunpack.c.l.b16 %v1269
  %v2140 = vunpack.c.h.b16 %v1269
  %v2141 = vunpack.c.l.b16 %v1270
  %v2142 = vunpack.c.l.b16 %v1271
  %v2143 = vunpack.c.h.b16 %v1271
  %v2144 = vunpack.c.l.b16 %v1272
  %v2145 = vunpack.c.l.b16 %v1273
  %v2146 = vunpack.c.h.b16 %v1273
  %v2147 = vunpack.c.l.b16 %v1274
  %v2148 = vunpack.c.l.b16 %v1275
  %v2149 = vunpack.c.h.b16 %v1275
  %v2150 = vunpack.c.l.b16 %v1276
  %v2151 = vunpack.c.l.b16 %v1277
  %v2152 = vunpack.c.h.b16 %v1277
  %v2153 = vunpack.c.l.b16 %v1278
  %v2154 = vunpack.c.l.b16 %v1279
  %v2155 = vunpack.c.h.b16 %v1279
  %v2156 = vunpack.c.l.b16 %v1280
  %v2157 = vunpack.c.l.b16 %v1281
  %v2158 = vunpack.c.h.b16 %v1281
  %v2159 = vunpack.c.l.b16 %v1282
  %v2160 = vunpack.c.l.b16 %v1283
  %v2161 = vunpack.c.h.b16 %v1283
  %v2162 = vunpack.c.l.b16 %v1284
  %v2163 = vunpack.c.l.b16 %v1285
  %v2164 = vunpack.c.h.b16 %v1285
  %v2165 = vunpack.c.l.b16 %v1286
  %v2166 = vunpack.c.l.b16 %v1287
  %v2167 = vunpack.c.h.b16 %v1287
  %v2168 = vunpack.c.l.b16 %v1288
  %v2169 = vunpack.c.l.b16 %v1289
  %v2170 = vunpack.c.h.b16 %v1289
  %v2171 = vunpack.c.l.b16 %v1290
  %v2172 = vunpack.c.l.b16 %v1291
  %v2173 = vunpack.c.h.b16 %v1291
  %v2174 = vunpack.c.l.b16 %v1292
  %v2175 = vunpack.c.l.b16 %v1293
  %v2176 = vunpack.c.h.b16 %v1293
  %v2177 = vunpack.c.l.b16 %v1294
  %v2178 = vunpack.c.l.b16 %v1295
  %v2179 = vunpack.c.h.b16 %v1295
  %v2180 = vunpack.c.l.b16 %v1296
  %v2181 = vunpack.c.l.b16 %v1297
  %v2182 = vunpack.c.h.b16 %v1297
  %v2183 = vunpack.c.l.b16 %v1298
  %v2184 = vunpack.c.l.b16 %v1299
  %v2185 = vunpack.c.h.b16 %v1299
  %v2186 = vunpack.c.l.b16 %v1300
  %v2187 = vunpack.c.l.b16 %v1301
  %v2188 = vunpack.c.h.b16 %v1301
  %v2189 = vunpack.c.l.b16 %v1302
  %v2190 = vunpack.c.l.b16 %v1303
  %v2191 = vunpack.c.h.b16 %v1303
  %v2192 = vunpack.c.l.b16 %v1304
  %v2193 = vpack.c.b16 %v1668, %v1665
  %v2194 = vpack.c.b16 %v1669, %v1666
  %v2195 = vpack.c.b16 %v1670, %v1667
  %v2196 = vpack.c.b16 %v1674, %v1671
  %v2197 = vpack.c.b16 %v1675, %v1672
  %v2198 = vpack.c.b16 %v1676, %v1673
  %v2199 = vpack.c.b16 %v1680, %v1677
  %v2200 = vpack.c.b16 %v1681, %v1678
  %v2201 = vpack.c.b16 %v1682, %v1679
  %v2202 = vpack.c.b16 %v1686, %v1683
  %v2203 = vpack.c.b16 %v1687, %v1684
  %v2204 = vpack.c.b16 %v1688, %v1685
  %v2205 = vpack.c.b16 %v1692, %v1689
  %v2206 = vpack.c.b16 %v1693, %v1690
  %v2207 = vpack.c.b16 %v1694, %v1691
  %v2208 = vpack.c.b16 %v1698, %v1695
  %v2209 = vpack.c.b16 %v1699, %v1696
  %v2210 = vpack.c.b16 %v1700, %v1697
  %v2211 = vpack.c.b16 %v1704, %v1701
  %v2212 = vpack.c.b16 %v1705, %v1702
  %v2213 = vpack.c.b16 %v1706, %v1703
  %v2214 = vpack.c.b16 %v1710, %v1707
  %v2215 = vpack.c.b16 %v1711, %v1708
  %v2216 = vpack.c.b16 %v1712, %v1709
  %v2217 = vpack.c.b16 %v1716, %v1713
  %v2218 = vpack.c.b16 %v1717, %v1714
  %v2219 = vpack.c.b16 %v1718, %v1715
  %v2220 = vpack.c.b16 %v1722, %v1719
  %v2221 = vpack.c.b16 %v1723, %v1720
  %v2222 = vpack.c.b16 %v1724, %v1721
  %v2223 = vpack.c.b16 %v1728, %v1725
  %v2224 = vpack.c.b16 %v1729, %v1726
  %v2225 = vpack.c.b16 %v1730, %v1727
  %v2226 = vpack.c.b16 %v1734, %v1731
  %v2227 = vpack.c.b16 %v1735, %v1732
  %v2228 = vpack.c.b16 %v1736, %v1733
  %v2229 = vpack.c.b16 %v1740, %v1737
  %v2230 = vpack.c.b16 %v1741, %v1738
  %v2231 = vpack.c.b16 %v1742, %v1739
  %v2232 = vpack.c.b16 %v1746, %v1743
  %v2233 = vpack.c.b16 %v1747, %v1744
  %v2234 = vpack.c.b16 %v1748, %v1745
  %v2235 = vpack.c.b16 %v1752, %v1749
  %v2236 = vpack.c.b16 %v1753, %v1750
  %v2237 = vpack.c.b16 %v1754, %v1751
  %v2238 = vpack.c.b16 %v1758, %v1755
  %v2239 = vpack.c.b16 %v1759, %v1756
  %v2240 = vpack.c.b16 %v1760, %v1757
  %v2241 = vpack.c.b16 %v1764, %v1761
  %v2242 = vpack.c.b16 %v1765, %v1762
  %v2243 = vpack.c.b16 %v1766, %v1763
  %v2244 = vpack.c.b16 %v1770, %v1767
  %v2245 = vpack.c.b16 %v1771, %v1768
  %v2246 = vpack.c.b16 %v1772, %v1769
  %v2247 = vpack.c.b16 %v1776, %v1773
  %v2248 = vpack.c.b16 %v1777, %v1774
  %v2249 = vpack.c.b16 %v1778, %v1775
  %v2250 = vpack.c.b16 %v1782, %v1779
  %v2251 = vpack.c.b16 %v1783, %v1780
  %v2252 = vpack.c.b16 %v1784, %v1781
  %v2253 = vpack.c.b16 %v1788, %v1785
  %v2254 = vpack.c.b16 %v1789, %v1786
  %v2255 = vpack.c.b16 %v1790, %v1787
  %v2256 = vpack.c.b16 %v1794, %v1791
  %v2257 = vpack.c.b16 %v1795, %v1792
  %v2258 = vpack.c.b16 %v1796, %v1793
  %v2259 = vpack.c.b16 %v1800, %v1797
  %v2260 = vpack.c.b16 %v1801, %v1798
  %v2261 = vpack.c.b16 %v1802, %v1799
  %v2262 = vpack.c.b16 %v1806, %v1803
  %v2263 = vpack.c.b16 %v1807, %v1804
  %v2264 = vpack.c.b16 %v1808, %v1805
  %v2265 = vpack.c.b16 %v1812, %v1809
  %v2266 = vpack.c.b16 %v1813, %v1810
  %v2267 = vpack.c.b16 %v1814, %v1811
  %v2268 = vpack.c.b16 %v1818, %v1815
  %v2269 = vpack.c.b16 %v1819, %v1816
  %v2270 = vpack.c.b16 %v1820, %v1817
  %v2271 = vpack.c.b16 %v1824, %v1821
  %v2272 = vpack.c.b16 %v1825, %v1822
  %v2273 = vpack.c.b16 %v1826, %v1823
  %v2274 = vpack.c.b16 %v1830, %v1827
  %v2275 = vpack.c.b16 %v1831, %v1828
  %v2276 = vpack.c.b16 %v1832, %v1829
  %v2277 = vpack.c.b16 %v1836, %v1833
  %v2278 = vpack.c.b16 %v1837, %v1834
  %v2279 = vpack.c.b16 %v1838, %v1835
  %v2280 = vpack.c.b16 %v1842, %v1839
  %v2281 = vpack.c.b16 %v1843, %v1840
  %v2282 = vpack.c.b16 %v1844, %v1841
  %v2283 = vpack.c.b16 %v1848, %v1845
  %v2284 = vpack.c.b16 %v1849, %v1846
  %v2285 = vpack.c.b16 %v1850, %v1847
  %v2286 = vpack.c.b16 %v1854, %v1851
  %v2287 = vpack.c.b16 %v1855, %v1852
  %v2288 = vpack.c.b16 %v1856, %v1853
  %v2289 = vpack.c.b16 %v1860, %v1857
  %v2290 = vpack.c.b16 %v1861, %v1858
  %v2291 = vpack.c.b16 %v1862, %v1859
  %v2292 = vpack.c.b16 %v1866, %v1863
  %v2293 = vpack.c.b16 %v1867, %v1864
  %v2294 = vpack.c.b16 %v1868, %v1865
  %v2295 = vpack.c.b16 %v1872, %v1869
  %v2296 = vpack.c.b16 %v1873, %v1870
  %v2297 = vpack.c.b16 %v1874, %v1871
  %v2298 = vpack.c.b16 %v1878, %v1875
  %v2299 = vpack.c.b16 %v1879, %v1876
  %v2300 = vpack.c.b16 %v1880, %v1877
  %v2301 = vpack.c.b16 %v1884, %v1881
  %v2302 = vpack.c.b16 %v1885, %v1882
  %v2303 = vpack.c.b16 %v1886, %v1883
  %v2304 = vpack.c.b16 %v1890, %v1887
  %v2305 = vpack.c.b16 %v1891, %v1888
  %v2306 = vpack.c.b16 %v1892, %v1889
  %v2307 = vpack.c.b16 %v1896, %v1893
  %v2308 = vpack.c.b16 %v1897, %v1894
  %v2309 = vpack.c.b16 %v1898, %v1895
  %v2310 = vpack.c.b16 %v1902, %v1899
  %v2311 = vpack.c.b16 %v1903, %v1900
  %v2312 = vpack.c.b16 %v1904, %v1901
  %v2313 = vpack.c.b16 %v1908, %v1905
  %v2314 = vpack.c.b16 %v1909, %v1906
  %v2315 = vpack.c.b16 %v1910, %v1907
  %v2316 = vpack.c.b16 %v1914, %v1911
  %v2317 = vpack.c.b16 %v1915, %v1912
  %v2318 = vpack.c.b16 %v1916, %v1913
  %v2319 = vpack.c.b16 %v1920, %v1917
  %v2320 = vpack.c.b16 %v1921, %v1918
  %v2321 = vpack.c.b16 %v1922, %v1919
  %v2322 = vpack.c.b16 %v1926, %v1923
  %v2323 = vpack.c.b16 %v1927, %v1924
  %v2324 = vpack.c.b16 %v1928, %v1925
  %v2325 = vpack.c.b16 %v1932, %v1929
  %v2326 = vpack.c.b16 %v1933, %v1930
  %v2327 = vpack.c.b16 %v1934, %v1931
  %v2328 = vpack.c.b16 %v1938, %v1935
  %v2329 = vpack.c.b16 %v1939, %v1936
  %v2330 = vpack.c.b16 %v1940, %v1937
  %v2331 = vpack.c.b16 %v1944, %v1941
  %v2332 = vpack.c.b16 %v1945, %v1942
  %v2333 = vpack.c.b16 %v1946, %v1943
  %v2334 = vpack.c.b16 %v1950, %v1947
  %v2335 = vpack.c.b16 %v1951, %v1948
  %v2336 = vpack.c.b16 %v1952, %v1949
  %v2337 = vpack.c.b16 %v1956, %v1953
  %v2338 = vpack.c.b16 %v1957, %v1954
  %v2339 = vpack.c.b16 %v1958, %v1955
  %v2340 = vpack.c.b16 %v1962, %v1959
  %v2341 = vpack.c.b16 %v1963, %v1960
  %v2342 = vpack.c.b16 %v1964, %v1961
  %v2343 = vpack.c.b16 %v1968, %v1965
  %v2344 = vpack.c.b16 %v1969, %v1966
  %v2345 = vpack.c.b16 %v1970, %v1967
  %v2346 = vpack.c.b16 %v1974, %v1971
  %v2347 = vpack.c.b16 %v1975, %v1972
  %v2348 = vpack.c.b16 %v1976, %v1973
  %v2349 = vpack.c.b16 %v1980, %v1977
  %v2350 = vpack.c.b16 %v1981, %v1978
  %v2351 = vpack.c.b16 %v1982, %v1979
  %v2352 = vpack.c.b16 %v1986, %v1983
  %v2353 = vpack.c.b16 %v1987, %v1984
  %v2354 = vpack.c.b16 %v1988, %v1985
  %v2355 = vpack.c.b16 %v1992, %v1989
  %v2356 = vpack.c.b16 %v1993, %v1990
  %v2357 = vpack.c.b16 %v1994, %v1991
  %v2358 = vpack.c.b16 %v1998, %v1995
  %v2359 = vpack.c.b16 %v1999, %v1996
  %v2360 = vpack.c.b16 %v2000, %v1997
  %v2361 = vpack.c.b16 %v2004, %v2001
  %v2362 = vpack.c.b16 %v2005, %v2002
  %v2363 = vpack.c.b16 %v2006, %v2003
  %v2364 = vpack.c.b16 %v2010, %v2007
  %v2365 = vpack.c.b16 %v2011, %v2008
  %v2366 = vpack.c.b16 %v2012, %v2009
  %v2367 = vpack.c.b16 %v2016, %v2013
  %v2368 = vpack.c.b16 %v2017, %v2014
  %v2369 = vpack.c.b16 %v2018, %v2015
  %v2370 = vpack.c.b16 %v2022, %v2019
  %v2371 = vpack.c.b16 %v2023, %v2020
  %v2372 = vpack.c.b16 %v2024, %v2021
  %v2373 = vpack.c.b16 %v2028, %v2025
  %v2374 = vpack.c.b16 %v2029, %v2026
  %v2375 = vpack.c.b16 %v2030, %v2027
  %v2376 = vpack.c.b16 %v2034, %v2031
  %v2377 = vpack.c.b16 %v2035, %v2032
  %v2378 = vpack.c.b16 %v2036, %v2033
  %v2379 = vpack.c.b16 %v2040, %v2037
  %v2380 = vpack.c.b16 %v2041, %v2038
  %v2381 = vpack.c.b16 %v2042, %v2039
  %v2382 = vpack.c.b16 %v2046, %v2043
  %v2383 = vpack.c.b16 %v2047, %v2044
  %v2384 = vpack.c.b16 %v2048, %v2045
  %v2385 = vpack.c.b16 %v2052, %v2049
  %v2386 = vpack.c.b16 %v2053, %v2050
  %v2387 = vpack.c.b16 %v2054, %v2051
  %v2388 = vpack.c.b16 %v2058, %v2055
  %v2389 = vpack.c.b16 %v2059, %v2056
  %v2390 = vpack.c.b16 %v2060, %v2057
  %v2391 = vpack.c.b16 %v2064, %v2061
  %v2392 = vpack.c.b16 %v2065, %v2062
  %v2393 = vpack.c.b16 %v2066, %v2063
  %v2394 = vpack.c.b16 %v2070, %v2067
  %v2395 = vpack.c.b16 %v2071, %v2068
  %v2396 = vpack.c.b16 %v2072, %v2069
  %v2397 = vpack.c.b16 %v2076, %v2073
  %v2398 = vpack.c.b16 %v2077, %v2074
  %v2399 = vpack.c.b16 %v2078, %v2075
  %v2400 = vpack.c.b16 %v2082, %v2079
  %v2401 = vpack.c.b16 %v2083, %v2080
  %v2402 = vpack.c.b16 %v2084, %v2081
  %v2403 = vpack.c.b16 %v2088, %v2085
  %v2404 = vpack.c.b16 %v2089, %v2086
  %v2405 = vpack.c.b16 %v2090, %v2087
  %v2406 = vpack.c.b16 %v2094, %v2091
  %v2407 = vpack.c.b16 %v2095, %v2092
  %v2408 = vpack.c.b16 %v2096, %v2093
  %v2409 = vpack.c.b16 %v2100, %v2097
  %v2410 = vpack.c.b16 %v2101, %v2098
  %v2411 = vpack.c.b16 %v2102, %v2099
  %v2412 = vpack.c.b16 %v2106, %v2103
  %v2413 = vpack.c.b16 %v2107, %v2104
  %v2414 = vpack.c.b16 %v2108, %v2105
  %v2415 = vpack.c.b16 %v2112, %v2109
  %v2416 = vpack.c.b16 %v2113, %v2110
  %v2417 = vpack.c.b16 %v2114, %v2111
  %v2418 = vpack.c.b16 %v2118, %v2115
  %v2419 = vpack.c.b16 %v2119, %v2116
  %v2420 = vpack.c.b16 %v2120, %v2117
  %v2421 = vpack.c.b16 %v2124, %v2121
  %v2422 = vpack.c.b16 %v2125, %v2122
  %v2423 = vpack.c.b16 %v2126, %v2123
  %v2424 = vpack.c.b16 %v2130, %v2127
  %v2425 = vpack.c.b16 %v2131, %v2128
  %v2426 = vpack.c.b16 %v2132, %v2129
  %v2427 = vpack.c.b16 %v2136, %v2133
  %v2428 = vpack.c.b16 %v2137, %v2134
  %v2429 = vpack.c.b16 %v2138, %v2135
  %v2430 = vpack.c.b16 %v2142, %v2139
  %v2431 = vpack.c.b16 %v2143, %v2140
  %v2432 = vpack.c.b16 %v2144, %v2141
  %v2433 = vpack.c.b16 %v2148, %v2145
  %v2434 = vpack.c.b16 %v2149, %v2146
  %v2435 = vpack.c.b16 %v2150, %v2147
  %v2436 = vpack.c.b16 %v2154, %v2151
  %v2437 = vpack.c.b16 %v2155, %v2152
  %v2438 = vpack.c.b16 %v2156, %v2153
  %v2439 = vpack.c.b16 %v2160, %v2157
  %v2440 = vpack.c.b16 %v2161, %v2158
  %v2441 = vpack.c.b16 %v2162, %v2159
  %v2442 = vpack.c.b16 %v2166, %v2163
  %v2443 = vpack.c.b16 %v2167, %v2164
  %v2444 = vpack.c.b16 %v2168, %v2165
  %v2445 = vpack.c.b16 %v2172, %v2169
  %v2446 = vpack.c.b16 %v2173, %v2170
  %v2447 = vpack.c.b16 %v2174, %v2171
  %v2448 = vpack.c.b16 %v2178, %v2175
  %v2449 = vpack.c.b16 %v2179, %v2176
  %v2450 = vpack.c.b16 %v2180, %v2177
  %v2451 = vpack.c.b16 %v2184, %v2181
  %v2452 = vpack.c.b16 %v2185, %v2182
  %v2453 = vpack.c.b16 %v2186, %v2183
  %v2454 = vpack.c.b16 %v2190, %v2187
  %v2455 = vpack.c.b16 %v2191, %v2188
  %v2456 = vpack.c.b16 %v2192, %v2189
  %2721 = vmatpush.bf16.msra.mxu0 %v2214
  %2722 = vmatpush.bf16.msra.mxu0 %v2211
  %2723 = vmatpush.bf16.msra.mxu0 %v2208
  %2724 = vmatpush.bf16.msra.mxu0 %v2205
  %2725 = vmatpush.bf16.msra.mxu0 %v2202
  %2726 = vmatpush.bf16.msra.mxu0 %v2199
  %2727 = vmatpush.bf16.msra.mxu0 %v2196
  %2728 = vmatpush.bf16.msra.mxu0 %v2193
  %2729 = vmatmul.bf16.gmra.mxu0 %v341
  %v2730 = vpop.f32.mrf.mxu0
  %v2731 = vadd.f32 %v1307, %v2730
  %v2732 = vpop.f32.mrf.mxu0
  %v2733 = vadd.f32 %v1307, %v2732
  %2734 = vmatmul.bf16.gmra.mxu0 %v347
  %v2735 = vpop.f32.mrf.mxu0
  %v2736 = vadd.f32 %v1307, %v2735
  %v2737 = vpop.f32.mrf.mxu0
  %v2738 = vadd.f32 %v1307, %v2737
  %2739 = vmatmul.bf16.gmra.mxu0 %v353
  %v2740 = vpop.f32.mrf.mxu0
  %v2741 = vadd.f32 %v1307, %v2740
  %v2742 = vpop.f32.mrf.mxu0
  %v2743 = vadd.f32 %v1307, %v2742
  %2744 = vmatmul.bf16.gmra.mxu0 %v359
  %v2745 = vpop.f32.mrf.mxu0
  %v2746 = vadd.f32 %v1307, %v2745
  %v2747 = vpop.f32.mrf.mxu0
  %v2748 = vadd.f32 %v1307, %v2747
  %2749 = vmatmul.bf16.gmra.mxu0 %v365
  %v2750 = vpop.f32.mrf.mxu0
  %v2751 = vadd.f32 %v1307, %v2750
  %v2752 = vpop.f32.mrf.mxu0
  %v2753 = vadd.f32 %v1307, %v2752
  %2754 = vmatmul.bf16.gmra.mxu0 %v371
  %v2755 = vpop.f32.mrf.mxu0
  %v2756 = vadd.f32 %v1307, %v2755
  %v2757 = vpop.f32.mrf.mxu0
  %v2758 = vadd.f32 %v1307, %v2757
  %2759 = vmatmul.bf16.gmra.mxu0 %v377
  %v2760 = vpop.f32.mrf.mxu0
  %v2761 = vadd.f32 %v1307, %v2760
  %v2762 = vpop.f32.mrf.mxu0
  %v2763 = vadd.f32 %v1307, %v2762
  %2764 = vmatmul.bf16.gmra.mxu0 %v383
  %v2765 = vpop.f32.mrf.mxu0
  %v2766 = vadd.f32 %v1307, %v2765
  %v2767 = vpop.f32.mrf.mxu0
  %v2768 = vadd.f32 %v1307, %v2767
  %2769 = vmatmul.bf16.gmra.mxu0 %v389
  %v2770 = vpop.f32.mrf.mxu0
  %v2771 = vadd.f32 %v1307, %v2770
  %v2772 = vpop.f32.mrf.mxu0
  %v2773 = vadd.f32 %v1307, %v2772
  %2774 = vmatmul.bf16.gmra.mxu0 %v395
  %v2775 = vpop.f32.mrf.mxu0
  %v2776 = vadd.f32 %v1307, %v2775
  %v2777 = vpop.f32.mrf.mxu0
  %v2778 = vadd.f32 %v1307, %v2777
  %2779 = vdwg.mxu0
  %2780 = vmatpush.bf16.msra.mxu0 %v2238
  %2781 = vmatpush.bf16.msra.mxu0 %v2235
  %2782 = vmatpush.bf16.msra.mxu0 %v2232
  %2783 = vmatpush.bf16.msra.mxu0 %v2229
  %2784 = vmatpush.bf16.msra.mxu0 %v2226
  %2785 = vmatpush.bf16.msra.mxu0 %v2223
  %2786 = vmatpush.bf16.msra.mxu0 %v2220
  %2787 = vmatpush.bf16.msra.mxu0 %v2217
  %2788 = vmatmul.bf16.gmra.mxu0 %v342
  %v2789 = vpop.f32.mrf.mxu0
  %v2790 = vadd.f32 %v2731, %v2789
  %v2791 = vpop.f32.mrf.mxu0
  %v2792 = vadd.f32 %v2733, %v2791
  %2793 = vmatmul.bf16.gmra.mxu0 %v348
  %v2794 = vpop.f32.mrf.mxu0
  %v2795 = vadd.f32 %v2736, %v2794
  %v2796 = vpop.f32.mrf.mxu0
  %v2797 = vadd.f32 %v2738, %v2796
  %2798 = vmatmul.bf16.gmra.mxu0 %v354
  %v2799 = vpop.f32.mrf.mxu0
  %v2800 = vadd.f32 %v2741, %v2799
  %v2801 = vpop.f32.mrf.mxu0
  %v2802 = vadd.f32 %v2743, %v2801
  %2803 = vmatmul.bf16.gmra.mxu0 %v360
  %v2804 = vpop.f32.mrf.mxu0
  %v2805 = vadd.f32 %v2746, %v2804
  %v2806 = vpop.f32.mrf.mxu0
  %v2807 = vadd.f32 %v2748, %v2806
  %2808 = vmatmul.bf16.gmra.mxu0 %v366
  %v2809 = vpop.f32.mrf.mxu0
  %v2810 = vadd.f32 %v2751, %v2809
  %v2811 = vpop.f32.mrf.mxu0
  %v2812 = vadd.f32 %v2753, %v2811
  %2813 = vmatmul.bf16.gmra.mxu0 %v372
  %v2814 = vpop.f32.mrf.mxu0
  %v2815 = vadd.f32 %v2756, %v2814
  %v2816 = vpop.f32.mrf.mxu0
  %v2817 = vadd.f32 %v2758, %v2816
  %2818 = vmatmul.bf16.gmra.mxu0 %v378
  %v2819 = vpop.f32.mrf.mxu0
  %v2820 = vadd.f32 %v2761, %v2819
  %v2821 = vpop.f32.mrf.mxu0
  %v2822 = vadd.f32 %v2763, %v2821
  %2823 = vmatmul.bf16.gmra.mxu0 %v384
  %v2824 = vpop.f32.mrf.mxu0
  %v2825 = vadd.f32 %v2766, %v2824
  %v2826 = vpop.f32.mrf.mxu0
  %v2827 = vadd.f32 %v2768, %v2826
  %2828 = vmatmul.bf16.gmra.mxu0 %v390
  %v2829 = vpop.f32.mrf.mxu0
  %v2830 = vadd.f32 %v2771, %v2829
  %v2831 = vpop.f32.mrf.mxu0
  %v2832 = vadd.f32 %v2773, %v2831
  %2833 = vmatmul.bf16.gmra.mxu0 %v396
  %v2834 = vpop.f32.mrf.mxu0
  %v2835 = vadd.f32 %v2776, %v2834
  %v2836 = vpop.f32.mrf.mxu0
  %v2837 = vadd.f32 %v2778, %v2836
  %2838 = vdwg.mxu0
  %2839 = vmatpush.bf16.msra.mxu0 %v2262
  %2840 = vmatpush.bf16.msra.mxu0 %v2259
  %2841 = vmatpush.bf16.msra.mxu0 %v2256
  %2842 = vmatpush.bf16.msra.mxu0 %v2253
  %2843 = vmatpush.bf16.msra.mxu0 %v2250
  %2844 = vmatpush.bf16.msra.mxu0 %v2247
  %2845 = vmatpush.bf16.msra.mxu0 %v2244
  %2846 = vmatpush.bf16.msra.mxu0 %v2241
  %2847 = vmatmul.bf16.gmra.mxu0 %v343
  %v2848 = vpop.f32.mrf.mxu0
  %v2849 = vadd.f32 %v2790, %v2848
  %v2850 = vpop.f32.mrf.mxu0
  %v2851 = vadd.f32 %v2792, %v2850
  %2852 = vmatmul.bf16.gmra.mxu0 %v349
  %v2853 = vpop.f32.mrf.mxu0
  %v2854 = vadd.f32 %v2795, %v2853
  %v2855 = vpop.f32.mrf.mxu0
  %v2856 = vadd.f32 %v2797, %v2855
  %2857 = vmatmul.bf16.gmra.mxu0 %v355
  %v2858 = vpop.f32.mrf.mxu0
  %v2859 = vadd.f32 %v2800, %v2858
  %v2860 = vpop.f32.mrf.mxu0
  %v2861 = vadd.f32 %v2802, %v2860
  %2862 = vmatmul.bf16.gmra.mxu0 %v361
  %v2863 = vpop.f32.mrf.mxu0
  %v2864 = vadd.f32 %v2805, %v2863
  %v2865 = vpop.f32.mrf.mxu0
  %v2866 = vadd.f32 %v2807, %v2865
  %2867 = vmatmul.bf16.gmra.mxu0 %v367
  %v2868 = vpop.f32.mrf.mxu0
  %v2869 = vadd.f32 %v2810, %v2868
  %v2870 = vpop.f32.mrf.mxu0
  %v2871 = vadd.f32 %v2812, %v2870
  %2872 = vmatmul.bf16.gmra.mxu0 %v373
  %v2873 = vpop.f32.mrf.mxu0
  %v2874 = vadd.f32 %v2815, %v2873
  %v2875 = vpop.f32.mrf.mxu0
  %v2876 = vadd.f32 %v2817, %v2875
  %2877 = vmatmul.bf16.gmra.mxu0 %v379
  %v2878 = vpop.f32.mrf.mxu0
  %v2879 = vadd.f32 %v2820, %v2878
  %v2880 = vpop.f32.mrf.mxu0
  %v2881 = vadd.f32 %v2822, %v2880
  %2882 = vmatmul.bf16.gmra.mxu0 %v385
  %v2883 = vpop.f32.mrf.mxu0
  %v2884 = vadd.f32 %v2825, %v2883
  %v2885 = vpop.f32.mrf.mxu0
  %v2886 = vadd.f32 %v2827, %v2885
  %2887 = vmatmul.bf16.gmra.mxu0 %v391
  %v2888 = vpop.f32.mrf.mxu0
  %v2889 = vadd.f32 %v2830, %v2888
  %v2890 = vpop.f32.mrf.mxu0
  %v2891 = vadd.f32 %v2832, %v2890
  %2892 = vmatmul.bf16.gmra.mxu0 %v397
  %v2893 = vpop.f32.mrf.mxu0
  %v2894 = vadd.f32 %v2835, %v2893
  %v2895 = vpop.f32.mrf.mxu0
  %v2896 = vadd.f32 %v2837, %v2895
  %2897 = vdwg.mxu0
  %2898 = vmatpush.bf16.msra.mxu0 %v2286
  %2899 = vmatpush.bf16.msra.mxu0 %v2283
  %2900 = vmatpush.bf16.msra.mxu0 %v2280
  %2901 = vmatpush.bf16.msra.mxu0 %v2277
  %2902 = vmatpush.bf16.msra.mxu0 %v2274
  %2903 = vmatpush.bf16.msra.mxu0 %v2271
  %2904 = vmatpush.bf16.msra.mxu0 %v2268
  %2905 = vmatpush.bf16.msra.mxu0 %v2265
  %2906 = vmatmul.bf16.gmra.mxu0 %v344
  %v2907 = vpop.f32.mrf.mxu0
  %v2908 = vadd.f32 %v2849, %v2907
  %v2909 = vpop.f32.mrf.mxu0
  %v2910 = vadd.f32 %v2851, %v2909
  %2911 = vmatmul.bf16.gmra.mxu0 %v350
  %v2912 = vpop.f32.mrf.mxu0
  %v2913 = vadd.f32 %v2854, %v2912
  %v2914 = vpop.f32.mrf.mxu0
  %v2915 = vadd.f32 %v2856, %v2914
  %2916 = vmatmul.bf16.gmra.mxu0 %v356
  %v2917 = vpop.f32.mrf.mxu0
  %v2918 = vadd.f32 %v2859, %v2917
  %v2919 = vpop.f32.mrf.mxu0
  %v2920 = vadd.f32 %v2861, %v2919
  %2921 = vmatmul.bf16.gmra.mxu0 %v362
  %v2922 = vpop.f32.mrf.mxu0
  %v2923 = vadd.f32 %v2864, %v2922
  %v2924 = vpop.f32.mrf.mxu0
  %v2925 = vadd.f32 %v2866, %v2924
  %2926 = vmatmul.bf16.gmra.mxu0 %v368
  %v2927 = vpop.f32.mrf.mxu0
  %v2928 = vadd.f32 %v2869, %v2927
  %v2929 = vpop.f32.mrf.mxu0
  %v2930 = vadd.f32 %v2871, %v2929
  %2931 = vmatmul.bf16.gmra.mxu0 %v374
  %v2932 = vpop.f32.mrf.mxu0
  %v2933 = vadd.f32 %v2874, %v2932
  %v2934 = vpop.f32.mrf.mxu0
  %v2935 = vadd.f32 %v2876, %v2934
  %2936 = vmatmul.bf16.gmra.mxu0 %v380
  %v2937 = vpop.f32.mrf.mxu0
  %v2938 = vadd.f32 %v2879, %v2937
  %v2939 = vpop.f32.mrf.mxu0
  %v2940 = vadd.f32 %v2881, %v2939
  %2941 = vmatmul.bf16.gmra.mxu0 %v386
  %v2942 = vpop.f32.mrf.mxu0
  %v2943 = vadd.f32 %v2884, %v2942
  %v2944 = vpop.f32.mrf.mxu0
  %v2945 = vadd.f32 %v2886, %v2944
  %2946 = vmatmul.bf16.gmra.mxu0 %v392
  %v2947 = vpop.f32.mrf.mxu0
  %v2948 = vadd.f32 %v2889, %v2947
  %v2949 = vpop.f32.mrf.mxu0
  %v2950 = vadd.f32 %v2891, %v2949
  %2951 = vmatmul.bf16.gmra.mxu0 %v398
  %v2952 = vpop.f32.mrf.mxu0
  %v2953 = vadd.f32 %v2894, %v2952
  %v2954 = vpop.f32.mrf.mxu0
  %v2955 = vadd.f32 %v2896, %v2954
  %2956 = vdwg.mxu0
  %2957 = vmatpush.bf16.msra.mxu0 %v2310
  %2958 = vmatpush.bf16.msra.mxu0 %v2307
  %2959 = vmatpush.bf16.msra.mxu0 %v2304
  %2960 = vmatpush.bf16.msra.mxu0 %v2301
  %2961 = vmatpush.bf16.msra.mxu0 %v2298
  %2962 = vmatpush.bf16.msra.mxu0 %v2295
  %2963 = vmatpush.bf16.msra.mxu0 %v2292
  %2964 = vmatpush.bf16.msra.mxu0 %v2289
  %2965 = vmatmul.bf16.gmra.mxu0 %v345
  %v2966 = vpop.f32.mrf.mxu0
  %v2967 = vadd.f32 %v2908, %v2966
  %v2968 = vpop.f32.mrf.mxu0
  %v2969 = vadd.f32 %v2910, %v2968
  %2970 = vmatmul.bf16.gmra.mxu0 %v351
  %v2971 = vpop.f32.mrf.mxu0
  %v2972 = vadd.f32 %v2913, %v2971
  %v2973 = vpop.f32.mrf.mxu0
  %v2974 = vadd.f32 %v2915, %v2973
  %2975 = vmatmul.bf16.gmra.mxu0 %v357
  %v2976 = vpop.f32.mrf.mxu0
  %v2977 = vadd.f32 %v2918, %v2976
  %v2978 = vpop.f32.mrf.mxu0
  %v2979 = vadd.f32 %v2920, %v2978
  %2980 = vmatmul.bf16.gmra.mxu0 %v363
  %v2981 = vpop.f32.mrf.mxu0
  %v2982 = vadd.f32 %v2923, %v2981
  %v2983 = vpop.f32.mrf.mxu0
  %v2984 = vadd.f32 %v2925, %v2983
  %2985 = vmatmul.bf16.gmra.mxu0 %v369
  %v2986 = vpop.f32.mrf.mxu0
  %v2987 = vadd.f32 %v2928, %v2986
  %v2988 = vpop.f32.mrf.mxu0
  %v2989 = vadd.f32 %v2930, %v2988
  %2990 = vmatmul.bf16.gmra.mxu0 %v375
  %v2991 = vpop.f32.mrf.mxu0
  %v2992 = vadd.f32 %v2933, %v2991
  %v2993 = vpop.f32.mrf.mxu0
  %v2994 = vadd.f32 %v2935, %v2993
  %2995 = vmatmul.bf16.gmra.mxu0 %v381
  %v2996 = vpop.f32.mrf.mxu0
  %v2997 = vadd.f32 %v2938, %v2996
  %v2998 = vpop.f32.mrf.mxu0
  %v2999 = vadd.f32 %v2940, %v2998
  %3000 = vmatmul.bf16.gmra.mxu0 %v387
  %v3001 = vpop.f32.mrf.mxu0
  %v3002 = vadd.f32 %v2943, %v3001
  %v3003 = vpop.f32.mrf.mxu0
  %v3004 = vadd.f32 %v2945, %v3003
  %3005 = vmatmul.bf16.gmra.mxu0 %v393
  %v3006 = vpop.f32.mrf.mxu0
  %v3007 = vadd.f32 %v2948, %v3006
  %v3008 = vpop.f32.mrf.mxu0
  %v3009 = vadd.f32 %v2950, %v3008
  %3010 = vmatmul.bf16.gmra.mxu0 %v399
  %v3011 = vpop.f32.mrf.mxu0
  %v3012 = vadd.f32 %v2953, %v3011
  %v3013 = vpop.f32.mrf.mxu0
  %v3014 = vadd.f32 %v2955, %v3013
  %3015 = vdwg.mxu0
  %3016 = vmatpush.bf16.msra.mxu0 %v2334
  %3017 = vmatpush.bf16.msra.mxu0 %v2331
  %3018 = vmatpush.bf16.msra.mxu0 %v2328
  %3019 = vmatpush.bf16.msra.mxu0 %v2325
  %3020 = vmatpush.bf16.msra.mxu0 %v2322
  %3021 = vmatpush.bf16.msra.mxu0 %v2319
  %3022 = vmatpush.bf16.msra.mxu0 %v2316
  %3023 = vmatpush.bf16.msra.mxu0 %v2313
  %3024 = vmatmul.bf16.gmra.mxu0 %v915
  %v3025 = vpop.f32.mrf.mxu0
  %v3026 = vadd.f32 %v2967, %v3025
  %v3027 = vpop.f32.mrf.mxu0
  %v3028 = vadd.f32 %v2969, %v3027
  %3029 = vmatmul.bf16.gmra.mxu0 %v919
  %v3030 = vpop.f32.mrf.mxu0
  %v3031 = vadd.f32 %v2972, %v3030
  %v3032 = vpop.f32.mrf.mxu0
  %v3033 = vadd.f32 %v2974, %v3032
  %3034 = vmatmul.bf16.gmra.mxu0 %v923
  %v3035 = vpop.f32.mrf.mxu0
  %v3036 = vadd.f32 %v2977, %v3035
  %v3037 = vpop.f32.mrf.mxu0
  %v3038 = vadd.f32 %v2979, %v3037
  %3039 = vmatmul.bf16.gmra.mxu0 %v927
  %v3040 = vpop.f32.mrf.mxu0
  %v3041 = vadd.f32 %v2982, %v3040
  %v3042 = vpop.f32.mrf.mxu0
  %v3043 = vadd.f32 %v2984, %v3042
  %3044 = vmatmul.bf16.gmra.mxu0 %v931
  %v3045 = vpop.f32.mrf.mxu0
  %v3046 = vadd.f32 %v2987, %v3045
  %v3047 = vpop.f32.mrf.mxu0
  %v3048 = vadd.f32 %v2989, %v3047
  %3049 = vmatmul.bf16.gmra.mxu0 %v935
  %v3050 = vpop.f32.mrf.mxu0
  %v3051 = vadd.f32 %v2992, %v3050
  %v3052 = vpop.f32.mrf.mxu0
  %v3053 = vadd.f32 %v2994, %v3052
  %3054 = vmatmul.bf16.gmra.mxu0 %v939
  %v3055 = vpop.f32.mrf.mxu0
  %v3056 = vadd.f32 %v2997, %v3055
  %v3057 = vpop.f32.mrf.mxu0
  %v3058 = vadd.f32 %v2999, %v3057
  %3059 = vmatmul.bf16.gmra.mxu0 %v943
  %v3060 = vpop.f32.mrf.mxu0
  %v3061 = vadd.f32 %v3002, %v3060
  %v3062 = vpop.f32.mrf.mxu0
  %v3063 = vadd.f32 %v3004, %v3062
  %3064 = vmatmul.bf16.gmra.mxu0 %v947
  %v3065 = vpop.f32.mrf.mxu0
  %v3066 = vadd.f32 %v3007, %v3065
  %v3067 = vpop.f32.mrf.mxu0
  %v3068 = vadd.f32 %v3009, %v3067
  %3069 = vmatmul.bf16.gmra.mxu0 %v951
  %v3070 = vpop.f32.mrf.mxu0
  %v3071 = vadd.f32 %v3012, %v3070
  %v3072 = vpop.f32.mrf.mxu0
  %v3073 = vadd.f32 %v3014, %v3072
  %3074 = vdwg.mxu0
  %3075 = vmatpush.bf16.msra.mxu0 %v2358
  %3076 = vmatpush.bf16.msra.mxu0 %v2355
  %3077 = vmatpush.bf16.msra.mxu0 %v2352
  %3078 = vmatpush.bf16.msra.mxu0 %v2349
  %3079 = vmatpush.bf16.msra.mxu0 %v2346
  %3080 = vmatpush.bf16.msra.mxu0 %v2343
  %3081 = vmatpush.bf16.msra.mxu0 %v2340
  %3082 = vmatpush.bf16.msra.mxu0 %v2337
  %3083 = vmatmul.bf16.gmra.mxu0 %v812
  %v3084 = vpop.f32.mrf.mxu0
  %v3085 = vadd.f32 %v3026, %v3084
  %v3086 = vpop.f32.mrf.mxu0
  %v3087 = vadd.f32 %v3028, %v3086
  %3088 = vmatmul.bf16.gmra.mxu0 %v817
  %v3089 = vpop.f32.mrf.mxu0
  %v3090 = vadd.f32 %v3031, %v3089
  %v3091 = vpop.f32.mrf.mxu0
  %v3092 = vadd.f32 %v3033, %v3091
  %3093 = vmatmul.bf16.gmra.mxu0 %v822
  %v3094 = vpop.f32.mrf.mxu0
  %v3095 = vadd.f32 %v3036, %v3094
  %v3096 = vpop.f32.mrf.mxu0
  %v3097 = vadd.f32 %v3038, %v3096
  %3098 = vmatmul.bf16.gmra.mxu0 %v827
  %v3099 = vpop.f32.mrf.mxu0
  %v3100 = vadd.f32 %v3041, %v3099
  %v3101 = vpop.f32.mrf.mxu0
  %v3102 = vadd.f32 %v3043, %v3101
  %3103 = vmatmul.bf16.gmra.mxu0 %v832
  %v3104 = vpop.f32.mrf.mxu0
  %v3105 = vadd.f32 %v3046, %v3104
  %v3106 = vpop.f32.mrf.mxu0
  %v3107 = vadd.f32 %v3048, %v3106
  %3108 = vmatmul.bf16.gmra.mxu0 %v837
  %v3109 = vpop.f32.mrf.mxu0
  %v3110 = vadd.f32 %v3051, %v3109
  %v3111 = vpop.f32.mrf.mxu0
  %v3112 = vadd.f32 %v3053, %v3111
  %3113 = vmatmul.bf16.gmra.mxu0 %v842
  %v3114 = vpop.f32.mrf.mxu0
  %v3115 = vadd.f32 %v3056, %v3114
  %v3116 = vpop.f32.mrf.mxu0
  %v3117 = vadd.f32 %v3058, %v3116
  %3118 = vmatmul.bf16.gmra.mxu0 %v847
  %v3119 = vpop.f32.mrf.mxu0
  %v3120 = vadd.f32 %v3061, %v3119
  %v3121 = vpop.f32.mrf.mxu0
  %v3122 = vadd.f32 %v3063, %v3121
  %3123 = vmatmul.bf16.gmra.mxu0 %v852
  %v3124 = vpop.f32.mrf.mxu0
  %v3125 = vadd.f32 %v3066, %v3124
  %v3126 = vpop.f32.mrf.mxu0
  %v3127 = vadd.f32 %v3068, %v3126
  %3128 = vmatmul.bf16.gmra.mxu0 %v857
  %v3129 = vpop.f32.mrf.mxu0
  %v3130 = vadd.f32 %v3071, %v3129
  %v3131 = vpop.f32.mrf.mxu0
  %v3132 = vadd.f32 %v3073, %v3131
  %3133 = vdwg.mxu0
  %3134 = vmatpush.bf16.msra.mxu0 %v2382
  %3135 = vmatpush.bf16.msra.mxu0 %v2379
  %3136 = vmatpush.bf16.msra.mxu0 %v2376
  %3137 = vmatpush.bf16.msra.mxu0 %v2373
  %3138 = vmatpush.bf16.msra.mxu0 %v2370
  %3139 = vmatpush.bf16.msra.mxu0 %v2367
  %3140 = vmatpush.bf16.msra.mxu0 %v2364
  %3141 = vmatpush.bf16.msra.mxu0 %v2361
  %3142 = vmatmul.bf16.gmra.mxu0 %v813
  %v3143 = vpop.f32.mrf.mxu0
  %v3144 = vadd.f32 %v3085, %v3143
  %v3145 = vpop.f32.mrf.mxu0
  %v3146 = vadd.f32 %v3087, %v3145
  %3147 = vmatmul.bf16.gmra.mxu0 %v818
  %v3148 = vpop.f32.mrf.mxu0
  %v3149 = vadd.f32 %v3090, %v3148
  %v3150 = vpop.f32.mrf.mxu0
  %v3151 = vadd.f32 %v3092, %v3150
  %3152 = vmatmul.bf16.gmra.mxu0 %v823
  %v3153 = vpop.f32.mrf.mxu0
  %v3154 = vadd.f32 %v3095, %v3153
  %v3155 = vpop.f32.mrf.mxu0
  %v3156 = vadd.f32 %v3097, %v3155
  %3157 = vmatmul.bf16.gmra.mxu0 %v828
  %v3158 = vpop.f32.mrf.mxu0
  %v3159 = vadd.f32 %v3100, %v3158
  %v3160 = vpop.f32.mrf.mxu0
  %v3161 = vadd.f32 %v3102, %v3160
  %3162 = vmatmul.bf16.gmra.mxu0 %v833
  %v3163 = vpop.f32.mrf.mxu0
  %v3164 = vadd.f32 %v3105, %v3163
  %v3165 = vpop.f32.mrf.mxu0
  %v3166 = vadd.f32 %v3107, %v3165
  %3167 = vmatmul.bf16.gmra.mxu0 %v838
  %v3168 = vpop.f32.mrf.mxu0
  %v3169 = vadd.f32 %v3110, %v3168
  %v3170 = vpop.f32.mrf.mxu0
  %v3171 = vadd.f32 %v3112, %v3170
  %3172 = vmatmul.bf16.gmra.mxu0 %v843
  %v3173 = vpop.f32.mrf.mxu0
  %v3174 = vadd.f32 %v3115, %v3173
  %v3175 = vpop.f32.mrf.mxu0
  %v3176 = vadd.f32 %v3117, %v3175
  %3177 = vmatmul.bf16.gmra.mxu0 %v848
  %v3178 = vpop.f32.mrf.mxu0
  %v3179 = vadd.f32 %v3120, %v3178
  %v3180 = vpop.f32.mrf.mxu0
  %v3181 = vadd.f32 %v3122, %v3180
  %3182 = vmatmul.bf16.gmra.mxu0 %v853
  %v3183 = vpop.f32.mrf.mxu0
  %v3184 = vadd.f32 %v3125, %v3183
  %v3185 = vpop.f32.mrf.mxu0
  %v3186 = vadd.f32 %v3127, %v3185
  %3187 = vmatmul.bf16.gmra.mxu0 %v858
  %v3188 = vpop.f32.mrf.mxu0
  %v3189 = vadd.f32 %v3130, %v3188
  %v3190 = vpop.f32.mrf.mxu0
  %v3191 = vadd.f32 %v3132, %v3190
  %3192 = vdwg.mxu0
  %3193 = vmatpush.bf16.msra.mxu0 %v2406
  %3194 = vmatpush.bf16.msra.mxu0 %v2403
  %3195 = vmatpush.bf16.msra.mxu0 %v2400
  %3196 = vmatpush.bf16.msra.mxu0 %v2397
  %3197 = vmatpush.bf16.msra.mxu0 %v2394
  %3198 = vmatpush.bf16.msra.mxu0 %v2391
  %3199 = vmatpush.bf16.msra.mxu0 %v2388
  %3200 = vmatpush.bf16.msra.mxu0 %v2385
  %3201 = vmatmul.bf16.gmra.mxu0 %v814
  %v3202 = vpop.f32.mrf.mxu0
  %v3203 = vadd.f32 %v3144, %v3202
  %v3204 = vpop.f32.mrf.mxu0
  %v3205 = vadd.f32 %v3146, %v3204
  %3206 = vmatmul.bf16.gmra.mxu0 %v819
  %v3207 = vpop.f32.mrf.mxu0
  %v3208 = vadd.f32 %v3149, %v3207
  %v3209 = vpop.f32.mrf.mxu0
  %v3210 = vadd.f32 %v3151, %v3209
  %3211 = vmatmul.bf16.gmra.mxu0 %v824
  %v3212 = vpop.f32.mrf.mxu0
  %v3213 = vadd.f32 %v3154, %v3212
  %v3214 = vpop.f32.mrf.mxu0
  %v3215 = vadd.f32 %v3156, %v3214
  %3216 = vmatmul.bf16.gmra.mxu0 %v829
  %v3217 = vpop.f32.mrf.mxu0
  %v3218 = vadd.f32 %v3159, %v3217
  %v3219 = vpop.f32.mrf.mxu0
  %v3220 = vadd.f32 %v3161, %v3219
  %3221 = vmatmul.bf16.gmra.mxu0 %v834
  %v3222 = vpop.f32.mrf.mxu0
  %v3223 = vadd.f32 %v3164, %v3222
  %v3224 = vpop.f32.mrf.mxu0
  %v3225 = vadd.f32 %v3166, %v3224
  %3226 = vmatmul.bf16.gmra.mxu0 %v839
  %v3227 = vpop.f32.mrf.mxu0
  %v3228 = vadd.f32 %v3169, %v3227
  %v3229 = vpop.f32.mrf.mxu0
  %v3230 = vadd.f32 %v3171, %v3229
  %3231 = vmatmul.bf16.gmra.mxu0 %v844
  %v3232 = vpop.f32.mrf.mxu0
  %v3233 = vadd.f32 %v3174, %v3232
  %v3234 = vpop.f32.mrf.mxu0
  %v3235 = vadd.f32 %v3176, %v3234
  %3236 = vmatmul.bf16.gmra.mxu0 %v849
  %v3237 = vpop.f32.mrf.mxu0
  %v3238 = vadd.f32 %v3179, %v3237
  %v3239 = vpop.f32.mrf.mxu0
  %v3240 = vadd.f32 %v3181, %v3239
  %3241 = vmatmul.bf16.gmra.mxu0 %v854
  %v3242 = vpop.f32.mrf.mxu0
  %v3243 = vadd.f32 %v3184, %v3242
  %v3244 = vpop.f32.mrf.mxu0
  %v3245 = vadd.f32 %v3186, %v3244
  %3246 = vmatmul.bf16.gmra.mxu0 %v859
  %v3247 = vpop.f32.mrf.mxu0
  %v3248 = vadd.f32 %v3189, %v3247
  %v3249 = vpop.f32.mrf.mxu0
  %v3250 = vadd.f32 %v3191, %v3249
  %3251 = vdwg.mxu0
  %3252 = vmatpush.bf16.msra.mxu0 %v2430
  %3253 = vmatpush.bf16.msra.mxu0 %v2427
  %3254 = vmatpush.bf16.msra.mxu0 %v2424
  %3255 = vmatpush.bf16.msra.mxu0 %v2421
  %3256 = vmatpush.bf16.msra.mxu0 %v2418
  %3257 = vmatpush.bf16.msra.mxu0 %v2415
  %3258 = vmatpush.bf16.msra.mxu0 %v2412
  %3259 = vmatpush.bf16.msra.mxu0 %v2409
  %3260 = vmatmul.bf16.gmra.mxu0 %v815
  %v3261 = vpop.f32.mrf.mxu0
  %v3262 = vadd.f32 %v3203, %v3261
  %v3263 = vpop.f32.mrf.mxu0
  %v3264 = vadd.f32 %v3205, %v3263
  %3265 = vmatmul.bf16.gmra.mxu0 %v820
  %v3266 = vpop.f32.mrf.mxu0
  %v3267 = vadd.f32 %v3208, %v3266
  %v3268 = vpop.f32.mrf.mxu0
  %v3269 = vadd.f32 %v3210, %v3268
  %3270 = vmatmul.bf16.gmra.mxu0 %v825
  %v3271 = vpop.f32.mrf.mxu0
  %v3272 = vadd.f32 %v3213, %v3271
  %v3273 = vpop.f32.mrf.mxu0
  %v3274 = vadd.f32 %v3215, %v3273
  %3275 = vmatmul.bf16.gmra.mxu0 %v830
  %v3276 = vpop.f32.mrf.mxu0
  %v3277 = vadd.f32 %v3218, %v3276
  %v3278 = vpop.f32.mrf.mxu0
  %v3279 = vadd.f32 %v3220, %v3278
  %3280 = vmatmul.bf16.gmra.mxu0 %v835
  %v3281 = vpop.f32.mrf.mxu0
  %v3282 = vadd.f32 %v3223, %v3281
  %v3283 = vpop.f32.mrf.mxu0
  %v3284 = vadd.f32 %v3225, %v3283
  %3285 = vmatmul.bf16.gmra.mxu0 %v840
  %v3286 = vpop.f32.mrf.mxu0
  %v3287 = vadd.f32 %v3228, %v3286
  %v3288 = vpop.f32.mrf.mxu0
  %v3289 = vadd.f32 %v3230, %v3288
  %3290 = vmatmul.bf16.gmra.mxu0 %v845
  %v3291 = vpop.f32.mrf.mxu0
  %v3292 = vadd.f32 %v3233, %v3291
  %v3293 = vpop.f32.mrf.mxu0
  %v3294 = vadd.f32 %v3235, %v3293
  %3295 = vmatmul.bf16.gmra.mxu0 %v850
  %v3296 = vpop.f32.mrf.mxu0
  %v3297 = vadd.f32 %v3238, %v3296
  %v3298 = vpop.f32.mrf.mxu0
  %v3299 = vadd.f32 %v3240, %v3298
  %3300 = vmatmul.bf16.gmra.mxu0 %v855
  %v3301 = vpop.f32.mrf.mxu0
  %v3302 = vadd.f32 %v3243, %v3301
  %v3303 = vpop.f32.mrf.mxu0
  %v3304 = vadd.f32 %v3245, %v3303
  %3305 = vmatmul.bf16.gmra.mxu0 %v860
  %v3306 = vpop.f32.mrf.mxu0
  %v3307 = vadd.f32 %v3248, %v3306
  %v3308 = vpop.f32.mrf.mxu0
  %v3309 = vadd.f32 %v3250, %v3308
  %3310 = vdwg.mxu0
  %3311 = vmatpush.bf16.msra.mxu0 %v2454
  %3312 = vmatpush.bf16.msra.mxu0 %v2451
  %3313 = vmatpush.bf16.msra.mxu0 %v2448
  %3314 = vmatpush.bf16.msra.mxu0 %v2445
  %3315 = vmatpush.bf16.msra.mxu0 %v2442
  %3316 = vmatpush.bf16.msra.mxu0 %v2439
  %3317 = vmatpush.bf16.msra.mxu0 %v2436
  %3318 = vmatpush.bf16.msra.mxu0 %v2433
  %3319 = vmatmul.bf16.gmra.mxu0 %v816
  %v3320 = vpop.f32.mrf.mxu0
  %v3321 = vadd.f32 %v3262, %v3320
  %v3322 = vpop.f32.mrf.mxu0
  %v3323 = vadd.f32 %v3264, %v3322
  %3324 = vmatmul.bf16.gmra.mxu0 %v821
  %v3325 = vpop.f32.mrf.mxu0
  %v3326 = vadd.f32 %v3267, %v3325
  %v3327 = vpop.f32.mrf.mxu0
  %v3328 = vadd.f32 %v3269, %v3327
  %3329 = vmatmul.bf16.gmra.mxu0 %v826
  %v3330 = vpop.f32.mrf.mxu0
  %v3331 = vadd.f32 %v3272, %v3330
  %v3332 = vpop.f32.mrf.mxu0
  %v3333 = vadd.f32 %v3274, %v3332
  %3334 = vmatmul.bf16.gmra.mxu0 %v831
  %v3335 = vpop.f32.mrf.mxu0
  %v3336 = vadd.f32 %v3277, %v3335
  %v3337 = vpop.f32.mrf.mxu0
  %v3338 = vadd.f32 %v3279, %v3337
  %3339 = vmatmul.bf16.gmra.mxu0 %v836
  %v3340 = vpop.f32.mrf.mxu0
  %v3341 = vadd.f32 %v3282, %v3340
  %v3342 = vpop.f32.mrf.mxu0
  %v3343 = vadd.f32 %v3284, %v3342
  %3344 = vmatmul.bf16.gmra.mxu0 %v841
  %v3345 = vpop.f32.mrf.mxu0
  %v3346 = vadd.f32 %v3287, %v3345
  %v3347 = vpop.f32.mrf.mxu0
  %v3348 = vadd.f32 %v3289, %v3347
  %3349 = vmatmul.bf16.gmra.mxu0 %v846
  %v3350 = vpop.f32.mrf.mxu0
  %v3351 = vadd.f32 %v3292, %v3350
  %v3352 = vpop.f32.mrf.mxu0
  %v3353 = vadd.f32 %v3294, %v3352
  %3354 = vmatmul.bf16.gmra.mxu0 %v851
  %v3355 = vpop.f32.mrf.mxu0
  %v3356 = vadd.f32 %v3297, %v3355
  %v3357 = vpop.f32.mrf.mxu0
  %v3358 = vadd.f32 %v3299, %v3357
  %3359 = vmatmul.bf16.gmra.mxu0 %v856
  %v3360 = vpop.f32.mrf.mxu0
  %v3361 = vadd.f32 %v3302, %v3360
  %v3362 = vpop.f32.mrf.mxu0
  %v3363 = vadd.f32 %v3304, %v3362
  %3364 = vmatmul.bf16.gmra.mxu0 %v861
  %v3365 = vpop.f32.mrf.mxu0
  %v3366 = vadd.f32 %v3307, %v3365
  %v3367 = vpop.f32.mrf.mxu0
  %v3368 = vadd.f32 %v3309, %v3367
  %3369 = vdwg.mxu0
  %3370 = vmatpush.bf16.msra.mxu0 %v2215
  %3371 = vmatpush.bf16.msra.mxu0 %v2212
  %3372 = vmatpush.bf16.msra.mxu0 %v2209
  %3373 = vmatpush.bf16.msra.mxu0 %v2206
  %3374 = vmatpush.bf16.msra.mxu0 %v2203
  %3375 = vmatpush.bf16.msra.mxu0 %v2200
  %3376 = vmatpush.bf16.msra.mxu0 %v2197
  %3377 = vmatpush.bf16.msra.mxu0 %v2194
  %3378 = vmatmul.bf16.gmra.mxu0 %v341
  %v3379 = vpop.f32.mrf.mxu0
  %v3380 = vadd.f32 %v1308, %v3379
  %v3381 = vpop.f32.mrf.mxu0
  %v3382 = vadd.f32 %v1308, %v3381
  %3383 = vmatmul.bf16.gmra.mxu0 %v347
  %v3384 = vpop.f32.mrf.mxu0
  %v3385 = vadd.f32 %v1308, %v3384
  %v3386 = vpop.f32.mrf.mxu0
  %v3387 = vadd.f32 %v1308, %v3386
  %3388 = vmatmul.bf16.gmra.mxu0 %v353
  %v3389 = vpop.f32.mrf.mxu0
  %v3390 = vadd.f32 %v1308, %v3389
  %v3391 = vpop.f32.mrf.mxu0
  %v3392 = vadd.f32 %v1308, %v3391
  %3393 = vmatmul.bf16.gmra.mxu0 %v359
  %v3394 = vpop.f32.mrf.mxu0
  %v3395 = vadd.f32 %v1308, %v3394
  %v3396 = vpop.f32.mrf.mxu0
  %v3397 = vadd.f32 %v1308, %v3396
  %3398 = vmatmul.bf16.gmra.mxu0 %v365
  %v3399 = vpop.f32.mrf.mxu0
  %v3400 = vadd.f32 %v1308, %v3399
  %v3401 = vpop.f32.mrf.mxu0
  %v3402 = vadd.f32 %v1308, %v3401
  %3403 = vmatmul.bf16.gmra.mxu0 %v371
  %v3404 = vpop.f32.mrf.mxu0
  %v3405 = vadd.f32 %v1308, %v3404
  %v3406 = vpop.f32.mrf.mxu0
  %v3407 = vadd.f32 %v1308, %v3406
  %3408 = vmatmul.bf16.gmra.mxu0 %v377
  %v3409 = vpop.f32.mrf.mxu0
  %v3410 = vadd.f32 %v1308, %v3409
  %v3411 = vpop.f32.mrf.mxu0
  %v3412 = vadd.f32 %v1308, %v3411
  %3413 = vmatmul.bf16.gmra.mxu0 %v383
  %v3414 = vpop.f32.mrf.mxu0
  %v3415 = vadd.f32 %v1308, %v3414
  %v3416 = vpop.f32.mrf.mxu0
  %v3417 = vadd.f32 %v1308, %v3416
  %3418 = vmatmul.bf16.gmra.mxu0 %v389
  %v3419 = vpop.f32.mrf.mxu0
  %v3420 = vadd.f32 %v1308, %v3419
  %v3421 = vpop.f32.mrf.mxu0
  %v3422 = vadd.f32 %v1308, %v3421
  %3423 = vmatmul.bf16.gmra.mxu0 %v395
  %v3424 = vpop.f32.mrf.mxu0
  %v3425 = vadd.f32 %v1308, %v3424
  %v3426 = vpop.f32.mrf.mxu0
  %v3427 = vadd.f32 %v1308, %v3426
  %3428 = vdwg.mxu0
  %3429 = vmatpush.bf16.msra.mxu0 %v2239
  %3430 = vmatpush.bf16.msra.mxu0 %v2236
  %3431 = vmatpush.bf16.msra.mxu0 %v2233
  %3432 = vmatpush.bf16.msra.mxu0 %v2230
  %3433 = vmatpush.bf16.msra.mxu0 %v2227
  %3434 = vmatpush.bf16.msra.mxu0 %v2224
  %3435 = vmatpush.bf16.msra.mxu0 %v2221
  %3436 = vmatpush.bf16.msra.mxu0 %v2218
  %3437 = vmatmul.bf16.gmra.mxu0 %v342
  %v3438 = vpop.f32.mrf.mxu0
  %v3439 = vadd.f32 %v3380, %v3438
  %v3440 = vpop.f32.mrf.mxu0
  %v3441 = vadd.f32 %v3382, %v3440
  %3442 = vmatmul.bf16.gmra.mxu0 %v348
  %v3443 = vpop.f32.mrf.mxu0
  %v3444 = vadd.f32 %v3385, %v3443
  %v3445 = vpop.f32.mrf.mxu0
  %v3446 = vadd.f32 %v3387, %v3445
  %3447 = vmatmul.bf16.gmra.mxu0 %v354
  %v3448 = vpop.f32.mrf.mxu0
  %v3449 = vadd.f32 %v3390, %v3448
  %v3450 = vpop.f32.mrf.mxu0
  %v3451 = vadd.f32 %v3392, %v3450
  %3452 = vmatmul.bf16.gmra.mxu0 %v360
  %v3453 = vpop.f32.mrf.mxu0
  %v3454 = vadd.f32 %v3395, %v3453
  %v3455 = vpop.f32.mrf.mxu0
  %v3456 = vadd.f32 %v3397, %v3455
  %3457 = vmatmul.bf16.gmra.mxu0 %v366
  %v3458 = vpop.f32.mrf.mxu0
  %v3459 = vadd.f32 %v3400, %v3458
  %v3460 = vpop.f32.mrf.mxu0
  %v3461 = vadd.f32 %v3402, %v3460
  %3462 = vmatmul.bf16.gmra.mxu0 %v372
  %v3463 = vpop.f32.mrf.mxu0
  %v3464 = vadd.f32 %v3405, %v3463
  %v3465 = vpop.f32.mrf.mxu0
  %v3466 = vadd.f32 %v3407, %v3465
  %3467 = vmatmul.bf16.gmra.mxu0 %v378
  %v3468 = vpop.f32.mrf.mxu0
  %v3469 = vadd.f32 %v3410, %v3468
  %v3470 = vpop.f32.mrf.mxu0
  %v3471 = vadd.f32 %v3412, %v3470
  %3472 = vmatmul.bf16.gmra.mxu0 %v384
  %v3473 = vpop.f32.mrf.mxu0
  %v3474 = vadd.f32 %v3415, %v3473
  %v3475 = vpop.f32.mrf.mxu0
  %v3476 = vadd.f32 %v3417, %v3475
  %3477 = vmatmul.bf16.gmra.mxu0 %v390
  %v3478 = vpop.f32.mrf.mxu0
  %v3479 = vadd.f32 %v3420, %v3478
  %v3480 = vpop.f32.mrf.mxu0
  %v3481 = vadd.f32 %v3422, %v3480
  %3482 = vmatmul.bf16.gmra.mxu0 %v396
  %v3483 = vpop.f32.mrf.mxu0
  %v3484 = vadd.f32 %v3425, %v3483
  %v3485 = vpop.f32.mrf.mxu0
  %v3486 = vadd.f32 %v3427, %v3485
  %3487 = vdwg.mxu0
  %3488 = vmatpush.bf16.msra.mxu0 %v2263
  %3489 = vmatpush.bf16.msra.mxu0 %v2260
  %3490 = vmatpush.bf16.msra.mxu0 %v2257
  %3491 = vmatpush.bf16.msra.mxu0 %v2254
  %3492 = vmatpush.bf16.msra.mxu0 %v2251
  %3493 = vmatpush.bf16.msra.mxu0 %v2248
  %3494 = vmatpush.bf16.msra.mxu0 %v2245
  %3495 = vmatpush.bf16.msra.mxu0 %v2242
  %3496 = vmatmul.bf16.gmra.mxu0 %v343
  %v3497 = vpop.f32.mrf.mxu0
  %v3498 = vadd.f32 %v3439, %v3497
  %v3499 = vpop.f32.mrf.mxu0
  %v3500 = vadd.f32 %v3441, %v3499
  %3501 = vmatmul.bf16.gmra.mxu0 %v349
  %v3502 = vpop.f32.mrf.mxu0
  %v3503 = vadd.f32 %v3444, %v3502
  %v3504 = vpop.f32.mrf.mxu0
  %v3505 = vadd.f32 %v3446, %v3504
  %3506 = vmatmul.bf16.gmra.mxu0 %v355
  %v3507 = vpop.f32.mrf.mxu0
  %v3508 = vadd.f32 %v3449, %v3507
  %v3509 = vpop.f32.mrf.mxu0
  %v3510 = vadd.f32 %v3451, %v3509
  %3511 = vmatmul.bf16.gmra.mxu0 %v361
  %v3512 = vpop.f32.mrf.mxu0
  %v3513 = vadd.f32 %v3454, %v3512
  %v3514 = vpop.f32.mrf.mxu0
  %v3515 = vadd.f32 %v3456, %v3514
  %3516 = vmatmul.bf16.gmra.mxu0 %v367
  %v3517 = vpop.f32.mrf.mxu0
  %v3518 = vadd.f32 %v3459, %v3517
  %v3519 = vpop.f32.mrf.mxu0
  %v3520 = vadd.f32 %v3461, %v3519
  %3521 = vmatmul.bf16.gmra.mxu0 %v373
  %v3522 = vpop.f32.mrf.mxu0
  %v3523 = vadd.f32 %v3464, %v3522
  %v3524 = vpop.f32.mrf.mxu0
  %v3525 = vadd.f32 %v3466, %v3524
  %3526 = vmatmul.bf16.gmra.mxu0 %v379
  %v3527 = vpop.f32.mrf.mxu0
  %v3528 = vadd.f32 %v3469, %v3527
  %v3529 = vpop.f32.mrf.mxu0
  %v3530 = vadd.f32 %v3471, %v3529
  %3531 = vmatmul.bf16.gmra.mxu0 %v385
  %v3532 = vpop.f32.mrf.mxu0
  %v3533 = vadd.f32 %v3474, %v3532
  %v3534 = vpop.f32.mrf.mxu0
  %v3535 = vadd.f32 %v3476, %v3534
  %3536 = vmatmul.bf16.gmra.mxu0 %v391
  %v3537 = vpop.f32.mrf.mxu0
  %v3538 = vadd.f32 %v3479, %v3537
  %v3539 = vpop.f32.mrf.mxu0
  %v3540 = vadd.f32 %v3481, %v3539
  %3541 = vmatmul.bf16.gmra.mxu0 %v397
  %v3542 = vpop.f32.mrf.mxu0
  %v3543 = vadd.f32 %v3484, %v3542
  %v3544 = vpop.f32.mrf.mxu0
  %v3545 = vadd.f32 %v3486, %v3544
  %3546 = vdwg.mxu0
  %3547 = vmatpush.bf16.msra.mxu0 %v2287
  %3548 = vmatpush.bf16.msra.mxu0 %v2284
  %3549 = vmatpush.bf16.msra.mxu0 %v2281
  %3550 = vmatpush.bf16.msra.mxu0 %v2278
  %3551 = vmatpush.bf16.msra.mxu0 %v2275
  %3552 = vmatpush.bf16.msra.mxu0 %v2272
  %3553 = vmatpush.bf16.msra.mxu0 %v2269
  %3554 = vmatpush.bf16.msra.mxu0 %v2266
  %3555 = vmatmul.bf16.gmra.mxu0 %v344
  %v3556 = vpop.f32.mrf.mxu0
  %v3557 = vadd.f32 %v3498, %v3556
  %v3558 = vpop.f32.mrf.mxu0
  %v3559 = vadd.f32 %v3500, %v3558
  %3560 = vmatmul.bf16.gmra.mxu0 %v350
  %v3561 = vpop.f32.mrf.mxu0
  %v3562 = vadd.f32 %v3503, %v3561
  %v3563 = vpop.f32.mrf.mxu0
  %v3564 = vadd.f32 %v3505, %v3563
  %3565 = vmatmul.bf16.gmra.mxu0 %v356
  %v3566 = vpop.f32.mrf.mxu0
  %v3567 = vadd.f32 %v3508, %v3566
  %v3568 = vpop.f32.mrf.mxu0
  %v3569 = vadd.f32 %v3510, %v3568
  %3570 = vmatmul.bf16.gmra.mxu0 %v362
  %v3571 = vpop.f32.mrf.mxu0
  %v3572 = vadd.f32 %v3513, %v3571
  %v3573 = vpop.f32.mrf.mxu0
  %v3574 = vadd.f32 %v3515, %v3573
  %3575 = vmatmul.bf16.gmra.mxu0 %v368
  %v3576 = vpop.f32.mrf.mxu0
  %v3577 = vadd.f32 %v3518, %v3576
  %v3578 = vpop.f32.mrf.mxu0
  %v3579 = vadd.f32 %v3520, %v3578
  %3580 = vmatmul.bf16.gmra.mxu0 %v374
  %v3581 = vpop.f32.mrf.mxu0
  %v3582 = vadd.f32 %v3523, %v3581
  %v3583 = vpop.f32.mrf.mxu0
  %v3584 = vadd.f32 %v3525, %v3583
  %3585 = vmatmul.bf16.gmra.mxu0 %v380
  %v3586 = vpop.f32.mrf.mxu0
  %v3587 = vadd.f32 %v3528, %v3586
  %v3588 = vpop.f32.mrf.mxu0
  %v3589 = vadd.f32 %v3530, %v3588
  %3590 = vmatmul.bf16.gmra.mxu0 %v386
  %v3591 = vpop.f32.mrf.mxu0
  %v3592 = vadd.f32 %v3533, %v3591
  %v3593 = vpop.f32.mrf.mxu0
  %v3594 = vadd.f32 %v3535, %v3593
  %3595 = vmatmul.bf16.gmra.mxu0 %v392
  %v3596 = vpop.f32.mrf.mxu0
  %v3597 = vadd.f32 %v3538, %v3596
  %v3598 = vpop.f32.mrf.mxu0
  %v3599 = vadd.f32 %v3540, %v3598
  %3600 = vmatmul.bf16.gmra.mxu0 %v398
  %v3601 = vpop.f32.mrf.mxu0
  %v3602 = vadd.f32 %v3543, %v3601
  %v3603 = vpop.f32.mrf.mxu0
  %v3604 = vadd.f32 %v3545, %v3603
  %3605 = vdwg.mxu0
  %3606 = vmatpush.bf16.msra.mxu0 %v2311
  %3607 = vmatpush.bf16.msra.mxu0 %v2308
  %3608 = vmatpush.bf16.msra.mxu0 %v2305
  %3609 = vmatpush.bf16.msra.mxu0 %v2302
  %3610 = vmatpush.bf16.msra.mxu0 %v2299
  %3611 = vmatpush.bf16.msra.mxu0 %v2296
  %3612 = vmatpush.bf16.msra.mxu0 %v2293
  %3613 = vmatpush.bf16.msra.mxu0 %v2290
  %3614 = vmatmul.bf16.gmra.mxu0 %v345
  %v3615 = vpop.f32.mrf.mxu0
  %v3616 = vadd.f32 %v3557, %v3615
  %v3617 = vpop.f32.mrf.mxu0
  %v3618 = vadd.f32 %v3559, %v3617
  %3619 = vmatmul.bf16.gmra.mxu0 %v351
  %v3620 = vpop.f32.mrf.mxu0
  %v3621 = vadd.f32 %v3562, %v3620
  %v3622 = vpop.f32.mrf.mxu0
  %v3623 = vadd.f32 %v3564, %v3622
  %3624 = vmatmul.bf16.gmra.mxu0 %v357
  %v3625 = vpop.f32.mrf.mxu0
  %v3626 = vadd.f32 %v3567, %v3625
  %v3627 = vpop.f32.mrf.mxu0
  %v3628 = vadd.f32 %v3569, %v3627
  %3629 = vmatmul.bf16.gmra.mxu0 %v363
  %v3630 = vpop.f32.mrf.mxu0
  %v3631 = vadd.f32 %v3572, %v3630
  %v3632 = vpop.f32.mrf.mxu0
  %v3633 = vadd.f32 %v3574, %v3632
  %3634 = vmatmul.bf16.gmra.mxu0 %v369
  %v3635 = vpop.f32.mrf.mxu0
  %v3636 = vadd.f32 %v3577, %v3635
  %v3637 = vpop.f32.mrf.mxu0
  %v3638 = vadd.f32 %v3579, %v3637
  %3639 = vmatmul.bf16.gmra.mxu0 %v375
  %v3640 = vpop.f32.mrf.mxu0
  %v3641 = vadd.f32 %v3582, %v3640
  %v3642 = vpop.f32.mrf.mxu0
  %v3643 = vadd.f32 %v3584, %v3642
  %3644 = vmatmul.bf16.gmra.mxu0 %v381
  %v3645 = vpop.f32.mrf.mxu0
  %v3646 = vadd.f32 %v3587, %v3645
  %v3647 = vpop.f32.mrf.mxu0
  %v3648 = vadd.f32 %v3589, %v3647
  %3649 = vmatmul.bf16.gmra.mxu0 %v387
  %v3650 = vpop.f32.mrf.mxu0
  %v3651 = vadd.f32 %v3592, %v3650
  %v3652 = vpop.f32.mrf.mxu0
  %v3653 = vadd.f32 %v3594, %v3652
  %3654 = vmatmul.bf16.gmra.mxu0 %v393
  %v3655 = vpop.f32.mrf.mxu0
  %v3656 = vadd.f32 %v3597, %v3655
  %v3657 = vpop.f32.mrf.mxu0
  %v3658 = vadd.f32 %v3599, %v3657
  %3659 = vmatmul.bf16.gmra.mxu0 %v399
  %v3660 = vpop.f32.mrf.mxu0
  %v3661 = vadd.f32 %v3602, %v3660
  %v3662 = vpop.f32.mrf.mxu0
  %v3663 = vadd.f32 %v3604, %v3662
  %3664 = vdwg.mxu0
  %3665 = vmatpush.bf16.msra.mxu0 %v2335
  %3666 = vmatpush.bf16.msra.mxu0 %v2332
  %3667 = vmatpush.bf16.msra.mxu0 %v2329
  %3668 = vmatpush.bf16.msra.mxu0 %v2326
  %3669 = vmatpush.bf16.msra.mxu0 %v2323
  %3670 = vmatpush.bf16.msra.mxu0 %v2320
  %3671 = vmatpush.bf16.msra.mxu0 %v2317
  %3672 = vmatpush.bf16.msra.mxu0 %v2314
  %3673 = vmatmul.bf16.gmra.mxu0 %v915
  %v3674 = vpop.f32.mrf.mxu0
  %v3675 = vadd.f32 %v3616, %v3674
  %v3676 = vpop.f32.mrf.mxu0
  %v3677 = vadd.f32 %v3618, %v3676
  %3678 = vmatmul.bf16.gmra.mxu0 %v919
  %v3679 = vpop.f32.mrf.mxu0
  %v3680 = vadd.f32 %v3621, %v3679
  %v3681 = vpop.f32.mrf.mxu0
  %v3682 = vadd.f32 %v3623, %v3681
  %3683 = vmatmul.bf16.gmra.mxu0 %v923
  %v3684 = vpop.f32.mrf.mxu0
  %v3685 = vadd.f32 %v3626, %v3684
  %v3686 = vpop.f32.mrf.mxu0
  %v3687 = vadd.f32 %v3628, %v3686
  %3688 = vmatmul.bf16.gmra.mxu0 %v927
  %v3689 = vpop.f32.mrf.mxu0
  %v3690 = vadd.f32 %v3631, %v3689
  %v3691 = vpop.f32.mrf.mxu0
  %v3692 = vadd.f32 %v3633, %v3691
  %3693 = vmatmul.bf16.gmra.mxu0 %v931
  %v3694 = vpop.f32.mrf.mxu0
  %v3695 = vadd.f32 %v3636, %v3694
  %v3696 = vpop.f32.mrf.mxu0
  %v3697 = vadd.f32 %v3638, %v3696
  %3698 = vmatmul.bf16.gmra.mxu0 %v935
  %v3699 = vpop.f32.mrf.mxu0
  %v3700 = vadd.f32 %v3641, %v3699
  %v3701 = vpop.f32.mrf.mxu0
  %v3702 = vadd.f32 %v3643, %v3701
  %3703 = vmatmul.bf16.gmra.mxu0 %v939
  %v3704 = vpop.f32.mrf.mxu0
  %v3705 = vadd.f32 %v3646, %v3704
  %v3706 = vpop.f32.mrf.mxu0
  %v3707 = vadd.f32 %v3648, %v3706
  %3708 = vmatmul.bf16.gmra.mxu0 %v943
  %v3709 = vpop.f32.mrf.mxu0
  %v3710 = vadd.f32 %v3651, %v3709
  %v3711 = vpop.f32.mrf.mxu0
  %v3712 = vadd.f32 %v3653, %v3711
  %3713 = vmatmul.bf16.gmra.mxu0 %v947
  %v3714 = vpop.f32.mrf.mxu0
  %v3715 = vadd.f32 %v3656, %v3714
  %v3716 = vpop.f32.mrf.mxu0
  %v3717 = vadd.f32 %v3658, %v3716
  %3718 = vmatmul.bf16.gmra.mxu0 %v951
  %v3719 = vpop.f32.mrf.mxu0
  %v3720 = vadd.f32 %v3661, %v3719
  %v3721 = vpop.f32.mrf.mxu0
  %v3722 = vadd.f32 %v3663, %v3721
  %3723 = vdwg.mxu0
  %3724 = vmatpush.bf16.msra.mxu0 %v2359
  %3725 = vmatpush.bf16.msra.mxu0 %v2356
  %3726 = vmatpush.bf16.msra.mxu0 %v2353
  %3727 = vmatpush.bf16.msra.mxu0 %v2350
  %3728 = vmatpush.bf16.msra.mxu0 %v2347
  %3729 = vmatpush.bf16.msra.mxu0 %v2344
  %3730 = vmatpush.bf16.msra.mxu0 %v2341
  %3731 = vmatpush.bf16.msra.mxu0 %v2338
  %3732 = vmatmul.bf16.gmra.mxu0 %v812
  %v3733 = vpop.f32.mrf.mxu0
  %v3734 = vadd.f32 %v3675, %v3733
  %v3735 = vpop.f32.mrf.mxu0
  %v3736 = vadd.f32 %v3677, %v3735
  %3737 = vmatmul.bf16.gmra.mxu0 %v817
  %v3738 = vpop.f32.mrf.mxu0
  %v3739 = vadd.f32 %v3680, %v3738
  %v3740 = vpop.f32.mrf.mxu0
  %v3741 = vadd.f32 %v3682, %v3740
  %3742 = vmatmul.bf16.gmra.mxu0 %v822
  %v3743 = vpop.f32.mrf.mxu0
  %v3744 = vadd.f32 %v3685, %v3743
  %v3745 = vpop.f32.mrf.mxu0
  %v3746 = vadd.f32 %v3687, %v3745
  %3747 = vmatmul.bf16.gmra.mxu0 %v827
  %v3748 = vpop.f32.mrf.mxu0
  %v3749 = vadd.f32 %v3690, %v3748
  %v3750 = vpop.f32.mrf.mxu0
  %v3751 = vadd.f32 %v3692, %v3750
  %3752 = vmatmul.bf16.gmra.mxu0 %v832
  %v3753 = vpop.f32.mrf.mxu0
  %v3754 = vadd.f32 %v3695, %v3753
  %v3755 = vpop.f32.mrf.mxu0
  %v3756 = vadd.f32 %v3697, %v3755
  %3757 = vmatmul.bf16.gmra.mxu0 %v837
  %v3758 = vpop.f32.mrf.mxu0
  %v3759 = vadd.f32 %v3700, %v3758
  %v3760 = vpop.f32.mrf.mxu0
  %v3761 = vadd.f32 %v3702, %v3760
  %3762 = vmatmul.bf16.gmra.mxu0 %v842
  %v3763 = vpop.f32.mrf.mxu0
  %v3764 = vadd.f32 %v3705, %v3763
  %v3765 = vpop.f32.mrf.mxu0
  %v3766 = vadd.f32 %v3707, %v3765
  %3767 = vmatmul.bf16.gmra.mxu0 %v847
  %v3768 = vpop.f32.mrf.mxu0
  %v3769 = vadd.f32 %v3710, %v3768
  %v3770 = vpop.f32.mrf.mxu0
  %v3771 = vadd.f32 %v3712, %v3770
  %3772 = vmatmul.bf16.gmra.mxu0 %v852
  %v3773 = vpop.f32.mrf.mxu0
  %v3774 = vadd.f32 %v3715, %v3773
  %v3775 = vpop.f32.mrf.mxu0
  %v3776 = vadd.f32 %v3717, %v3775
  %3777 = vmatmul.bf16.gmra.mxu0 %v857
  %v3778 = vpop.f32.mrf.mxu0
  %v3779 = vadd.f32 %v3720, %v3778
  %v3780 = vpop.f32.mrf.mxu0
  %v3781 = vadd.f32 %v3722, %v3780
  %3782 = vdwg.mxu0
  %3783 = vmatpush.bf16.msra.mxu0 %v2383
  %3784 = vmatpush.bf16.msra.mxu0 %v2380
  %3785 = vmatpush.bf16.msra.mxu0 %v2377
  %3786 = vmatpush.bf16.msra.mxu0 %v2374
  %3787 = vmatpush.bf16.msra.mxu0 %v2371
  %3788 = vmatpush.bf16.msra.mxu0 %v2368
  %3789 = vmatpush.bf16.msra.mxu0 %v2365
  %3790 = vmatpush.bf16.msra.mxu0 %v2362
  %3791 = vmatmul.bf16.gmra.mxu0 %v813
  %v3792 = vpop.f32.mrf.mxu0
  %v3793 = vadd.f32 %v3734, %v3792
  %v3794 = vpop.f32.mrf.mxu0
  %v3795 = vadd.f32 %v3736, %v3794
  %3796 = vmatmul.bf16.gmra.mxu0 %v818
  %v3797 = vpop.f32.mrf.mxu0
  %v3798 = vadd.f32 %v3739, %v3797
  %v3799 = vpop.f32.mrf.mxu0
  %v3800 = vadd.f32 %v3741, %v3799
  %3801 = vmatmul.bf16.gmra.mxu0 %v823
  %v3802 = vpop.f32.mrf.mxu0
  %v3803 = vadd.f32 %v3744, %v3802
  %v3804 = vpop.f32.mrf.mxu0
  %v3805 = vadd.f32 %v3746, %v3804
  %3806 = vmatmul.bf16.gmra.mxu0 %v828
  %v3807 = vpop.f32.mrf.mxu0
  %v3808 = vadd.f32 %v3749, %v3807
  %v3809 = vpop.f32.mrf.mxu0
  %v3810 = vadd.f32 %v3751, %v3809
  %3811 = vmatmul.bf16.gmra.mxu0 %v833
  %v3812 = vpop.f32.mrf.mxu0
  %v3813 = vadd.f32 %v3754, %v3812
  %v3814 = vpop.f32.mrf.mxu0
  %v3815 = vadd.f32 %v3756, %v3814
  %3816 = vmatmul.bf16.gmra.mxu0 %v838
  %v3817 = vpop.f32.mrf.mxu0
  %v3818 = vadd.f32 %v3759, %v3817
  %v3819 = vpop.f32.mrf.mxu0
  %v3820 = vadd.f32 %v3761, %v3819
  %3821 = vmatmul.bf16.gmra.mxu0 %v843
  %v3822 = vpop.f32.mrf.mxu0
  %v3823 = vadd.f32 %v3764, %v3822
  %v3824 = vpop.f32.mrf.mxu0
  %v3825 = vadd.f32 %v3766, %v3824
  %3826 = vmatmul.bf16.gmra.mxu0 %v848
  %v3827 = vpop.f32.mrf.mxu0
  %v3828 = vadd.f32 %v3769, %v3827
  %v3829 = vpop.f32.mrf.mxu0
  %v3830 = vadd.f32 %v3771, %v3829
  %3831 = vmatmul.bf16.gmra.mxu0 %v853
  %v3832 = vpop.f32.mrf.mxu0
  %v3833 = vadd.f32 %v3774, %v3832
  %v3834 = vpop.f32.mrf.mxu0
  %v3835 = vadd.f32 %v3776, %v3834
  %3836 = vmatmul.bf16.gmra.mxu0 %v858
  %v3837 = vpop.f32.mrf.mxu0
  %v3838 = vadd.f32 %v3779, %v3837
  %v3839 = vpop.f32.mrf.mxu0
  %v3840 = vadd.f32 %v3781, %v3839
  %3841 = vdwg.mxu0
  %3842 = vmatpush.bf16.msra.mxu0 %v2407
  %3843 = vmatpush.bf16.msra.mxu0 %v2404
  %3844 = vmatpush.bf16.msra.mxu0 %v2401
  %3845 = vmatpush.bf16.msra.mxu0 %v2398
  %3846 = vmatpush.bf16.msra.mxu0 %v2395
  %3847 = vmatpush.bf16.msra.mxu0 %v2392
  %3848 = vmatpush.bf16.msra.mxu0 %v2389
  %3849 = vmatpush.bf16.msra.mxu0 %v2386
  %3850 = vmatmul.bf16.gmra.mxu0 %v814
  %v3851 = vpop.f32.mrf.mxu0
  %v3852 = vadd.f32 %v3793, %v3851
  %v3853 = vpop.f32.mrf.mxu0
  %v3854 = vadd.f32 %v3795, %v3853
  %3855 = vmatmul.bf16.gmra.mxu0 %v819
  %v3856 = vpop.f32.mrf.mxu0
  %v3857 = vadd.f32 %v3798, %v3856
  %v3858 = vpop.f32.mrf.mxu0
  %v3859 = vadd.f32 %v3800, %v3858
  %3860 = vmatmul.bf16.gmra.mxu0 %v824
  %v3861 = vpop.f32.mrf.mxu0
  %v3862 = vadd.f32 %v3803, %v3861
  %v3863 = vpop.f32.mrf.mxu0
  %v3864 = vadd.f32 %v3805, %v3863
  %3865 = vmatmul.bf16.gmra.mxu0 %v829
  %v3866 = vpop.f32.mrf.mxu0
  %v3867 = vadd.f32 %v3808, %v3866
  %v3868 = vpop.f32.mrf.mxu0
  %v3869 = vadd.f32 %v3810, %v3868
  %3870 = vmatmul.bf16.gmra.mxu0 %v834
  %v3871 = vpop.f32.mrf.mxu0
  %v3872 = vadd.f32 %v3813, %v3871
  %v3873 = vpop.f32.mrf.mxu0
  %v3874 = vadd.f32 %v3815, %v3873
  %3875 = vmatmul.bf16.gmra.mxu0 %v839
  %v3876 = vpop.f32.mrf.mxu0
  %v3877 = vadd.f32 %v3818, %v3876
  %v3878 = vpop.f32.mrf.mxu0
  %v3879 = vadd.f32 %v3820, %v3878
  %3880 = vmatmul.bf16.gmra.mxu0 %v844
  %v3881 = vpop.f32.mrf.mxu0
  %v3882 = vadd.f32 %v3823, %v3881
  %v3883 = vpop.f32.mrf.mxu0
  %v3884 = vadd.f32 %v3825, %v3883
  %3885 = vmatmul.bf16.gmra.mxu0 %v849
  %v3886 = vpop.f32.mrf.mxu0
  %v3887 = vadd.f32 %v3828, %v3886
  %v3888 = vpop.f32.mrf.mxu0
  %v3889 = vadd.f32 %v3830, %v3888
  %3890 = vmatmul.bf16.gmra.mxu0 %v854
  %v3891 = vpop.f32.mrf.mxu0
  %v3892 = vadd.f32 %v3833, %v3891
  %v3893 = vpop.f32.mrf.mxu0
  %v3894 = vadd.f32 %v3835, %v3893
  %3895 = vmatmul.bf16.gmra.mxu0 %v859
  %v3896 = vpop.f32.mrf.mxu0
  %v3897 = vadd.f32 %v3838, %v3896
  %v3898 = vpop.f32.mrf.mxu0
  %v3899 = vadd.f32 %v3840, %v3898
  %3900 = vdwg.mxu0
  %3901 = vmatpush.bf16.msra.mxu0 %v2431
  %3902 = vmatpush.bf16.msra.mxu0 %v2428
  %3903 = vmatpush.bf16.msra.mxu0 %v2425
  %3904 = vmatpush.bf16.msra.mxu0 %v2422
  %3905 = vmatpush.bf16.msra.mxu0 %v2419
  %3906 = vmatpush.bf16.msra.mxu0 %v2416
  %3907 = vmatpush.bf16.msra.mxu0 %v2413
  %3908 = vmatpush.bf16.msra.mxu0 %v2410
  %3909 = vmatmul.bf16.gmra.mxu0 %v815
  %v3910 = vpop.f32.mrf.mxu0
  %v3911 = vadd.f32 %v3852, %v3910
  %v3912 = vpop.f32.mrf.mxu0
  %v3913 = vadd.f32 %v3854, %v3912
  %3914 = vmatmul.bf16.gmra.mxu0 %v820
  %v3915 = vpop.f32.mrf.mxu0
  %v3916 = vadd.f32 %v3857, %v3915
  %v3917 = vpop.f32.mrf.mxu0
  %v3918 = vadd.f32 %v3859, %v3917
  %3919 = vmatmul.bf16.gmra.mxu0 %v825
  %v3920 = vpop.f32.mrf.mxu0
  %v3921 = vadd.f32 %v3862, %v3920
  %v3922 = vpop.f32.mrf.mxu0
  %v3923 = vadd.f32 %v3864, %v3922
  %3924 = vmatmul.bf16.gmra.mxu0 %v830
  %v3925 = vpop.f32.mrf.mxu0
  %v3926 = vadd.f32 %v3867, %v3925
  %v3927 = vpop.f32.mrf.mxu0
  %v3928 = vadd.f32 %v3869, %v3927
  %3929 = vmatmul.bf16.gmra.mxu0 %v835
  %v3930 = vpop.f32.mrf.mxu0
  %v3931 = vadd.f32 %v3872, %v3930
  %v3932 = vpop.f32.mrf.mxu0
  %v3933 = vadd.f32 %v3874, %v3932
  %3934 = vmatmul.bf16.gmra.mxu0 %v840
  %v3935 = vpop.f32.mrf.mxu0
  %v3936 = vadd.f32 %v3877, %v3935
  %v3937 = vpop.f32.mrf.mxu0
  %v3938 = vadd.f32 %v3879, %v3937
  %3939 = vmatmul.bf16.gmra.mxu0 %v845
  %v3940 = vpop.f32.mrf.mxu0
  %v3941 = vadd.f32 %v3882, %v3940
  %v3942 = vpop.f32.mrf.mxu0
  %v3943 = vadd.f32 %v3884, %v3942
  %3944 = vmatmul.bf16.gmra.mxu0 %v850
  %v3945 = vpop.f32.mrf.mxu0
  %v3946 = vadd.f32 %v3887, %v3945
  %v3947 = vpop.f32.mrf.mxu0
  %v3948 = vadd.f32 %v3889, %v3947
  %3949 = vmatmul.bf16.gmra.mxu0 %v855
  %v3950 = vpop.f32.mrf.mxu0
  %v3951 = vadd.f32 %v3892, %v3950
  %v3952 = vpop.f32.mrf.mxu0
  %v3953 = vadd.f32 %v3894, %v3952
  %3954 = vmatmul.bf16.gmra.mxu0 %v860
  %v3955 = vpop.f32.mrf.mxu0
  %v3956 = vadd.f32 %v3897, %v3955
  %v3957 = vpop.f32.mrf.mxu0
  %v3958 = vadd.f32 %v3899, %v3957
  %3959 = vdwg.mxu0
  %3960 = vmatpush.bf16.msra.mxu0 %v2455
  %3961 = vmatpush.bf16.msra.mxu0 %v2452
  %3962 = vmatpush.bf16.msra.mxu0 %v2449
  %3963 = vmatpush.bf16.msra.mxu0 %v2446
  %3964 = vmatpush.bf16.msra.mxu0 %v2443
  %3965 = vmatpush.bf16.msra.mxu0 %v2440
  %3966 = vmatpush.bf16.msra.mxu0 %v2437
  %3967 = vmatpush.bf16.msra.mxu0 %v2434
  %3968 = vmatmul.bf16.gmra.mxu0 %v816
  %v3969 = vpop.f32.mrf.mxu0
  %v3970 = vadd.f32 %v3911, %v3969
  %v3971 = vpop.f32.mrf.mxu0
  %v3972 = vadd.f32 %v3913, %v3971
  %3973 = vmatmul.bf16.gmra.mxu0 %v821
  %v3974 = vpop.f32.mrf.mxu0
  %v3975 = vadd.f32 %v3916, %v3974
  %v3976 = vpop.f32.mrf.mxu0
  %v3977 = vadd.f32 %v3918, %v3976
  %3978 = vmatmul.bf16.gmra.mxu0 %v826
  %v3979 = vpop.f32.mrf.mxu0
  %v3980 = vadd.f32 %v3921, %v3979
  %v3981 = vpop.f32.mrf.mxu0
  %v3982 = vadd.f32 %v3923, %v3981
  %3983 = vmatmul.bf16.gmra.mxu0 %v831
  %v3984 = vpop.f32.mrf.mxu0
  %v3985 = vadd.f32 %v3926, %v3984
  %v3986 = vpop.f32.mrf.mxu0
  %v3987 = vadd.f32 %v3928, %v3986
  %3988 = vmatmul.bf16.gmra.mxu0 %v836
  %v3989 = vpop.f32.mrf.mxu0
  %v3990 = vadd.f32 %v3931, %v3989
  %v3991 = vpop.f32.mrf.mxu0
  %v3992 = vadd.f32 %v3933, %v3991
  %3993 = vmatmul.bf16.gmra.mxu0 %v841
  %v3994 = vpop.f32.mrf.mxu0
  %v3995 = vadd.f32 %v3936, %v3994
  %v3996 = vpop.f32.mrf.mxu0
  %v3997 = vadd.f32 %v3938, %v3996
  %3998 = vmatmul.bf16.gmra.mxu0 %v846
  %v3999 = vpop.f32.mrf.mxu0
  %v4000 = vadd.f32 %v3941, %v3999
  %v4001 = vpop.f32.mrf.mxu0
  %v4002 = vadd.f32 %v3943, %v4001
  %4003 = vmatmul.bf16.gmra.mxu0 %v851
  %v4004 = vpop.f32.mrf.mxu0
  %v4005 = vadd.f32 %v3946, %v4004
  %v4006 = vpop.f32.mrf.mxu0
  %v4007 = vadd.f32 %v3948, %v4006
  %4008 = vmatmul.bf16.gmra.mxu0 %v856
  %v4009 = vpop.f32.mrf.mxu0
  %v4010 = vadd.f32 %v3951, %v4009
  %v4011 = vpop.f32.mrf.mxu0
  %v4012 = vadd.f32 %v3953, %v4011
  %4013 = vmatmul.bf16.gmra.mxu0 %v861
  %v4014 = vpop.f32.mrf.mxu0
  %v4015 = vadd.f32 %v3956, %v4014
  %v4016 = vpop.f32.mrf.mxu0
  %v4017 = vadd.f32 %v3958, %v4016
  %4018 = vdwg.mxu0
  %4019 = vmatpush.bf16.msra.mxu0 %v2216
  %4020 = vmatpush.bf16.msra.mxu0 %v2213
  %4021 = vmatpush.bf16.msra.mxu0 %v2210
  %4022 = vmatpush.bf16.msra.mxu0 %v2207
  %4023 = vmatpush.bf16.msra.mxu0 %v2204
  %4024 = vmatpush.bf16.msra.mxu0 %v2201
  %4025 = vmatpush.bf16.msra.mxu0 %v2198
  %4026 = vmatpush.bf16.msra.mxu0 %v2195
  %4027 = vmatmul.bf16.gmra.mxu0 %v341
  %v4028 = vpop.f32.mrf.mxu0
  %v4029 = vadd.f32 %v1309, %v4028
  %v4030 = vpop.f32.mrf.mxu0
  %v4031 = vadd.f32 %v1309, %v4030
  %4032 = vmatmul.bf16.gmra.mxu0 %v347
  %v4033 = vpop.f32.mrf.mxu0
  %v4034 = vadd.f32 %v1309, %v4033
  %v4035 = vpop.f32.mrf.mxu0
  %v4036 = vadd.f32 %v1309, %v4035
  %4037 = vmatmul.bf16.gmra.mxu0 %v353
  %v4038 = vpop.f32.mrf.mxu0
  %v4039 = vadd.f32 %v1309, %v4038
  %v4040 = vpop.f32.mrf.mxu0
  %v4041 = vadd.f32 %v1309, %v4040
  %4042 = vmatmul.bf16.gmra.mxu0 %v359
  %v4043 = vpop.f32.mrf.mxu0
  %v4044 = vadd.f32 %v1309, %v4043
  %v4045 = vpop.f32.mrf.mxu0
  %v4046 = vadd.f32 %v1309, %v4045
  %4047 = vmatmul.bf16.gmra.mxu0 %v365
  %v4048 = vpop.f32.mrf.mxu0
  %v4049 = vadd.f32 %v1309, %v4048
  %v4050 = vpop.f32.mrf.mxu0
  %v4051 = vadd.f32 %v1309, %v4050
  %4052 = vmatmul.bf16.gmra.mxu0 %v371
  %v4053 = vpop.f32.mrf.mxu0
  %v4054 = vadd.f32 %v1309, %v4053
  %v4055 = vpop.f32.mrf.mxu0
  %v4056 = vadd.f32 %v1309, %v4055
  %4057 = vmatmul.bf16.gmra.mxu0 %v377
  %v4058 = vpop.f32.mrf.mxu0
  %v4059 = vadd.f32 %v1309, %v4058
  %v4060 = vpop.f32.mrf.mxu0
  %v4061 = vadd.f32 %v1309, %v4060
  %4062 = vmatmul.bf16.gmra.mxu0 %v383
  %v4063 = vpop.f32.mrf.mxu0
  %v4064 = vadd.f32 %v1309, %v4063
  %v4065 = vpop.f32.mrf.mxu0
  %v4066 = vadd.f32 %v1309, %v4065
  %4067 = vmatmul.bf16.gmra.mxu0 %v389
  %v4068 = vpop.f32.mrf.mxu0
  %v4069 = vadd.f32 %v1309, %v4068
  %v4070 = vpop.f32.mrf.mxu0
  %v4071 = vadd.f32 %v1309, %v4070
  %4072 = vmatmul.bf16.gmra.mxu0 %v395
  %v4073 = vpop.f32.mrf.mxu0
  %v4074 = vadd.f32 %v1309, %v4073
  %v4075 = vpop.f32.mrf.mxu0
  %v4076 = vadd.f32 %v1309, %v4075
  %4077 = vdwg.mxu0
  %4078 = vmatpush.bf16.msra.mxu0 %v2240
  %4079 = vmatpush.bf16.msra.mxu0 %v2237
  %4080 = vmatpush.bf16.msra.mxu0 %v2234
  %4081 = vmatpush.bf16.msra.mxu0 %v2231
  %4082 = vmatpush.bf16.msra.mxu0 %v2228
  %4083 = vmatpush.bf16.msra.mxu0 %v2225
  %4084 = vmatpush.bf16.msra.mxu0 %v2222
  %4085 = vmatpush.bf16.msra.mxu0 %v2219
  %4086 = vmatmul.bf16.gmra.mxu0 %v342
  %v4087 = vpop.f32.mrf.mxu0
  %v4088 = vadd.f32 %v4029, %v4087
  %v4089 = vpop.f32.mrf.mxu0
  %v4090 = vadd.f32 %v4031, %v4089
  %4091 = vmatmul.bf16.gmra.mxu0 %v348
  %v4092 = vpop.f32.mrf.mxu0
  %v4093 = vadd.f32 %v4034, %v4092
  %v4094 = vpop.f32.mrf.mxu0
  %v4095 = vadd.f32 %v4036, %v4094
  %4096 = vmatmul.bf16.gmra.mxu0 %v354
  %v4097 = vpop.f32.mrf.mxu0
  %v4098 = vadd.f32 %v4039, %v4097
  %v4099 = vpop.f32.mrf.mxu0
  %v4100 = vadd.f32 %v4041, %v4099
  %4101 = vmatmul.bf16.gmra.mxu0 %v360
  %v4102 = vpop.f32.mrf.mxu0
  %v4103 = vadd.f32 %v4044, %v4102
  %v4104 = vpop.f32.mrf.mxu0
  %v4105 = vadd.f32 %v4046, %v4104
  %4106 = vmatmul.bf16.gmra.mxu0 %v366
  %v4107 = vpop.f32.mrf.mxu0
  %v4108 = vadd.f32 %v4049, %v4107
  %v4109 = vpop.f32.mrf.mxu0
  %v4110 = vadd.f32 %v4051, %v4109
  %4111 = vmatmul.bf16.gmra.mxu0 %v372
  %v4112 = vpop.f32.mrf.mxu0
  %v4113 = vadd.f32 %v4054, %v4112
  %v4114 = vpop.f32.mrf.mxu0
  %v4115 = vadd.f32 %v4056, %v4114
  %4116 = vmatmul.bf16.gmra.mxu0 %v378
  %v4117 = vpop.f32.mrf.mxu0
  %v4118 = vadd.f32 %v4059, %v4117
  %v4119 = vpop.f32.mrf.mxu0
  %v4120 = vadd.f32 %v4061, %v4119
  %4121 = vmatmul.bf16.gmra.mxu0 %v384
  %v4122 = vpop.f32.mrf.mxu0
  %v4123 = vadd.f32 %v4064, %v4122
  %v4124 = vpop.f32.mrf.mxu0
  %v4125 = vadd.f32 %v4066, %v4124
  %4126 = vmatmul.bf16.gmra.mxu0 %v390
  %v4127 = vpop.f32.mrf.mxu0
  %v4128 = vadd.f32 %v4069, %v4127
  %v4129 = vpop.f32.mrf.mxu0
  %v4130 = vadd.f32 %v4071, %v4129
  %4131 = vmatmul.bf16.gmra.mxu0 %v396
  %v4132 = vpop.f32.mrf.mxu0
  %v4133 = vadd.f32 %v4074, %v4132
  %v4134 = vpop.f32.mrf.mxu0
  %v4135 = vadd.f32 %v4076, %v4134
  %4136 = vdwg.mxu0
  %4137 = vmatpush.bf16.msra.mxu0 %v2264
  %4138 = vmatpush.bf16.msra.mxu0 %v2261
  %4139 = vmatpush.bf16.msra.mxu0 %v2258
  %4140 = vmatpush.bf16.msra.mxu0 %v2255
  %4141 = vmatpush.bf16.msra.mxu0 %v2252
  %4142 = vmatpush.bf16.msra.mxu0 %v2249
  %4143 = vmatpush.bf16.msra.mxu0 %v2246
  %4144 = vmatpush.bf16.msra.mxu0 %v2243
  %4145 = vmatmul.bf16.gmra.mxu0 %v343
  %v4146 = vpop.f32.mrf.mxu0
  %v4147 = vadd.f32 %v4088, %v4146
  %v4148 = vpop.f32.mrf.mxu0
  %v4149 = vadd.f32 %v4090, %v4148
  %4150 = vmatmul.bf16.gmra.mxu0 %v349
  %v4151 = vpop.f32.mrf.mxu0
  %v4152 = vadd.f32 %v4093, %v4151
  %v4153 = vpop.f32.mrf.mxu0
  %v4154 = vadd.f32 %v4095, %v4153
  %4155 = vmatmul.bf16.gmra.mxu0 %v355
  %v4156 = vpop.f32.mrf.mxu0
  %v4157 = vadd.f32 %v4098, %v4156
  %v4158 = vpop.f32.mrf.mxu0
  %v4159 = vadd.f32 %v4100, %v4158
  %4160 = vmatmul.bf16.gmra.mxu0 %v361
  %v4161 = vpop.f32.mrf.mxu0
  %v4162 = vadd.f32 %v4103, %v4161
  %v4163 = vpop.f32.mrf.mxu0
  %v4164 = vadd.f32 %v4105, %v4163
  %4165 = vmatmul.bf16.gmra.mxu0 %v367
  %v4166 = vpop.f32.mrf.mxu0
  %v4167 = vadd.f32 %v4108, %v4166
  %v4168 = vpop.f32.mrf.mxu0
  %v4169 = vadd.f32 %v4110, %v4168
  %4170 = vmatmul.bf16.gmra.mxu0 %v373
  %v4171 = vpop.f32.mrf.mxu0
  %v4172 = vadd.f32 %v4113, %v4171
  %v4173 = vpop.f32.mrf.mxu0
  %v4174 = vadd.f32 %v4115, %v4173
  %4175 = vmatmul.bf16.gmra.mxu0 %v379
  %v4176 = vpop.f32.mrf.mxu0
  %v4177 = vadd.f32 %v4118, %v4176
  %v4178 = vpop.f32.mrf.mxu0
  %v4179 = vadd.f32 %v4120, %v4178
  %4180 = vmatmul.bf16.gmra.mxu0 %v385
  %v4181 = vpop.f32.mrf.mxu0
  %v4182 = vadd.f32 %v4123, %v4181
  %v4183 = vpop.f32.mrf.mxu0
  %v4184 = vadd.f32 %v4125, %v4183
  %4185 = vmatmul.bf16.gmra.mxu0 %v391
  %v4186 = vpop.f32.mrf.mxu0
  %v4187 = vadd.f32 %v4128, %v4186
  %v4188 = vpop.f32.mrf.mxu0
  %v4189 = vadd.f32 %v4130, %v4188
  %4190 = vmatmul.bf16.gmra.mxu0 %v397
  %v4191 = vpop.f32.mrf.mxu0
  %v4192 = vadd.f32 %v4133, %v4191
  %v4193 = vpop.f32.mrf.mxu0
  %v4194 = vadd.f32 %v4135, %v4193
  %4195 = vdwg.mxu0
  %4196 = vmatpush.bf16.msra.mxu0 %v2288
  %4197 = vmatpush.bf16.msra.mxu0 %v2285
  %4198 = vmatpush.bf16.msra.mxu0 %v2282
  %4199 = vmatpush.bf16.msra.mxu0 %v2279
  %4200 = vmatpush.bf16.msra.mxu0 %v2276
  %4201 = vmatpush.bf16.msra.mxu0 %v2273
  %4202 = vmatpush.bf16.msra.mxu0 %v2270
  %4203 = vmatpush.bf16.msra.mxu0 %v2267
  %4204 = vmatmul.bf16.gmra.mxu0 %v344
  %v4205 = vpop.f32.mrf.mxu0
  %v4206 = vadd.f32 %v4147, %v4205
  %v4207 = vpop.f32.mrf.mxu0
  %v4208 = vadd.f32 %v4149, %v4207
  %4209 = vmatmul.bf16.gmra.mxu0 %v350
  %v4210 = vpop.f32.mrf.mxu0
  %v4211 = vadd.f32 %v4152, %v4210
  %v4212 = vpop.f32.mrf.mxu0
  %v4213 = vadd.f32 %v4154, %v4212
  %4214 = vmatmul.bf16.gmra.mxu0 %v356
  %v4215 = vpop.f32.mrf.mxu0
  %v4216 = vadd.f32 %v4157, %v4215
  %v4217 = vpop.f32.mrf.mxu0
  %v4218 = vadd.f32 %v4159, %v4217
  %4219 = vmatmul.bf16.gmra.mxu0 %v362
  %v4220 = vpop.f32.mrf.mxu0
  %v4221 = vadd.f32 %v4162, %v4220
  %v4222 = vpop.f32.mrf.mxu0
  %v4223 = vadd.f32 %v4164, %v4222
  %4224 = vmatmul.bf16.gmra.mxu0 %v368
  %v4225 = vpop.f32.mrf.mxu0
  %v4226 = vadd.f32 %v4167, %v4225
  %v4227 = vpop.f32.mrf.mxu0
  %v4228 = vadd.f32 %v4169, %v4227
  %4229 = vmatmul.bf16.gmra.mxu0 %v374
  %v4230 = vpop.f32.mrf.mxu0
  %v4231 = vadd.f32 %v4172, %v4230
  %v4232 = vpop.f32.mrf.mxu0
  %v4233 = vadd.f32 %v4174, %v4232
  %4234 = vmatmul.bf16.gmra.mxu0 %v380
  %v4235 = vpop.f32.mrf.mxu0
  %v4236 = vadd.f32 %v4177, %v4235
  %v4237 = vpop.f32.mrf.mxu0
  %v4238 = vadd.f32 %v4179, %v4237
  %4239 = vmatmul.bf16.gmra.mxu0 %v386
  %v4240 = vpop.f32.mrf.mxu0
  %v4241 = vadd.f32 %v4182, %v4240
  %v4242 = vpop.f32.mrf.mxu0
  %v4243 = vadd.f32 %v4184, %v4242
  %4244 = vmatmul.bf16.gmra.mxu0 %v392
  %v4245 = vpop.f32.mrf.mxu0
  %v4246 = vadd.f32 %v4187, %v4245
  %v4247 = vpop.f32.mrf.mxu0
  %v4248 = vadd.f32 %v4189, %v4247
  %4249 = vmatmul.bf16.gmra.mxu0 %v398
  %v4250 = vpop.f32.mrf.mxu0
  %v4251 = vadd.f32 %v4192, %v4250
  %v4252 = vpop.f32.mrf.mxu0
  %v4253 = vadd.f32 %v4194, %v4252
  %4254 = vdwg.mxu0
  %4255 = vmatpush.bf16.msra.mxu0 %v2312
  %4256 = vmatpush.bf16.msra.mxu0 %v2309
  %4257 = vmatpush.bf16.msra.mxu0 %v2306
  %4258 = vmatpush.bf16.msra.mxu0 %v2303
  %4259 = vmatpush.bf16.msra.mxu0 %v2300
  %4260 = vmatpush.bf16.msra.mxu0 %v2297
  %4261 = vmatpush.bf16.msra.mxu0 %v2294
  %4262 = vmatpush.bf16.msra.mxu0 %v2291
  %4263 = vmatmul.bf16.gmra.mxu0 %v345
  %v4264 = vpop.f32.mrf.mxu0
  %v4265 = vadd.f32 %v4206, %v4264
  %v4266 = vpop.f32.mrf.mxu0
  %v4267 = vadd.f32 %v4208, %v4266
  %4268 = vmatmul.bf16.gmra.mxu0 %v351
  %v4269 = vpop.f32.mrf.mxu0
  %v4270 = vadd.f32 %v4211, %v4269
  %v4271 = vpop.f32.mrf.mxu0
  %v4272 = vadd.f32 %v4213, %v4271
  %4273 = vmatmul.bf16.gmra.mxu0 %v357
  %v4274 = vpop.f32.mrf.mxu0
  %v4275 = vadd.f32 %v4216, %v4274
  %v4276 = vpop.f32.mrf.mxu0
  %v4277 = vadd.f32 %v4218, %v4276
  %4278 = vmatmul.bf16.gmra.mxu0 %v363
  %v4279 = vpop.f32.mrf.mxu0
  %v4280 = vadd.f32 %v4221, %v4279
  %v4281 = vpop.f32.mrf.mxu0
  %v4282 = vadd.f32 %v4223, %v4281
  %4283 = vmatmul.bf16.gmra.mxu0 %v369
  %v4284 = vpop.f32.mrf.mxu0
  %v4285 = vadd.f32 %v4226, %v4284
  %v4286 = vpop.f32.mrf.mxu0
  %v4287 = vadd.f32 %v4228, %v4286
  %4288 = vmatmul.bf16.gmra.mxu0 %v375
  %v4289 = vpop.f32.mrf.mxu0
  %v4290 = vadd.f32 %v4231, %v4289
  %v4291 = vpop.f32.mrf.mxu0
  %v4292 = vadd.f32 %v4233, %v4291
  %4293 = vmatmul.bf16.gmra.mxu0 %v381
  %v4294 = vpop.f32.mrf.mxu0
  %v4295 = vadd.f32 %v4236, %v4294
  %v4296 = vpop.f32.mrf.mxu0
  %v4297 = vadd.f32 %v4238, %v4296
  %4298 = vmatmul.bf16.gmra.mxu0 %v387
  %v4299 = vpop.f32.mrf.mxu0
  %v4300 = vadd.f32 %v4241, %v4299
  %v4301 = vpop.f32.mrf.mxu0
  %v4302 = vadd.f32 %v4243, %v4301
  %4303 = vmatmul.bf16.gmra.mxu0 %v393
  %v4304 = vpop.f32.mrf.mxu0
  %v4305 = vadd.f32 %v4246, %v4304
  %v4306 = vpop.f32.mrf.mxu0
  %v4307 = vadd.f32 %v4248, %v4306
  %4308 = vmatmul.bf16.gmra.mxu0 %v399
  %v4309 = vpop.f32.mrf.mxu0
  %v4310 = vadd.f32 %v4251, %v4309
  %v4311 = vpop.f32.mrf.mxu0
  %v4312 = vadd.f32 %v4253, %v4311
  %4313 = vdwg.mxu0
  %4314 = vmatpush.bf16.msra.mxu0 %v2336
  %4315 = vmatpush.bf16.msra.mxu0 %v2333
  %4316 = vmatpush.bf16.msra.mxu0 %v2330
  %4317 = vmatpush.bf16.msra.mxu0 %v2327
  %4318 = vmatpush.bf16.msra.mxu0 %v2324
  %4319 = vmatpush.bf16.msra.mxu0 %v2321
  %4320 = vmatpush.bf16.msra.mxu0 %v2318
  %4321 = vmatpush.bf16.msra.mxu0 %v2315
  %4322 = vmatmul.bf16.gmra.mxu0 %v915
  %v4323 = vpop.f32.mrf.mxu0
  %v4324 = vadd.f32 %v4265, %v4323
  %v4325 = vpop.f32.mrf.mxu0
  %v4326 = vadd.f32 %v4267, %v4325
  %4327 = vmatmul.bf16.gmra.mxu0 %v919
  %v4328 = vpop.f32.mrf.mxu0
  %v4329 = vadd.f32 %v4270, %v4328
  %v4330 = vpop.f32.mrf.mxu0
  %v4331 = vadd.f32 %v4272, %v4330
  %4332 = vmatmul.bf16.gmra.mxu0 %v923
  %v4333 = vpop.f32.mrf.mxu0
  %v4334 = vadd.f32 %v4275, %v4333
  %v4335 = vpop.f32.mrf.mxu0
  %v4336 = vadd.f32 %v4277, %v4335
  %4337 = vmatmul.bf16.gmra.mxu0 %v927
  %v4338 = vpop.f32.mrf.mxu0
  %v4339 = vadd.f32 %v4280, %v4338
  %v4340 = vpop.f32.mrf.mxu0
  %v4341 = vadd.f32 %v4282, %v4340
  %4342 = vmatmul.bf16.gmra.mxu0 %v931
  %v4343 = vpop.f32.mrf.mxu0
  %v4344 = vadd.f32 %v4285, %v4343
  %v4345 = vpop.f32.mrf.mxu0
  %v4346 = vadd.f32 %v4287, %v4345
  %4347 = vmatmul.bf16.gmra.mxu0 %v935
  %v4348 = vpop.f32.mrf.mxu0
  %v4349 = vadd.f32 %v4290, %v4348
  %v4350 = vpop.f32.mrf.mxu0
  %v4351 = vadd.f32 %v4292, %v4350
  %4352 = vmatmul.bf16.gmra.mxu0 %v939
  %v4353 = vpop.f32.mrf.mxu0
  %v4354 = vadd.f32 %v4295, %v4353
  %v4355 = vpop.f32.mrf.mxu0
  %v4356 = vadd.f32 %v4297, %v4355
  %4357 = vmatmul.bf16.gmra.mxu0 %v943
  %v4358 = vpop.f32.mrf.mxu0
  %v4359 = vadd.f32 %v4300, %v4358
  %v4360 = vpop.f32.mrf.mxu0
  %v4361 = vadd.f32 %v4302, %v4360
  %4362 = vmatmul.bf16.gmra.mxu0 %v947
  %v4363 = vpop.f32.mrf.mxu0
  %v4364 = vadd.f32 %v4305, %v4363
  %v4365 = vpop.f32.mrf.mxu0
  %v4366 = vadd.f32 %v4307, %v4365
  %4367 = vmatmul.bf16.gmra.mxu0 %v951
  %v4368 = vpop.f32.mrf.mxu0
  %v4369 = vadd.f32 %v4310, %v4368
  %v4370 = vpop.f32.mrf.mxu0
  %v4371 = vadd.f32 %v4312, %v4370
  %4372 = vdwg.mxu0
  %4373 = vmatpush.bf16.msra.mxu0 %v2360
  %4374 = vmatpush.bf16.msra.mxu0 %v2357
  %4375 = vmatpush.bf16.msra.mxu0 %v2354
  %4376 = vmatpush.bf16.msra.mxu0 %v2351
  %4377 = vmatpush.bf16.msra.mxu0 %v2348
  %4378 = vmatpush.bf16.msra.mxu0 %v2345
  %4379 = vmatpush.bf16.msra.mxu0 %v2342
  %4380 = vmatpush.bf16.msra.mxu0 %v2339
  %4381 = vmatmul.bf16.gmra.mxu0 %v812
  %v4382 = vpop.f32.mrf.mxu0
  %v4383 = vadd.f32 %v4324, %v4382
  %v4384 = vpop.f32.mrf.mxu0
  %v4385 = vadd.f32 %v4326, %v4384
  %4386 = vmatmul.bf16.gmra.mxu0 %v817
  %v4387 = vpop.f32.mrf.mxu0
  %v4388 = vadd.f32 %v4329, %v4387
  %v4389 = vpop.f32.mrf.mxu0
  %v4390 = vadd.f32 %v4331, %v4389
  %4391 = vmatmul.bf16.gmra.mxu0 %v822
  %v4392 = vpop.f32.mrf.mxu0
  %v4393 = vadd.f32 %v4334, %v4392
  %v4394 = vpop.f32.mrf.mxu0
  %v4395 = vadd.f32 %v4336, %v4394
  %4396 = vmatmul.bf16.gmra.mxu0 %v827
  %v4397 = vpop.f32.mrf.mxu0
  %v4398 = vadd.f32 %v4339, %v4397
  %v4399 = vpop.f32.mrf.mxu0
  %v4400 = vadd.f32 %v4341, %v4399
  %4401 = vmatmul.bf16.gmra.mxu0 %v832
  %v4402 = vpop.f32.mrf.mxu0
  %v4403 = vadd.f32 %v4344, %v4402
  %v4404 = vpop.f32.mrf.mxu0
  %v4405 = vadd.f32 %v4346, %v4404
  %4406 = vmatmul.bf16.gmra.mxu0 %v837
  %v4407 = vpop.f32.mrf.mxu0
  %v4408 = vadd.f32 %v4349, %v4407
  %v4409 = vpop.f32.mrf.mxu0
  %v4410 = vadd.f32 %v4351, %v4409
  %4411 = vmatmul.bf16.gmra.mxu0 %v842
  %v4412 = vpop.f32.mrf.mxu0
  %v4413 = vadd.f32 %v4354, %v4412
  %v4414 = vpop.f32.mrf.mxu0
  %v4415 = vadd.f32 %v4356, %v4414
  %4416 = vmatmul.bf16.gmra.mxu0 %v847
  %v4417 = vpop.f32.mrf.mxu0
  %v4418 = vadd.f32 %v4359, %v4417
  %v4419 = vpop.f32.mrf.mxu0
  %v4420 = vadd.f32 %v4361, %v4419
  %4421 = vmatmul.bf16.gmra.mxu0 %v852
  %v4422 = vpop.f32.mrf.mxu0
  %v4423 = vadd.f32 %v4364, %v4422
  %v4424 = vpop.f32.mrf.mxu0
  %v4425 = vadd.f32 %v4366, %v4424
  %4426 = vmatmul.bf16.gmra.mxu0 %v857
  %v4427 = vpop.f32.mrf.mxu0
  %v4428 = vadd.f32 %v4369, %v4427
  %v4429 = vpop.f32.mrf.mxu0
  %v4430 = vadd.f32 %v4371, %v4429
  %4431 = vdwg.mxu0
  %4432 = vmatpush.bf16.msra.mxu0 %v2384
  %4433 = vmatpush.bf16.msra.mxu0 %v2381
  %4434 = vmatpush.bf16.msra.mxu0 %v2378
  %4435 = vmatpush.bf16.msra.mxu0 %v2375
  %4436 = vmatpush.bf16.msra.mxu0 %v2372
  %4437 = vmatpush.bf16.msra.mxu0 %v2369
  %4438 = vmatpush.bf16.msra.mxu0 %v2366
  %4439 = vmatpush.bf16.msra.mxu0 %v2363
  %4440 = vmatmul.bf16.gmra.mxu0 %v813
  %v4441 = vpop.f32.mrf.mxu0
  %v4442 = vadd.f32 %v4383, %v4441
  %v4443 = vpop.f32.mrf.mxu0
  %v4444 = vadd.f32 %v4385, %v4443
  %4445 = vmatmul.bf16.gmra.mxu0 %v818
  %v4446 = vpop.f32.mrf.mxu0
  %v4447 = vadd.f32 %v4388, %v4446
  %v4448 = vpop.f32.mrf.mxu0
  %v4449 = vadd.f32 %v4390, %v4448
  %4450 = vmatmul.bf16.gmra.mxu0 %v823
  %v4451 = vpop.f32.mrf.mxu0
  %v4452 = vadd.f32 %v4393, %v4451
  %v4453 = vpop.f32.mrf.mxu0
  %v4454 = vadd.f32 %v4395, %v4453
  %4455 = vmatmul.bf16.gmra.mxu0 %v828
  %v4456 = vpop.f32.mrf.mxu0
  %v4457 = vadd.f32 %v4398, %v4456
  %v4458 = vpop.f32.mrf.mxu0
  %v4459 = vadd.f32 %v4400, %v4458
  %4460 = vmatmul.bf16.gmra.mxu0 %v833
  %v4461 = vpop.f32.mrf.mxu0
  %v4462 = vadd.f32 %v4403, %v4461
  %v4463 = vpop.f32.mrf.mxu0
  %v4464 = vadd.f32 %v4405, %v4463
  %4465 = vmatmul.bf16.gmra.mxu0 %v838
  %v4466 = vpop.f32.mrf.mxu0
  %v4467 = vadd.f32 %v4408, %v4466
  %v4468 = vpop.f32.mrf.mxu0
  %v4469 = vadd.f32 %v4410, %v4468
  %4470 = vmatmul.bf16.gmra.mxu0 %v843
  %v4471 = vpop.f32.mrf.mxu0
  %v4472 = vadd.f32 %v4413, %v4471
  %v4473 = vpop.f32.mrf.mxu0
  %v4474 = vadd.f32 %v4415, %v4473
  %4475 = vmatmul.bf16.gmra.mxu0 %v848
  %v4476 = vpop.f32.mrf.mxu0
  %v4477 = vadd.f32 %v4418, %v4476
  %v4478 = vpop.f32.mrf.mxu0
  %v4479 = vadd.f32 %v4420, %v4478
  %4480 = vmatmul.bf16.gmra.mxu0 %v853
  %v4481 = vpop.f32.mrf.mxu0
  %v4482 = vadd.f32 %v4423, %v4481
  %v4483 = vpop.f32.mrf.mxu0
  %v4484 = vadd.f32 %v4425, %v4483
  %4485 = vmatmul.bf16.gmra.mxu0 %v858
  %v4486 = vpop.f32.mrf.mxu0
  %v4487 = vadd.f32 %v4428, %v4486
  %v4488 = vpop.f32.mrf.mxu0
  %v4489 = vadd.f32 %v4430, %v4488
  %4490 = vdwg.mxu0
  %4491 = vmatpush.bf16.msra.mxu0 %v2408
  %4492 = vmatpush.bf16.msra.mxu0 %v2405
  %4493 = vmatpush.bf16.msra.mxu0 %v2402
  %4494 = vmatpush.bf16.msra.mxu0 %v2399
  %4495 = vmatpush.bf16.msra.mxu0 %v2396
  %4496 = vmatpush.bf16.msra.mxu0 %v2393
  %4497 = vmatpush.bf16.msra.mxu0 %v2390
  %4498 = vmatpush.bf16.msra.mxu0 %v2387
  %4499 = vmatmul.bf16.gmra.mxu0 %v814
  %v4500 = vpop.f32.mrf.mxu0
  %v4501 = vadd.f32 %v4442, %v4500
  %v4502 = vpop.f32.mrf.mxu0
  %v4503 = vadd.f32 %v4444, %v4502
  %4504 = vmatmul.bf16.gmra.mxu0 %v819
  %v4505 = vpop.f32.mrf.mxu0
  %v4506 = vadd.f32 %v4447, %v4505
  %v4507 = vpop.f32.mrf.mxu0
  %v4508 = vadd.f32 %v4449, %v4507
  %4509 = vmatmul.bf16.gmra.mxu0 %v824
  %v4510 = vpop.f32.mrf.mxu0
  %v4511 = vadd.f32 %v4452, %v4510
  %v4512 = vpop.f32.mrf.mxu0
  %v4513 = vadd.f32 %v4454, %v4512
  %4514 = vmatmul.bf16.gmra.mxu0 %v829
  %v4515 = vpop.f32.mrf.mxu0
  %v4516 = vadd.f32 %v4457, %v4515
  %v4517 = vpop.f32.mrf.mxu0
  %v4518 = vadd.f32 %v4459, %v4517
  %4519 = vmatmul.bf16.gmra.mxu0 %v834
  %v4520 = vpop.f32.mrf.mxu0
  %v4521 = vadd.f32 %v4462, %v4520
  %v4522 = vpop.f32.mrf.mxu0
  %v4523 = vadd.f32 %v4464, %v4522
  %4524 = vmatmul.bf16.gmra.mxu0 %v839
  %v4525 = vpop.f32.mrf.mxu0
  %v4526 = vadd.f32 %v4467, %v4525
  %v4527 = vpop.f32.mrf.mxu0
  %v4528 = vadd.f32 %v4469, %v4527
  %4529 = vmatmul.bf16.gmra.mxu0 %v844
  %v4530 = vpop.f32.mrf.mxu0
  %v4531 = vadd.f32 %v4472, %v4530
  %v4532 = vpop.f32.mrf.mxu0
  %v4533 = vadd.f32 %v4474, %v4532
  %4534 = vmatmul.bf16.gmra.mxu0 %v849
  %v4535 = vpop.f32.mrf.mxu0
  %v4536 = vadd.f32 %v4477, %v4535
  %v4537 = vpop.f32.mrf.mxu0
  %v4538 = vadd.f32 %v4479, %v4537
  %4539 = vmatmul.bf16.gmra.mxu0 %v854
  %v4540 = vpop.f32.mrf.mxu0
  %v4541 = vadd.f32 %v4482, %v4540
  %v4542 = vpop.f32.mrf.mxu0
  %v4543 = vadd.f32 %v4484, %v4542
  %4544 = vmatmul.bf16.gmra.mxu0 %v859
  %v4545 = vpop.f32.mrf.mxu0
  %v4546 = vadd.f32 %v4487, %v4545
  %v4547 = vpop.f32.mrf.mxu0
  %v4548 = vadd.f32 %v4489, %v4547
  %4549 = vdwg.mxu0
  %4550 = vmatpush.bf16.msra.mxu0 %v2432
  %4551 = vmatpush.bf16.msra.mxu0 %v2429
  %4552 = vmatpush.bf16.msra.mxu0 %v2426
  %4553 = vmatpush.bf16.msra.mxu0 %v2423
  %4554 = vmatpush.bf16.msra.mxu0 %v2420
  %4555 = vmatpush.bf16.msra.mxu0 %v2417
  %4556 = vmatpush.bf16.msra.mxu0 %v2414
  %4557 = vmatpush.bf16.msra.mxu0 %v2411
  %4558 = vmatmul.bf16.gmra.mxu0 %v815
  %v4559 = vpop.f32.mrf.mxu0
  %v4560 = vadd.f32 %v4501, %v4559
  %v4561 = vpop.f32.mrf.mxu0
  %v4562 = vadd.f32 %v4503, %v4561
  %4563 = vmatmul.bf16.gmra.mxu0 %v820
  %v4564 = vpop.f32.mrf.mxu0
  %v4565 = vadd.f32 %v4506, %v4564
  %v4566 = vpop.f32.mrf.mxu0
  %v4567 = vadd.f32 %v4508, %v4566
  %4568 = vmatmul.bf16.gmra.mxu0 %v825
  %v4569 = vpop.f32.mrf.mxu0
  %v4570 = vadd.f32 %v4511, %v4569
  %v4571 = vpop.f32.mrf.mxu0
  %v4572 = vadd.f32 %v4513, %v4571
  %4573 = vmatmul.bf16.gmra.mxu0 %v830
  %v4574 = vpop.f32.mrf.mxu0
  %v4575 = vadd.f32 %v4516, %v4574
  %v4576 = vpop.f32.mrf.mxu0
  %v4577 = vadd.f32 %v4518, %v4576
  %4578 = vmatmul.bf16.gmra.mxu0 %v835
  %v4579 = vpop.f32.mrf.mxu0
  %v4580 = vadd.f32 %v4521, %v4579
  %v4581 = vpop.f32.mrf.mxu0
  %v4582 = vadd.f32 %v4523, %v4581
  %4583 = vmatmul.bf16.gmra.mxu0 %v840
  %v4584 = vpop.f32.mrf.mxu0
  %v4585 = vadd.f32 %v4526, %v4584
  %v4586 = vpop.f32.mrf.mxu0
  %v4587 = vadd.f32 %v4528, %v4586
  %4588 = vmatmul.bf16.gmra.mxu0 %v845
  %v4589 = vpop.f32.mrf.mxu0
  %v4590 = vadd.f32 %v4531, %v4589
  %v4591 = vpop.f32.mrf.mxu0
  %v4592 = vadd.f32 %v4533, %v4591
  %4593 = vmatmul.bf16.gmra.mxu0 %v850
  %v4594 = vpop.f32.mrf.mxu0
  %v4595 = vadd.f32 %v4536, %v4594
  %v4596 = vpop.f32.mrf.mxu0
  %v4597 = vadd.f32 %v4538, %v4596
  %4598 = vmatmul.bf16.gmra.mxu0 %v855
  %v4599 = vpop.f32.mrf.mxu0
  %v4600 = vadd.f32 %v4541, %v4599
  %v4601 = vpop.f32.mrf.mxu0
  %v4602 = vadd.f32 %v4543, %v4601
  %4603 = vmatmul.bf16.gmra.mxu0 %v860
  %v4604 = vpop.f32.mrf.mxu0
  %v4605 = vadd.f32 %v4546, %v4604
  %v4606 = vpop.f32.mrf.mxu0
  %v4607 = vadd.f32 %v4548, %v4606
  %4608 = vdwg.mxu0
  %4609 = vmatpush.bf16.msra.mxu0 %v2456
  %4610 = vmatpush.bf16.msra.mxu0 %v2453
  %4611 = vmatpush.bf16.msra.mxu0 %v2450
  %4612 = vmatpush.bf16.msra.mxu0 %v2447
  %4613 = vmatpush.bf16.msra.mxu0 %v2444
  %4614 = vmatpush.bf16.msra.mxu0 %v2441
  %4615 = vmatpush.bf16.msra.mxu0 %v2438
  %4616 = vmatpush.bf16.msra.mxu0 %v2435
  %4617 = vmatmul.bf16.gmra.mxu0 %v816
  %v4618 = vpop.f32.mrf.mxu0
  %v4619 = vadd.f32 %v4560, %v4618
  %v4620 = vpop.f32.mrf.mxu0
  %v4621 = vadd.f32 %v4562, %v4620
  %4622 = vmatmul.bf16.gmra.mxu0 %v821
  %v4623 = vpop.f32.mrf.mxu0
  %v4624 = vadd.f32 %v4565, %v4623
  %v4625 = vpop.f32.mrf.mxu0
  %v4626 = vadd.f32 %v4567, %v4625
  %4627 = vmatmul.bf16.gmra.mxu0 %v826
  %v4628 = vpop.f32.mrf.mxu0
  %v4629 = vadd.f32 %v4570, %v4628
  %v4630 = vpop.f32.mrf.mxu0
  %v4631 = vadd.f32 %v4572, %v4630
  %4632 = vmatmul.bf16.gmra.mxu0 %v831
  %v4633 = vpop.f32.mrf.mxu0
  %v4634 = vadd.f32 %v4575, %v4633
  %v4635 = vpop.f32.mrf.mxu0
  %v4636 = vadd.f32 %v4577, %v4635
  %4637 = vmatmul.bf16.gmra.mxu0 %v836
  %v4638 = vpop.f32.mrf.mxu0
  %v4639 = vadd.f32 %v4580, %v4638
  %v4640 = vpop.f32.mrf.mxu0
  %v4641 = vadd.f32 %v4582, %v4640
  %4642 = vmatmul.bf16.gmra.mxu0 %v841
  %v4643 = vpop.f32.mrf.mxu0
  %v4644 = vadd.f32 %v4585, %v4643
  %v4645 = vpop.f32.mrf.mxu0
  %v4646 = vadd.f32 %v4587, %v4645
  %4647 = vmatmul.bf16.gmra.mxu0 %v846
  %v4648 = vpop.f32.mrf.mxu0
  %v4649 = vadd.f32 %v4590, %v4648
  %v4650 = vpop.f32.mrf.mxu0
  %v4651 = vadd.f32 %v4592, %v4650
  %4652 = vmatmul.bf16.gmra.mxu0 %v851
  %v4653 = vpop.f32.mrf.mxu0
  %v4654 = vadd.f32 %v4595, %v4653
  %v4655 = vpop.f32.mrf.mxu0
  %v4656 = vadd.f32 %v4597, %v4655
  %4657 = vmatmul.bf16.gmra.mxu0 %v856
  %v4658 = vpop.f32.mrf.mxu0
  %v4659 = vadd.f32 %v4600, %v4658
  %v4660 = vpop.f32.mrf.mxu0
  %v4661 = vadd.f32 %v4602, %v4660
  %4662 = vmatmul.bf16.gmra.mxu0 %v861
  %v4663 = vpop.f32.mrf.mxu0
  %v4664 = vadd.f32 %v4605, %v4663
  %v4665 = vpop.f32.mrf.mxu0
  %v4666 = vadd.f32 %v4607, %v4665
  %4667 = vdwg.mxu0
  %v4668 = vmax.f32 %v3321, 0.0
  %v4669 = vmax.f32 %v3970, 0.0
  %v4670 = vmax.f32 %v4619, 0.0
  %v4671 = vmax.f32 %v3323, 0.0
  %v4672 = vmax.f32 %v3972, 0.0
  %v4673 = vmax.f32 %v4621, 0.0
  %v4674 = vmax.f32 %v3326, 0.0
  %v4675 = vmax.f32 %v3975, 0.0
  %v4676 = vmax.f32 %v4624, 0.0
  %v4677 = vmax.f32 %v3328, 0.0
  %v4678 = vmax.f32 %v3977, 0.0
  %v4679 = vmax.f32 %v4626, 0.0
  %v4680 = vmax.f32 %v3331, 0.0
  %v4681 = vmax.f32 %v3980, 0.0
  %v4682 = vmax.f32 %v4629, 0.0
  %v4683 = vmax.f32 %v3333, 0.0
  %v4684 = vmax.f32 %v3982, 0.0
  %v4685 = vmax.f32 %v4631, 0.0
  %v4686 = vmax.f32 %v3336, 0.0
  %v4687 = vmax.f32 %v3985, 0.0
  %v4688 = vmax.f32 %v4634, 0.0
  %v4689 = vmax.f32 %v3338, 0.0
  %v4690 = vmax.f32 %v3987, 0.0
  %v4691 = vmax.f32 %v4636, 0.0
  %v4692 = vmax.f32 %v3341, 0.0
  %v4693 = vmax.f32 %v3990, 0.0
  %v4694 = vmax.f32 %v4639, 0.0
  %v4695 = vmax.f32 %v3343, 0.0
  %v4696 = vmax.f32 %v3992, 0.0
  %v4697 = vmax.f32 %v4641, 0.0
  %v4698 = vmax.f32 %v3346, 0.0
  %v4699 = vmax.f32 %v3995, 0.0
  %v4700 = vmax.f32 %v4644, 0.0
  %v4701 = vmax.f32 %v3348, 0.0
  %v4702 = vmax.f32 %v3997, 0.0
  %v4703 = vmax.f32 %v4646, 0.0
  %v4704 = vmax.f32 %v3351, 0.0
  %v4705 = vmax.f32 %v4000, 0.0
  %v4706 = vmax.f32 %v4649, 0.0
  %v4707 = vmax.f32 %v3353, 0.0
  %v4708 = vmax.f32 %v4002, 0.0
  %v4709 = vmax.f32 %v4651, 0.0
  %v4710 = vmax.f32 %v3356, 0.0
  %v4711 = vmax.f32 %v4005, 0.0
  %v4712 = vmax.f32 %v4654, 0.0
  %v4713 = vmax.f32 %v3358, 0.0
  %v4714 = vmax.f32 %v4007, 0.0
  %v4715 = vmax.f32 %v4656, 0.0
  %v4716 = vmax.f32 %v3361, 0.0
  %v4717 = vmax.f32 %v4010, 0.0
  %v4718 = vmax.f32 %v4659, 0.0
  %v4719 = vmax.f32 %v3363, 0.0
  %v4720 = vmax.f32 %v4012, 0.0
  %v4721 = vmax.f32 %v4661, 0.0
  %v4722 = vmax.f32 %v3366, 0.0
  %v4723 = vmax.f32 %v4015, 0.0
  %v4724 = vmax.f32 %v4664, 0.0
  %v4725 = vmax.f32 %v3368, 0.0
  %v4726 = vmax.f32 %v4017, 0.0
  %v4727 = vmax.f32 %v4666, 0.0
  %v4728 = vpack.c.bf16 %v4669, %v4668
  %v4729 = vpack.c.bf16 %v4670, %v4670
  %v4730 = vpack.c.bf16 %v4672, %v4671
  %v4731 = vpack.c.bf16 %v4673, %v4673
  %v4732 = vpack.c.bf16 %v4675, %v4674
  %v4733 = vpack.c.bf16 %v4676, %v4676
  %v4734 = vpack.c.bf16 %v4678, %v4677
  %v4735 = vpack.c.bf16 %v4679, %v4679
  %v4736 = vpack.c.bf16 %v4681, %v4680
  %v4737 = vpack.c.bf16 %v4682, %v4682
  %v4738 = vpack.c.bf16 %v4684, %v4683
  %v4739 = vpack.c.bf16 %v4685, %v4685
  %v4740 = vpack.c.bf16 %v4687, %v4686
  %v4741 = vpack.c.bf16 %v4688, %v4688
  %v4742 = vpack.c.bf16 %v4690, %v4689
  %v4743 = vpack.c.bf16 %v4691, %v4691
  %v4744 = vpack.c.bf16 %v4693, %v4692
  %v4745 = vpack.c.bf16 %v4694, %v4694
  %v4746 = vpack.c.bf16 %v4696, %v4695
  %v4747 = vpack.c.bf16 %v4697, %v4697
  %v4748 = vpack.c.bf16 %v4699, %v4698
  %v4749 = vpack.c.bf16 %v4700, %v4700
  %v4750 = vpack.c.bf16 %v4702, %v4701
  %v4751 = vpack.c.bf16 %v4703, %v4703
  %v4752 = vpack.c.bf16 %v4705, %v4704
  %v4753 = vpack.c.bf16 %v4706, %v4706
  %v4754 = vpack.c.bf16 %v4708, %v4707
  %v4755 = vpack.c.bf16 %v4709, %v4709
  %v4756 = vpack.c.bf16 %v4711, %v4710
  %v4757 = vpack.c.bf16 %v4712, %v4712
  %v4758 = vpack.c.bf16 %v4714, %v4713
  %v4759 = vpack.c.bf16 %v4715, %v4715
  %v4760 = vpack.c.bf16 %v4717, %v4716
  %v4761 = vpack.c.bf16 %v4718, %v4718
  %v4762 = vpack.c.bf16 %v4720, %v4719
  %v4763 = vpack.c.bf16 %v4721, %v4721
  %v4764 = vpack.c.bf16 %v4723, %v4722
  %v4765 = vpack.c.bf16 %v4724, %v4724
  %v4766 = vpack.c.bf16 %v4726, %v4725
  %v4767 = vpack.c.bf16 %v4727, %v4727
  %v4772 = vunpack.c.l.b16 %v4728
  %v4773 = vunpack.c.h.b16 %v4728
  %v4774 = vunpack.c.l.b16 %v4729
  %v4775 = vunpack.c.l.b16 %v4730
  %v4776 = vunpack.c.h.b16 %v4730
  %v4777 = vunpack.c.l.b16 %v4731
  %v4778 = vpack.c.b16 %v4775, %v4772
  %v4779 = vpack.c.b16 %v4776, %v4773
  %v4780 = vpack.c.b16 %v4777, %v4774
  %v4787 = vunpack.c.l.b16 %v4732
  %v4788 = vunpack.c.h.b16 %v4732
  %v4789 = vunpack.c.l.b16 %v4733
  %v4790 = vunpack.c.l.b16 %v4734
  %v4791 = vunpack.c.h.b16 %v4734
  %v4792 = vunpack.c.l.b16 %v4735
  %v4793 = vpack.c.b16 %v4790, %v4787
  %v4794 = vpack.c.b16 %v4791, %v4788
  %v4795 = vpack.c.b16 %v4792, %v4789
  %4796 = vrot.lane.b32.xlu0 %v4793, 64
  %v4797 = vpop.permute.xlu0 %4796
  %4798 = vrot.lane.b32.xlu0 %v4794, 64
  %v4799 = vpop.permute.xlu0 %4798
  %4800 = vrot.lane.b32.xlu0 %v4795, 64
  %v4801 = vpop.permute.xlu0 %4800
  %v4802 = vsel %vm811, %v4797, %v4799
  %v4803 = vsel %vm811, %v4799, %v4801
  %v4810 = vunpack.c.l.b16 %v4736
  %v4811 = vunpack.c.h.b16 %v4736
  %v4812 = vunpack.c.l.b16 %v4737
  %v4813 = vunpack.c.l.b16 %v4738
  %v4814 = vunpack.c.h.b16 %v4738
  %v4815 = vunpack.c.l.b16 %v4739
  %v4816 = vpack.c.b16 %v4813, %v4810
  %v4817 = vpack.c.b16 %v4814, %v4811
  %v4818 = vpack.c.b16 %v4815, %v4812
  %v4825 = vunpack.c.l.b16 %v4740
  %v4826 = vunpack.c.h.b16 %v4740
  %v4827 = vunpack.c.l.b16 %v4741
  %v4828 = vunpack.c.l.b16 %v4742
  %v4829 = vunpack.c.h.b16 %v4742
  %v4830 = vunpack.c.l.b16 %v4743
  %v4831 = vpack.c.b16 %v4828, %v4825
  %v4832 = vpack.c.b16 %v4829, %v4826
  %v4833 = vpack.c.b16 %v4830, %v4827
  %4834 = vrot.lane.b32.xlu0 %v4831, 64
  %v4835 = vpop.permute.xlu0 %4834
  %4836 = vrot.lane.b32.xlu0 %v4832, 64
  %v4837 = vpop.permute.xlu0 %4836
  %4838 = vrot.lane.b32.xlu0 %v4833, 64
  %v4839 = vpop.permute.xlu0 %4838
  %v4840 = vsel %vm811, %v4835, %v4837
  %v4841 = vsel %vm811, %v4837, %v4839
  %v4846 = vsel %vm912, %v4780, %v4797
  %v4850 = vsel %vm912, %v4818, %v4835
  %v4856 = vunpack.c.l.b16 %v4744
  %v4857 = vunpack.c.h.b16 %v4744
  %v4858 = vunpack.c.l.b16 %v4745
  %v4859 = vunpack.c.l.b16 %v4746
  %v4860 = vunpack.c.h.b16 %v4746
  %v4861 = vunpack.c.l.b16 %v4747
  %v4862 = vpack.c.b16 %v4859, %v4856
  %v4863 = vpack.c.b16 %v4860, %v4857
  %v4864 = vpack.c.b16 %v4861, %v4858
  %v4871 = vunpack.c.l.b16 %v4748
  %v4872 = vunpack.c.h.b16 %v4748
  %v4873 = vunpack.c.l.b16 %v4749
  %v4874 = vunpack.c.l.b16 %v4750
  %v4875 = vunpack.c.h.b16 %v4750
  %v4876 = vunpack.c.l.b16 %v4751
  %v4877 = vpack.c.b16 %v4874, %v4871
  %v4878 = vpack.c.b16 %v4875, %v4872
  %v4879 = vpack.c.b16 %v4876, %v4873
  %4880 = vrot.lane.b32.xlu0 %v4877, 64
  %v4881 = vpop.permute.xlu0 %4880
  %4882 = vrot.lane.b32.xlu0 %v4878, 64
  %v4883 = vpop.permute.xlu0 %4882
  %4884 = vrot.lane.b32.xlu0 %v4879, 64
  %v4885 = vpop.permute.xlu0 %4884
  %v4886 = vsel %vm811, %v4881, %v4883
  %v4887 = vsel %vm811, %v4883, %v4885
  %v4892 = vsel %vm912, %v4864, %v4881
  %v4898 = vunpack.c.l.b16 %v4752
  %v4899 = vunpack.c.h.b16 %v4752
  %v4900 = vunpack.c.l.b16 %v4753
  %v4901 = vunpack.c.l.b16 %v4754
  %v4902 = vunpack.c.h.b16 %v4754
  %v4903 = vunpack.c.l.b16 %v4755
  %v4904 = vpack.c.b16 %v4901, %v4898
  %v4905 = vpack.c.b16 %v4902, %v4899
  %v4906 = vpack.c.b16 %v4903, %v4900
  %v4913 = vunpack.c.l.b16 %v4756
  %v4914 = vunpack.c.h.b16 %v4756
  %v4915 = vunpack.c.l.b16 %v4757
  %v4916 = vunpack.c.l.b16 %v4758
  %v4917 = vunpack.c.h.b16 %v4758
  %v4918 = vunpack.c.l.b16 %v4759
  %v4919 = vpack.c.b16 %v4916, %v4913
  %v4920 = vpack.c.b16 %v4917, %v4914
  %v4921 = vpack.c.b16 %v4918, %v4915
  %4922 = vrot.lane.b32.xlu0 %v4919, 64
  %v4923 = vpop.permute.xlu0 %4922
  %4924 = vrot.lane.b32.xlu0 %v4920, 64
  %v4925 = vpop.permute.xlu0 %4924
  %4926 = vrot.lane.b32.xlu0 %v4921, 64
  %v4927 = vpop.permute.xlu0 %4926
  %v4928 = vsel %vm811, %v4923, %v4925
  %v4929 = vsel %vm811, %v4925, %v4927
  %v4934 = vsel %vm912, %v4906, %v4923
  %v4940 = vunpack.c.l.b16 %v4760
  %v4941 = vunpack.c.h.b16 %v4760
  %v4942 = vunpack.c.l.b16 %v4761
  %v4943 = vunpack.c.l.b16 %v4762
  %v4944 = vunpack.c.h.b16 %v4762
  %v4945 = vunpack.c.l.b16 %v4763
  %v4946 = vpack.c.b16 %v4943, %v4940
  %v4947 = vpack.c.b16 %v4944, %v4941
  %v4948 = vpack.c.b16 %v4945, %v4942
  %v4955 = vunpack.c.l.b16 %v4764
  %v4956 = vunpack.c.h.b16 %v4764
  %v4957 = vunpack.c.l.b16 %v4765
  %v4958 = vunpack.c.l.b16 %v4766
  %v4959 = vunpack.c.h.b16 %v4766
  %v4960 = vunpack.c.l.b16 %v4767
  %v4961 = vpack.c.b16 %v4958, %v4955
  %v4962 = vpack.c.b16 %v4959, %v4956
  %v4963 = vpack.c.b16 %v4960, %v4957
  %4964 = vrot.lane.b32.xlu0 %v4961, 64
  %v4965 = vpop.permute.xlu0 %4964
  %4966 = vrot.lane.b32.xlu0 %v4962, 64
  %v4967 = vpop.permute.xlu0 %4966
  %4968 = vrot.lane.b32.xlu0 %v4963, 64
  %v4969 = vpop.permute.xlu0 %4968
  %v4970 = vsel %vm811, %v4965, %v4967
  %v4971 = vsel %vm811, %v4967, %v4969
  %v4976 = vsel %vm912, %v4948, %v4965
  %v4978 = vld [vmem:[%s3] sm:$0xff]
  %v4979 = vld [vmem:[%s3 + $0x8] sm:$0xff]
  %v4980 = vld [vmem:[%s3 + $0x10] sm:$0xff]
  %v4981 = vld [vmem:[%s3 + $0x18] sm:$0xff]
  %v4982 = vld [vmem:[%s3 + $0x20] sm:$0xff]
  %v4983 = vld [vmem:[%s3 + $0x28] sm:$0xff]
  %v4984 = vld [vmem:[%s3 + $0x30] sm:$0xff]
  %v4985 = vld [vmem:[%s3 + $0x38] sm:$0xff]
  %v4986 = vld [vmem:[%s3 + $0x40] sm:$0xff]
  %v4987 = vld [vmem:[%s3 + $0x48] sm:$0xff]
  %v4988 = vld [vmem:[%s3 + $0x50] sm:$0xff]
  %v4989 = vld [vmem:[%s3 + $0x58] sm:$0xff]
  %v4990 = vld [vmem:[%s3 + $0x60] sm:$0xff]
  %v4991 = vld [vmem:[%s3 + $0x68] sm:$0xff]
  %v4992 = vld [vmem:[%s3 + $0x70] sm:$0xff]
  %v4993 = vld [vmem:[%s3 + $0x78] sm:$0xff]
  %v4994 = vld [vmem:[%s3 + $0x80] sm:$0xff]
  %v4995 = vld [vmem:[%s3 + $0x88] sm:$0xff]
  %v4996 = vld [vmem:[%s3 + $0x90] sm:$0xff]
  %v4997 = vld [vmem:[%s3 + $0x98] sm:$0xff]
  %v4998 = vld [vmem:[%s3 + $0xa0] sm:$0xff]
  %v4999 = vld [vmem:[%s3 + $0xa8] sm:$0xff]
  %v5000 = vld [vmem:[%s3 + $0xb0] sm:$0xff]
  %v5001 = vld [vmem:[%s3 + $0xb8] sm:$0xff]
  %v5002 = vld [vmem:[%s3 + $0xc0] sm:$0xff]
  %v5003 = vld [vmem:[%s3 + $0xc8] sm:$0xff]
  %v5004 = vld [vmem:[%s3 + $0xd0] sm:$0xff]
  %v5005 = vld [vmem:[%s3 + $0xd8] sm:$0xff]
  %v5006 = vld [vmem:[%s3 + $0xe0] sm:$0xff]
  %v5007 = vld [vmem:[%s3 + $0xe8] sm:$0xff]
  %v5008 = vld [vmem:[%s3 + $0xf0] sm:$0xff]
  %v5009 = vld [vmem:[%s3 + $0xf8] sm:$0xff]
  %v5010 = vld [vmem:[%s3 + $0x100] sm:$0xff]
  %v5011 = vld [vmem:[%s3 + $0x108] sm:$0xff]
  %v5012 = vld [vmem:[%s3 + $0x110] sm:$0xff]
  %v5013 = vld [vmem:[%s3 + $0x118] sm:$0xff]
  %v5014 = vld [vmem:[%s3 + $0x120] sm:$0xff]
  %v5015 = vld [vmem:[%s3 + $0x128] sm:$0xff]
  %v5016 = vld [vmem:[%s3 + $0x130] sm:$0xff]
  %v5017 = vld [vmem:[%s3 + $0x138] sm:$0xff]
  %v5018 = vld [vmem:[%s3 + $0x140] sm:$0xff]
  %v5019 = vld [vmem:[%s3 + $0x148] sm:$0xff]
  %v5020 = vld [vmem:[%s3 + $0x150] sm:$0xff]
  %v5021 = vld [vmem:[%s3 + $0x158] sm:$0xff]
  %v5022 = vld [vmem:[%s3 + $0x160] sm:$0xff]
  %v5023 = vld [vmem:[%s3 + $0x168] sm:$0xff]
  %v5024 = vld [vmem:[%s3 + $0x170] sm:$0xff]
  %v5025 = vld [vmem:[%s3 + $0x178] sm:$0xff]
  %v5026 = vld [vmem:[%s3 + $0x180] sm:$0xff]
  %v5027 = vld [vmem:[%s3 + $0x188] sm:$0xff]
  %v5028 = vld [vmem:[%s3 + $0x190] sm:$0xff]
  %v5029 = vld [vmem:[%s3 + $0x198] sm:$0xff]
  %v5030 = vld [vmem:[%s3 + $0x1a0] sm:$0xff]
  %v5031 = vld [vmem:[%s3 + $0x1a8] sm:$0xff]
  %v5032 = vld [vmem:[%s3 + $0x1b0] sm:$0xff]
  %v5033 = vld [vmem:[%s3 + $0x1b8] sm:$0xff]
  %v5034 = vld [vmem:[%s3 + $0x1c0] sm:$0xff]
  %v5035 = vld [vmem:[%s3 + $0x1c8] sm:$0xff]
  %v5036 = vld [vmem:[%s3 + $0x1d0] sm:$0xff]
  %v5037 = vld [vmem:[%s3 + $0x1d8] sm:$0xff]
  %v5038 = vld [vmem:[%s3 + $0x1e0] sm:$0xff]
  %v5039 = vld [vmem:[%s3 + $0x1e8] sm:$0xff]
  %v5040 = vld [vmem:[%s3 + $0x1f0] sm:$0xff]
  %v5041 = vld [vmem:[%s3 + $0x1f8] sm:$0xff]
  %v5042 = vld [vmem:[%s3 + $0x200] sm:$0xff]
  %v5043 = vld [vmem:[%s3 + $0x208] sm:$0xff]
  %v5044 = vld [vmem:[%s3 + $0x210] sm:$0xff]
  %v5045 = vld [vmem:[%s3 + $0x218] sm:$0xff]
  %v5046 = vld [vmem:[%s3 + $0x220] sm:$0xff]
  %v5047 = vld [vmem:[%s3 + $0x228] sm:$0xff]
  %v5048 = vld [vmem:[%s3 + $0x230] sm:$0xff]
  %v5049 = vld [vmem:[%s3 + $0x238] sm:$0xff]
  %v5050 = vld [vmem:[%s3 + $0x240] sm:$0xff]
  %v5051 = vld [vmem:[%s3 + $0x248] sm:$0xff]
  %v5052 = vld [vmem:[%s3 + $0x250] sm:$0xff]
  %v5053 = vld [vmem:[%s3 + $0x258] sm:$0xff]
  %v5054 = vld [vmem:[%s3 + $0x260] sm:$0xff]
  %v5055 = vld [vmem:[%s3 + $0x268] sm:$0xff]
  %v5056 = vld [vmem:[%s3 + $0x270] sm:$0xff]
  %v5057 = vld [vmem:[%s3 + $0x278] sm:$0xff]
  %v5058 = vld [vmem:[%s3 + $0x280] sm:$0xff]
  %v5059 = vld [vmem:[%s3 + $0x288] sm:$0xff]
  %v5060 = vld [vmem:[%s3 + $0x290] sm:$0xff]
  %v5061 = vld [vmem:[%s3 + $0x298] sm:$0xff]
  %v5062 = vld [vmem:[%s3 + $0x2a0] sm:$0xff]
  %v5063 = vld [vmem:[%s3 + $0x2a8] sm:$0xff]
  %v5064 = vld [vmem:[%s3 + $0x2b0] sm:$0xff]
  %v5065 = vld [vmem:[%s3 + $0x2b8] sm:$0xff]
  %v5066 = vld [vmem:[%s3 + $0x2c0] sm:$0xff]
  %v5067 = vld [vmem:[%s3 + $0x2c8] sm:$0xff]
  %v5068 = vld [vmem:[%s3 + $0x2d0] sm:$0xff]
  %v5069 = vld [vmem:[%s3 + $0x2d8] sm:$0xff]
  %v5070 = vld [vmem:[%s3 + $0x2e0] sm:$0xff]
  %v5071 = vld [vmem:[%s3 + $0x2e8] sm:$0xff]
  %v5072 = vld [vmem:[%s3 + $0x2f0] sm:$0xff]
  %v5073 = vld [vmem:[%s3 + $0x2f8] sm:$0xff]
  %v5074 = vld [vmem:[%s3 + $0x300] sm:$0xff]
  %v5075 = vld [vmem:[%s3 + $0x308] sm:$0xff]
  %v5076 = vld [vmem:[%s3 + $0x310] sm:$0xff]
  %v5077 = vld [vmem:[%s3 + $0x318] sm:$0xff]
  %v5078 = vld [vmem:[%s3 + $0x320] sm:$0xff]
  %v5079 = vld [vmem:[%s3 + $0x328] sm:$0xff]
  %v5080 = vld [vmem:[%s3 + $0x330] sm:$0xff]
  %v5081 = vld [vmem:[%s3 + $0x338] sm:$0xff]
  %v5082 = vld [vmem:[%s3 + $0x340] sm:$0xff]
  %v5083 = vld [vmem:[%s3 + $0x348] sm:$0xff]
  %v5084 = vld [vmem:[%s3 + $0x350] sm:$0xff]
  %v5085 = vld [vmem:[%s3 + $0x358] sm:$0xff]
  %v5086 = vld [vmem:[%s3 + $0x360] sm:$0xff]
  %v5087 = vld [vmem:[%s3 + $0x368] sm:$0xff]
  %v5088 = vld [vmem:[%s3 + $0x370] sm:$0xff]
  %v5089 = vld [vmem:[%s3 + $0x378] sm:$0xff]
  %v5090 = vld [vmem:[%s3 + $0x380] sm:$0xff]
  %v5091 = vld [vmem:[%s3 + $0x388] sm:$0xff]
  %v5092 = vld [vmem:[%s3 + $0x390] sm:$0xff]
  %v5093 = vld [vmem:[%s3 + $0x398] sm:$0xff]
  %v5094 = vld [vmem:[%s3 + $0x3a0] sm:$0xff]
  %v5095 = vld [vmem:[%s3 + $0x3a8] sm:$0xff]
  %v5096 = vld [vmem:[%s3 + $0x3b0] sm:$0xff]
  %v5097 = vld [vmem:[%s3 + $0x3b8] sm:$0xff]
  %v5098 = vld [vmem:[%s3 + $0x3c0] sm:$0xff]
  %v5099 = vld [vmem:[%s3 + $0x3c8] sm:$0xff]
  %v5100 = vld [vmem:[%s3 + $0x3d0] sm:$0xff]
  %v5101 = vld [vmem:[%s3 + $0x3d8] sm:$0xff]
  %v5102 = vld [vmem:[%s3 + $0x3e0] sm:$0xff]
  %v5103 = vld [vmem:[%s3 + $0x3e8] sm:$0xff]
  %v5104 = vld [vmem:[%s3 + $0x3f0] sm:$0xff]
  %v5105 = vld [vmem:[%s3 + $0x3f8] sm:$0xff]
  %v5106 = vld [vmem:[%s3 + $0x400] sm:$0xff]
  %v5107 = vld [vmem:[%s3 + $0x408] sm:$0xff]
  %v5108 = vld [vmem:[%s3 + $0x410] sm:$0xff]
  %v5109 = vld [vmem:[%s3 + $0x418] sm:$0xff]
  %v5110 = vld [vmem:[%s3 + $0x420] sm:$0xff]
  %v5111 = vld [vmem:[%s3 + $0x428] sm:$0xff]
  %v5112 = vld [vmem:[%s3 + $0x430] sm:$0xff]
  %v5113 = vld [vmem:[%s3 + $0x438] sm:$0xff]
  %v5114 = vld [vmem:[%s3 + $0x440] sm:$0xff]
  %v5115 = vld [vmem:[%s3 + $0x448] sm:$0xff]
  %v5116 = vld [vmem:[%s3 + $0x450] sm:$0xff]
  %v5117 = vld [vmem:[%s3 + $0x458] sm:$0xff]
  %v5118 = vld [vmem:[%s3 + $0x460] sm:$0xff]
  %v5119 = vld [vmem:[%s3 + $0x468] sm:$0xff]
  %v5120 = vld [vmem:[%s3 + $0x470] sm:$0xff]
  %v5121 = vld [vmem:[%s3 + $0x478] sm:$0xff]
  %v5122 = vld [vmem:[%s3 + $0x480] sm:$0xff]
  %v5123 = vld [vmem:[%s3 + $0x488] sm:$0xff]
  %v5124 = vld [vmem:[%s3 + $0x490] sm:$0xff]
  %v5125 = vld [vmem:[%s3 + $0x498] sm:$0xff]
  %v5126 = vld [vmem:[%s3 + $0x4a0] sm:$0xff]
  %v5127 = vld [vmem:[%s3 + $0x4a8] sm:$0xff]
  %v5128 = vld [vmem:[%s3 + $0x4b0] sm:$0xff]
  %v5129 = vld [vmem:[%s3 + $0x4b8] sm:$0xff]
  %v5130 = vld [vmem:[%s3 + $0x4c0] sm:$0xff]
  %v5131 = vld [vmem:[%s3 + $0x4c8] sm:$0xff]
  %v5132 = vld [vmem:[%s3 + $0x4d0] sm:$0xff]
  %v5133 = vld [vmem:[%s3 + $0x4d8] sm:$0xff]
  %v5134 = vld [vmem:[%s3 + $0x4e0] sm:$0xff]
  %v5135 = vld [vmem:[%s3 + $0x4e8] sm:$0xff]
  %v5136 = vld [vmem:[%s3 + $0x4f0] sm:$0xff]
  %v5137 = vld [vmem:[%s3 + $0x4f8] sm:$0xff]
  %v5138 = vld [vmem:[%s4] sm:$0x3]
  %v5140 = vperm.slane %v5138, 0
  %v5141 = vperm.slane %v5138, 1
  %v5304 = vunpack.c.l.b16 %v4978
  %v5305 = vunpack.c.h.b16 %v4978
  %v5306 = vunpack.c.l.b16 %v4979
  %v5307 = vunpack.c.h.b16 %v4979
  %v5308 = vunpack.c.l.b16 %v4980
  %v5309 = vunpack.c.h.b16 %v4980
  %v5310 = vunpack.c.l.b16 %v4981
  %v5311 = vunpack.c.h.b16 %v4981
  %v5312 = vunpack.c.l.b16 %v4982
  %v5313 = vunpack.c.h.b16 %v4982
  %v5314 = vunpack.c.l.b16 %v4983
  %v5315 = vunpack.c.h.b16 %v4983
  %v5316 = vunpack.c.l.b16 %v4984
  %v5317 = vunpack.c.h.b16 %v4984
  %v5318 = vunpack.c.l.b16 %v4985
  %v5319 = vunpack.c.h.b16 %v4985
  %v5320 = vunpack.c.l.b16 %v4986
  %v5321 = vunpack.c.h.b16 %v4986
  %v5322 = vunpack.c.l.b16 %v4987
  %v5323 = vunpack.c.h.b16 %v4987
  %v5324 = vunpack.c.l.b16 %v4988
  %v5325 = vunpack.c.h.b16 %v4988
  %v5326 = vunpack.c.l.b16 %v4989
  %v5327 = vunpack.c.h.b16 %v4989
  %v5328 = vunpack.c.l.b16 %v4990
  %v5329 = vunpack.c.h.b16 %v4990
  %v5330 = vunpack.c.l.b16 %v4991
  %v5331 = vunpack.c.h.b16 %v4991
  %v5332 = vunpack.c.l.b16 %v4992
  %v5333 = vunpack.c.h.b16 %v4992
  %v5334 = vunpack.c.l.b16 %v4993
  %v5335 = vunpack.c.h.b16 %v4993
  %v5336 = vunpack.c.l.b16 %v4994
  %v5337 = vunpack.c.h.b16 %v4994
  %v5338 = vunpack.c.l.b16 %v4995
  %v5339 = vunpack.c.h.b16 %v4995
  %v5340 = vunpack.c.l.b16 %v4996
  %v5341 = vunpack.c.h.b16 %v4996
  %v5342 = vunpack.c.l.b16 %v4997
  %v5343 = vunpack.c.h.b16 %v4997
  %v5344 = vunpack.c.l.b16 %v4998
  %v5345 = vunpack.c.h.b16 %v4998
  %v5346 = vunpack.c.l.b16 %v4999
  %v5347 = vunpack.c.h.b16 %v4999
  %v5348 = vunpack.c.l.b16 %v5000
  %v5349 = vunpack.c.h.b16 %v5000
  %v5350 = vunpack.c.l.b16 %v5001
  %v5351 = vunpack.c.h.b16 %v5001
  %v5352 = vunpack.c.l.b16 %v5002
  %v5353 = vunpack.c.h.b16 %v5002
  %v5354 = vunpack.c.l.b16 %v5003
  %v5355 = vunpack.c.h.b16 %v5003
  %v5356 = vunpack.c.l.b16 %v5004
  %v5357 = vunpack.c.h.b16 %v5004
  %v5358 = vunpack.c.l.b16 %v5005
  %v5359 = vunpack.c.h.b16 %v5005
  %v5360 = vunpack.c.l.b16 %v5006
  %v5361 = vunpack.c.h.b16 %v5006
  %v5362 = vunpack.c.l.b16 %v5007
  %v5363 = vunpack.c.h.b16 %v5007
  %v5364 = vunpack.c.l.b16 %v5008
  %v5365 = vunpack.c.h.b16 %v5008
  %v5366 = vunpack.c.l.b16 %v5009
  %v5367 = vunpack.c.h.b16 %v5009
  %v5368 = vunpack.c.l.b16 %v5010
  %v5369 = vunpack.c.h.b16 %v5010
  %v5370 = vunpack.c.l.b16 %v5011
  %v5371 = vunpack.c.h.b16 %v5011
  %v5372 = vunpack.c.l.b16 %v5012
  %v5373 = vunpack.c.h.b16 %v5012
  %v5374 = vunpack.c.l.b16 %v5013
  %v5375 = vunpack.c.h.b16 %v5013
  %v5376 = vunpack.c.l.b16 %v5014
  %v5377 = vunpack.c.h.b16 %v5014
  %v5378 = vunpack.c.l.b16 %v5015
  %v5379 = vunpack.c.h.b16 %v5015
  %v5380 = vunpack.c.l.b16 %v5016
  %v5381 = vunpack.c.h.b16 %v5016
  %v5382 = vunpack.c.l.b16 %v5017
  %v5383 = vunpack.c.h.b16 %v5017
  %v5384 = vunpack.c.l.b16 %v5018
  %v5385 = vunpack.c.h.b16 %v5018
  %v5386 = vunpack.c.l.b16 %v5019
  %v5387 = vunpack.c.h.b16 %v5019
  %v5388 = vunpack.c.l.b16 %v5020
  %v5389 = vunpack.c.h.b16 %v5020
  %v5390 = vunpack.c.l.b16 %v5021
  %v5391 = vunpack.c.h.b16 %v5021
  %v5392 = vunpack.c.l.b16 %v5022
  %v5393 = vunpack.c.h.b16 %v5022
  %v5394 = vunpack.c.l.b16 %v5023
  %v5395 = vunpack.c.h.b16 %v5023
  %v5396 = vunpack.c.l.b16 %v5024
  %v5397 = vunpack.c.h.b16 %v5024
  %v5398 = vunpack.c.l.b16 %v5025
  %v5399 = vunpack.c.h.b16 %v5025
  %v5400 = vunpack.c.l.b16 %v5026
  %v5401 = vunpack.c.h.b16 %v5026
  %v5402 = vunpack.c.l.b16 %v5027
  %v5403 = vunpack.c.h.b16 %v5027
  %v5404 = vunpack.c.l.b16 %v5028
  %v5405 = vunpack.c.h.b16 %v5028
  %v5406 = vunpack.c.l.b16 %v5029
  %v5407 = vunpack.c.h.b16 %v5029
  %v5408 = vunpack.c.l.b16 %v5030
  %v5409 = vunpack.c.h.b16 %v5030
  %v5410 = vunpack.c.l.b16 %v5031
  %v5411 = vunpack.c.h.b16 %v5031
  %v5412 = vunpack.c.l.b16 %v5032
  %v5413 = vunpack.c.h.b16 %v5032
  %v5414 = vunpack.c.l.b16 %v5033
  %v5415 = vunpack.c.h.b16 %v5033
  %v5416 = vunpack.c.l.b16 %v5034
  %v5417 = vunpack.c.h.b16 %v5034
  %v5418 = vunpack.c.l.b16 %v5035
  %v5419 = vunpack.c.h.b16 %v5035
  %v5420 = vunpack.c.l.b16 %v5036
  %v5421 = vunpack.c.h.b16 %v5036
  %v5422 = vunpack.c.l.b16 %v5037
  %v5423 = vunpack.c.h.b16 %v5037
  %v5424 = vunpack.c.l.b16 %v5038
  %v5425 = vunpack.c.h.b16 %v5038
  %v5426 = vunpack.c.l.b16 %v5039
  %v5427 = vunpack.c.h.b16 %v5039
  %v5428 = vunpack.c.l.b16 %v5040
  %v5429 = vunpack.c.h.b16 %v5040
  %v5430 = vunpack.c.l.b16 %v5041
  %v5431 = vunpack.c.h.b16 %v5041
  %v5432 = vunpack.c.l.b16 %v5042
  %v5433 = vunpack.c.h.b16 %v5042
  %v5434 = vunpack.c.l.b16 %v5043
  %v5435 = vunpack.c.h.b16 %v5043
  %v5436 = vunpack.c.l.b16 %v5044
  %v5437 = vunpack.c.h.b16 %v5044
  %v5438 = vunpack.c.l.b16 %v5045
  %v5439 = vunpack.c.h.b16 %v5045
  %v5440 = vunpack.c.l.b16 %v5046
  %v5441 = vunpack.c.h.b16 %v5046
  %v5442 = vunpack.c.l.b16 %v5047
  %v5443 = vunpack.c.h.b16 %v5047
  %v5444 = vunpack.c.l.b16 %v5048
  %v5445 = vunpack.c.h.b16 %v5048
  %v5446 = vunpack.c.l.b16 %v5049
  %v5447 = vunpack.c.h.b16 %v5049
  %v5448 = vunpack.c.l.b16 %v5050
  %v5449 = vunpack.c.h.b16 %v5050
  %v5450 = vunpack.c.l.b16 %v5051
  %v5451 = vunpack.c.h.b16 %v5051
  %v5452 = vunpack.c.l.b16 %v5052
  %v5453 = vunpack.c.h.b16 %v5052
  %v5454 = vunpack.c.l.b16 %v5053
  %v5455 = vunpack.c.h.b16 %v5053
  %v5456 = vunpack.c.l.b16 %v5054
  %v5457 = vunpack.c.h.b16 %v5054
  %v5458 = vunpack.c.l.b16 %v5055
  %v5459 = vunpack.c.h.b16 %v5055
  %v5460 = vunpack.c.l.b16 %v5056
  %v5461 = vunpack.c.h.b16 %v5056
  %v5462 = vunpack.c.l.b16 %v5057
  %v5463 = vunpack.c.h.b16 %v5057
  %v5464 = vunpack.c.l.b16 %v5058
  %v5465 = vunpack.c.h.b16 %v5058
  %v5466 = vunpack.c.l.b16 %v5059
  %v5467 = vunpack.c.h.b16 %v5059
  %v5468 = vunpack.c.l.b16 %v5060
  %v5469 = vunpack.c.h.b16 %v5060
  %v5470 = vunpack.c.l.b16 %v5061
  %v5471 = vunpack.c.h.b16 %v5061
  %v5472 = vunpack.c.l.b16 %v5062
  %v5473 = vunpack.c.h.b16 %v5062
  %v5474 = vunpack.c.l.b16 %v5063
  %v5475 = vunpack.c.h.b16 %v5063
  %v5476 = vunpack.c.l.b16 %v5064
  %v5477 = vunpack.c.h.b16 %v5064
  %v5478 = vunpack.c.l.b16 %v5065
  %v5479 = vunpack.c.h.b16 %v5065
  %v5480 = vunpack.c.l.b16 %v5066
  %v5481 = vunpack.c.h.b16 %v5066
  %v5482 = vunpack.c.l.b16 %v5067
  %v5483 = vunpack.c.h.b16 %v5067
  %v5484 = vunpack.c.l.b16 %v5068
  %v5485 = vunpack.c.h.b16 %v5068
  %v5486 = vunpack.c.l.b16 %v5069
  %v5487 = vunpack.c.h.b16 %v5069
  %v5488 = vunpack.c.l.b16 %v5070
  %v5489 = vunpack.c.h.b16 %v5070
  %v5490 = vunpack.c.l.b16 %v5071
  %v5491 = vunpack.c.h.b16 %v5071
  %v5492 = vunpack.c.l.b16 %v5072
  %v5493 = vunpack.c.h.b16 %v5072
  %v5494 = vunpack.c.l.b16 %v5073
  %v5495 = vunpack.c.h.b16 %v5073
  %v5496 = vunpack.c.l.b16 %v5074
  %v5497 = vunpack.c.h.b16 %v5074
  %v5498 = vunpack.c.l.b16 %v5075
  %v5499 = vunpack.c.h.b16 %v5075
  %v5500 = vunpack.c.l.b16 %v5076
  %v5501 = vunpack.c.h.b16 %v5076
  %v5502 = vunpack.c.l.b16 %v5077
  %v5503 = vunpack.c.h.b16 %v5077
  %v5504 = vunpack.c.l.b16 %v5078
  %v5505 = vunpack.c.h.b16 %v5078
  %v5506 = vunpack.c.l.b16 %v5079
  %v5507 = vunpack.c.h.b16 %v5079
  %v5508 = vunpack.c.l.b16 %v5080
  %v5509 = vunpack.c.h.b16 %v5080
  %v5510 = vunpack.c.l.b16 %v5081
  %v5511 = vunpack.c.h.b16 %v5081
  %v5512 = vunpack.c.l.b16 %v5082
  %v5513 = vunpack.c.h.b16 %v5082
  %v5514 = vunpack.c.l.b16 %v5083
  %v5515 = vunpack.c.h.b16 %v5083
  %v5516 = vunpack.c.l.b16 %v5084
  %v5517 = vunpack.c.h.b16 %v5084
  %v5518 = vunpack.c.l.b16 %v5085
  %v5519 = vunpack.c.h.b16 %v5085
  %v5520 = vunpack.c.l.b16 %v5086
  %v5521 = vunpack.c.h.b16 %v5086
  %v5522 = vunpack.c.l.b16 %v5087
  %v5523 = vunpack.c.h.b16 %v5087
  %v5524 = vunpack.c.l.b16 %v5088
  %v5525 = vunpack.c.h.b16 %v5088
  %v5526 = vunpack.c.l.b16 %v5089
  %v5527 = vunpack.c.h.b16 %v5089
  %v5528 = vunpack.c.l.b16 %v5090
  %v5529 = vunpack.c.h.b16 %v5090
  %v5530 = vunpack.c.l.b16 %v5091
  %v5531 = vunpack.c.h.b16 %v5091
  %v5532 = vunpack.c.l.b16 %v5092
  %v5533 = vunpack.c.h.b16 %v5092
  %v5534 = vunpack.c.l.b16 %v5093
  %v5535 = vunpack.c.h.b16 %v5093
  %v5536 = vunpack.c.l.b16 %v5094
  %v5537 = vunpack.c.h.b16 %v5094
  %v5538 = vunpack.c.l.b16 %v5095
  %v5539 = vunpack.c.h.b16 %v5095
  %v5540 = vunpack.c.l.b16 %v5096
  %v5541 = vunpack.c.h.b16 %v5096
  %v5542 = vunpack.c.l.b16 %v5097
  %v5543 = vunpack.c.h.b16 %v5097
  %v5544 = vunpack.c.l.b16 %v5098
  %v5545 = vunpack.c.h.b16 %v5098
  %v5546 = vunpack.c.l.b16 %v5099
  %v5547 = vunpack.c.h.b16 %v5099
  %v5548 = vunpack.c.l.b16 %v5100
  %v5549 = vunpack.c.h.b16 %v5100
  %v5550 = vunpack.c.l.b16 %v5101
  %v5551 = vunpack.c.h.b16 %v5101
  %v5552 = vunpack.c.l.b16 %v5102
  %v5553 = vunpack.c.h.b16 %v5102
  %v5554 = vunpack.c.l.b16 %v5103
  %v5555 = vunpack.c.h.b16 %v5103
  %v5556 = vunpack.c.l.b16 %v5104
  %v5557 = vunpack.c.h.b16 %v5104
  %v5558 = vunpack.c.l.b16 %v5105
  %v5559 = vunpack.c.h.b16 %v5105
  %v5560 = vunpack.c.l.b16 %v5106
  %v5561 = vunpack.c.h.b16 %v5106
  %v5562 = vunpack.c.l.b16 %v5107
  %v5563 = vunpack.c.h.b16 %v5107
  %v5564 = vunpack.c.l.b16 %v5108
  %v5565 = vunpack.c.h.b16 %v5108
  %v5566 = vunpack.c.l.b16 %v5109
  %v5567 = vunpack.c.h.b16 %v5109
  %v5568 = vunpack.c.l.b16 %v5110
  %v5569 = vunpack.c.h.b16 %v5110
  %v5570 = vunpack.c.l.b16 %v5111
  %v5571 = vunpack.c.h.b16 %v5111
  %v5572 = vunpack.c.l.b16 %v5112
  %v5573 = vunpack.c.h.b16 %v5112
  %v5574 = vunpack.c.l.b16 %v5113
  %v5575 = vunpack.c.h.b16 %v5113
  %v5576 = vunpack.c.l.b16 %v5114
  %v5577 = vunpack.c.h.b16 %v5114
  %v5578 = vunpack.c.l.b16 %v5115
  %v5579 = vunpack.c.h.b16 %v5115
  %v5580 = vunpack.c.l.b16 %v5116
  %v5581 = vunpack.c.h.b16 %v5116
  %v5582 = vunpack.c.l.b16 %v5117
  %v5583 = vunpack.c.h.b16 %v5117
  %v5584 = vunpack.c.l.b16 %v5118
  %v5585 = vunpack.c.h.b16 %v5118
  %v5586 = vunpack.c.l.b16 %v5119
  %v5587 = vunpack.c.h.b16 %v5119
  %v5588 = vunpack.c.l.b16 %v5120
  %v5589 = vunpack.c.h.b16 %v5120
  %v5590 = vunpack.c.l.b16 %v5121
  %v5591 = vunpack.c.h.b16 %v5121
  %v5592 = vunpack.c.l.b16 %v5122
  %v5593 = vunpack.c.h.b16 %v5122
  %v5594 = vunpack.c.l.b16 %v5123
  %v5595 = vunpack.c.h.b16 %v5123
  %v5596 = vunpack.c.l.b16 %v5124
  %v5597 = vunpack.c.h.b16 %v5124
  %v5598 = vunpack.c.l.b16 %v5125
  %v5599 = vunpack.c.h.b16 %v5125
  %v5600 = vunpack.c.l.b16 %v5126
  %v5601 = vunpack.c.h.b16 %v5126
  %v5602 = vunpack.c.l.b16 %v5127
  %v5603 = vunpack.c.h.b16 %v5127
  %v5604 = vunpack.c.l.b16 %v5128
  %v5605 = vunpack.c.h.b16 %v5128
  %v5606 = vunpack.c.l.b16 %v5129
  %v5607 = vunpack.c.h.b16 %v5129
  %v5608 = vunpack.c.l.b16 %v5130
  %v5609 = vunpack.c.h.b16 %v5130
  %v5610 = vunpack.c.l.b16 %v5131
  %v5611 = vunpack.c.h.b16 %v5131
  %v5612 = vunpack.c.l.b16 %v5132
  %v5613 = vunpack.c.h.b16 %v5132
  %v5614 = vunpack.c.l.b16 %v5133
  %v5615 = vunpack.c.h.b16 %v5133
  %v5616 = vunpack.c.l.b16 %v5134
  %v5617 = vunpack.c.h.b16 %v5134
  %v5618 = vunpack.c.l.b16 %v5135
  %v5619 = vunpack.c.h.b16 %v5135
  %v5620 = vunpack.c.l.b16 %v5136
  %v5621 = vunpack.c.h.b16 %v5136
  %v5622 = vunpack.c.l.b16 %v5137
  %v5623 = vunpack.c.h.b16 %v5137
  %v5624 = vpack.c.b16 %v5306, %v5304
  %v5625 = vpack.c.b16 %v5307, %v5305
  %v5626 = vpack.c.b16 %v5310, %v5308
  %v5627 = vpack.c.b16 %v5311, %v5309
  %v5628 = vpack.c.b16 %v5314, %v5312
  %v5629 = vpack.c.b16 %v5315, %v5313
  %v5630 = vpack.c.b16 %v5318, %v5316
  %v5631 = vpack.c.b16 %v5319, %v5317
  %v5632 = vpack.c.b16 %v5322, %v5320
  %v5633 = vpack.c.b16 %v5323, %v5321
  %v5634 = vpack.c.b16 %v5326, %v5324
  %v5635 = vpack.c.b16 %v5327, %v5325
  %v5636 = vpack.c.b16 %v5330, %v5328
  %v5637 = vpack.c.b16 %v5331, %v5329
  %v5638 = vpack.c.b16 %v5334, %v5332
  %v5639 = vpack.c.b16 %v5335, %v5333
  %v5640 = vpack.c.b16 %v5338, %v5336
  %v5641 = vpack.c.b16 %v5339, %v5337
  %v5642 = vpack.c.b16 %v5342, %v5340
  %v5643 = vpack.c.b16 %v5343, %v5341
  %v5644 = vpack.c.b16 %v5346, %v5344
  %v5645 = vpack.c.b16 %v5347, %v5345
  %v5646 = vpack.c.b16 %v5350, %v5348
  %v5647 = vpack.c.b16 %v5351, %v5349
  %v5648 = vpack.c.b16 %v5354, %v5352
  %v5649 = vpack.c.b16 %v5355, %v5353
  %v5650 = vpack.c.b16 %v5358, %v5356
  %v5651 = vpack.c.b16 %v5359, %v5357
  %v5652 = vpack.c.b16 %v5362, %v5360
  %v5653 = vpack.c.b16 %v5363, %v5361
  %v5654 = vpack.c.b16 %v5366, %v5364
  %v5655 = vpack.c.b16 %v5367, %v5365
  %v5656 = vpack.c.b16 %v5370, %v5368
  %v5657 = vpack.c.b16 %v5371, %v5369
  %v5658 = vpack.c.b16 %v5374, %v5372
  %v5659 = vpack.c.b16 %v5375, %v5373
  %v5660 = vpack.c.b16 %v5378, %v5376
  %v5661 = vpack.c.b16 %v5379, %v5377
  %v5662 = vpack.c.b16 %v5382, %v5380
  %v5663 = vpack.c.b16 %v5383, %v5381
  %v5664 = vpack.c.b16 %v5386, %v5384
  %v5665 = vpack.c.b16 %v5387, %v5385
  %v5666 = vpack.c.b16 %v5390, %v5388
  %v5667 = vpack.c.b16 %v5391, %v5389
  %v5668 = vpack.c.b16 %v5394, %v5392
  %v5669 = vpack.c.b16 %v5395, %v5393
  %v5670 = vpack.c.b16 %v5398, %v5396
  %v5671 = vpack.c.b16 %v5399, %v5397
  %v5672 = vpack.c.b16 %v5402, %v5400
  %v5673 = vpack.c.b16 %v5403, %v5401
  %v5674 = vpack.c.b16 %v5406, %v5404
  %v5675 = vpack.c.b16 %v5407, %v5405
  %v5676 = vpack.c.b16 %v5410, %v5408
  %v5677 = vpack.c.b16 %v5411, %v5409
  %v5678 = vpack.c.b16 %v5414, %v5412
  %v5679 = vpack.c.b16 %v5415, %v5413
  %v5680 = vpack.c.b16 %v5418, %v5416
  %v5681 = vpack.c.b16 %v5419, %v5417
  %v5682 = vpack.c.b16 %v5422, %v5420
  %v5683 = vpack.c.b16 %v5423, %v5421
  %v5684 = vpack.c.b16 %v5426, %v5424
  %v5685 = vpack.c.b16 %v5427, %v5425
  %v5686 = vpack.c.b16 %v5430, %v5428
  %v5687 = vpack.c.b16 %v5431, %v5429
  %v5688 = vpack.c.b16 %v5434, %v5432
  %v5689 = vpack.c.b16 %v5435, %v5433
  %v5690 = vpack.c.b16 %v5438, %v5436
  %v5691 = vpack.c.b16 %v5439, %v5437
  %v5692 = vpack.c.b16 %v5442, %v5440
  %v5693 = vpack.c.b16 %v5443, %v5441
  %v5694 = vpack.c.b16 %v5446, %v5444
  %v5695 = vpack.c.b16 %v5447, %v5445
  %v5696 = vpack.c.b16 %v5450, %v5448
  %v5697 = vpack.c.b16 %v5451, %v5449
  %v5698 = vpack.c.b16 %v5454, %v5452
  %v5699 = vpack.c.b16 %v5455, %v5453
  %v5700 = vpack.c.b16 %v5458, %v5456
  %v5701 = vpack.c.b16 %v5459, %v5457
  %v5702 = vpack.c.b16 %v5462, %v5460
  %v5703 = vpack.c.b16 %v5463, %v5461
  %v5704 = vpack.c.b16 %v5466, %v5464
  %v5705 = vpack.c.b16 %v5467, %v5465
  %v5706 = vpack.c.b16 %v5470, %v5468
  %v5707 = vpack.c.b16 %v5471, %v5469
  %v5708 = vpack.c.b16 %v5474, %v5472
  %v5709 = vpack.c.b16 %v5475, %v5473
  %v5710 = vpack.c.b16 %v5478, %v5476
  %v5711 = vpack.c.b16 %v5479, %v5477
  %v5712 = vpack.c.b16 %v5482, %v5480
  %v5713 = vpack.c.b16 %v5483, %v5481
  %v5714 = vpack.c.b16 %v5486, %v5484
  %v5715 = vpack.c.b16 %v5487, %v5485
  %v5716 = vpack.c.b16 %v5490, %v5488
  %v5717 = vpack.c.b16 %v5491, %v5489
  %v5718 = vpack.c.b16 %v5494, %v5492
  %v5719 = vpack.c.b16 %v5495, %v5493
  %v5720 = vpack.c.b16 %v5498, %v5496
  %v5721 = vpack.c.b16 %v5499, %v5497
  %v5722 = vpack.c.b16 %v5502, %v5500
  %v5723 = vpack.c.b16 %v5503, %v5501
  %v5724 = vpack.c.b16 %v5506, %v5504
  %v5725 = vpack.c.b16 %v5507, %v5505
  %v5726 = vpack.c.b16 %v5510, %v5508
  %v5727 = vpack.c.b16 %v5511, %v5509
  %v5728 = vpack.c.b16 %v5514, %v5512
  %v5729 = vpack.c.b16 %v5515, %v5513
  %v5730 = vpack.c.b16 %v5518, %v5516
  %v5731 = vpack.c.b16 %v5519, %v5517
  %v5732 = vpack.c.b16 %v5522, %v5520
  %v5733 = vpack.c.b16 %v5523, %v5521
  %v5734 = vpack.c.b16 %v5526, %v5524
  %v5735 = vpack.c.b16 %v5527, %v5525
  %v5736 = vpack.c.b16 %v5530, %v5528
  %v5737 = vpack.c.b16 %v5531, %v5529
  %v5738 = vpack.c.b16 %v5534, %v5532
  %v5739 = vpack.c.b16 %v5535, %v5533
  %v5740 = vpack.c.b16 %v5538, %v5536
  %v5741 = vpack.c.b16 %v5539, %v5537
  %v5742 = vpack.c.b16 %v5542, %v5540
  %v5743 = vpack.c.b16 %v5543, %v5541
  %v5744 = vpack.c.b16 %v5546, %v5544
  %v5745 = vpack.c.b16 %v5547, %v5545
  %v5746 = vpack.c.b16 %v5550, %v5548
  %v5747 = vpack.c.b16 %v5551, %v5549
  %v5748 = vpack.c.b16 %v5554, %v5552
  %v5749 = vpack.c.b16 %v5555, %v5553
  %v5750 = vpack.c.b16 %v5558, %v5556
  %v5751 = vpack.c.b16 %v5559, %v5557
  %v5752 = vpack.c.b16 %v5562, %v5560
  %v5753 = vpack.c.b16 %v5563, %v5561
  %v5754 = vpack.c.b16 %v5566, %v5564
  %v5755 = vpack.c.b16 %v5567, %v5565
  %v5756 = vpack.c.b16 %v5570, %v5568
  %v5757 = vpack.c.b16 %v5571, %v5569
  %v5758 = vpack.c.b16 %v5574, %v5572
  %v5759 = vpack.c.b16 %v5575, %v5573
  %v5760 = vpack.c.b16 %v5578, %v5576
  %v5761 = vpack.c.b16 %v5579, %v5577
  %v5762 = vpack.c.b16 %v5582, %v5580
  %v5763 = vpack.c.b16 %v5583, %v5581
  %v5764 = vpack.c.b16 %v5586, %v5584
  %v5765 = vpack.c.b16 %v5587, %v5585
  %v5766 = vpack.c.b16 %v5590, %v5588
  %v5767 = vpack.c.b16 %v5591, %v5589
  %v5768 = vpack.c.b16 %v5594, %v5592
  %v5769 = vpack.c.b16 %v5595, %v5593
  %v5770 = vpack.c.b16 %v5598, %v5596
  %v5771 = vpack.c.b16 %v5599, %v5597
  %v5772 = vpack.c.b16 %v5602, %v5600
  %v5773 = vpack.c.b16 %v5603, %v5601
  %v5774 = vpack.c.b16 %v5606, %v5604
  %v5775 = vpack.c.b16 %v5607, %v5605
  %v5776 = vpack.c.b16 %v5610, %v5608
  %v5777 = vpack.c.b16 %v5611, %v5609
  %v5778 = vpack.c.b16 %v5614, %v5612
  %v5779 = vpack.c.b16 %v5615, %v5613
  %v5780 = vpack.c.b16 %v5618, %v5616
  %v5781 = vpack.c.b16 %v5619, %v5617
  %v5782 = vpack.c.b16 %v5622, %v5620
  %v5783 = vpack.c.b16 %v5623, %v5621
  %5944 = vmatpush.bf16.msra.mxu0 %v5638
  %5945 = vmatpush.bf16.msra.mxu0 %v5636
  %5946 = vmatpush.bf16.msra.mxu0 %v5634
  %5947 = vmatpush.bf16.msra.mxu0 %v5632
  %5948 = vmatpush.bf16.msra.mxu0 %v5630
  %5949 = vmatpush.bf16.msra.mxu0 %v5628
  %5950 = vmatpush.bf16.msra.mxu0 %v5626
  %5951 = vmatpush.bf16.msra.mxu0 %v5624
  %5952 = vmatmul.bf16.gmra.mxu0 %v4778
  %v5953 = vpop.f32.mrf.mxu0
  %v5954 = vadd.f32 %v5140, %v5953
  %v5955 = vpop.f32.mrf.mxu0
  %v5956 = vadd.f32 %v5140, %v5955
  %5957 = vmatmul.bf16.gmra.mxu0 %v4816
  %v5958 = vpop.f32.mrf.mxu0
  %v5959 = vadd.f32 %v5140, %v5958
  %v5960 = vpop.f32.mrf.mxu0
  %v5961 = vadd.f32 %v5140, %v5960
  %5962 = vmatmul.bf16.gmra.mxu0 %v4862
  %v5963 = vpop.f32.mrf.mxu0
  %v5964 = vadd.f32 %v5140, %v5963
  %v5965 = vpop.f32.mrf.mxu0
  %v5966 = vadd.f32 %v5140, %v5965
  %5967 = vmatmul.bf16.gmra.mxu0 %v4904
  %v5968 = vpop.f32.mrf.mxu0
  %v5969 = vadd.f32 %v5140, %v5968
  %v5970 = vpop.f32.mrf.mxu0
  %v5971 = vadd.f32 %v5140, %v5970
  %5972 = vdwg.mxu0
  %5973 = vmatpush.bf16.msra.mxu0 %v5654
  %5974 = vmatpush.bf16.msra.mxu0 %v5652
  %5975 = vmatpush.bf16.msra.mxu0 %v5650
  %5976 = vmatpush.bf16.msra.mxu0 %v5648
  %5977 = vmatpush.bf16.msra.mxu0 %v5646
  %5978 = vmatpush.bf16.msra.mxu0 %v5644
  %5979 = vmatpush.bf16.msra.mxu0 %v5642
  %5980 = vmatpush.bf16.msra.mxu0 %v5640
  %5981 = vmatmul.bf16.gmra.mxu0 %v4779
  %v5982 = vpop.f32.mrf.mxu0
  %v5983 = vadd.f32 %v5954, %v5982
  %v5984 = vpop.f32.mrf.mxu0
  %v5985 = vadd.f32 %v5956, %v5984
  %5986 = vmatmul.bf16.gmra.mxu0 %v4817
  %v5987 = vpop.f32.mrf.mxu0
  %v5988 = vadd.f32 %v5959, %v5987
  %v5989 = vpop.f32.mrf.mxu0
  %v5990 = vadd.f32 %v5961, %v5989
  %5991 = vmatmul.bf16.gmra.mxu0 %v4863
  %v5992 = vpop.f32.mrf.mxu0
  %v5993 = vadd.f32 %v5964, %v5992
  %v5994 = vpop.f32.mrf.mxu0
  %v5995 = vadd.f32 %v5966, %v5994
  %5996 = vmatmul.bf16.gmra.mxu0 %v4905
  %v5997 = vpop.f32.mrf.mxu0
  %v5998 = vadd.f32 %v5969, %v5997
  %v5999 = vpop.f32.mrf.mxu0
  %v6000 = vadd.f32 %v5971, %v5999
  %6001 = vdwg.mxu0
  %6002 = vmatpush.bf16.msra.mxu0 %v5670
  %6003 = vmatpush.bf16.msra.mxu0 %v5668
  %6004 = vmatpush.bf16.msra.mxu0 %v5666
  %6005 = vmatpush.bf16.msra.mxu0 %v5664
  %6006 = vmatpush.bf16.msra.mxu0 %v5662
  %6007 = vmatpush.bf16.msra.mxu0 %v5660
  %6008 = vmatpush.bf16.msra.mxu0 %v5658
  %6009 = vmatpush.bf16.msra.mxu0 %v5656
  %6010 = vmatmul.bf16.gmra.mxu0 %v4846
  %v6011 = vpop.f32.mrf.mxu0
  %v6012 = vadd.f32 %v5983, %v6011
  %v6013 = vpop.f32.mrf.mxu0
  %v6014 = vadd.f32 %v5985, %v6013
  %6015 = vmatmul.bf16.gmra.mxu0 %v4850
  %v6016 = vpop.f32.mrf.mxu0
  %v6017 = vadd.f32 %v5988, %v6016
  %v6018 = vpop.f32.mrf.mxu0
  %v6019 = vadd.f32 %v5990, %v6018
  %6020 = vmatmul.bf16.gmra.mxu0 %v4892
  %v6021 = vpop.f32.mrf.mxu0
  %v6022 = vadd.f32 %v5993, %v6021
  %v6023 = vpop.f32.mrf.mxu0
  %v6024 = vadd.f32 %v5995, %v6023
  %6025 = vmatmul.bf16.gmra.mxu0 %v4934
  %v6026 = vpop.f32.mrf.mxu0
  %v6027 = vadd.f32 %v5998, %v6026
  %v6028 = vpop.f32.mrf.mxu0
  %v6029 = vadd.f32 %v6000, %v6028
  %6030 = vdwg.mxu0
  %6031 = vmatpush.bf16.msra.mxu0 %v5686
  %6032 = vmatpush.bf16.msra.mxu0 %v5684
  %6033 = vmatpush.bf16.msra.mxu0 %v5682
  %6034 = vmatpush.bf16.msra.mxu0 %v5680
  %6035 = vmatpush.bf16.msra.mxu0 %v5678
  %6036 = vmatpush.bf16.msra.mxu0 %v5676
  %6037 = vmatpush.bf16.msra.mxu0 %v5674
  %6038 = vmatpush.bf16.msra.mxu0 %v5672
  %6039 = vmatmul.bf16.gmra.mxu0 %v4802
  %v6040 = vpop.f32.mrf.mxu0
  %v6041 = vadd.f32 %v6012, %v6040
  %v6042 = vpop.f32.mrf.mxu0
  %v6043 = vadd.f32 %v6014, %v6042
  %6044 = vmatmul.bf16.gmra.mxu0 %v4840
  %v6045 = vpop.f32.mrf.mxu0
  %v6046 = vadd.f32 %v6017, %v6045
  %v6047 = vpop.f32.mrf.mxu0
  %v6048 = vadd.f32 %v6019, %v6047
  %6049 = vmatmul.bf16.gmra.mxu0 %v4886
  %v6050 = vpop.f32.mrf.mxu0
  %v6051 = vadd.f32 %v6022, %v6050
  %v6052 = vpop.f32.mrf.mxu0
  %v6053 = vadd.f32 %v6024, %v6052
  %6054 = vmatmul.bf16.gmra.mxu0 %v4928
  %v6055 = vpop.f32.mrf.mxu0
  %v6056 = vadd.f32 %v6027, %v6055
  %v6057 = vpop.f32.mrf.mxu0
  %v6058 = vadd.f32 %v6029, %v6057
  %6059 = vdwg.mxu0
  %6060 = vmatpush.bf16.msra.mxu0 %v5702
  %6061 = vmatpush.bf16.msra.mxu0 %v5700
  %6062 = vmatpush.bf16.msra.mxu0 %v5698
  %6063 = vmatpush.bf16.msra.mxu0 %v5696
  %6064 = vmatpush.bf16.msra.mxu0 %v5694
  %6065 = vmatpush.bf16.msra.mxu0 %v5692
  %6066 = vmatpush.bf16.msra.mxu0 %v5690
  %6067 = vmatpush.bf16.msra.mxu0 %v5688
  %6068 = vmatmul.bf16.gmra.mxu0 %v4803
  %v6069 = vpop.f32.mrf.mxu0
  %v6070 = vadd.f32 %v6041, %v6069
  %v6071 = vpop.f32.mrf.mxu0
  %v6072 = vadd.f32 %v6043, %v6071
  %6073 = vmatmul.bf16.gmra.mxu0 %v4841
  %v6074 = vpop.f32.mrf.mxu0
  %v6075 = vadd.f32 %v6046, %v6074
  %v6076 = vpop.f32.mrf.mxu0
  %v6077 = vadd.f32 %v6048, %v6076
  %6078 = vmatmul.bf16.gmra.mxu0 %v4887
  %v6079 = vpop.f32.mrf.mxu0
  %v6080 = vadd.f32 %v6051, %v6079
  %v6081 = vpop.f32.mrf.mxu0
  %v6082 = vadd.f32 %v6053, %v6081
  %6083 = vmatmul.bf16.gmra.mxu0 %v4929
  %v6084 = vpop.f32.mrf.mxu0
  %v6085 = vadd.f32 %v6056, %v6084
  %v6086 = vpop.f32.mrf.mxu0
  %v6087 = vadd.f32 %v6058, %v6086
  %6088 = vdwg.mxu0
  %6089 = vmatpush.bf16.msra.mxu0 %v5718
  %6090 = vmatpush.bf16.msra.mxu0 %v5716
  %6091 = vmatpush.bf16.msra.mxu0 %v5714
  %6092 = vmatpush.bf16.msra.mxu0 %v5712
  %6093 = vmatpush.bf16.msra.mxu0 %v5710
  %6094 = vmatpush.bf16.msra.mxu0 %v5708
  %6095 = vmatpush.bf16.msra.mxu0 %v5706
  %6096 = vmatpush.bf16.msra.mxu0 %v5704
  %6097 = vmatmul.bf16.gmra.mxu0 %v4816
  %v6098 = vpop.f32.mrf.mxu0
  %v6099 = vadd.f32 %v6070, %v6098
  %v6100 = vpop.f32.mrf.mxu0
  %v6101 = vadd.f32 %v6072, %v6100
  %6102 = vmatmul.bf16.gmra.mxu0 %v4862
  %v6103 = vpop.f32.mrf.mxu0
  %v6104 = vadd.f32 %v6075, %v6103
  %v6105 = vpop.f32.mrf.mxu0
  %v6106 = vadd.f32 %v6077, %v6105
  %6107 = vmatmul.bf16.gmra.mxu0 %v4904
  %v6108 = vpop.f32.mrf.mxu0
  %v6109 = vadd.f32 %v6080, %v6108
  %v6110 = vpop.f32.mrf.mxu0
  %v6111 = vadd.f32 %v6082, %v6110
  %6112 = vmatmul.bf16.gmra.mxu0 %v4946
  %v6113 = vpop.f32.mrf.mxu0
  %v6114 = vadd.f32 %v6085, %v6113
  %v6115 = vpop.f32.mrf.mxu0
  %v6116 = vadd.f32 %v6087, %v6115
  %6117 = vdwg.mxu0
  %6118 = vmatpush.bf16.msra.mxu0 %v5734
  %6119 = vmatpush.bf16.msra.mxu0 %v5732
  %6120 = vmatpush.bf16.msra.mxu0 %v5730
  %6121 = vmatpush.bf16.msra.mxu0 %v5728
  %6122 = vmatpush.bf16.msra.mxu0 %v5726
  %6123 = vmatpush.bf16.msra.mxu0 %v5724
  %6124 = vmatpush.bf16.msra.mxu0 %v5722
  %6125 = vmatpush.bf16.msra.mxu0 %v5720
  %6126 = vmatmul.bf16.gmra.mxu0 %v4817
  %v6127 = vpop.f32.mrf.mxu0
  %v6128 = vadd.f32 %v6099, %v6127
  %v6129 = vpop.f32.mrf.mxu0
  %v6130 = vadd.f32 %v6101, %v6129
  %6131 = vmatmul.bf16.gmra.mxu0 %v4863
  %v6132 = vpop.f32.mrf.mxu0
  %v6133 = vadd.f32 %v6104, %v6132
  %v6134 = vpop.f32.mrf.mxu0
  %v6135 = vadd.f32 %v6106, %v6134
  %6136 = vmatmul.bf16.gmra.mxu0 %v4905
  %v6137 = vpop.f32.mrf.mxu0
  %v6138 = vadd.f32 %v6109, %v6137
  %v6139 = vpop.f32.mrf.mxu0
  %v6140 = vadd.f32 %v6111, %v6139
  %6141 = vmatmul.bf16.gmra.mxu0 %v4947
  %v6142 = vpop.f32.mrf.mxu0
  %v6143 = vadd.f32 %v6114, %v6142
  %v6144 = vpop.f32.mrf.mxu0
  %v6145 = vadd.f32 %v6116, %v6144
  %6146 = vdwg.mxu0
  %6147 = vmatpush.bf16.msra.mxu0 %v5750
  %6148 = vmatpush.bf16.msra.mxu0 %v5748
  %6149 = vmatpush.bf16.msra.mxu0 %v5746
  %6150 = vmatpush.bf16.msra.mxu0 %v5744
  %6151 = vmatpush.bf16.msra.mxu0 %v5742
  %6152 = vmatpush.bf16.msra.mxu0 %v5740
  %6153 = vmatpush.bf16.msra.mxu0 %v5738
  %6154 = vmatpush.bf16.msra.mxu0 %v5736
  %6155 = vmatmul.bf16.gmra.mxu0 %v4850
  %v6156 = vpop.f32.mrf.mxu0
  %v6157 = vadd.f32 %v6128, %v6156
  %v6158 = vpop.f32.mrf.mxu0
  %v6159 = vadd.f32 %v6130, %v6158
  %6160 = vmatmul.bf16.gmra.mxu0 %v4892
  %v6161 = vpop.f32.mrf.mxu0
  %v6162 = vadd.f32 %v6133, %v6161
  %v6163 = vpop.f32.mrf.mxu0
  %v6164 = vadd.f32 %v6135, %v6163
  %6165 = vmatmul.bf16.gmra.mxu0 %v4934
  %v6166 = vpop.f32.mrf.mxu0
  %v6167 = vadd.f32 %v6138, %v6166
  %v6168 = vpop.f32.mrf.mxu0
  %v6169 = vadd.f32 %v6140, %v6168
  %6170 = vmatmul.bf16.gmra.mxu0 %v4976
  %v6171 = vpop.f32.mrf.mxu0
  %v6172 = vadd.f32 %v6143, %v6171
  %v6173 = vpop.f32.mrf.mxu0
  %v6174 = vadd.f32 %v6145, %v6173
  %6175 = vdwg.mxu0
  %6176 = vmatpush.bf16.msra.mxu0 %v5766
  %6177 = vmatpush.bf16.msra.mxu0 %v5764
  %6178 = vmatpush.bf16.msra.mxu0 %v5762
  %6179 = vmatpush.bf16.msra.mxu0 %v5760
  %6180 = vmatpush.bf16.msra.mxu0 %v5758
  %6181 = vmatpush.bf16.msra.mxu0 %v5756
  %6182 = vmatpush.bf16.msra.mxu0 %v5754
  %6183 = vmatpush.bf16.msra.mxu0 %v5752
  %6184 = vmatmul.bf16.gmra.mxu0 %v4840
  %v6185 = vpop.f32.mrf.mxu0
  %v6186 = vadd.f32 %v6157, %v6185
  %v6187 = vpop.f32.mrf.mxu0
  %v6188 = vadd.f32 %v6159, %v6187
  %6189 = vmatmul.bf16.gmra.mxu0 %v4886
  %v6190 = vpop.f32.mrf.mxu0
  %v6191 = vadd.f32 %v6162, %v6190
  %v6192 = vpop.f32.mrf.mxu0
  %v6193 = vadd.f32 %v6164, %v6192
  %6194 = vmatmul.bf16.gmra.mxu0 %v4928
  %v6195 = vpop.f32.mrf.mxu0
  %v6196 = vadd.f32 %v6167, %v6195
  %v6197 = vpop.f32.mrf.mxu0
  %v6198 = vadd.f32 %v6169, %v6197
  %6199 = vmatmul.bf16.gmra.mxu0 %v4970
  %v6200 = vpop.f32.mrf.mxu0
  %v6201 = vadd.f32 %v6172, %v6200
  %v6202 = vpop.f32.mrf.mxu0
  %v6203 = vadd.f32 %v6174, %v6202
  %6204 = vdwg.mxu0
  %6205 = vmatpush.bf16.msra.mxu0 %v5782
  %6206 = vmatpush.bf16.msra.mxu0 %v5780
  %6207 = vmatpush.bf16.msra.mxu0 %v5778
  %6208 = vmatpush.bf16.msra.mxu0 %v5776
  %6209 = vmatpush.bf16.msra.mxu0 %v5774
  %6210 = vmatpush.bf16.msra.mxu0 %v5772
  %6211 = vmatpush.bf16.msra.mxu0 %v5770
  %6212 = vmatpush.bf16.msra.mxu0 %v5768
  %6213 = vmatmul.bf16.gmra.mxu0 %v4841
  %v6214 = vpop.f32.mrf.mxu0
  %v6215 = vadd.f32 %v6186, %v6214
  %v6216 = vpop.f32.mrf.mxu0
  %v6217 = vadd.f32 %v6188, %v6216
  %6218 = vmatmul.bf16.gmra.mxu0 %v4887
  %v6219 = vpop.f32.mrf.mxu0
  %v6220 = vadd.f32 %v6191, %v6219
  %v6221 = vpop.f32.mrf.mxu0
  %v6222 = vadd.f32 %v6193, %v6221
  %6223 = vmatmul.bf16.gmra.mxu0 %v4929
  %v6224 = vpop.f32.mrf.mxu0
  %v6225 = vadd.f32 %v6196, %v6224
  %v6226 = vpop.f32.mrf.mxu0
  %v6227 = vadd.f32 %v6198, %v6226
  %6228 = vmatmul.bf16.gmra.mxu0 %v4971
  %v6229 = vpop.f32.mrf.mxu0
  %v6230 = vadd.f32 %v6201, %v6229
  %v6231 = vpop.f32.mrf.mxu0
  %v6232 = vadd.f32 %v6203, %v6231
  %6233 = vdwg.mxu0
  %6234 = vmatpush.bf16.msra.mxu0 %v5639
  %6235 = vmatpush.bf16.msra.mxu0 %v5637
  %6236 = vmatpush.bf16.msra.mxu0 %v5635
  %6237 = vmatpush.bf16.msra.mxu0 %v5633
  %6238 = vmatpush.bf16.msra.mxu0 %v5631
  %6239 = vmatpush.bf16.msra.mxu0 %v5629
  %6240 = vmatpush.bf16.msra.mxu0 %v5627
  %6241 = vmatpush.bf16.msra.mxu0 %v5625
  %6242 = vmatmul.bf16.gmra.mxu0 %v4778
  %v6243 = vpop.f32.mrf.mxu0
  %v6244 = vadd.f32 %v5141, %v6243
  %v6245 = vpop.f32.mrf.mxu0
  %v6246 = vadd.f32 %v5141, %v6245
  %6247 = vmatmul.bf16.gmra.mxu0 %v4816
  %v6248 = vpop.f32.mrf.mxu0
  %v6249 = vadd.f32 %v5141, %v6248
  %v6250 = vpop.f32.mrf.mxu0
  %v6251 = vadd.f32 %v5141, %v6250
  %6252 = vmatmul.bf16.gmra.mxu0 %v4862
  %v6253 = vpop.f32.mrf.mxu0
  %v6254 = vadd.f32 %v5141, %v6253
  %v6255 = vpop.f32.mrf.mxu0
  %v6256 = vadd.f32 %v5141, %v6255
  %6257 = vmatmul.bf16.gmra.mxu0 %v4904
  %v6258 = vpop.f32.mrf.mxu0
  %v6259 = vadd.f32 %v5141, %v6258
  %v6260 = vpop.f32.mrf.mxu0
  %v6261 = vadd.f32 %v5141, %v6260
  %6262 = vdwg.mxu0
  %6263 = vmatpush.bf16.msra.mxu0 %v5655
  %6264 = vmatpush.bf16.msra.mxu0 %v5653
  %6265 = vmatpush.bf16.msra.mxu0 %v5651
  %6266 = vmatpush.bf16.msra.mxu0 %v5649
  %6267 = vmatpush.bf16.msra.mxu0 %v5647
  %6268 = vmatpush.bf16.msra.mxu0 %v5645
  %6269 = vmatpush.bf16.msra.mxu0 %v5643
  %6270 = vmatpush.bf16.msra.mxu0 %v5641
  %6271 = vmatmul.bf16.gmra.mxu0 %v4779
  %v6272 = vpop.f32.mrf.mxu0
  %v6273 = vadd.f32 %v6244, %v6272
  %v6274 = vpop.f32.mrf.mxu0
  %v6275 = vadd.f32 %v6246, %v6274
  %6276 = vmatmul.bf16.gmra.mxu0 %v4817
  %v6277 = vpop.f32.mrf.mxu0
  %v6278 = vadd.f32 %v6249, %v6277
  %v6279 = vpop.f32.mrf.mxu0
  %v6280 = vadd.f32 %v6251, %v6279
  %6281 = vmatmul.bf16.gmra.mxu0 %v4863
  %v6282 = vpop.f32.mrf.mxu0
  %v6283 = vadd.f32 %v6254, %v6282
  %v6284 = vpop.f32.mrf.mxu0
  %v6285 = vadd.f32 %v6256, %v6284
  %6286 = vmatmul.bf16.gmra.mxu0 %v4905
  %v6287 = vpop.f32.mrf.mxu0
  %v6288 = vadd.f32 %v6259, %v6287
  %v6289 = vpop.f32.mrf.mxu0
  %v6290 = vadd.f32 %v6261, %v6289
  %6291 = vdwg.mxu0
  %6292 = vmatpush.bf16.msra.mxu0 %v5671
  %6293 = vmatpush.bf16.msra.mxu0 %v5669
  %6294 = vmatpush.bf16.msra.mxu0 %v5667
  %6295 = vmatpush.bf16.msra.mxu0 %v5665
  %6296 = vmatpush.bf16.msra.mxu0 %v5663
  %6297 = vmatpush.bf16.msra.mxu0 %v5661
  %6298 = vmatpush.bf16.msra.mxu0 %v5659
  %6299 = vmatpush.bf16.msra.mxu0 %v5657
  %6300 = vmatmul.bf16.gmra.mxu0 %v4846
  %v6301 = vpop.f32.mrf.mxu0
  %v6302 = vadd.f32 %v6273, %v6301
  %v6303 = vpop.f32.mrf.mxu0
  %v6304 = vadd.f32 %v6275, %v6303
  %6305 = vmatmul.bf16.gmra.mxu0 %v4850
  %v6306 = vpop.f32.mrf.mxu0
  %v6307 = vadd.f32 %v6278, %v6306
  %v6308 = vpop.f32.mrf.mxu0
  %v6309 = vadd.f32 %v6280, %v6308
  %6310 = vmatmul.bf16.gmra.mxu0 %v4892
  %v6311 = vpop.f32.mrf.mxu0
  %v6312 = vadd.f32 %v6283, %v6311
  %v6313 = vpop.f32.mrf.mxu0
  %v6314 = vadd.f32 %v6285, %v6313
  %6315 = vmatmul.bf16.gmra.mxu0 %v4934
  %v6316 = vpop.f32.mrf.mxu0
  %v6317 = vadd.f32 %v6288, %v6316
  %v6318 = vpop.f32.mrf.mxu0
  %v6319 = vadd.f32 %v6290, %v6318
  %6320 = vdwg.mxu0
  %6321 = vmatpush.bf16.msra.mxu0 %v5687
  %6322 = vmatpush.bf16.msra.mxu0 %v5685
  %6323 = vmatpush.bf16.msra.mxu0 %v5683
  %6324 = vmatpush.bf16.msra.mxu0 %v5681
  %6325 = vmatpush.bf16.msra.mxu0 %v5679
  %6326 = vmatpush.bf16.msra.mxu0 %v5677
  %6327 = vmatpush.bf16.msra.mxu0 %v5675
  %6328 = vmatpush.bf16.msra.mxu0 %v5673
  %6329 = vmatmul.bf16.gmra.mxu0 %v4802
  %v6330 = vpop.f32.mrf.mxu0
  %v6331 = vadd.f32 %v6302, %v6330
  %v6332 = vpop.f32.mrf.mxu0
  %v6333 = vadd.f32 %v6304, %v6332
  %6334 = vmatmul.bf16.gmra.mxu0 %v4840
  %v6335 = vpop.f32.mrf.mxu0
  %v6336 = vadd.f32 %v6307, %v6335
  %v6337 = vpop.f32.mrf.mxu0
  %v6338 = vadd.f32 %v6309, %v6337
  %6339 = vmatmul.bf16.gmra.mxu0 %v4886
  %v6340 = vpop.f32.mrf.mxu0
  %v6341 = vadd.f32 %v6312, %v6340
  %v6342 = vpop.f32.mrf.mxu0
  %v6343 = vadd.f32 %v6314, %v6342
  %6344 = vmatmul.bf16.gmra.mxu0 %v4928
  %v6345 = vpop.f32.mrf.mxu0
  %v6346 = vadd.f32 %v6317, %v6345
  %v6347 = vpop.f32.mrf.mxu0
  %v6348 = vadd.f32 %v6319, %v6347
  %6349 = vdwg.mxu0
  %6350 = vmatpush.bf16.msra.mxu0 %v5703
  %6351 = vmatpush.bf16.msra.mxu0 %v5701
  %6352 = vmatpush.bf16.msra.mxu0 %v5699
  %6353 = vmatpush.bf16.msra.mxu0 %v5697
  %6354 = vmatpush.bf16.msra.mxu0 %v5695
  %6355 = vmatpush.bf16.msra.mxu0 %v5693
  %6356 = vmatpush.bf16.msra.mxu0 %v5691
  %6357 = vmatpush.bf16.msra.mxu0 %v5689
  %6358 = vmatmul.bf16.gmra.mxu0 %v4803
  %v6359 = vpop.f32.mrf.mxu0
  %v6360 = vadd.f32 %v6331, %v6359
  %v6361 = vpop.f32.mrf.mxu0
  %v6362 = vadd.f32 %v6333, %v6361
  %6363 = vmatmul.bf16.gmra.mxu0 %v4841
  %v6364 = vpop.f32.mrf.mxu0
  %v6365 = vadd.f32 %v6336, %v6364
  %v6366 = vpop.f32.mrf.mxu0
  %v6367 = vadd.f32 %v6338, %v6366
  %6368 = vmatmul.bf16.gmra.mxu0 %v4887
  %v6369 = vpop.f32.mrf.mxu0
  %v6370 = vadd.f32 %v6341, %v6369
  %v6371 = vpop.f32.mrf.mxu0
  %v6372 = vadd.f32 %v6343, %v6371
  %6373 = vmatmul.bf16.gmra.mxu0 %v4929
  %v6374 = vpop.f32.mrf.mxu0
  %v6375 = vadd.f32 %v6346, %v6374
  %v6376 = vpop.f32.mrf.mxu0
  %v6377 = vadd.f32 %v6348, %v6376
  %6378 = vdwg.mxu0
  %6379 = vmatpush.bf16.msra.mxu0 %v5719
  %6380 = vmatpush.bf16.msra.mxu0 %v5717
  %6381 = vmatpush.bf16.msra.mxu0 %v5715
  %6382 = vmatpush.bf16.msra.mxu0 %v5713
  %6383 = vmatpush.bf16.msra.mxu0 %v5711
  %6384 = vmatpush.bf16.msra.mxu0 %v5709
  %6385 = vmatpush.bf16.msra.mxu0 %v5707
  %6386 = vmatpush.bf16.msra.mxu0 %v5705
  %6387 = vmatmul.bf16.gmra.mxu0 %v4816
  %v6388 = vpop.f32.mrf.mxu0
  %v6389 = vadd.f32 %v6360, %v6388
  %v6390 = vpop.f32.mrf.mxu0
  %v6391 = vadd.f32 %v6362, %v6390
  %6392 = vmatmul.bf16.gmra.mxu0 %v4862
  %v6393 = vpop.f32.mrf.mxu0
  %v6394 = vadd.f32 %v6365, %v6393
  %v6395 = vpop.f32.mrf.mxu0
  %v6396 = vadd.f32 %v6367, %v6395
  %6397 = vmatmul.bf16.gmra.mxu0 %v4904
  %v6398 = vpop.f32.mrf.mxu0
  %v6399 = vadd.f32 %v6370, %v6398
  %v6400 = vpop.f32.mrf.mxu0
  %v6401 = vadd.f32 %v6372, %v6400
  %6402 = vmatmul.bf16.gmra.mxu0 %v4946
  %v6403 = vpop.f32.mrf.mxu0
  %v6404 = vadd.f32 %v6375, %v6403
  %v6405 = vpop.f32.mrf.mxu0
  %v6406 = vadd.f32 %v6377, %v6405
  %6407 = vdwg.mxu0
  %6408 = vmatpush.bf16.msra.mxu0 %v5735
  %6409 = vmatpush.bf16.msra.mxu0 %v5733
  %6410 = vmatpush.bf16.msra.mxu0 %v5731
  %6411 = vmatpush.bf16.msra.mxu0 %v5729
  %6412 = vmatpush.bf16.msra.mxu0 %v5727
  %6413 = vmatpush.bf16.msra.mxu0 %v5725
  %6414 = vmatpush.bf16.msra.mxu0 %v5723
  %6415 = vmatpush.bf16.msra.mxu0 %v5721
  %6416 = vmatmul.bf16.gmra.mxu0 %v4817
  %v6417 = vpop.f32.mrf.mxu0
  %v6418 = vadd.f32 %v6389, %v6417
  %v6419 = vpop.f32.mrf.mxu0
  %v6420 = vadd.f32 %v6391, %v6419
  %6421 = vmatmul.bf16.gmra.mxu0 %v4863
  %v6422 = vpop.f32.mrf.mxu0
  %v6423 = vadd.f32 %v6394, %v6422
  %v6424 = vpop.f32.mrf.mxu0
  %v6425 = vadd.f32 %v6396, %v6424
  %6426 = vmatmul.bf16.gmra.mxu0 %v4905
  %v6427 = vpop.f32.mrf.mxu0
  %v6428 = vadd.f32 %v6399, %v6427
  %v6429 = vpop.f32.mrf.mxu0
  %v6430 = vadd.f32 %v6401, %v6429
  %6431 = vmatmul.bf16.gmra.mxu0 %v4947
  %v6432 = vpop.f32.mrf.mxu0
  %v6433 = vadd.f32 %v6404, %v6432
  %v6434 = vpop.f32.mrf.mxu0
  %v6435 = vadd.f32 %v6406, %v6434
  %6436 = vdwg.mxu0
  %6437 = vmatpush.bf16.msra.mxu0 %v5751
  %6438 = vmatpush.bf16.msra.mxu0 %v5749
  %6439 = vmatpush.bf16.msra.mxu0 %v5747
  %6440 = vmatpush.bf16.msra.mxu0 %v5745
  %6441 = vmatpush.bf16.msra.mxu0 %v5743
  %6442 = vmatpush.bf16.msra.mxu0 %v5741
  %6443 = vmatpush.bf16.msra.mxu0 %v5739
  %6444 = vmatpush.bf16.msra.mxu0 %v5737
  %6445 = vmatmul.bf16.gmra.mxu0 %v4850
  %v6446 = vpop.f32.mrf.mxu0
  %v6447 = vadd.f32 %v6418, %v6446
  %v6448 = vpop.f32.mrf.mxu0
  %v6449 = vadd.f32 %v6420, %v6448
  %6450 = vmatmul.bf16.gmra.mxu0 %v4892
  %v6451 = vpop.f32.mrf.mxu0
  %v6452 = vadd.f32 %v6423, %v6451
  %v6453 = vpop.f32.mrf.mxu0
  %v6454 = vadd.f32 %v6425, %v6453
  %6455 = vmatmul.bf16.gmra.mxu0 %v4934
  %v6456 = vpop.f32.mrf.mxu0
  %v6457 = vadd.f32 %v6428, %v6456
  %v6458 = vpop.f32.mrf.mxu0
  %v6459 = vadd.f32 %v6430, %v6458
  %6460 = vmatmul.bf16.gmra.mxu0 %v4976
  %v6461 = vpop.f32.mrf.mxu0
  %v6462 = vadd.f32 %v6433, %v6461
  %v6463 = vpop.f32.mrf.mxu0
  %v6464 = vadd.f32 %v6435, %v6463
  %6465 = vdwg.mxu0
  %6466 = vmatpush.bf16.msra.mxu0 %v5767
  %6467 = vmatpush.bf16.msra.mxu0 %v5765
  %6468 = vmatpush.bf16.msra.mxu0 %v5763
  %6469 = vmatpush.bf16.msra.mxu0 %v5761
  %6470 = vmatpush.bf16.msra.mxu0 %v5759
  %6471 = vmatpush.bf16.msra.mxu0 %v5757
  %6472 = vmatpush.bf16.msra.mxu0 %v5755
  %6473 = vmatpush.bf16.msra.mxu0 %v5753
  %6474 = vmatmul.bf16.gmra.mxu0 %v4840
  %v6475 = vpop.f32.mrf.mxu0
  %v6476 = vadd.f32 %v6447, %v6475
  %v6477 = vpop.f32.mrf.mxu0
  %v6478 = vadd.f32 %v6449, %v6477
  %6479 = vmatmul.bf16.gmra.mxu0 %v4886
  %v6480 = vpop.f32.mrf.mxu0
  %v6481 = vadd.f32 %v6452, %v6480
  %v6482 = vpop.f32.mrf.mxu0
  %v6483 = vadd.f32 %v6454, %v6482
  %6484 = vmatmul.bf16.gmra.mxu0 %v4928
  %v6485 = vpop.f32.mrf.mxu0
  %v6486 = vadd.f32 %v6457, %v6485
  %v6487 = vpop.f32.mrf.mxu0
  %v6488 = vadd.f32 %v6459, %v6487
  %6489 = vmatmul.bf16.gmra.mxu0 %v4970
  %v6490 = vpop.f32.mrf.mxu0
  %v6491 = vadd.f32 %v6462, %v6490
  %v6492 = vpop.f32.mrf.mxu0
  %v6493 = vadd.f32 %v6464, %v6492
  %6494 = vdwg.mxu0
  %6495 = vmatpush.bf16.msra.mxu0 %v5783
  %6496 = vmatpush.bf16.msra.mxu0 %v5781
  %6497 = vmatpush.bf16.msra.mxu0 %v5779
  %6498 = vmatpush.bf16.msra.mxu0 %v5777
  %6499 = vmatpush.bf16.msra.mxu0 %v5775
  %6500 = vmatpush.bf16.msra.mxu0 %v5773
  %6501 = vmatpush.bf16.msra.mxu0 %v5771
  %6502 = vmatpush.bf16.msra.mxu0 %v5769
  %6503 = vmatmul.bf16.gmra.mxu0 %v4841
  %v6504 = vpop.f32.mrf.mxu0
  %v6505 = vadd.f32 %v6476, %v6504
  %v6506 = vpop.f32.mrf.mxu0
  %v6507 = vadd.f32 %v6478, %v6506
  %6508 = vmatmul.bf16.gmra.mxu0 %v4887
  %v6509 = vpop.f32.mrf.mxu0
  %v6510 = vadd.f32 %v6481, %v6509
  %v6511 = vpop.f32.mrf.mxu0
  %v6512 = vadd.f32 %v6483, %v6511
  %6513 = vmatmul.bf16.gmra.mxu0 %v4929
  %v6514 = vpop.f32.mrf.mxu0
  %v6515 = vadd.f32 %v6486, %v6514
  %v6516 = vpop.f32.mrf.mxu0
  %v6517 = vadd.f32 %v6488, %v6516
  %6518 = vmatmul.bf16.gmra.mxu0 %v4971
  %v6519 = vpop.f32.mrf.mxu0
  %v6520 = vadd.f32 %v6491, %v6519
  %v6521 = vpop.f32.mrf.mxu0
  %v6522 = vadd.f32 %v6493, %v6521
  %6523 = vdwg.mxu0
  %v6524 = vmax.f32 %v6215, 0.0
  %v6525 = vmax.f32 %v6505, 0.0
  %v6526 = vmax.f32 %v6217, 0.0
  %v6527 = vmax.f32 %v6507, 0.0
  %v6528 = vmax.f32 %v6220, 0.0
  %v6529 = vmax.f32 %v6510, 0.0
  %v6530 = vmax.f32 %v6222, 0.0
  %v6531 = vmax.f32 %v6512, 0.0
  %v6532 = vmax.f32 %v6225, 0.0
  %v6533 = vmax.f32 %v6515, 0.0
  %v6534 = vmax.f32 %v6227, 0.0
  %v6535 = vmax.f32 %v6517, 0.0
  %v6536 = vmax.f32 %v6230, 0.0
  %v6537 = vmax.f32 %v6520, 0.0
  %v6538 = vmax.f32 %v6232, 0.0
  %v6539 = vmax.f32 %v6522, 0.0
  %v6540 = vpack.c.bf16 %v6525, %v6524
  %v6541 = vpack.c.bf16 %v6527, %v6526
  %v6542 = vpack.c.bf16 %v6529, %v6528
  %v6543 = vpack.c.bf16 %v6531, %v6530
  %v6544 = vpack.c.bf16 %v6533, %v6532
  %v6545 = vpack.c.bf16 %v6535, %v6534
  %v6546 = vpack.c.bf16 %v6537, %v6536
  %v6547 = vpack.c.bf16 %v6539, %v6538
  %v6550 = vunpack.c.l.b16 %v6540
  %v6551 = vunpack.c.h.b16 %v6540
  %v6552 = vunpack.c.l.b16 %v6541
  %v6553 = vunpack.c.h.b16 %v6541
  %v6554 = vpack.c.b16 %v6552, %v6550
  %v6555 = vpack.c.b16 %v6553, %v6551
  %v6560 = vunpack.c.l.b16 %v6542
  %v6561 = vunpack.c.h.b16 %v6542
  %v6562 = vunpack.c.l.b16 %v6543
  %v6563 = vunpack.c.h.b16 %v6543
  %v6564 = vpack.c.b16 %v6562, %v6560
  %v6565 = vpack.c.b16 %v6563, %v6561
  %v6570 = vunpack.c.l.b16 %v6544
  %v6571 = vunpack.c.h.b16 %v6544
  %v6572 = vunpack.c.l.b16 %v6545
  %v6573 = vunpack.c.h.b16 %v6545
  %v6574 = vpack.c.b16 %v6572, %v6570
  %v6575 = vpack.c.b16 %v6573, %v6571
  %v6580 = vunpack.c.l.b16 %v6546
  %v6581 = vunpack.c.h.b16 %v6546
  %v6582 = vunpack.c.l.b16 %v6547
  %v6583 = vunpack.c.h.b16 %v6547
  %v6584 = vpack.c.b16 %v6582, %v6580
  %v6585 = vpack.c.b16 %v6583, %v6581
  %v6588 = vld [vmem:[%s5] sm:$0xf]
  %v6589 = vld [vmem:[%s5 + $0x4] sm:$0xf]
  %v6590 = vld [vmem:[%s5 + $0x8] sm:$0xf]
  %v6591 = vld [vmem:[%s5 + $0xc] sm:$0xf]
  %v6592 = vld [vmem:[%s5 + $0x10] sm:$0xf]
  %v6593 = vld [vmem:[%s5 + $0x14] sm:$0xf]
  %v6594 = vld [vmem:[%s5 + $0x18] sm:$0xf]
  %v6595 = vld [vmem:[%s5 + $0x1c] sm:$0xf]
  %v6596 = vld [vmem:[%s5 + $0x20] sm:$0xf]
  %v6597 = vld [vmem:[%s5 + $0x24] sm:$0xf]
  %v6598 = vld [vmem:[%s5 + $0x28] sm:$0xf]
  %v6599 = vld [vmem:[%s5 + $0x2c] sm:$0xf]
  %v6600 = vld [vmem:[%s5 + $0x30] sm:$0xf]
  %v6601 = vld [vmem:[%s5 + $0x34] sm:$0xf]
  %v6602 = vld [vmem:[%s5 + $0x38] sm:$0xf]
  %v6603 = vld [vmem:[%s5 + $0x3c] sm:$0xf]
  %v6604 = vld [vmem:[%s5 + $0x40] sm:$0xf]
  %v6605 = vld [vmem:[%s5 + $0x44] sm:$0xf]
  %v6606 = vld [vmem:[%s5 + $0x48] sm:$0xf]
  %v6607 = vld [vmem:[%s5 + $0x4c] sm:$0xf]
  %v6608 = vld [vmem:[%s5 + $0x50] sm:$0xf]
  %v6609 = vld [vmem:[%s5 + $0x54] sm:$0xf]
  %v6610 = vld [vmem:[%s5 + $0x58] sm:$0xf]
  %v6611 = vld [vmem:[%s5 + $0x5c] sm:$0xf]
  %v6612 = vld [vmem:[%s5 + $0x60] sm:$0xf]
  %v6613 = vld [vmem:[%s5 + $0x64] sm:$0xf]
  %v6614 = vld [vmem:[%s5 + $0x68] sm:$0xf]
  %v6615 = vld [vmem:[%s5 + $0x6c] sm:$0xf]
  %v6616 = vld [vmem:[%s5 + $0x70] sm:$0xf]
  %v6617 = vld [vmem:[%s5 + $0x74] sm:$0xf]
  %v6618 = vld [vmem:[%s5 + $0x78] sm:$0xf]
  %v6619 = vld [vmem:[%s5 + $0x7c] sm:$0xf]
  %v6620 = vld [vmem:[%s5 + $0x80] sm:$0xf]
  %v6621 = vld [vmem:[%s5 + $0x84] sm:$0xf]
  %v6622 = vld [vmem:[%s5 + $0x88] sm:$0xf]
  %v6623 = vld [vmem:[%s5 + $0x8c] sm:$0xf]
  %v6624 = vld [vmem:[%s5 + $0x90] sm:$0xf]
  %v6625 = vld [vmem:[%s5 + $0x94] sm:$0xf]
  %v6626 = vld [vmem:[%s5 + $0x98] sm:$0xf]
  %v6627 = vld [vmem:[%s5 + $0x9c] sm:$0xf]
  %v6628 = vld [vmem:[%s5 + $0xa0] sm:$0xf]
  %v6629 = vld [vmem:[%s5 + $0xa4] sm:$0xf]
  %v6630 = vld [vmem:[%s5 + $0xa8] sm:$0xf]
  %v6631 = vld [vmem:[%s5 + $0xac] sm:$0xf]
  %v6632 = vld [vmem:[%s5 + $0xb0] sm:$0xf]
  %v6633 = vld [vmem:[%s5 + $0xb4] sm:$0xf]
  %v6634 = vld [vmem:[%s5 + $0xb8] sm:$0xf]
  %v6635 = vld [vmem:[%s5 + $0xbc] sm:$0xf]
  %v6636 = vld [vmem:[%s5 + $0xc0] sm:$0xf]
  %v6637 = vld [vmem:[%s5 + $0xc4] sm:$0xf]
  %v6638 = vld [vmem:[%s5 + $0xc8] sm:$0xf]
  %v6639 = vld [vmem:[%s5 + $0xcc] sm:$0xf]
  %v6640 = vld [vmem:[%s5 + $0xd0] sm:$0xf]
  %v6641 = vld [vmem:[%s5 + $0xd4] sm:$0xf]
  %v6642 = vld [vmem:[%s5 + $0xd8] sm:$0xf]
  %v6643 = vld [vmem:[%s5 + $0xdc] sm:$0xf]
  %v6644 = vld [vmem:[%s5 + $0xe0] sm:$0xf]
  %v6645 = vld [vmem:[%s5 + $0xe4] sm:$0xf]
  %v6646 = vld [vmem:[%s5 + $0xe8] sm:$0xf]
  %v6647 = vld [vmem:[%s5 + $0xec] sm:$0xf]
  %v6648 = vld [vmem:[%s5 + $0xf0] sm:$0xf]
  %v6649 = vld [vmem:[%s5 + $0xf4] sm:$0xf]
  %v6650 = vld [vmem:[%s5 + $0xf8] sm:$0xf]
  %v6651 = vld [vmem:[%s5 + $0xfc] sm:$0xf]
  %v6652 = vld [vmem:[%s5 + $0x100] sm:$0xf]
  %v6653 = vld [vmem:[%s5 + $0x104] sm:$0xf]
  %v6654 = vld [vmem:[%s5 + $0x108] sm:$0xf]
  %v6655 = vld [vmem:[%s5 + $0x10c] sm:$0xf]
  %v6656 = vld [vmem:[%s5 + $0x110] sm:$0xf]
  %v6657 = vld [vmem:[%s5 + $0x114] sm:$0xf]
  %v6658 = vld [vmem:[%s5 + $0x118] sm:$0xf]
  %v6659 = vld [vmem:[%s5 + $0x11c] sm:$0xf]
  %v6660 = vld [vmem:[%s5 + $0x120] sm:$0xf]
  %v6661 = vld [vmem:[%s5 + $0x124] sm:$0xf]
  %v6662 = vld [vmem:[%s5 + $0x128] sm:$0xf]
  %v6663 = vld [vmem:[%s5 + $0x12c] sm:$0xf]
  %v6664 = vld [vmem:[%s5 + $0x130] sm:$0xf]
  %v6665 = vld [vmem:[%s5 + $0x134] sm:$0xf]
  %v6666 = vld [vmem:[%s5 + $0x138] sm:$0xf]
  %v6667 = vld [vmem:[%s5 + $0x13c] sm:$0xf]
  %v6668 = vld [vmem:[%s5 + $0x140] sm:$0xf]
  %v6669 = vld [vmem:[%s5 + $0x144] sm:$0xf]
  %v6670 = vld [vmem:[%s5 + $0x148] sm:$0xf]
  %v6671 = vld [vmem:[%s5 + $0x14c] sm:$0xf]
  %v6672 = vld [vmem:[%s5 + $0x150] sm:$0xf]
  %v6673 = vld [vmem:[%s5 + $0x154] sm:$0xf]
  %v6674 = vld [vmem:[%s5 + $0x158] sm:$0xf]
  %v6675 = vld [vmem:[%s5 + $0x15c] sm:$0xf]
  %v6676 = vld [vmem:[%s5 + $0x160] sm:$0xf]
  %v6677 = vld [vmem:[%s5 + $0x164] sm:$0xf]
  %v6678 = vld [vmem:[%s5 + $0x168] sm:$0xf]
  %v6679 = vld [vmem:[%s5 + $0x16c] sm:$0xf]
  %v6680 = vld [vmem:[%s5 + $0x170] sm:$0xf]
  %v6681 = vld [vmem:[%s5 + $0x174] sm:$0xf]
  %v6682 = vld [vmem:[%s5 + $0x178] sm:$0xf]
  %v6683 = vld [vmem:[%s5 + $0x17c] sm:$0xf]
  %v6684 = vld [vmem:[%s6] sm:$0x1]
  %v6686 = vperm.slane %v6684, 0
  %v6784 = vunpack.c.l.b16 %v6588
  %v6785 = vunpack.c.l.b16 %v6589
  %v6786 = vunpack.c.l.b16 %v6590
  %v6787 = vunpack.c.l.b16 %v6591
  %v6788 = vunpack.c.l.b16 %v6592
  %v6789 = vunpack.c.l.b16 %v6593
  %v6790 = vunpack.c.l.b16 %v6594
  %v6791 = vunpack.c.l.b16 %v6595
  %v6792 = vunpack.c.l.b16 %v6596
  %v6793 = vunpack.c.l.b16 %v6597
  %v6794 = vunpack.c.l.b16 %v6598
  %v6795 = vunpack.c.l.b16 %v6599
  %v6796 = vunpack.c.l.b16 %v6600
  %v6797 = vunpack.c.l.b16 %v6601
  %v6798 = vunpack.c.l.b16 %v6602
  %v6799 = vunpack.c.l.b16 %v6603
  %v6800 = vunpack.c.l.b16 %v6604
  %v6801 = vunpack.c.l.b16 %v6605
  %v6802 = vunpack.c.l.b16 %v6606
  %v6803 = vunpack.c.l.b16 %v6607
  %v6804 = vunpack.c.l.b16 %v6608
  %v6805 = vunpack.c.l.b16 %v6609
  %v6806 = vunpack.c.l.b16 %v6610
  %v6807 = vunpack.c.l.b16 %v6611
  %v6808 = vunpack.c.l.b16 %v6612
  %v6809 = vunpack.c.l.b16 %v6613
  %v6810 = vunpack.c.l.b16 %v6614
  %v6811 = vunpack.c.l.b16 %v6615
  %v6812 = vunpack.c.l.b16 %v6616
  %v6813 = vunpack.c.l.b16 %v6617
  %v6814 = vunpack.c.l.b16 %v6618
  %v6815 = vunpack.c.l.b16 %v6619
  %v6816 = vunpack.c.l.b16 %v6620
  %v6817 = vunpack.c.l.b16 %v6621
  %v6818 = vunpack.c.l.b16 %v6622
  %v6819 = vunpack.c.l.b16 %v6623
  %v6820 = vunpack.c.l.b16 %v6624
  %v6821 = vunpack.c.l.b16 %v6625
  %v6822 = vunpack.c.l.b16 %v6626
  %v6823 = vunpack.c.l.b16 %v6627
  %v6824 = vunpack.c.l.b16 %v6628
  %v6825 = vunpack.c.l.b16 %v6629
  %v6826 = vunpack.c.l.b16 %v6630
  %v6827 = vunpack.c.l.b16 %v6631
  %v6828 = vunpack.c.l.b16 %v6632
  %v6829 = vunpack.c.l.b16 %v6633
  %v6830 = vunpack.c.l.b16 %v6634
  %v6831 = vunpack.c.l.b16 %v6635
  %v6832 = vunpack.c.l.b16 %v6636
  %v6833 = vunpack.c.l.b16 %v6637
  %v6834 = vunpack.c.l.b16 %v6638
  %v6835 = vunpack.c.l.b16 %v6639
  %v6836 = vunpack.c.l.b16 %v6640
  %v6837 = vunpack.c.l.b16 %v6641
  %v6838 = vunpack.c.l.b16 %v6642
  %v6839 = vunpack.c.l.b16 %v6643
  %v6840 = vunpack.c.l.b16 %v6644
  %v6841 = vunpack.c.l.b16 %v6645
  %v6842 = vunpack.c.l.b16 %v6646
  %v6843 = vunpack.c.l.b16 %v6647
  %v6844 = vunpack.c.l.b16 %v6648
  %v6845 = vunpack.c.l.b16 %v6649
  %v6846 = vunpack.c.l.b16 %v6650
  %v6847 = vunpack.c.l.b16 %v6651
  %v6848 = vunpack.c.l.b16 %v6652
  %v6849 = vunpack.c.l.b16 %v6653
  %v6850 = vunpack.c.l.b16 %v6654
  %v6851 = vunpack.c.l.b16 %v6655
  %v6852 = vunpack.c.l.b16 %v6656
  %v6853 = vunpack.c.l.b16 %v6657
  %v6854 = vunpack.c.l.b16 %v6658
  %v6855 = vunpack.c.l.b16 %v6659
  %v6856 = vunpack.c.l.b16 %v6660
  %v6857 = vunpack.c.l.b16 %v6661
  %v6858 = vunpack.c.l.b16 %v6662
  %v6859 = vunpack.c.l.b16 %v6663
  %v6860 = vunpack.c.l.b16 %v6664
  %v6861 = vunpack.c.l.b16 %v6665
  %v6862 = vunpack.c.l.b16 %v6666
  %v6863 = vunpack.c.l.b16 %v6667
  %v6864 = vunpack.c.l.b16 %v6668
  %v6865 = vunpack.c.l.b16 %v6669
  %v6866 = vunpack.c.l.b16 %v6670
  %v6867 = vunpack.c.l.b16 %v6671
  %v6868 = vunpack.c.l.b16 %v6672
  %v6869 = vunpack.c.l.b16 %v6673
  %v6870 = vunpack.c.l.b16 %v6674
  %v6871 = vunpack.c.l.b16 %v6675
  %v6872 = vunpack.c.l.b16 %v6676
  %v6873 = vunpack.c.l.b16 %v6677
  %v6874 = vunpack.c.l.b16 %v6678
  %v6875 = vunpack.c.l.b16 %v6679
  %v6876 = vunpack.c.l.b16 %v6680
  %v6877 = vunpack.c.l.b16 %v6681
  %v6878 = vunpack.c.l.b16 %v6682
  %v6879 = vunpack.c.l.b16 %v6683
  %v6880 = vpack.c.b16 %v6785, %v6784
  %v6881 = vpack.c.b16 %v6787, %v6786
  %v6882 = vpack.c.b16 %v6789, %v6788
  %v6883 = vpack.c.b16 %v6791, %v6790
  %v6884 = vpack.c.b16 %v6793, %v6792
  %v6885 = vpack.c.b16 %v6795, %v6794
  %v6886 = vpack.c.b16 %v6797, %v6796
  %v6887 = vpack.c.b16 %v6799, %v6798
  %v6888 = vpack.c.b16 %v6801, %v6800
  %v6889 = vpack.c.b16 %v6803, %v6802
  %v6890 = vpack.c.b16 %v6805, %v6804
  %v6891 = vpack.c.b16 %v6807, %v6806
  %v6892 = vpack.c.b16 %v6809, %v6808
  %v6893 = vpack.c.b16 %v6811, %v6810
  %v6894 = vpack.c.b16 %v6813, %v6812
  %v6895 = vpack.c.b16 %v6815, %v6814
  %v6896 = vpack.c.b16 %v6817, %v6816
  %v6897 = vpack.c.b16 %v6819, %v6818
  %v6898 = vpack.c.b16 %v6821, %v6820
  %v6899 = vpack.c.b16 %v6823, %v6822
  %v6900 = vpack.c.b16 %v6825, %v6824
  %v6901 = vpack.c.b16 %v6827, %v6826
  %v6902 = vpack.c.b16 %v6829, %v6828
  %v6903 = vpack.c.b16 %v6831, %v6830
  %v6904 = vpack.c.b16 %v6833, %v6832
  %v6905 = vpack.c.b16 %v6835, %v6834
  %v6906 = vpack.c.b16 %v6837, %v6836
  %v6907 = vpack.c.b16 %v6839, %v6838
  %v6908 = vpack.c.b16 %v6841, %v6840
  %v6909 = vpack.c.b16 %v6843, %v6842
  %v6910 = vpack.c.b16 %v6845, %v6844
  %v6911 = vpack.c.b16 %v6847, %v6846
  %v6912 = vpack.c.b16 %v6849, %v6848
  %v6913 = vpack.c.b16 %v6851, %v6850
  %v6914 = vpack.c.b16 %v6853, %v6852
  %v6915 = vpack.c.b16 %v6855, %v6854
  %v6916 = vpack.c.b16 %v6857, %v6856
  %v6917 = vpack.c.b16 %v6859, %v6858
  %v6918 = vpack.c.b16 %v6861, %v6860
  %v6919 = vpack.c.b16 %v6863, %v6862
  %v6920 = vpack.c.b16 %v6865, %v6864
  %v6921 = vpack.c.b16 %v6867, %v6866
  %v6922 = vpack.c.b16 %v6869, %v6868
  %v6923 = vpack.c.b16 %v6871, %v6870
  %v6924 = vpack.c.b16 %v6873, %v6872
  %v6925 = vpack.c.b16 %v6875, %v6874
  %v6926 = vpack.c.b16 %v6877, %v6876
  %v6927 = vpack.c.b16 %v6879, %v6878
  %6976 = vmatpush.bf16.msra.mxu0 %v6887
  %6977 = vmatpush.bf16.msra.mxu0 %v6886
  %6978 = vmatpush.bf16.msra.mxu0 %v6885
  %6979 = vmatpush.bf16.msra.mxu0 %v6884
  %6980 = vmatpush.bf16.msra.mxu0 %v6883
  %6981 = vmatpush.bf16.msra.mxu0 %v6882
  %6982 = vmatpush.bf16.msra.mxu0 %v6881
  %6983 = vmatpush.bf16.msra.mxu0 %v6880
  %6984 = vmatmul.bf16.gmra.mxu0 %v6554
  %v6985 = vpop.f32.mrf.mxu0
  %v6986 = vadd.f32 %v6686, %v6985
  %v6987 = vpop.f32.mrf.mxu0
  %v6988 = vadd.f32 %v6686, %v6987
  %6989 = vmatmul.bf16.gmra.mxu0 %v6564
  %v6990 = vpop.f32.mrf.mxu0
  %v6991 = vadd.f32 %v6686, %v6990
  %v6992 = vpop.f32.mrf.mxu0
  %v6993 = vadd.f32 %v6686, %v6992
  %6994 = vdwg.mxu0
  %6995 = vmatpush.bf16.msra.mxu0 %v6895
  %6996 = vmatpush.bf16.msra.mxu0 %v6894
  %6997 = vmatpush.bf16.msra.mxu0 %v6893
  %6998 = vmatpush.bf16.msra.mxu0 %v6892
  %6999 = vmatpush.bf16.msra.mxu0 %v6891
  %7000 = vmatpush.bf16.msra.mxu0 %v6890
  %7001 = vmatpush.bf16.msra.mxu0 %v6889
  %7002 = vmatpush.bf16.msra.mxu0 %v6888
  %7003 = vmatmul.bf16.gmra.mxu0 %v6555
  %v7004 = vpop.f32.mrf.mxu0
  %v7005 = vadd.f32 %v6986, %v7004
  %v7006 = vpop.f32.mrf.mxu0
  %v7007 = vadd.f32 %v6988, %v7006
  %7008 = vmatmul.bf16.gmra.mxu0 %v6565
  %v7009 = vpop.f32.mrf.mxu0
  %v7010 = vadd.f32 %v6991, %v7009
  %v7011 = vpop.f32.mrf.mxu0
  %v7012 = vadd.f32 %v6993, %v7011
  %7013 = vdwg.mxu0
  %7014 = vmatpush.bf16.msra.mxu0 %v6903
  %7015 = vmatpush.bf16.msra.mxu0 %v6902
  %7016 = vmatpush.bf16.msra.mxu0 %v6901
  %7017 = vmatpush.bf16.msra.mxu0 %v6900
  %7018 = vmatpush.bf16.msra.mxu0 %v6899
  %7019 = vmatpush.bf16.msra.mxu0 %v6898
  %7020 = vmatpush.bf16.msra.mxu0 %v6897
  %7021 = vmatpush.bf16.msra.mxu0 %v6896
  %7022 = vmatmul.bf16.gmra.mxu0 %v6564
  %v7023 = vpop.f32.mrf.mxu0
  %v7024 = vadd.f32 %v7005, %v7023
  %v7025 = vpop.f32.mrf.mxu0
  %v7026 = vadd.f32 %v7007, %v7025
  %7027 = vmatmul.bf16.gmra.mxu0 %v6574
  %v7028 = vpop.f32.mrf.mxu0
  %v7029 = vadd.f32 %v7010, %v7028
  %v7030 = vpop.f32.mrf.mxu0
  %v7031 = vadd.f32 %v7012, %v7030
  %7032 = vdwg.mxu0
  %7033 = vmatpush.bf16.msra.mxu0 %v6911
  %7034 = vmatpush.bf16.msra.mxu0 %v6910
  %7035 = vmatpush.bf16.msra.mxu0 %v6909
  %7036 = vmatpush.bf16.msra.mxu0 %v6908
  %7037 = vmatpush.bf16.msra.mxu0 %v6907
  %7038 = vmatpush.bf16.msra.mxu0 %v6906
  %7039 = vmatpush.bf16.msra.mxu0 %v6905
  %7040 = vmatpush.bf16.msra.mxu0 %v6904
  %7041 = vmatmul.bf16.gmra.mxu0 %v6565
  %v7042 = vpop.f32.mrf.mxu0
  %v7043 = vadd.f32 %v7024, %v7042
  %v7044 = vpop.f32.mrf.mxu0
  %v7045 = vadd.f32 %v7026, %v7044
  %7046 = vmatmul.bf16.gmra.mxu0 %v6575
  %v7047 = vpop.f32.mrf.mxu0
  %v7048 = vadd.f32 %v7029, %v7047
  %v7049 = vpop.f32.mrf.mxu0
  %v7050 = vadd.f32 %v7031, %v7049
  %7051 = vdwg.mxu0
  %7052 = vmatpush.bf16.msra.mxu0 %v6919
  %7053 = vmatpush.bf16.msra.mxu0 %v6918
  %7054 = vmatpush.bf16.msra.mxu0 %v6917
  %7055 = vmatpush.bf16.msra.mxu0 %v6916
  %7056 = vmatpush.bf16.msra.mxu0 %v6915
  %7057 = vmatpush.bf16.msra.mxu0 %v6914
  %7058 = vmatpush.bf16.msra.mxu0 %v6913
  %7059 = vmatpush.bf16.msra.mxu0 %v6912
  %7060 = vmatmul.bf16.gmra.mxu0 %v6574
  %v7061 = vpop.f32.mrf.mxu0
  %v7062 = vadd.f32 %v7043, %v7061
  %v7063 = vpop.f32.mrf.mxu0
  %v7064 = vadd.f32 %v7045, %v7063
  %7065 = vmatmul.bf16.gmra.mxu0 %v6584
  %v7066 = vpop.f32.mrf.mxu0
  %v7067 = vadd.f32 %v7048, %v7066
  %v7068 = vpop.f32.mrf.mxu0
  %v7069 = vadd.f32 %v7050, %v7068
  %7070 = vdwg.mxu0
  %7071 = vmatpush.bf16.msra.mxu0 %v6927
  %7072 = vmatpush.bf16.msra.mxu0 %v6926
  %7073 = vmatpush.bf16.msra.mxu0 %v6925
  %7074 = vmatpush.bf16.msra.mxu0 %v6924
  %7075 = vmatpush.bf16.msra.mxu0 %v6923
  %7076 = vmatpush.bf16.msra.mxu0 %v6922
  %7077 = vmatpush.bf16.msra.mxu0 %v6921
  %7078 = vmatpush.bf16.msra.mxu0 %v6920
  %7079 = vmatmul.bf16.gmra.mxu0 %v6575
  %v7080 = vpop.f32.mrf.mxu0
  %v7081 = vadd.f32 %v7062, %v7080
  %v7082 = vpop.f32.mrf.mxu0
  %v7083 = vadd.f32 %v7064, %v7082
  %7084 = vmatmul.bf16.gmra.mxu0 %v6585
  %v7085 = vpop.f32.mrf.mxu0
  %v7086 = vadd.f32 %v7067, %v7085
  %v7087 = vpop.f32.mrf.mxu0
  %v7088 = vadd.f32 %v7069, %v7087
  %7089 = vdwg.mxu0
  %v7090 = vmax.f32 %v7081, 0.0
  %v7091 = vmax.f32 %v7083, 0.0
  %v7092 = vmax.f32 %v7086, 0.0
  %v7093 = vmax.f32 %v7088, 0.0
  %v7094 = vpack.c.bf16 %v7090, %v7090
  %v7095 = vpack.c.bf16 %v7091, %v7091
  %v7096 = vpack.c.bf16 %v7092, %v7092
  %v7097 = vpack.c.bf16 %v7093, %v7093
  %v7100 = vunpack.c.l.b16 %v7094
  %v7101 = vunpack.c.l.b16 %v7095
  %v7102 = vpack.c.b16 %v7101, %v7100
  %v7106 = vunpack.c.l.b16 %v7096
  %v7107 = vunpack.c.l.b16 %v7097
  %v7108 = vpack.c.b16 %v7107, %v7106
  %v7110 = vld [vmem:[%s7] sm:$0xff]
  %v7111 = vld [vmem:[%s7 + $0x8] sm:$0xff]
  %v7112 = vld [vmem:[%s7 + $0x10] sm:$0xff]
  %v7113 = vld [vmem:[%s7 + $0x18] sm:$0xff]
  %v7114 = vld [vmem:[%s7 + $0x20] sm:$0xff]
  %v7115 = vld [vmem:[%s7 + $0x28] sm:$0xff]
  %v7116 = vld [vmem:[%s7 + $0x30] sm:$0xff]
  %v7117 = vld [vmem:[%s7 + $0x38] sm:$0xff]
  %v7118 = vld [vmem:[%s7 + $0x40] sm:$0xff]
  %v7119 = vld [vmem:[%s7 + $0x48] sm:$0xff]
  %v7120 = vld [vmem:[%s7 + $0x50] sm:$0xff]
  %v7121 = vld [vmem:[%s7 + $0x58] sm:$0xff]
  %v7122 = vld [vmem:[%s7 + $0x60] sm:$0xff]
  %v7123 = vld [vmem:[%s7 + $0x68] sm:$0xff]
  %v7124 = vld [vmem:[%s7 + $0x70] sm:$0xff]
  %v7125 = vld [vmem:[%s7 + $0x78] sm:$0xff]
  %v7126 = vld [vmem:[%s7 + $0x80] sm:$0xff]
  %v7127 = vld [vmem:[%s7 + $0x88] sm:$0xff]
  %v7128 = vld [vmem:[%s7 + $0x90] sm:$0xff]
  %v7129 = vld [vmem:[%s7 + $0x98] sm:$0xff]
  %v7130 = vld [vmem:[%s7 + $0xa0] sm:$0xff]
  %v7131 = vld [vmem:[%s7 + $0xa8] sm:$0xff]
  %v7132 = vld [vmem:[%s7 + $0xb0] sm:$0xff]
  %v7133 = vld [vmem:[%s7 + $0xb8] sm:$0xff]
  %v7134 = vld [vmem:[%s7 + $0xc0] sm:$0xff]
  %v7135 = vld [vmem:[%s7 + $0xc8] sm:$0xff]
  %v7136 = vld [vmem:[%s7 + $0xd0] sm:$0xff]
  %v7137 = vld [vmem:[%s7 + $0xd8] sm:$0xff]
  %v7138 = vld [vmem:[%s7 + $0xe0] sm:$0xff]
  %v7139 = vld [vmem:[%s7 + $0xe8] sm:$0xff]
  %v7140 = vld [vmem:[%s7 + $0xf0] sm:$0xff]
  %v7141 = vld [vmem:[%s7 + $0xf8] sm:$0xff]
  %v7142 = vld [vmem:[%s7 + $0x100] sm:$0xff]
  %v7143 = vld [vmem:[%s7 + $0x108] sm:$0xff]
  %v7144 = vld [vmem:[%s7 + $0x110] sm:$0xff]
  %v7145 = vld [vmem:[%s7 + $0x118] sm:$0xff]
  %v7146 = vld [vmem:[%s7 + $0x120] sm:$0xff]
  %v7147 = vld [vmem:[%s7 + $0x128] sm:$0xff]
  %v7148 = vld [vmem:[%s7 + $0x130] sm:$0xff]
  %v7149 = vld [vmem:[%s7 + $0x138] sm:$0xff]
  %v7150 = vld [vmem:[%s7 + $0x140] sm:$0xff]
  %v7151 = vld [vmem:[%s7 + $0x148] sm:$0xff]
  %v7152 = vld [vmem:[%s7 + $0x150] sm:$0xff]
  %v7153 = vld [vmem:[%s7 + $0x158] sm:$0xff]
  %v7154 = vld [vmem:[%s7 + $0x160] sm:$0xff]
  %v7155 = vld [vmem:[%s7 + $0x168] sm:$0xff]
  %v7156 = vld [vmem:[%s7 + $0x170] sm:$0xff]
  %v7157 = vld [vmem:[%s7 + $0x178] sm:$0xff]
  %v7158 = vld [vmem:[%s7 + $0x180] sm:$0xff]
  %v7159 = vld [vmem:[%s7 + $0x188] sm:$0xff]
  %v7160 = vld [vmem:[%s7 + $0x190] sm:$0xff]
  %v7161 = vld [vmem:[%s7 + $0x198] sm:$0xff]
  %v7162 = vld [vmem:[%s7 + $0x1a0] sm:$0xff]
  %v7163 = vld [vmem:[%s7 + $0x1a8] sm:$0xff]
  %v7164 = vld [vmem:[%s7 + $0x1b0] sm:$0xff]
  %v7165 = vld [vmem:[%s7 + $0x1b8] sm:$0xff]
  %v7166 = vld [vmem:[%s7 + $0x1c0] sm:$0xff]
  %v7167 = vld [vmem:[%s7 + $0x1c8] sm:$0xff]
  %v7168 = vld [vmem:[%s7 + $0x1d0] sm:$0xff]
  %v7169 = vld [vmem:[%s7 + $0x1d8] sm:$0xff]
  %v7170 = vld [vmem:[%s7 + $0x1e0] sm:$0xff]
  %v7171 = vld [vmem:[%s7 + $0x1e8] sm:$0xff]
  %v7172 = vld [vmem:[%s7 + $0x1f0] sm:$0xff]
  %v7173 = vld [vmem:[%s7 + $0x1f8] sm:$0xff]
  %v7174 = vld [vmem:[%s8] sm:$0xf]
  %v7176 = vperm.slane %v7174, 0
  %v7177 = vperm.slane %v7174, 1
  %v7178 = vperm.slane %v7174, 2
  %v7179 = vperm.slane %v7174, 3
  %v7248 = vunpack.c.l.b16 %v7110
  %v7249 = vunpack.c.h.b16 %v7110
  %v7250 = vunpack.c.l.b16 %v7111
  %v7251 = vunpack.c.h.b16 %v7111
  %v7252 = vunpack.c.l.b16 %v7112
  %v7253 = vunpack.c.h.b16 %v7112
  %v7254 = vunpack.c.l.b16 %v7113
  %v7255 = vunpack.c.h.b16 %v7113
  %v7256 = vunpack.c.l.b16 %v7114
  %v7257 = vunpack.c.h.b16 %v7114
  %v7258 = vunpack.c.l.b16 %v7115
  %v7259 = vunpack.c.h.b16 %v7115
  %v7260 = vunpack.c.l.b16 %v7116
  %v7261 = vunpack.c.h.b16 %v7116
  %v7262 = vunpack.c.l.b16 %v7117
  %v7263 = vunpack.c.h.b16 %v7117
  %v7264 = vunpack.c.l.b16 %v7118
  %v7265 = vunpack.c.h.b16 %v7118
  %v7266 = vunpack.c.l.b16 %v7119
  %v7267 = vunpack.c.h.b16 %v7119
  %v7268 = vunpack.c.l.b16 %v7120
  %v7269 = vunpack.c.h.b16 %v7120
  %v7270 = vunpack.c.l.b16 %v7121
  %v7271 = vunpack.c.h.b16 %v7121
  %v7272 = vunpack.c.l.b16 %v7122
  %v7273 = vunpack.c.h.b16 %v7122
  %v7274 = vunpack.c.l.b16 %v7123
  %v7275 = vunpack.c.h.b16 %v7123
  %v7276 = vunpack.c.l.b16 %v7124
  %v7277 = vunpack.c.h.b16 %v7124
  %v7278 = vunpack.c.l.b16 %v7125
  %v7279 = vunpack.c.h.b16 %v7125
  %v7280 = vunpack.c.l.b16 %v7126
  %v7281 = vunpack.c.h.b16 %v7126
  %v7282 = vunpack.c.l.b16 %v7127
  %v7283 = vunpack.c.h.b16 %v7127
  %v7284 = vunpack.c.l.b16 %v7128
  %v7285 = vunpack.c.h.b16 %v7128
  %v7286 = vunpack.c.l.b16 %v7129
  %v7287 = vunpack.c.h.b16 %v7129
  %v7288 = vunpack.c.l.b16 %v7130
  %v7289 = vunpack.c.h.b16 %v7130
  %v7290 = vunpack.c.l.b16 %v7131
  %v7291 = vunpack.c.h.b16 %v7131
  %v7292 = vunpack.c.l.b16 %v7132
  %v7293 = vunpack.c.h.b16 %v7132
  %v7294 = vunpack.c.l.b16 %v7133
  %v7295 = vunpack.c.h.b16 %v7133
  %v7296 = vunpack.c.l.b16 %v7134
  %v7297 = vunpack.c.h.b16 %v7134
  %v7298 = vunpack.c.l.b16 %v7135
  %v7299 = vunpack.c.h.b16 %v7135
  %v7300 = vunpack.c.l.b16 %v7136
  %v7301 = vunpack.c.h.b16 %v7136
  %v7302 = vunpack.c.l.b16 %v7137
  %v7303 = vunpack.c.h.b16 %v7137
  %v7304 = vunpack.c.l.b16 %v7138
  %v7305 = vunpack.c.h.b16 %v7138
  %v7306 = vunpack.c.l.b16 %v7139
  %v7307 = vunpack.c.h.b16 %v7139
  %v7308 = vunpack.c.l.b16 %v7140
  %v7309 = vunpack.c.h.b16 %v7140
  %v7310 = vunpack.c.l.b16 %v7141
  %v7311 = vunpack.c.h.b16 %v7141
  %v7312 = vunpack.c.l.b16 %v7142
  %v7313 = vunpack.c.h.b16 %v7142
  %v7314 = vunpack.c.l.b16 %v7143
  %v7315 = vunpack.c.h.b16 %v7143
  %v7316 = vunpack.c.l.b16 %v7144
  %v7317 = vunpack.c.h.b16 %v7144
  %v7318 = vunpack.c.l.b16 %v7145
  %v7319 = vunpack.c.h.b16 %v7145
  %v7320 = vunpack.c.l.b16 %v7146
  %v7321 = vunpack.c.h.b16 %v7146
  %v7322 = vunpack.c.l.b16 %v7147
  %v7323 = vunpack.c.h.b16 %v7147
  %v7324 = vunpack.c.l.b16 %v7148
  %v7325 = vunpack.c.h.b16 %v7148
  %v7326 = vunpack.c.l.b16 %v7149
  %v7327 = vunpack.c.h.b16 %v7149
  %v7328 = vunpack.c.l.b16 %v7150
  %v7329 = vunpack.c.h.b16 %v7150
  %v7330 = vunpack.c.l.b16 %v7151
  %v7331 = vunpack.c.h.b16 %v7151
  %v7332 = vunpack.c.l.b16 %v7152
  %v7333 = vunpack.c.h.b16 %v7152
  %v7334 = vunpack.c.l.b16 %v7153
  %v7335 = vunpack.c.h.b16 %v7153
  %v7336 = vunpack.c.l.b16 %v7154
  %v7337 = vunpack.c.h.b16 %v7154
  %v7338 = vunpack.c.l.b16 %v7155
  %v7339 = vunpack.c.h.b16 %v7155
  %v7340 = vunpack.c.l.b16 %v7156
  %v7341 = vunpack.c.h.b16 %v7156
  %v7342 = vunpack.c.l.b16 %v7157
  %v7343 = vunpack.c.h.b16 %v7157
  %v7344 = vunpack.c.l.b16 %v7158
  %v7345 = vunpack.c.h.b16 %v7158
  %v7346 = vunpack.c.l.b16 %v7159
  %v7347 = vunpack.c.h.b16 %v7159
  %v7348 = vunpack.c.l.b16 %v7160
  %v7349 = vunpack.c.h.b16 %v7160
  %v7350 = vunpack.c.l.b16 %v7161
  %v7351 = vunpack.c.h.b16 %v7161
  %v7352 = vunpack.c.l.b16 %v7162
  %v7353 = vunpack.c.h.b16 %v7162
  %v7354 = vunpack.c.l.b16 %v7163
  %v7355 = vunpack.c.h.b16 %v7163
  %v7356 = vunpack.c.l.b16 %v7164
  %v7357 = vunpack.c.h.b16 %v7164
  %v7358 = vunpack.c.l.b16 %v7165
  %v7359 = vunpack.c.h.b16 %v7165
  %v7360 = vunpack.c.l.b16 %v7166
  %v7361 = vunpack.c.h.b16 %v7166
  %v7362 = vunpack.c.l.b16 %v7167
  %v7363 = vunpack.c.h.b16 %v7167
  %v7364 = vunpack.c.l.b16 %v7168
  %v7365 = vunpack.c.h.b16 %v7168
  %v7366 = vunpack.c.l.b16 %v7169
  %v7367 = vunpack.c.h.b16 %v7169
  %v7368 = vunpack.c.l.b16 %v7170
  %v7369 = vunpack.c.h.b16 %v7170
  %v7370 = vunpack.c.l.b16 %v7171
  %v7371 = vunpack.c.h.b16 %v7171
  %v7372 = vunpack.c.l.b16 %v7172
  %v7373 = vunpack.c.h.b16 %v7172
  %v7374 = vunpack.c.l.b16 %v7173
  %v7375 = vunpack.c.h.b16 %v7173
  %v7376 = vpack.c.b16 %v7252, %v7248
  %v7377 = vpack.c.b16 %v7253, %v7249
  %v7378 = vpack.c.b16 %v7254, %v7250
  %v7379 = vpack.c.b16 %v7255, %v7251
  %v7380 = vpack.c.b16 %v7260, %v7256
  %v7381 = vpack.c.b16 %v7261, %v7257
  %v7382 = vpack.c.b16 %v7262, %v7258
  %v7383 = vpack.c.b16 %v7263, %v7259
  %v7384 = vpack.c.b16 %v7268, %v7264
  %v7385 = vpack.c.b16 %v7269, %v7265
  %v7386 = vpack.c.b16 %v7270, %v7266
  %v7387 = vpack.c.b16 %v7271, %v7267
  %v7388 = vpack.c.b16 %v7276, %v7272
  %v7389 = vpack.c.b16 %v7277, %v7273
  %v7390 = vpack.c.b16 %v7278, %v7274
  %v7391 = vpack.c.b16 %v7279, %v7275
  %v7392 = vpack.c.b16 %v7284, %v7280
  %v7393 = vpack.c.b16 %v7285, %v7281
  %v7394 = vpack.c.b16 %v7286, %v7282
  %v7395 = vpack.c.b16 %v7287, %v7283
  %v7396 = vpack.c.b16 %v7292, %v7288
  %v7397 = vpack.c.b16 %v7293, %v7289
  %v7398 = vpack.c.b16 %v7294, %v7290
  %v7399 = vpack.c.b16 %v7295, %v7291
  %v7400 = vpack.c.b16 %v7300, %v7296
  %v7401 = vpack.c.b16 %v7301, %v7297
  %v7402 = vpack.c.b16 %v7302, %v7298
  %v7403 = vpack.c.b16 %v7303, %v7299
  %v7404 = vpack.c.b16 %v7308, %v7304
  %v7405 = vpack.c.b16 %v7309, %v7305
  %v7406 = vpack.c.b16 %v7310, %v7306
  %v7407 = vpack.c.b16 %v7311, %v7307
  %v7408 = vpack.c.b16 %v7316, %v7312
  %v7409 = vpack.c.b16 %v7317, %v7313
  %v7410 = vpack.c.b16 %v7318, %v7314
  %v7411 = vpack.c.b16 %v7319, %v7315
  %v7412 = vpack.c.b16 %v7324, %v7320
  %v7413 = vpack.c.b16 %v7325, %v7321
  %v7414 = vpack.c.b16 %v7326, %v7322
  %v7415 = vpack.c.b16 %v7327, %v7323
  %v7416 = vpack.c.b16 %v7332, %v7328
  %v7417 = vpack.c.b16 %v7333, %v7329
  %v7418 = vpack.c.b16 %v7334, %v7330
  %v7419 = vpack.c.b16 %v7335, %v7331
  %v7420 = vpack.c.b16 %v7340, %v7336
  %v7421 = vpack.c.b16 %v7341, %v7337
  %v7422 = vpack.c.b16 %v7342, %v7338
  %v7423 = vpack.c.b16 %v7343, %v7339
  %v7424 = vpack.c.b16 %v7348, %v7344
  %v7425 = vpack.c.b16 %v7349, %v7345
  %v7426 = vpack.c.b16 %v7350, %v7346
  %v7427 = vpack.c.b16 %v7351, %v7347
  %v7428 = vpack.c.b16 %v7356, %v7352
  %v7429 = vpack.c.b16 %v7357, %v7353
  %v7430 = vpack.c.b16 %v7358, %v7354
  %v7431 = vpack.c.b16 %v7359, %v7355
  %v7432 = vpack.c.b16 %v7364, %v7360
  %v7433 = vpack.c.b16 %v7365, %v7361
  %v7434 = vpack.c.b16 %v7366, %v7362
  %v7435 = vpack.c.b16 %v7367, %v7363
  %v7436 = vpack.c.b16 %v7372, %v7368
  %v7437 = vpack.c.b16 %v7373, %v7369
  %v7438 = vpack.c.b16 %v7374, %v7370
  %v7439 = vpack.c.b16 %v7375, %v7371
  %7504 = vmatpush.bf16.msra.mxu0 %v7404
  %7505 = vmatpush.bf16.msra.mxu0 %v7400
  %7506 = vmatpush.bf16.msra.mxu0 %v7396
  %7507 = vmatpush.bf16.msra.mxu0 %v7392
  %7508 = vmatpush.bf16.msra.mxu0 %v7388
  %7509 = vmatpush.bf16.msra.mxu0 %v7384
  %7510 = vmatpush.bf16.msra.mxu0 %v7380
  %7511 = vmatpush.bf16.msra.mxu0 %v7376
  %7512 = vmatmul.bf16.gmra.mxu0 %v7102
  %v7513 = vpop.f32.mrf.mxu0
  %v7514 = vadd.f32 %v7176, %v7513
  %v7515 = vpop.f32.mrf.mxu0
  %v7516 = vadd.f32 %v7176, %v7515
  %7517 = vdwg.mxu0
  %7518 = vmatpush.bf16.msra.mxu0 %v7436
  %7519 = vmatpush.bf16.msra.mxu0 %v7432
  %7520 = vmatpush.bf16.msra.mxu0 %v7428
  %7521 = vmatpush.bf16.msra.mxu0 %v7424
  %7522 = vmatpush.bf16.msra.mxu0 %v7420
  %7523 = vmatpush.bf16.msra.mxu0 %v7416
  %7524 = vmatpush.bf16.msra.mxu0 %v7412
  %7525 = vmatpush.bf16.msra.mxu0 %v7408
  %7526 = vmatmul.bf16.gmra.mxu0 %v7108
  %v7527 = vpop.f32.mrf.mxu0
  %v7528 = vadd.f32 %v7514, %v7527
  %v7529 = vpop.f32.mrf.mxu0
  %v7530 = vadd.f32 %v7516, %v7529
  %7531 = vdwg.mxu0
  %7532 = vmatpush.bf16.msra.mxu0 %v7405
  %7533 = vmatpush.bf16.msra.mxu0 %v7401
  %7534 = vmatpush.bf16.msra.mxu0 %v7397
  %7535 = vmatpush.bf16.msra.mxu0 %v7393
  %7536 = vmatpush.bf16.msra.mxu0 %v7389
  %7537 = vmatpush.bf16.msra.mxu0 %v7385
  %7538 = vmatpush.bf16.msra.mxu0 %v7381
  %7539 = vmatpush.bf16.msra.mxu0 %v7377
  %7540 = vmatmul.bf16.gmra.mxu0 %v7102
  %v7541 = vpop.f32.mrf.mxu0
  %v7542 = vadd.f32 %v7177, %v7541
  %v7543 = vpop.f32.mrf.mxu0
  %v7544 = vadd.f32 %v7177, %v7543
  %7545 = vdwg.mxu0
  %7546 = vmatpush.bf16.msra.mxu0 %v7437
  %7547 = vmatpush.bf16.msra.mxu0 %v7433
  %7548 = vmatpush.bf16.msra.mxu0 %v7429
  %7549 = vmatpush.bf16.msra.mxu0 %v7425
  %7550 = vmatpush.bf16.msra.mxu0 %v7421
  %7551 = vmatpush.bf16.msra.mxu0 %v7417
  %7552 = vmatpush.bf16.msra.mxu0 %v7413
  %7553 = vmatpush.bf16.msra.mxu0 %v7409
  %7554 = vmatmul.bf16.gmra.mxu0 %v7108
  %v7555 = vpop.f32.mrf.mxu0
  %v7556 = vadd.f32 %v7542, %v7555
  %v7557 = vpop.f32.mrf.mxu0
  %v7558 = vadd.f32 %v7544, %v7557
  %7559 = vdwg.mxu0
  %7560 = vmatpush.bf16.msra.mxu0 %v7406
  %7561 = vmatpush.bf16.msra.mxu0 %v7402
  %7562 = vmatpush.bf16.msra.mxu0 %v7398
  %7563 = vmatpush.bf16.msra.mxu0 %v7394
  %7564 = vmatpush.bf16.msra.mxu0 %v7390
  %7565 = vmatpush.bf16.msra.mxu0 %v7386
  %7566 = vmatpush.bf16.msra.mxu0 %v7382
  %7567 = vmatpush.bf16.msra.mxu0 %v7378
  %7568 = vmatmul.bf16.gmra.mxu0 %v7102
  %v7569 = vpop.f32.mrf.mxu0
  %v7570 = vadd.f32 %v7178, %v7569
  %v7571 = vpop.f32.mrf.mxu0
  %v7572 = vadd.f32 %v7178, %v7571
  %7573 = vdwg.mxu0
  %7574 = vmatpush.bf16.msra.mxu0 %v7438
  %7575 = vmatpush.bf16.msra.mxu0 %v7434
  %7576 = vmatpush.bf16.msra.mxu0 %v7430
  %7577 = vmatpush.bf16.msra.mxu0 %v7426
  %7578 = vmatpush.bf16.msra.mxu0 %v7422
  %7579 = vmatpush.bf16.msra.mxu0 %v7418
  %7580 = vmatpush.bf16.msra.mxu0 %v7414
  %7581 = vmatpush.bf16.msra.mxu0 %v7410
  %7582 = vmatmul.bf16.gmra.mxu0 %v7108
  %v7583 = vpop.f32.mrf.mxu0
  %v7584 = vadd.f32 %v7570, %v7583
  %v7585 = vpop.f32.mrf.mxu0
  %v7586 = vadd.f32 %v7572, %v7585
  %7587 = vdwg.mxu0
  %7588 = vmatpush.bf16.msra.mxu0 %v7407
  %7589 = vmatpush.bf16.msra.mxu0 %v7403
  %7590 = vmatpush.bf16.msra.mxu0 %v7399
  %7591 = vmatpush.bf16.msra.mxu0 %v7395
  %7592 = vmatpush.bf16.msra.mxu0 %v7391
  %7593 = vmatpush.bf16.msra.mxu0 %v7387
  %7594 = vmatpush.bf16.msra.mxu0 %v7383
  %7595 = vmatpush.bf16.msra.mxu0 %v7379
  %7596 = vmatmul.bf16.gmra.mxu0 %v7102
  %v7597 = vpop.f32.mrf.mxu0
  %v7598 = vadd.f32 %v7179, %v7597
  %v7599 = vpop.f32.mrf.mxu0
  %v7600 = vadd.f32 %v7179, %v7599
  %7601 = vdwg.mxu0
  %7602 = vmatpush.bf16.msra.mxu0 %v7439
  %7603 = vmatpush.bf16.msra.mxu0 %v7435
  %7604 = vmatpush.bf16.msra.mxu0 %v7431
  %7605 = vmatpush.bf16.msra.mxu0 %v7427
  %7606 = vmatpush.bf16.msra.mxu0 %v7423
  %7607 = vmatpush.bf16.msra.mxu0 %v7419
  %7608 = vmatpush.bf16.msra.mxu0 %v7415
  %7609 = vmatpush.bf16.msra.mxu0 %v7411
  %7610 = vmatmul.bf16.gmra.mxu0 %v7108
  %v7611 = vpop.f32.mrf.mxu0
  %v7612 = vadd.f32 %v7598, %v7611
  %v7613 = vpop.f32.mrf.mxu0
  %v7614 = vadd.f32 %v7600, %v7613
  %7615 = vdwg.mxu0
  %v7616 = vmax.f32 %v7528, 0.0
  %v7617 = vmax.f32 %v7556, 0.0
  %v7618 = vmax.f32 %v7584, 0.0
  %v7619 = vmax.f32 %v7612, 0.0
  %v7620 = vmax.f32 %v7530, 0.0
  %v7621 = vmax.f32 %v7558, 0.0
  %v7622 = vmax.f32 %v7586, 0.0
  %v7623 = vmax.f32 %v7614, 0.0
  %v7624 = vld [vmem:[%s9] sm:$0xf]
  %v7626 = vperm.slane %v7624, 0
  %v7627 = vperm.slane %v7624, 1
  %v7628 = vperm.slane %v7624, 2
  %v7629 = vperm.slane %v7624, 3
  %v7634 = vmul.f32 %v7616, %v7626
  %v7635 = vmul.f32 %v7617, %v7627
  %v7636 = vmul.f32 %v7618, %v7628
  %v7637 = vmul.f32 %v7619, %v7629
  %v7638 = vmul.f32 %v7620, %v7626
  %v7639 = vmul.f32 %v7621, %v7627
  %v7640 = vmul.f32 %v7622, %v7628
  %v7641 = vmul.f32 %v7623, %v7629
  %v7642 = vadd.f32 %v7634, %v7635
  %v7643 = vadd.f32 %v7642, %v7636
  %v7644 = vadd.f32 %v7643, %v7637
  %7645 = vadd.xlane.f32.xlu0 %v7644
  %v7646 = vpop.xlane.xlu0 %7645
  %v7647 = vadd.f32 %v7638, %v7639
  %v7648 = vadd.f32 %v7647, %v7640
  %v7649 = vadd.f32 %v7648, %v7641
  %7650 = vadd.xlane.f32.xlu0 %v7649
  %v7651 = vpop.xlane.xlu0 %7650
  %v7652 = vld [vmem:[#allocation2] sm:$0x1]
  %v7654 = vperm.slane %v7652, 0
  %v7656 = vadd.f32 %v7646, %v7654
  %v7657 = vadd.f32 %v7651, %v7654
  %vm7658 = vcmask 7168
  %7659 = vst.msk [vmem:[%s11] sm:$0xff] %vm7658, %v7656
  %7660 = vst.msk [vmem:[%s11 + $0x8] sm:$0xff] %vm7658, %v7657
  // Predicated region
  $region46: #{critic_forward.1} parent=0 // pred_check
    _
  $region47: #{critic_forward.1} parent=0 // pred_check_branch
    %7662 = sbr.rel (0) target = $region49
  $region48: #{critic_forward.1} parent=0 // pred_region
    _
  $region49: #{critic_forward.1} parent=0 // pred_fallthru
    _
  // Predicated region
  $region50: #{critic_forward.1} parent=0 // pred_check
    _
  $region51: #{critic_forward.1} parent=0 // pred_check_branch
    %7664 = sbr.rel (0) target = $region53
  $region52: #{critic_forward.1} parent=0 // pred_region
    _
  $region53: #{critic_forward.1} parent=0 // pred_fallthru
    _

</llo_original>
